<compile_context>
chip_gen: v6e
topology: v6e:2x2x1
jax: 0.10.0
libtpu: 0.0.40
codegen_flags: <defaults>
</compile_context>

<pallas_src>
import functools

import jax
import jax.numpy as jnp
import numpy as np
from jax.experimental import pallas as pl
from jax.experimental.pallas import tpu as pltpu

E_CHAR = 50
MAX_WORD_LEN = 21
KERNEL_SIZE = 5
N_WINDOWS = MAX_WORD_LEN - KERNEL_SIZE + 1  # 17
LANE = 128
MIN_STEPS = 4  # keep >=4 grid steps for large inputs (2 TCs on v7x, >=2 each)


def _round_up(x, m):
    return (x + m - 1) // m * m


def _cdiv(a, b):
    return -(-a // b)


def _char_cnn_kernel(ids_ref, wf_ref, bconv_ref, whw_ref, bhw_ref, out_ref):
    """One grid step processes a tile of words.

    ids_ref  : (21, TILE) int32  char ids, word positions on the major axis
    wf_ref   : (5, V, F)         conv taps with the char embedding pre-folded
    bconv_ref: (1, F)
    whw_ref  : (F, 2F)           fused highway weight [proj | gate]
    bhw_ref  : (1, 2F)
    out_ref  : (TILE, F)
    """
    t = ids_ref.shape[1]
    v = wf_ref.shape[1]
    f = out_ref.shape[-1]

    # One-hot over char ids, built once, laid out (positions, words, chars) so
    # the sliding-window slices below are on the non-tiled major axis (no
    # sublane-offset relayout copies).  V <= 128 -> one lane-vreg wide.
    ids = ids_ref[...]                                             # (21, T)
    iota_v = jax.lax.broadcasted_iota(jnp.int32, (MAX_WORD_LEN, t, v), 2)
    one_hot = (iota_v == ids[:, :, None]).astype(jnp.float32)      # (21, T, V)

    # Conv1d as 5 tap matmuls against the embedding-folded weights (MXU).
    # one_hot[k:k+17] is a free slice along the leading (major) axis.
    acc = jnp.einsum('ptv,vf->ptf', one_hot[0:N_WINDOWS], wf_ref[0],
                     preferred_element_type=jnp.float32)           # (17, T, F)
    for k in range(1, KERNEL_SIZE):
        acc = acc + jnp.einsum('ptv,vf->ptf', one_hot[k:k + N_WINDOWS],
                               wf_ref[k], preferred_element_type=jnp.float32)

    # Max-pool over the 17 window positions (major axis -> elementwise maxes).
    # Bias + ReLU commute with the max, so apply them once on (T, F).  Exact.
    conv = jnp.maximum(jnp.max(acc, axis=0) + bconv_ref[...], 0.0)  # (T, F)

    # Fused highway: one (T,F)@(F,2F) matmul, then split into proj / gate.
    hw = jnp.dot(conv, whw_ref[...],
                 preferred_element_type=jnp.float32) + bhw_ref[...]
    proj = jnp.maximum(hw[:, :f], 0.0)
    gate = jax.nn.sigmoid(hw[:, f:])
    out = gate * proj + (1.0 - gate) * conv

    # Dropout: eval mode -> identity.
    out_ref[...] = out.astype(out_ref.dtype)


def _pick_tile_and_vmem():
    """Per-generation defaults: big tiles on 128-MiB-VMEM parts (v5e/v6e),
    conservative on v7x (64 MiB per TensorCore) and unknown chips."""
    kind = ""
    try:
        kind = jax.devices()[0].device_kind.lower()
    except Exception:
        pass
    if ("v5" in kind) or ("v6" in kind):
        return 1024, 96 * 1024 * 1024
    return 512, 56 * 1024 * 1024


@functools.partial(jax.jit, static_argnames=("tile", "vmem_limit_bytes"))
def _forward(ids, char_emb_table, w_conv, b_conv, w_proj, b_proj,
             w_gate, b_gate, *, tile, vmem_limit_bytes):
    sent_len, batch, word_len = ids.shape
    assert word_len == MAX_WORD_LEN
    assert char_emb_table.shape[1] == E_CHAR
    vocab = char_emb_table.shape[0]
    assert vocab <= LANE, "char vocab must fit within one 128-lane vreg"
    f = w_conv.shape[-1]

    n_words = sent_len * batch
    # Tile is the lane dim of the ids block -> multiple of 128; also keep at
    # least MIN_STEPS grid steps once the input is large enough.
    cap = max(LANE, _round_up(_cdiv(n_words, MIN_STEPS), LANE))
    tile = max(LANE, min(_round_up(tile, LANE), cap))
    n_pad = _round_up(n_words, tile)

    flat_ids = ids.reshape(n_words, word_len)
    if n_pad != n_words:
        flat_ids = jnp.pad(flat_ids, ((0, n_pad - n_words), (0, 0)))
    ids_maj = flat_ids.T                                     # (21, n_pad)

    # Fold the char-embedding table into the conv taps (exact):
    #   W_fused[k] = char_emb @ w_conv[k] -> (V, F).
    w_fused = jnp.einsum('vc,kcf->kvf', char_emb_table, w_conv,
                         precision=jax.lax.Precision.HIGHEST)  # (5, V, F)
    # Fuse the two highway matrices into a single [proj | gate] block.
    w_hw = jnp.concatenate([w_proj, w_gate], axis=1)           # (F, 2F)
    b_hw = jnp.concatenate([b_proj, b_gate], axis=1)           # (1, 2F)

    grid = (n_pad // tile,)
    out = pl.pallas_call(
        _char_cnn_kernel,
        out_shape=jax.ShapeDtypeStruct((n_pad, f), jnp.float32),
        grid_spec=pltpu.PrefetchScalarGridSpec(
            num_scalar_prefetch=0,
            grid=grid,
            in_specs=[
                pl.BlockSpec((MAX_WORD_LEN, tile), lambda i: (0, i)),
                # Grid-invariant operands: constant index maps -> fetched once,
                # not re-DMA'd per grid step.
                pl.BlockSpec((KERNEL_SIZE, vocab, f), lambda i: (0, 0, 0)),
                pl.BlockSpec((1, f), lambda i: (0, 0)),
                pl.BlockSpec((f, 2 * f), lambda i: (0, 0)),
                pl.BlockSpec((1, 2 * f), lambda i: (0, 0)),
            ],
            out_specs=pl.BlockSpec((tile, f), lambda i: (i, 0)),
        ),
        compiler_params=pltpu.CompilerParams(
            dimension_semantics=("parallel",),
            vmem_limit_bytes=vmem_limit_bytes),
    )(ids_maj, w_fused, b_conv, w_hw, b_hw)

    return out[:n_words].reshape(sent_len, batch, f)


def model_embeddings_forward(ids, char_emb_table, w_conv, b_conv,
                             w_proj, b_proj, w_gate, b_gate,
                             *, tile=None, vmem_limit_bytes=None):
    """ids: int32 (sent_len, batch, 21) -> float32 (sent_len, batch, F)."""
    dt, dv = _pick_tile_and_vmem()
    return _forward(
        ids, char_emb_table, w_conv, b_conv, w_proj, b_proj, w_gate, b_gate,
        tile=tile if tile is not None else dt,
        vmem_limit_bytes=(vmem_limit_bytes if vmem_limit_bytes is not None
                          else dv))


def _reference(ids, char_emb_table, w_conv, b_conv, w_proj, b_proj,
               w_gate, b_gate):
    """Pure-JAX reference of the same forward pass (original op ordering)."""
    hi = jax.lax.Precision.HIGHEST
    sent_len, batch, word_len = ids.shape
    f = w_conv.shape[-1]
    x = jnp.take(char_emb_table, ids.reshape(-1, word_len), axis=0)  # (N,21,50)
    acc = jnp.broadcast_to(b_conv, (x.shape[0], N_WINDOWS, f))
    for k in range(KERNEL_SIZE):
        acc = acc + jnp.einsum('nlc,cf->nlf', x[:, k:k + N_WINDOWS, :],
                               w_conv[k], precision=hi)
    conv_out = jnp.max(jax.nn.relu(acc), axis=1)
    proj = jax.nn.relu(jnp.dot(conv_out, w_proj, precision=hi) + b_proj)
    gate = jax.nn.sigmoid(jnp.dot(conv_out, w_gate, precision=hi) + b_gate)
    hw = gate * proj + (1.0 - gate) * conv_out
    return hw.reshape(sent_len, batch, f)


if __name__ == "__main__":
    # Small, deterministic configuration.
    embed_size = 32          # F
    vocab_char_size = 30
    pad_token_idx = 0
    sent_len, batch = 8, 2

    key = jax.random.PRNGKey(0)
    k_emb, k_wc, k_bc, k_wp, k_bp, k_wg, k_bg, k_ids = jax.random.split(key, 8)

    # Parameters (deterministic synthetic init; pad row zeroed like nn.Embedding).
    char_emb = jax.random.normal(k_emb, (vocab_char_size, E_CHAR), jnp.float32) * 0.1
    char_emb = char_emb.at[pad_token_idx].set(0.0)
    w_conv = jax.random.normal(k_wc, (KERNEL_SIZE, E_CHAR, embed_size), jnp.float32) * 0.05
    b_conv = jax.random.normal(k_bc, (1, embed_size), jnp.float32) * 0.05
    w_proj = jax.random.normal(k_wp, (embed_size, embed_size), jnp.float32) * 0.1
    b_proj = jax.random.normal(k_bp, (1, embed_size), jnp.float32) * 0.1
    w_gate = jax.random.normal(k_wg, (embed_size, embed_size), jnp.float32) * 0.1
    b_gate = jax.random.normal(k_bg, (1, embed_size), jnp.float32) * 0.1

    # Input: character indices (sentence_length, batch_size, max_word_length).
    ids = jax.random.randint(k_ids, (sent_len, batch, MAX_WORD_LEN),
                             0, vocab_char_size, jnp.int32)

    out = model_embeddings_forward(ids, char_emb, w_conv, b_conv,
                                   w_proj, b_proj, w_gate, b_gate)
    out = jax.block_until_ready(out)

    ref = _reference(ids, char_emb, w_conv, b_conv, w_proj, b_proj,
                     w_gate, b_gate)
    assert out.shape == (sent_len, batch, embed_size)
    np.testing.assert_allclose(np.asarray(out), np.asarray(ref),
                               rtol=1e-4, atol=1e-4)
    print("KERNEL_OK")
</pallas_src>

<mosaic_0001>
module attributes {stable_mosaic.version = 11 : i64} {
  func.func @_char_cnn_kernel(%arg0: i32, %arg1: memref<21x128xi32, #tpu.memory_space<vmem>>, %arg2: memref<5x30x32xf32, #tpu.memory_space<vmem>>, %arg3: memref<1x32xf32, #tpu.memory_space<vmem>>, %arg4: memref<32x64xf32, #tpu.memory_space<vmem>>, %arg5: memref<1x64xf32, #tpu.memory_space<vmem>>, %arg6: memref<128x32xf32, #tpu.memory_space<vmem>>) attributes {dimension_semantics = [#tpu.dimension_semantics<parallel>], iteration_bounds = array<i64: 1>, scalar_prefetch = 0 : i64, scratch_operands = 0 : i64, tpu.core_type = #tpu.core_type<tc>, window_params = [{transform_indices = @transform_0, window_bounds = array<i64: 21, 128>}, {pipeline_mode = #tpu.pipeline_mode<synchronous>, transform_indices = @transform_1, window_bounds = array<i64: 5, 30, 32>}, {pipeline_mode = #tpu.pipeline_mode<synchronous>, transform_indices = @transform_2, window_bounds = array<i64: 1, 32>}, {pipeline_mode = #tpu.pipeline_mode<synchronous>, transform_indices = @transform_3, window_bounds = array<i64: 32, 64>}, {pipeline_mode = #tpu.pipeline_mode<synchronous>, transform_indices = @transform_4, window_bounds = array<i64: 1, 64>}, {transform_indices = @transform_5, window_bounds = array<i64: 128, 32>}]} {
    %c0 = arith.constant 0 : index
    %c0_0 = arith.constant 0 : index
    %0 = vector.load %arg1[%c0, %c0_0] : memref<21x128xi32, #tpu.memory_space<vmem>>, vector<21x128xi32>
    %1 = tpu.iota {dimensions = array<i32: 2>} : vector<21x128x30xi32>
    %2 = vector.shape_cast %0 : vector<21x128xi32> to vector<21x128x1xi32>
    %3 = vector.broadcast %2 : vector<21x128x1xi32> to vector<21x128x30xi32>
    %4 = arith.cmpi eq, %1, %3 : vector<21x128x30xi32>
    %5 = arith.extui %4 : vector<21x128x30xi1> to vector<21x128x30xi32>
    %6 = arith.sitofp %5 : vector<21x128x30xi32> to vector<21x128x30xf32>
    %7 = vector.extract_strided_slice %6 {offsets = [0, 0, 0], sizes = [17, 128, 30], strides = [1, 1, 1]} : vector<21x128x30xf32> to vector<17x128x30xf32>
    %c0_1 = arith.constant 0 : index
    %c0_2 = arith.constant 0 : index
    %c0_3 = arith.constant 0 : index
    %8 = vector.load %arg2[%c0_1, %c0_2, %c0_3] : memref<5x30x32xf32, #tpu.memory_space<vmem>>, vector<1x30x32xf32>
    %9 = vector.shape_cast %8 : vector<1x30x32xf32> to vector<30x32xf32>
    "tpu.trace_start"() <{level = 10 : i32, message = "ptv,vf->ptf"}> : () -> ()
    %cst = arith.constant dense<0.000000e+00> : vector<17x128x32xf32>
    %10 = tpu.matmul %7, %9, %cst {dimension_numbers = #tpu.dot_dimension_numbers<[2], [0], [0, 1], [1], [0, 0, 0, 1, 1, 1], [], []>} : vector<17x128x30xf32>, vector<30x32xf32>, vector<17x128x32xf32> -> vector<17x128x32xf32>
    "tpu.trace_stop"() : () -> ()
    %11 = vector.extract_strided_slice %6 {offsets = [1, 0, 0], sizes = [17, 128, 30], strides = [1, 1, 1]} : vector<21x128x30xf32> to vector<17x128x30xf32>
    %c1 = arith.constant 1 : index
    %c0_4 = arith.constant 0 : index
    %c0_5 = arith.constant 0 : index
    %12 = vector.load %arg2[%c1, %c0_4, %c0_5] : memref<5x30x32xf32, #tpu.memory_space<vmem>>, vector<1x30x32xf32>
    %13 = vector.shape_cast %12 : vector<1x30x32xf32> to vector<30x32xf32>
    "tpu.trace_start"() <{level = 10 : i32, message = "ptv,vf->ptf"}> : () -> ()
    %cst_6 = arith.constant dense<0.000000e+00> : vector<17x128x32xf32>
    %14 = tpu.matmul %11, %13, %cst_6 {dimension_numbers = #tpu.dot_dimension_numbers<[2], [0], [0, 1], [1], [0, 0, 0, 1, 1, 1], [], []>} : vector<17x128x30xf32>, vector<30x32xf32>, vector<17x128x32xf32> -> vector<17x128x32xf32>
    "tpu.trace_stop"() : () -> ()
    %15 = arith.addf %10, %14 : vector<17x128x32xf32>
    %16 = vector.extract_strided_slice %6 {offsets = [2, 0, 0], sizes = [17, 128, 30], strides = [1, 1, 1]} : vector<21x128x30xf32> to vector<17x128x30xf32>
    %c2 = arith.constant 2 : index
    %c0_7 = arith.constant 0 : index
    %c0_8 = arith.constant 0 : index
    %17 = vector.load %arg2[%c2, %c0_7, %c0_8] : memref<5x30x32xf32, #tpu.memory_space<vmem>>, vector<1x30x32xf32>
    %18 = vector.shape_cast %17 : vector<1x30x32xf32> to vector<30x32xf32>
    "tpu.trace_start"() <{level = 10 : i32, message = "ptv,vf->ptf"}> : () -> ()
    %cst_9 = arith.constant dense<0.000000e+00> : vector<17x128x32xf32>
    %19 = tpu.matmul %16, %18, %cst_9 {dimension_numbers = #tpu.dot_dimension_numbers<[2], [0], [0, 1], [1], [0, 0, 0, 1, 1, 1], [], []>} : vector<17x128x30xf32>, vector<30x32xf32>, vector<17x128x32xf32> -> vector<17x128x32xf32>
    "tpu.trace_stop"() : () -> ()
    %20 = arith.addf %15, %19 : vector<17x128x32xf32>
    %21 = vector.extract_strided_slice %6 {offsets = [3, 0, 0], sizes = [17, 128, 30], strides = [1, 1, 1]} : vector<21x128x30xf32> to vector<17x128x30xf32>
    %c3 = arith.constant 3 : index
    %c0_10 = arith.constant 0 : index
    %c0_11 = arith.constant 0 : index
    %22 = vector.load %arg2[%c3, %c0_10, %c0_11] : memref<5x30x32xf32, #tpu.memory_space<vmem>>, vector<1x30x32xf32>
    %23 = vector.shape_cast %22 : vector<1x30x32xf32> to vector<30x32xf32>
    "tpu.trace_start"() <{level = 10 : i32, message = "ptv,vf->ptf"}> : () -> ()
    %cst_12 = arith.constant dense<0.000000e+00> : vector<17x128x32xf32>
    %24 = tpu.matmul %21, %23, %cst_12 {dimension_numbers = #tpu.dot_dimension_numbers<[2], [0], [0, 1], [1], [0, 0, 0, 1, 1, 1], [], []>} : vector<17x128x30xf32>, vector<30x32xf32>, vector<17x128x32xf32> -> vector<17x128x32xf32>
    "tpu.trace_stop"() : () -> ()
    %25 = arith.addf %20, %24 : vector<17x128x32xf32>
    %26 = vector.extract_strided_slice %6 {offsets = [4, 0, 0], sizes = [17, 128, 30], strides = [1, 1, 1]} : vector<21x128x30xf32> to vector<17x128x30xf32>
    %c4 = arith.constant 4 : index
    %c0_13 = arith.constant 0 : index
    %c0_14 = arith.constant 0 : index
    %27 = vector.load %arg2[%c4, %c0_13, %c0_14] : memref<5x30x32xf32, #tpu.memory_space<vmem>>, vector<1x30x32xf32>
    %28 = vector.shape_cast %27 : vector<1x30x32xf32> to vector<30x32xf32>
    "tpu.trace_start"() <{level = 10 : i32, message = "ptv,vf->ptf"}> : () -> ()
    %cst_15 = arith.constant dense<0.000000e+00> : vector<17x128x32xf32>
    %29 = tpu.matmul %26, %28, %cst_15 {dimension_numbers = #tpu.dot_dimension_numbers<[2], [0], [0, 1], [1], [0, 0, 0, 1, 1, 1], [], []>} : vector<17x128x30xf32>, vector<30x32xf32>, vector<17x128x32xf32> -> vector<17x128x32xf32>
    "tpu.trace_stop"() : () -> ()
    %30 = arith.addf %25, %29 : vector<17x128x32xf32>
    %cst_16 = arith.constant dense<0xFF800000> : vector<128x32xf32>
    %31 = vector.multi_reduction <maximumf>, %30, %cst_16 [0] : vector<17x128x32xf32> to vector<128x32xf32>
    %c0_17 = arith.constant 0 : index
    %c0_18 = arith.constant 0 : index
    %32 = vector.load %arg3[%c0_17, %c0_18] : memref<1x32xf32, #tpu.memory_space<vmem>>, vector<1x32xf32>
    %33 = vector.broadcast %32 : vector<1x32xf32> to vector<128x32xf32>
    %34 = arith.addf %31, %33 : vector<128x32xf32>
    %cst_19 = arith.constant 0.000000e+00 : f32
    %35 = vector.broadcast %cst_19 : f32 to vector<128x32xf32>
    %36 = arith.maximumf %34, %35 : vector<128x32xf32>
    %c0_20 = arith.constant 0 : index
    %c0_21 = arith.constant 0 : index
    %37 = vector.load %arg4[%c0_20, %c0_21] : memref<32x64xf32, #tpu.memory_space<vmem>>, vector<32x64xf32>
    %cst_22 = arith.constant dense<0.000000e+00> : vector<128x64xf32>
    %38 = tpu.matmul %36, %37, %cst_22 {dimension_numbers = #tpu.dot_dimension_numbers<[1], [0], [0], [1], [0, 0, 1, 1], [], []>} : vector<128x32xf32>, vector<32x64xf32>, vector<128x64xf32> -> vector<128x64xf32>
    %c0_23 = arith.constant 0 : index
    %c0_24 = arith.constant 0 : index
    %39 = vector.load %arg5[%c0_23, %c0_24] : memref<1x64xf32, #tpu.memory_space<vmem>>, vector<1x64xf32>
    %40 = vector.broadcast %39 : vector<1x64xf32> to vector<128x64xf32>
    %41 = arith.addf %38, %40 : vector<128x64xf32>
    %42 = vector.extract_strided_slice %41 {offsets = [0, 0], sizes = [128, 32], strides = [1, 1]} : vector<128x64xf32> to vector<128x32xf32>
    %cst_25 = arith.constant 0.000000e+00 : f32
    %43 = vector.broadcast %cst_25 : f32 to vector<128x32xf32>
    %44 = arith.maximumf %42, %43 : vector<128x32xf32>
    %45 = vector.extract_strided_slice %41 {offsets = [0, 32], sizes = [128, 32], strides = [1, 1]} : vector<128x64xf32> to vector<128x32xf32>
    %46 = arith.negf %45 : vector<128x32xf32>
    %47 = math.exp %46 : vector<128x32xf32>
    %cst_26 = arith.constant 1.000000e+00 : f32
    %48 = vector.broadcast %cst_26 : f32 to vector<128x32xf32>
    %49 = arith.addf %48, %47 : vector<128x32xf32>
    %50 = arith.divf %48, %49 : vector<128x32xf32>
    %51 = arith.mulf %50, %44 : vector<128x32xf32>
    %cst_27 = arith.constant 1.000000e+00 : f32
    %52 = vector.broadcast %cst_27 : f32 to vector<128x32xf32>
    %53 = arith.subf %52, %50 : vector<128x32xf32>
    %54 = arith.mulf %53, %36 : vector<128x32xf32>
    %55 = arith.addf %51, %54 : vector<128x32xf32>
    %c0_28 = arith.constant 0 : index
    %c0_29 = arith.constant 0 : index
    %56 = vector.load %arg6[%c0_28, %c0_29] : memref<128x32xf32, #tpu.memory_space<vmem>>, vector<128x32xf32>
    tpu.vector_store %arg6[%c0_28, %c0_29], %55 {strides = array<i32>} : memref<128x32xf32, #tpu.memory_space<vmem>>, vector<128x32xf32>,
    return
  }
  func.func @transform_0(%arg0: i32) -> (i32, i32) {
    %c0_i32 = arith.constant 0 : i32
    %c0_i32_0 = arith.constant 0 : i32
    return %c0_i32, %arg0 : i32, i32
  }
  func.func @transform_1(%arg0: i32) -> (i32, i32, i32) {
    %c0_i32 = arith.constant 0 : i32
    %c0_i32_0 = arith.constant 0 : i32
    %c0_i32_1 = arith.constant 0 : i32
    %c0_i32_2 = arith.constant 0 : i32
    return %c0_i32, %c0_i32_0, %c0_i32_1 : i32, i32, i32
  }
  func.func @transform_2(%arg0: i32) -> (i32, i32) {
    %c0_i32 = arith.constant 0 : i32
    %c0_i32_0 = arith.constant 0 : i32
    %c0_i32_1 = arith.constant 0 : i32
    return %c0_i32, %c0_i32_0 : i32, i32
  }
  func.func @transform_3(%arg0: i32) -> (i32, i32) {
    %c0_i32 = arith.constant 0 : i32
    %c0_i32_0 = arith.constant 0 : i32
    %c0_i32_1 = arith.constant 0 : i32
    return %c0_i32, %c0_i32_0 : i32, i32
  }
  func.func @transform_4(%arg0: i32) -> (i32, i32) {
    %c0_i32 = arith.constant 0 : i32
    %c0_i32_0 = arith.constant 0 : i32
    %c0_i32_1 = arith.constant 0 : i32
    return %c0_i32, %c0_i32_0 : i32, i32
  }
  func.func @transform_5(%arg0: i32) -> (i32, i32) {
    %c0_i32 = arith.constant 0 : i32
    %c0_i32_0 = arith.constant 0 : i32
    return %arg0, %c0_i32 : i32, i32
  }
}

</mosaic_0001>

<llo_original>
// kernel: _forward.1
$region0: #{_forward.1}
  #allocation0 [shape = 'u32[]', space=smem, size = 0x4, offset = 0x4, fixed_abs, tag = 'smem constant byte address 0x4 - core index']
  #allocation1 [shape = 'u32[144,128]{1,0:T(1,128)}', space=vmem, size = 0x12000, scoped, tag = 'internal scratch']
  %s0 = inlined_call_operand.vmem [shape: s32[21,128], index: 0, kind: input, shape index: {}]
  %s1 = inlined_call_operand.vmem [shape: f32[5,30,32], index: 1, kind: input, shape index: {}]
  %s2 = inlined_call_operand.vmem [shape: f32[1,32], index: 2, kind: input, shape index: {}]
  %s3 = inlined_call_operand.vmem [shape: f32[32,64], index: 3, kind: input, shape index: {}]
  %s4 = inlined_call_operand.vmem [shape: f32[1,64], index: 4, kind: input, shape index: {}]
  %s5 = inlined_call_operand.vmem [shape: f32[128,32], index: 5, kind: output, shape index: {}]
  %s6 = sld [smem:[#allocation0]]
  $region30: #{_forward.1} parent=0
    _
  %s8 = ssub.s32 1, %s6
  %s9 = scalar_select 0, %s8, %s6
  // Predicated region
  $region2: #{_forward.1} parent=0 // pred_check
    _
  $region3: #{_forward.1} parent=0 // pred_check_branch
    %11 = sbr.rel (0) target = $region5
  $region4: #{_forward.1} parent=0 // pred_region
    _
  $region5: #{_forward.1} parent=0 // pred_fallthru
    _
  // Predicated region
  $region6: #{_forward.1} parent=0 // pred_check
    _
  $region7: #{_forward.1} parent=0 // pred_check_branch
    %13 = sbr.rel (0) target = $region9
  $region8: #{_forward.1} parent=0 // pred_region
    _
  $region9: #{_forward.1} parent=0 // pred_fallthru
    _
  // Predicated region
  $region10: #{_forward.1} parent=0 // pred_check
    _
  $region11: #{_forward.1} parent=0 // pred_check_branch
    %15 = sbr.rel (0) target = $region13
  $region12: #{_forward.1} parent=0 // pred_region
    _
  $region13: #{_forward.1} parent=0 // pred_fallthru
    _
  // Predicated region
  $region14: #{_forward.1} parent=0 // pred_check
    _
  $region15: #{_forward.1} parent=0 // pred_check_branch
    %17 = sbr.rel (0) target = $region17
  $region16: #{_forward.1} parent=0 // pred_region
    _
  $region17: #{_forward.1} parent=0 // pred_fallthru
    _
  // Predicated region
  $region18: #{_forward.1} parent=0 // pred_check
    _
  $region19: #{_forward.1} parent=0 // pred_check_branch
    %19 = sbr.rel (0) target = $region21
  $region20: #{_forward.1} parent=0 // pred_region
    _
  $region21: #{_forward.1} parent=0 // pred_fallthru
    _
  %v20 = vld [vmem:[%s0] sm:$0xff]
  %v21 = vld [vmem:[%s0 + $0x8] sm:$0xff]
  %v22 = vld [vmem:[%s0 + $0x10] sm:$0x1f]
  %v23 = vlaneseq
  %v24 = vand.u32 %v23, 127
  %v25 = vlaneseq
  %v26 = vshrl.u32 %v25, 7
  %v27 = vsub.s32 0, %v26
  %v28 = vrot.slane %v20, %v27
  %30 = vbcast.lane.b32.xlu0 %v28, 256
  %v31 = vpop.permute.xlu0 %30
  %s33 = sor.u32 256, 8
  %34 = vbcast.lane.b32.xlu0 %v28, %s33
  %v35 = vpop.permute.xlu0 %34
  %s37 = sor.u32 256, 16
  %38 = vbcast.lane.b32.xlu0 %v28, %s37
  %v39 = vpop.permute.xlu0 %38
  %s41 = sor.u32 256, 24
  %42 = vbcast.lane.b32.xlu0 %v28, %s41
  %v43 = vpop.permute.xlu0 %42
  %s45 = sor.u32 256, 32
  %46 = vbcast.lane.b32.xlu0 %v28, %s45
  %v47 = vpop.permute.xlu0 %46
  %s49 = sor.u32 256, 40
  %50 = vbcast.lane.b32.xlu0 %v28, %s49
  %v51 = vpop.permute.xlu0 %50
  %s53 = sor.u32 256, 48
  %54 = vbcast.lane.b32.xlu0 %v28, %s53
  %v55 = vpop.permute.xlu0 %54
  %s57 = sor.u32 256, 56
  %58 = vbcast.lane.b32.xlu0 %v28, %s57
  %v59 = vpop.permute.xlu0 %58
  %s61 = sor.u32 256, 64
  %62 = vbcast.lane.b32.xlu0 %v28, %s61
  %v63 = vpop.permute.xlu0 %62
  %s65 = sor.u32 256, 72
  %66 = vbcast.lane.b32.xlu0 %v28, %s65
  %v67 = vpop.permute.xlu0 %66
  %s69 = sor.u32 256, 80
  %70 = vbcast.lane.b32.xlu0 %v28, %s69
  %v71 = vpop.permute.xlu0 %70
  %s73 = sor.u32 256, 88
  %74 = vbcast.lane.b32.xlu0 %v28, %s73
  %v75 = vpop.permute.xlu0 %74
  %s77 = sor.u32 256, 96
  %78 = vbcast.lane.b32.xlu0 %v28, %s77
  %v79 = vpop.permute.xlu0 %78
  %s81 = sor.u32 256, 104
  %82 = vbcast.lane.b32.xlu0 %v28, %s81
  %v83 = vpop.permute.xlu0 %82
  %s85 = sor.u32 256, 112
  %86 = vbcast.lane.b32.xlu0 %v28, %s85
  %v87 = vpop.permute.xlu0 %86
  %s89 = sor.u32 256, 120
  %90 = vbcast.lane.b32.xlu0 %v28, %s89
  %v91 = vpop.permute.xlu0 %90
  %v92 = vlaneseq
  %v93 = vshrl.u32 %v92, 7
  %v94 = vsub.s32 1, %v93
  %v95 = vrot.slane %v20, %v94
  %97 = vbcast.lane.b32.xlu0 %v95, 256
  %v98 = vpop.permute.xlu0 %97
  %s100 = sor.u32 256, 8
  %101 = vbcast.lane.b32.xlu0 %v95, %s100
  %v102 = vpop.permute.xlu0 %101
  %s104 = sor.u32 256, 16
  %105 = vbcast.lane.b32.xlu0 %v95, %s104
  %v106 = vpop.permute.xlu0 %105
  %s108 = sor.u32 256, 24
  %109 = vbcast.lane.b32.xlu0 %v95, %s108
  %v110 = vpop.permute.xlu0 %109
  %s112 = sor.u32 256, 32
  %113 = vbcast.lane.b32.xlu0 %v95, %s112
  %v114 = vpop.permute.xlu0 %113
  %s116 = sor.u32 256, 40
  %117 = vbcast.lane.b32.xlu0 %v95, %s116
  %v118 = vpop.permute.xlu0 %117
  %s120 = sor.u32 256, 48
  %121 = vbcast.lane.b32.xlu0 %v95, %s120
  %v122 = vpop.permute.xlu0 %121
  %s124 = sor.u32 256, 56
  %125 = vbcast.lane.b32.xlu0 %v95, %s124
  %v126 = vpop.permute.xlu0 %125
  %s128 = sor.u32 256, 64
  %129 = vbcast.lane.b32.xlu0 %v95, %s128
  %v130 = vpop.permute.xlu0 %129
  %s132 = sor.u32 256, 72
  %133 = vbcast.lane.b32.xlu0 %v95, %s132
  %v134 = vpop.permute.xlu0 %133
  %s136 = sor.u32 256, 80
  %137 = vbcast.lane.b32.xlu0 %v95, %s136
  %v138 = vpop.permute.xlu0 %137
  %s140 = sor.u32 256, 88
  %141 = vbcast.lane.b32.xlu0 %v95, %s140
  %v142 = vpop.permute.xlu0 %141
  %s144 = sor.u32 256, 96
  %145 = vbcast.lane.b32.xlu0 %v95, %s144
  %v146 = vpop.permute.xlu0 %145
  %s148 = sor.u32 256, 104
  %149 = vbcast.lane.b32.xlu0 %v95, %s148
  %v150 = vpop.permute.xlu0 %149
  %s152 = sor.u32 256, 112
  %153 = vbcast.lane.b32.xlu0 %v95, %s152
  %v154 = vpop.permute.xlu0 %153
  %s156 = sor.u32 256, 120
  %157 = vbcast.lane.b32.xlu0 %v95, %s156
  %v158 = vpop.permute.xlu0 %157
  %v159 = vlaneseq
  %v160 = vshrl.u32 %v159, 7
  %v161 = vsub.s32 2, %v160
  %v162 = vrot.slane %v20, %v161
  %164 = vbcast.lane.b32.xlu0 %v162, 256
  %v165 = vpop.permute.xlu0 %164
  %s167 = sor.u32 256, 8
  %168 = vbcast.lane.b32.xlu0 %v162, %s167
  %v169 = vpop.permute.xlu0 %168
  %s171 = sor.u32 256, 16
  %172 = vbcast.lane.b32.xlu0 %v162, %s171
  %v173 = vpop.permute.xlu0 %172
  %s175 = sor.u32 256, 24
  %176 = vbcast.lane.b32.xlu0 %v162, %s175
  %v177 = vpop.permute.xlu0 %176
  %s179 = sor.u32 256, 32
  %180 = vbcast.lane.b32.xlu0 %v162, %s179
  %v181 = vpop.permute.xlu0 %180
  %s183 = sor.u32 256, 40
  %184 = vbcast.lane.b32.xlu0 %v162, %s183
  %v185 = vpop.permute.xlu0 %184
  %s187 = sor.u32 256, 48
  %188 = vbcast.lane.b32.xlu0 %v162, %s187
  %v189 = vpop.permute.xlu0 %188
  %s191 = sor.u32 256, 56
  %192 = vbcast.lane.b32.xlu0 %v162, %s191
  %v193 = vpop.permute.xlu0 %192
  %s195 = sor.u32 256, 64
  %196 = vbcast.lane.b32.xlu0 %v162, %s195
  %v197 = vpop.permute.xlu0 %196
  %s199 = sor.u32 256, 72
  %200 = vbcast.lane.b32.xlu0 %v162, %s199
  %v201 = vpop.permute.xlu0 %200
  %s203 = sor.u32 256, 80
  %204 = vbcast.lane.b32.xlu0 %v162, %s203
  %v205 = vpop.permute.xlu0 %204
  %s207 = sor.u32 256, 88
  %208 = vbcast.lane.b32.xlu0 %v162, %s207
  %v209 = vpop.permute.xlu0 %208
  %s211 = sor.u32 256, 96
  %212 = vbcast.lane.b32.xlu0 %v162, %s211
  %v213 = vpop.permute.xlu0 %212
  %s215 = sor.u32 256, 104
  %216 = vbcast.lane.b32.xlu0 %v162, %s215
  %v217 = vpop.permute.xlu0 %216
  %s219 = sor.u32 256, 112
  %220 = vbcast.lane.b32.xlu0 %v162, %s219
  %v221 = vpop.permute.xlu0 %220
  %s223 = sor.u32 256, 120
  %224 = vbcast.lane.b32.xlu0 %v162, %s223
  %v225 = vpop.permute.xlu0 %224
  %v226 = vlaneseq
  %v227 = vshrl.u32 %v226, 7
  %v228 = vsub.s32 3, %v227
  %v229 = vrot.slane %v20, %v228
  %231 = vbcast.lane.b32.xlu0 %v229, 256
  %v232 = vpop.permute.xlu0 %231
  %s234 = sor.u32 256, 8
  %235 = vbcast.lane.b32.xlu0 %v229, %s234
  %v236 = vpop.permute.xlu0 %235
  %s238 = sor.u32 256, 16
  %239 = vbcast.lane.b32.xlu0 %v229, %s238
  %v240 = vpop.permute.xlu0 %239
  %s242 = sor.u32 256, 24
  %243 = vbcast.lane.b32.xlu0 %v229, %s242
  %v244 = vpop.permute.xlu0 %243
  %s246 = sor.u32 256, 32
  %247 = vbcast.lane.b32.xlu0 %v229, %s246
  %v248 = vpop.permute.xlu0 %247
  %s250 = sor.u32 256, 40
  %251 = vbcast.lane.b32.xlu0 %v229, %s250
  %v252 = vpop.permute.xlu0 %251
  %s254 = sor.u32 256, 48
  %255 = vbcast.lane.b32.xlu0 %v229, %s254
  %v256 = vpop.permute.xlu0 %255
  %s258 = sor.u32 256, 56
  %259 = vbcast.lane.b32.xlu0 %v229, %s258
  %v260 = vpop.permute.xlu0 %259
  %s262 = sor.u32 256, 64
  %263 = vbcast.lane.b32.xlu0 %v229, %s262
  %v264 = vpop.permute.xlu0 %263
  %s266 = sor.u32 256, 72
  %267 = vbcast.lane.b32.xlu0 %v229, %s266
  %v268 = vpop.permute.xlu0 %267
  %s270 = sor.u32 256, 80
  %271 = vbcast.lane.b32.xlu0 %v229, %s270
  %v272 = vpop.permute.xlu0 %271
  %s274 = sor.u32 256, 88
  %275 = vbcast.lane.b32.xlu0 %v229, %s274
  %v276 = vpop.permute.xlu0 %275
  %s278 = sor.u32 256, 96
  %279 = vbcast.lane.b32.xlu0 %v229, %s278
  %v280 = vpop.permute.xlu0 %279
  %s282 = sor.u32 256, 104
  %283 = vbcast.lane.b32.xlu0 %v229, %s282
  %v284 = vpop.permute.xlu0 %283
  %s286 = sor.u32 256, 112
  %287 = vbcast.lane.b32.xlu0 %v229, %s286
  %v288 = vpop.permute.xlu0 %287
  %s290 = sor.u32 256, 120
  %291 = vbcast.lane.b32.xlu0 %v229, %s290
  %v292 = vpop.permute.xlu0 %291
  %v293 = vlaneseq
  %v294 = vshrl.u32 %v293, 7
  %v295 = vsub.s32 4, %v294
  %v296 = vrot.slane %v20, %v295
  %298 = vbcast.lane.b32.xlu0 %v296, 256
  %v299 = vpop.permute.xlu0 %298
  %s301 = sor.u32 256, 8
  %302 = vbcast.lane.b32.xlu0 %v296, %s301
  %v303 = vpop.permute.xlu0 %302
  %s305 = sor.u32 256, 16
  %306 = vbcast.lane.b32.xlu0 %v296, %s305
  %v307 = vpop.permute.xlu0 %306
  %s309 = sor.u32 256, 24
  %310 = vbcast.lane.b32.xlu0 %v296, %s309
  %v311 = vpop.permute.xlu0 %310
  %s313 = sor.u32 256, 32
  %314 = vbcast.lane.b32.xlu0 %v296, %s313
  %v315 = vpop.permute.xlu0 %314
  %s317 = sor.u32 256, 40
  %318 = vbcast.lane.b32.xlu0 %v296, %s317
  %v319 = vpop.permute.xlu0 %318
  %s321 = sor.u32 256, 48
  %322 = vbcast.lane.b32.xlu0 %v296, %s321
  %v323 = vpop.permute.xlu0 %322
  %s325 = sor.u32 256, 56
  %326 = vbcast.lane.b32.xlu0 %v296, %s325
  %v327 = vpop.permute.xlu0 %326
  %s329 = sor.u32 256, 64
  %330 = vbcast.lane.b32.xlu0 %v296, %s329
  %v331 = vpop.permute.xlu0 %330
  %s333 = sor.u32 256, 72
  %334 = vbcast.lane.b32.xlu0 %v296, %s333
  %v335 = vpop.permute.xlu0 %334
  %s337 = sor.u32 256, 80
  %338 = vbcast.lane.b32.xlu0 %v296, %s337
  %v339 = vpop.permute.xlu0 %338
  %s341 = sor.u32 256, 88
  %342 = vbcast.lane.b32.xlu0 %v296, %s341
  %v343 = vpop.permute.xlu0 %342
  %s345 = sor.u32 256, 96
  %346 = vbcast.lane.b32.xlu0 %v296, %s345
  %v347 = vpop.permute.xlu0 %346
  %s349 = sor.u32 256, 104
  %350 = vbcast.lane.b32.xlu0 %v296, %s349
  %v351 = vpop.permute.xlu0 %350
  %s353 = sor.u32 256, 112
  %354 = vbcast.lane.b32.xlu0 %v296, %s353
  %v355 = vpop.permute.xlu0 %354
  %s357 = sor.u32 256, 120
  %358 = vbcast.lane.b32.xlu0 %v296, %s357
  %v359 = vpop.permute.xlu0 %358
  %v360 = vlaneseq
  %v361 = vshrl.u32 %v360, 7
  %v362 = vsub.s32 5, %v361
  %v363 = vrot.slane %v20, %v362
  %365 = vbcast.lane.b32.xlu0 %v363, 256
  %v366 = vpop.permute.xlu0 %365
  %s368 = sor.u32 256, 8
  %369 = vbcast.lane.b32.xlu0 %v363, %s368
  %v370 = vpop.permute.xlu0 %369
  %s372 = sor.u32 256, 16
  %373 = vbcast.lane.b32.xlu0 %v363, %s372
  %v374 = vpop.permute.xlu0 %373
  %s376 = sor.u32 256, 24
  %377 = vbcast.lane.b32.xlu0 %v363, %s376
  %v378 = vpop.permute.xlu0 %377
  %s380 = sor.u32 256, 32
  %381 = vbcast.lane.b32.xlu0 %v363, %s380
  %v382 = vpop.permute.xlu0 %381
  %s384 = sor.u32 256, 40
  %385 = vbcast.lane.b32.xlu0 %v363, %s384
  %v386 = vpop.permute.xlu0 %385
  %s388 = sor.u32 256, 48
  %389 = vbcast.lane.b32.xlu0 %v363, %s388
  %v390 = vpop.permute.xlu0 %389
  %s392 = sor.u32 256, 56
  %393 = vbcast.lane.b32.xlu0 %v363, %s392
  %v394 = vpop.permute.xlu0 %393
  %s396 = sor.u32 256, 64
  %397 = vbcast.lane.b32.xlu0 %v363, %s396
  %v398 = vpop.permute.xlu0 %397
  %s400 = sor.u32 256, 72
  %401 = vbcast.lane.b32.xlu0 %v363, %s400
  %v402 = vpop.permute.xlu0 %401
  %s404 = sor.u32 256, 80
  %405 = vbcast.lane.b32.xlu0 %v363, %s404
  %v406 = vpop.permute.xlu0 %405
  %s408 = sor.u32 256, 88
  %409 = vbcast.lane.b32.xlu0 %v363, %s408
  %v410 = vpop.permute.xlu0 %409
  %s412 = sor.u32 256, 96
  %413 = vbcast.lane.b32.xlu0 %v363, %s412
  %v414 = vpop.permute.xlu0 %413
  %s416 = sor.u32 256, 104
  %417 = vbcast.lane.b32.xlu0 %v363, %s416
  %v418 = vpop.permute.xlu0 %417
  %s420 = sor.u32 256, 112
  %421 = vbcast.lane.b32.xlu0 %v363, %s420
  %v422 = vpop.permute.xlu0 %421
  %s424 = sor.u32 256, 120
  %425 = vbcast.lane.b32.xlu0 %v363, %s424
  %v426 = vpop.permute.xlu0 %425
  %v427 = vlaneseq
  %v428 = vshrl.u32 %v427, 7
  %v429 = vsub.s32 6, %v428
  %v430 = vrot.slane %v20, %v429
  %432 = vbcast.lane.b32.xlu0 %v430, 256
  %v433 = vpop.permute.xlu0 %432
  %s435 = sor.u32 256, 8
  %436 = vbcast.lane.b32.xlu0 %v430, %s435
  %v437 = vpop.permute.xlu0 %436
  %s439 = sor.u32 256, 16
  %440 = vbcast.lane.b32.xlu0 %v430, %s439
  %v441 = vpop.permute.xlu0 %440
  %s443 = sor.u32 256, 24
  %444 = vbcast.lane.b32.xlu0 %v430, %s443
  %v445 = vpop.permute.xlu0 %444
  %s447 = sor.u32 256, 32
  %448 = vbcast.lane.b32.xlu0 %v430, %s447
  %v449 = vpop.permute.xlu0 %448
  %s451 = sor.u32 256, 40
  %452 = vbcast.lane.b32.xlu0 %v430, %s451
  %v453 = vpop.permute.xlu0 %452
  %s455 = sor.u32 256, 48
  %456 = vbcast.lane.b32.xlu0 %v430, %s455
  %v457 = vpop.permute.xlu0 %456
  %s459 = sor.u32 256, 56
  %460 = vbcast.lane.b32.xlu0 %v430, %s459
  %v461 = vpop.permute.xlu0 %460
  %s463 = sor.u32 256, 64
  %464 = vbcast.lane.b32.xlu0 %v430, %s463
  %v465 = vpop.permute.xlu0 %464
  %s467 = sor.u32 256, 72
  %468 = vbcast.lane.b32.xlu0 %v430, %s467
  %v469 = vpop.permute.xlu0 %468
  %s471 = sor.u32 256, 80
  %472 = vbcast.lane.b32.xlu0 %v430, %s471
  %v473 = vpop.permute.xlu0 %472
  %s475 = sor.u32 256, 88
  %476 = vbcast.lane.b32.xlu0 %v430, %s475
  %v477 = vpop.permute.xlu0 %476
  %s479 = sor.u32 256, 96
  %480 = vbcast.lane.b32.xlu0 %v430, %s479
  %v481 = vpop.permute.xlu0 %480
  %s483 = sor.u32 256, 104
  %484 = vbcast.lane.b32.xlu0 %v430, %s483
  %v485 = vpop.permute.xlu0 %484
  %s487 = sor.u32 256, 112
  %488 = vbcast.lane.b32.xlu0 %v430, %s487
  %v489 = vpop.permute.xlu0 %488
  %s491 = sor.u32 256, 120
  %492 = vbcast.lane.b32.xlu0 %v430, %s491
  %v493 = vpop.permute.xlu0 %492
  %v494 = vlaneseq
  %v495 = vshrl.u32 %v494, 7
  %v496 = vsub.s32 7, %v495
  %v497 = vrot.slane %v20, %v496
  %499 = vbcast.lane.b32.xlu0 %v497, 256
  %v500 = vpop.permute.xlu0 %499
  %s502 = sor.u32 256, 8
  %503 = vbcast.lane.b32.xlu0 %v497, %s502
  %v504 = vpop.permute.xlu0 %503
  %s506 = sor.u32 256, 16
  %507 = vbcast.lane.b32.xlu0 %v497, %s506
  %v508 = vpop.permute.xlu0 %507
  %s510 = sor.u32 256, 24
  %511 = vbcast.lane.b32.xlu0 %v497, %s510
  %v512 = vpop.permute.xlu0 %511
  %s514 = sor.u32 256, 32
  %515 = vbcast.lane.b32.xlu0 %v497, %s514
  %v516 = vpop.permute.xlu0 %515
  %s518 = sor.u32 256, 40
  %519 = vbcast.lane.b32.xlu0 %v497, %s518
  %v520 = vpop.permute.xlu0 %519
  %s522 = sor.u32 256, 48
  %523 = vbcast.lane.b32.xlu0 %v497, %s522
  %v524 = vpop.permute.xlu0 %523
  %s526 = sor.u32 256, 56
  %527 = vbcast.lane.b32.xlu0 %v497, %s526
  %v528 = vpop.permute.xlu0 %527
  %s530 = sor.u32 256, 64
  %531 = vbcast.lane.b32.xlu0 %v497, %s530
  %v532 = vpop.permute.xlu0 %531
  %s534 = sor.u32 256, 72
  %535 = vbcast.lane.b32.xlu0 %v497, %s534
  %v536 = vpop.permute.xlu0 %535
  %s538 = sor.u32 256, 80
  %539 = vbcast.lane.b32.xlu0 %v497, %s538
  %v540 = vpop.permute.xlu0 %539
  %s542 = sor.u32 256, 88
  %543 = vbcast.lane.b32.xlu0 %v497, %s542
  %v544 = vpop.permute.xlu0 %543
  %s546 = sor.u32 256, 96
  %547 = vbcast.lane.b32.xlu0 %v497, %s546
  %v548 = vpop.permute.xlu0 %547
  %s550 = sor.u32 256, 104
  %551 = vbcast.lane.b32.xlu0 %v497, %s550
  %v552 = vpop.permute.xlu0 %551
  %s554 = sor.u32 256, 112
  %555 = vbcast.lane.b32.xlu0 %v497, %s554
  %v556 = vpop.permute.xlu0 %555
  %s558 = sor.u32 256, 120
  %559 = vbcast.lane.b32.xlu0 %v497, %s558
  %v560 = vpop.permute.xlu0 %559
  %v561 = vlaneseq
  %v562 = vshrl.u32 %v561, 7
  %v563 = vsub.s32 0, %v562
  %v564 = vrot.slane %v21, %v563
  %566 = vbcast.lane.b32.xlu0 %v564, 256
  %v567 = vpop.permute.xlu0 %566
  %s569 = sor.u32 256, 8
  %570 = vbcast.lane.b32.xlu0 %v564, %s569
  %v571 = vpop.permute.xlu0 %570
  %s573 = sor.u32 256, 16
  %574 = vbcast.lane.b32.xlu0 %v564, %s573
  %v575 = vpop.permute.xlu0 %574
  %s577 = sor.u32 256, 24
  %578 = vbcast.lane.b32.xlu0 %v564, %s577
  %v579 = vpop.permute.xlu0 %578
  %s581 = sor.u32 256, 32
  %582 = vbcast.lane.b32.xlu0 %v564, %s581
  %v583 = vpop.permute.xlu0 %582
  %s585 = sor.u32 256, 40
  %586 = vbcast.lane.b32.xlu0 %v564, %s585
  %v587 = vpop.permute.xlu0 %586
  %s589 = sor.u32 256, 48
  %590 = vbcast.lane.b32.xlu0 %v564, %s589
  %v591 = vpop.permute.xlu0 %590
  %s593 = sor.u32 256, 56
  %594 = vbcast.lane.b32.xlu0 %v564, %s593
  %v595 = vpop.permute.xlu0 %594
  %s597 = sor.u32 256, 64
  %598 = vbcast.lane.b32.xlu0 %v564, %s597
  %v599 = vpop.permute.xlu0 %598
  %s601 = sor.u32 256, 72
  %602 = vbcast.lane.b32.xlu0 %v564, %s601
  %v603 = vpop.permute.xlu0 %602
  %s605 = sor.u32 256, 80
  %606 = vbcast.lane.b32.xlu0 %v564, %s605
  %v607 = vpop.permute.xlu0 %606
  %s609 = sor.u32 256, 88
  %610 = vbcast.lane.b32.xlu0 %v564, %s609
  %v611 = vpop.permute.xlu0 %610
  %s613 = sor.u32 256, 96
  %614 = vbcast.lane.b32.xlu0 %v564, %s613
  %v615 = vpop.permute.xlu0 %614
  %s617 = sor.u32 256, 104
  %618 = vbcast.lane.b32.xlu0 %v564, %s617
  %v619 = vpop.permute.xlu0 %618
  %s621 = sor.u32 256, 112
  %622 = vbcast.lane.b32.xlu0 %v564, %s621
  %v623 = vpop.permute.xlu0 %622
  %s625 = sor.u32 256, 120
  %626 = vbcast.lane.b32.xlu0 %v564, %s625
  %v627 = vpop.permute.xlu0 %626
  %v628 = vlaneseq
  %v629 = vshrl.u32 %v628, 7
  %v630 = vsub.s32 1, %v629
  %v631 = vrot.slane %v21, %v630
  %633 = vbcast.lane.b32.xlu0 %v631, 256
  %v634 = vpop.permute.xlu0 %633
  %s636 = sor.u32 256, 8
  %637 = vbcast.lane.b32.xlu0 %v631, %s636
  %v638 = vpop.permute.xlu0 %637
  %s640 = sor.u32 256, 16
  %641 = vbcast.lane.b32.xlu0 %v631, %s640
  %v642 = vpop.permute.xlu0 %641
  %s644 = sor.u32 256, 24
  %645 = vbcast.lane.b32.xlu0 %v631, %s644
  %v646 = vpop.permute.xlu0 %645
  %s648 = sor.u32 256, 32
  %649 = vbcast.lane.b32.xlu0 %v631, %s648
  %v650 = vpop.permute.xlu0 %649
  %s652 = sor.u32 256, 40
  %653 = vbcast.lane.b32.xlu0 %v631, %s652
  %v654 = vpop.permute.xlu0 %653
  %s656 = sor.u32 256, 48
  %657 = vbcast.lane.b32.xlu0 %v631, %s656
  %v658 = vpop.permute.xlu0 %657
  %s660 = sor.u32 256, 56
  %661 = vbcast.lane.b32.xlu0 %v631, %s660
  %v662 = vpop.permute.xlu0 %661
  %s664 = sor.u32 256, 64
  %665 = vbcast.lane.b32.xlu0 %v631, %s664
  %v666 = vpop.permute.xlu0 %665
  %s668 = sor.u32 256, 72
  %669 = vbcast.lane.b32.xlu0 %v631, %s668
  %v670 = vpop.permute.xlu0 %669
  %s672 = sor.u32 256, 80
  %673 = vbcast.lane.b32.xlu0 %v631, %s672
  %v674 = vpop.permute.xlu0 %673
  %s676 = sor.u32 256, 88
  %677 = vbcast.lane.b32.xlu0 %v631, %s676
  %v678 = vpop.permute.xlu0 %677
  %s680 = sor.u32 256, 96
  %681 = vbcast.lane.b32.xlu0 %v631, %s680
  %v682 = vpop.permute.xlu0 %681
  %s684 = sor.u32 256, 104
  %685 = vbcast.lane.b32.xlu0 %v631, %s684
  %v686 = vpop.permute.xlu0 %685
  %s688 = sor.u32 256, 112
  %689 = vbcast.lane.b32.xlu0 %v631, %s688
  %v690 = vpop.permute.xlu0 %689
  %s692 = sor.u32 256, 120
  %693 = vbcast.lane.b32.xlu0 %v631, %s692
  %v694 = vpop.permute.xlu0 %693
  %v695 = vlaneseq
  %v696 = vshrl.u32 %v695, 7
  %v697 = vsub.s32 2, %v696
  %v698 = vrot.slane %v21, %v697
  %700 = vbcast.lane.b32.xlu0 %v698, 256
  %v701 = vpop.permute.xlu0 %700
  %s703 = sor.u32 256, 8
  %704 = vbcast.lane.b32.xlu0 %v698, %s703
  %v705 = vpop.permute.xlu0 %704
  %s707 = sor.u32 256, 16
  %708 = vbcast.lane.b32.xlu0 %v698, %s707
  %v709 = vpop.permute.xlu0 %708
  %s711 = sor.u32 256, 24
  %712 = vbcast.lane.b32.xlu0 %v698, %s711
  %v713 = vpop.permute.xlu0 %712
  %s715 = sor.u32 256, 32
  %716 = vbcast.lane.b32.xlu0 %v698, %s715
  %v717 = vpop.permute.xlu0 %716
  %s719 = sor.u32 256, 40
  %720 = vbcast.lane.b32.xlu0 %v698, %s719
  %v721 = vpop.permute.xlu0 %720
  %s723 = sor.u32 256, 48
  %724 = vbcast.lane.b32.xlu0 %v698, %s723
  %v725 = vpop.permute.xlu0 %724
  %s727 = sor.u32 256, 56
  %728 = vbcast.lane.b32.xlu0 %v698, %s727
  %v729 = vpop.permute.xlu0 %728
  %s731 = sor.u32 256, 64
  %732 = vbcast.lane.b32.xlu0 %v698, %s731
  %v733 = vpop.permute.xlu0 %732
  %s735 = sor.u32 256, 72
  %736 = vbcast.lane.b32.xlu0 %v698, %s735
  %v737 = vpop.permute.xlu0 %736
  %s739 = sor.u32 256, 80
  %740 = vbcast.lane.b32.xlu0 %v698, %s739
  %v741 = vpop.permute.xlu0 %740
  %s743 = sor.u32 256, 88
  %744 = vbcast.lane.b32.xlu0 %v698, %s743
  %v745 = vpop.permute.xlu0 %744
  %s747 = sor.u32 256, 96
  %748 = vbcast.lane.b32.xlu0 %v698, %s747
  %v749 = vpop.permute.xlu0 %748
  %s751 = sor.u32 256, 104
  %752 = vbcast.lane.b32.xlu0 %v698, %s751
  %v753 = vpop.permute.xlu0 %752
  %s755 = sor.u32 256, 112
  %756 = vbcast.lane.b32.xlu0 %v698, %s755
  %v757 = vpop.permute.xlu0 %756
  %s759 = sor.u32 256, 120
  %760 = vbcast.lane.b32.xlu0 %v698, %s759
  %v761 = vpop.permute.xlu0 %760
  %v762 = vlaneseq
  %v763 = vshrl.u32 %v762, 7
  %v764 = vsub.s32 3, %v763
  %v765 = vrot.slane %v21, %v764
  %767 = vbcast.lane.b32.xlu0 %v765, 256
  %v768 = vpop.permute.xlu0 %767
  %s770 = sor.u32 256, 8
  %771 = vbcast.lane.b32.xlu0 %v765, %s770
  %v772 = vpop.permute.xlu0 %771
  %s774 = sor.u32 256, 16
  %775 = vbcast.lane.b32.xlu0 %v765, %s774
  %v776 = vpop.permute.xlu0 %775
  %s778 = sor.u32 256, 24
  %779 = vbcast.lane.b32.xlu0 %v765, %s778
  %v780 = vpop.permute.xlu0 %779
  %s782 = sor.u32 256, 32
  %783 = vbcast.lane.b32.xlu0 %v765, %s782
  %v784 = vpop.permute.xlu0 %783
  %s786 = sor.u32 256, 40
  %787 = vbcast.lane.b32.xlu0 %v765, %s786
  %v788 = vpop.permute.xlu0 %787
  %s790 = sor.u32 256, 48
  %791 = vbcast.lane.b32.xlu0 %v765, %s790
  %v792 = vpop.permute.xlu0 %791
  %s794 = sor.u32 256, 56
  %795 = vbcast.lane.b32.xlu0 %v765, %s794
  %v796 = vpop.permute.xlu0 %795
  %s798 = sor.u32 256, 64
  %799 = vbcast.lane.b32.xlu0 %v765, %s798
  %v800 = vpop.permute.xlu0 %799
  %s802 = sor.u32 256, 72
  %803 = vbcast.lane.b32.xlu0 %v765, %s802
  %v804 = vpop.permute.xlu0 %803
  %s806 = sor.u32 256, 80
  %807 = vbcast.lane.b32.xlu0 %v765, %s806
  %v808 = vpop.permute.xlu0 %807
  %s810 = sor.u32 256, 88
  %811 = vbcast.lane.b32.xlu0 %v765, %s810
  %v812 = vpop.permute.xlu0 %811
  %s814 = sor.u32 256, 96
  %815 = vbcast.lane.b32.xlu0 %v765, %s814
  %v816 = vpop.permute.xlu0 %815
  %s818 = sor.u32 256, 104
  %819 = vbcast.lane.b32.xlu0 %v765, %s818
  %v820 = vpop.permute.xlu0 %819
  %s822 = sor.u32 256, 112
  %823 = vbcast.lane.b32.xlu0 %v765, %s822
  %v824 = vpop.permute.xlu0 %823
  %s826 = sor.u32 256, 120
  %827 = vbcast.lane.b32.xlu0 %v765, %s826
  %v828 = vpop.permute.xlu0 %827
  %v829 = vlaneseq
  %v830 = vshrl.u32 %v829, 7
  %v831 = vsub.s32 4, %v830
  %v832 = vrot.slane %v21, %v831
  %834 = vbcast.lane.b32.xlu0 %v832, 256
  %v835 = vpop.permute.xlu0 %834
  %s837 = sor.u32 256, 8
  %838 = vbcast.lane.b32.xlu0 %v832, %s837
  %v839 = vpop.permute.xlu0 %838
  %s841 = sor.u32 256, 16
  %842 = vbcast.lane.b32.xlu0 %v832, %s841
  %v843 = vpop.permute.xlu0 %842
  %s845 = sor.u32 256, 24
  %846 = vbcast.lane.b32.xlu0 %v832, %s845
  %v847 = vpop.permute.xlu0 %846
  %s849 = sor.u32 256, 32
  %850 = vbcast.lane.b32.xlu0 %v832, %s849
  %v851 = vpop.permute.xlu0 %850
  %s853 = sor.u32 256, 40
  %854 = vbcast.lane.b32.xlu0 %v832, %s853
  %v855 = vpop.permute.xlu0 %854
  %s857 = sor.u32 256, 48
  %858 = vbcast.lane.b32.xlu0 %v832, %s857
  %v859 = vpop.permute.xlu0 %858
  %s861 = sor.u32 256, 56
  %862 = vbcast.lane.b32.xlu0 %v832, %s861
  %v863 = vpop.permute.xlu0 %862
  %s865 = sor.u32 256, 64
  %866 = vbcast.lane.b32.xlu0 %v832, %s865
  %v867 = vpop.permute.xlu0 %866
  %s869 = sor.u32 256, 72
  %870 = vbcast.lane.b32.xlu0 %v832, %s869
  %v871 = vpop.permute.xlu0 %870
  %s873 = sor.u32 256, 80
  %874 = vbcast.lane.b32.xlu0 %v832, %s873
  %v875 = vpop.permute.xlu0 %874
  %s877 = sor.u32 256, 88
  %878 = vbcast.lane.b32.xlu0 %v832, %s877
  %v879 = vpop.permute.xlu0 %878
  %s881 = sor.u32 256, 96
  %882 = vbcast.lane.b32.xlu0 %v832, %s881
  %v883 = vpop.permute.xlu0 %882
  %s885 = sor.u32 256, 104
  %886 = vbcast.lane.b32.xlu0 %v832, %s885
  %v887 = vpop.permute.xlu0 %886
  %s889 = sor.u32 256, 112
  %890 = vbcast.lane.b32.xlu0 %v832, %s889
  %v891 = vpop.permute.xlu0 %890
  %s893 = sor.u32 256, 120
  %894 = vbcast.lane.b32.xlu0 %v832, %s893
  %v895 = vpop.permute.xlu0 %894
  %v896 = vlaneseq
  %v897 = vshrl.u32 %v896, 7
  %v898 = vsub.s32 5, %v897
  %v899 = vrot.slane %v21, %v898
  %901 = vbcast.lane.b32.xlu0 %v899, 256
  %v902 = vpop.permute.xlu0 %901
  %s904 = sor.u32 256, 8
  %905 = vbcast.lane.b32.xlu0 %v899, %s904
  %v906 = vpop.permute.xlu0 %905
  %s908 = sor.u32 256, 16
  %909 = vbcast.lane.b32.xlu0 %v899, %s908
  %v910 = vpop.permute.xlu0 %909
  %s912 = sor.u32 256, 24
  %913 = vbcast.lane.b32.xlu0 %v899, %s912
  %v914 = vpop.permute.xlu0 %913
  %s916 = sor.u32 256, 32
  %917 = vbcast.lane.b32.xlu0 %v899, %s916
  %v918 = vpop.permute.xlu0 %917
  %s920 = sor.u32 256, 40
  %921 = vbcast.lane.b32.xlu0 %v899, %s920
  %v922 = vpop.permute.xlu0 %921
  %s924 = sor.u32 256, 48
  %925 = vbcast.lane.b32.xlu0 %v899, %s924
  %v926 = vpop.permute.xlu0 %925
  %s928 = sor.u32 256, 56
  %929 = vbcast.lane.b32.xlu0 %v899, %s928
  %v930 = vpop.permute.xlu0 %929
  %s932 = sor.u32 256, 64
  %933 = vbcast.lane.b32.xlu0 %v899, %s932
  %v934 = vpop.permute.xlu0 %933
  %s936 = sor.u32 256, 72
  %937 = vbcast.lane.b32.xlu0 %v899, %s936
  %v938 = vpop.permute.xlu0 %937
  %s940 = sor.u32 256, 80
  %941 = vbcast.lane.b32.xlu0 %v899, %s940
  %v942 = vpop.permute.xlu0 %941
  %s944 = sor.u32 256, 88
  %945 = vbcast.lane.b32.xlu0 %v899, %s944
  %v946 = vpop.permute.xlu0 %945
  %s948 = sor.u32 256, 96
  %949 = vbcast.lane.b32.xlu0 %v899, %s948
  %v950 = vpop.permute.xlu0 %949
  %s952 = sor.u32 256, 104
  %953 = vbcast.lane.b32.xlu0 %v899, %s952
  %v954 = vpop.permute.xlu0 %953
  %s956 = sor.u32 256, 112
  %957 = vbcast.lane.b32.xlu0 %v899, %s956
  %v958 = vpop.permute.xlu0 %957
  %s960 = sor.u32 256, 120
  %961 = vbcast.lane.b32.xlu0 %v899, %s960
  %v962 = vpop.permute.xlu0 %961
  %v963 = vlaneseq
  %v964 = vshrl.u32 %v963, 7
  %v965 = vsub.s32 6, %v964
  %v966 = vrot.slane %v21, %v965
  %968 = vbcast.lane.b32.xlu0 %v966, 256
  %v969 = vpop.permute.xlu0 %968
  %s971 = sor.u32 256, 8
  %972 = vbcast.lane.b32.xlu0 %v966, %s971
  %v973 = vpop.permute.xlu0 %972
  %s975 = sor.u32 256, 16
  %976 = vbcast.lane.b32.xlu0 %v966, %s975
  %v977 = vpop.permute.xlu0 %976
  %s979 = sor.u32 256, 24
  %980 = vbcast.lane.b32.xlu0 %v966, %s979
  %v981 = vpop.permute.xlu0 %980
  %s983 = sor.u32 256, 32
  %984 = vbcast.lane.b32.xlu0 %v966, %s983
  %v985 = vpop.permute.xlu0 %984
  %s987 = sor.u32 256, 40
  %988 = vbcast.lane.b32.xlu0 %v966, %s987
  %v989 = vpop.permute.xlu0 %988
  %s991 = sor.u32 256, 48
  %992 = vbcast.lane.b32.xlu0 %v966, %s991
  %v993 = vpop.permute.xlu0 %992
  %s995 = sor.u32 256, 56
  %996 = vbcast.lane.b32.xlu0 %v966, %s995
  %v997 = vpop.permute.xlu0 %996
  %s999 = sor.u32 256, 64
  %1000 = vbcast.lane.b32.xlu0 %v966, %s999
  %v1001 = vpop.permute.xlu0 %1000
  %s1003 = sor.u32 256, 72
  %1004 = vbcast.lane.b32.xlu0 %v966, %s1003
  %v1005 = vpop.permute.xlu0 %1004
  %s1007 = sor.u32 256, 80
  %1008 = vbcast.lane.b32.xlu0 %v966, %s1007
  %v1009 = vpop.permute.xlu0 %1008
  %s1011 = sor.u32 256, 88
  %1012 = vbcast.lane.b32.xlu0 %v966, %s1011
  %v1013 = vpop.permute.xlu0 %1012
  %s1015 = sor.u32 256, 96
  %1016 = vbcast.lane.b32.xlu0 %v966, %s1015
  %v1017 = vpop.permute.xlu0 %1016
  %s1019 = sor.u32 256, 104
  %1020 = vbcast.lane.b32.xlu0 %v966, %s1019
  %v1021 = vpop.permute.xlu0 %1020
  %s1023 = sor.u32 256, 112
  %1024 = vbcast.lane.b32.xlu0 %v966, %s1023
  %v1025 = vpop.permute.xlu0 %1024
  %s1027 = sor.u32 256, 120
  %1028 = vbcast.lane.b32.xlu0 %v966, %s1027
  %v1029 = vpop.permute.xlu0 %1028
  %v1030 = vlaneseq
  %v1031 = vshrl.u32 %v1030, 7
  %v1032 = vsub.s32 7, %v1031
  %v1033 = vrot.slane %v21, %v1032
  %1035 = vbcast.lane.b32.xlu0 %v1033, 256
  %v1036 = vpop.permute.xlu0 %1035
  %s1038 = sor.u32 256, 8
  %1039 = vbcast.lane.b32.xlu0 %v1033, %s1038
  %v1040 = vpop.permute.xlu0 %1039
  %s1042 = sor.u32 256, 16
  %1043 = vbcast.lane.b32.xlu0 %v1033, %s1042
  %v1044 = vpop.permute.xlu0 %1043
  %s1046 = sor.u32 256, 24
  %1047 = vbcast.lane.b32.xlu0 %v1033, %s1046
  %v1048 = vpop.permute.xlu0 %1047
  %s1050 = sor.u32 256, 32
  %1051 = vbcast.lane.b32.xlu0 %v1033, %s1050
  %v1052 = vpop.permute.xlu0 %1051
  %s1054 = sor.u32 256, 40
  %1055 = vbcast.lane.b32.xlu0 %v1033, %s1054
  %v1056 = vpop.permute.xlu0 %1055
  %s1058 = sor.u32 256, 48
  %1059 = vbcast.lane.b32.xlu0 %v1033, %s1058
  %v1060 = vpop.permute.xlu0 %1059
  %s1062 = sor.u32 256, 56
  %1063 = vbcast.lane.b32.xlu0 %v1033, %s1062
  %v1064 = vpop.permute.xlu0 %1063
  %s1066 = sor.u32 256, 64
  %1067 = vbcast.lane.b32.xlu0 %v1033, %s1066
  %v1068 = vpop.permute.xlu0 %1067
  %s1070 = sor.u32 256, 72
  %1071 = vbcast.lane.b32.xlu0 %v1033, %s1070
  %v1072 = vpop.permute.xlu0 %1071
  %s1074 = sor.u32 256, 80
  %1075 = vbcast.lane.b32.xlu0 %v1033, %s1074
  %v1076 = vpop.permute.xlu0 %1075
  %s1078 = sor.u32 256, 88
  %1079 = vbcast.lane.b32.xlu0 %v1033, %s1078
  %v1080 = vpop.permute.xlu0 %1079
  %s1082 = sor.u32 256, 96
  %1083 = vbcast.lane.b32.xlu0 %v1033, %s1082
  %v1084 = vpop.permute.xlu0 %1083
  %s1086 = sor.u32 256, 104
  %1087 = vbcast.lane.b32.xlu0 %v1033, %s1086
  %v1088 = vpop.permute.xlu0 %1087
  %s1090 = sor.u32 256, 112
  %1091 = vbcast.lane.b32.xlu0 %v1033, %s1090
  %v1092 = vpop.permute.xlu0 %1091
  %s1094 = sor.u32 256, 120
  %1095 = vbcast.lane.b32.xlu0 %v1033, %s1094
  %v1096 = vpop.permute.xlu0 %1095
  %v1097 = vlaneseq
  %v1098 = vshrl.u32 %v1097, 7
  %v1099 = vsub.s32 0, %v1098
  %v1100 = vrot.slane %v22, %v1099
  %1102 = vbcast.lane.b32.xlu0 %v1100, 256
  %v1103 = vpop.permute.xlu0 %1102
  %s1105 = sor.u32 256, 8
  %1106 = vbcast.lane.b32.xlu0 %v1100, %s1105
  %v1107 = vpop.permute.xlu0 %1106
  %s1109 = sor.u32 256, 16
  %1110 = vbcast.lane.b32.xlu0 %v1100, %s1109
  %v1111 = vpop.permute.xlu0 %1110
  %s1113 = sor.u32 256, 24
  %1114 = vbcast.lane.b32.xlu0 %v1100, %s1113
  %v1115 = vpop.permute.xlu0 %1114
  %s1117 = sor.u32 256, 32
  %1118 = vbcast.lane.b32.xlu0 %v1100, %s1117
  %v1119 = vpop.permute.xlu0 %1118
  %s1121 = sor.u32 256, 40
  %1122 = vbcast.lane.b32.xlu0 %v1100, %s1121
  %v1123 = vpop.permute.xlu0 %1122
  %s1125 = sor.u32 256, 48
  %1126 = vbcast.lane.b32.xlu0 %v1100, %s1125
  %v1127 = vpop.permute.xlu0 %1126
  %s1129 = sor.u32 256, 56
  %1130 = vbcast.lane.b32.xlu0 %v1100, %s1129
  %v1131 = vpop.permute.xlu0 %1130
  %s1133 = sor.u32 256, 64
  %1134 = vbcast.lane.b32.xlu0 %v1100, %s1133
  %v1135 = vpop.permute.xlu0 %1134
  %s1137 = sor.u32 256, 72
  %1138 = vbcast.lane.b32.xlu0 %v1100, %s1137
  %v1139 = vpop.permute.xlu0 %1138
  %s1141 = sor.u32 256, 80
  %1142 = vbcast.lane.b32.xlu0 %v1100, %s1141
  %v1143 = vpop.permute.xlu0 %1142
  %s1145 = sor.u32 256, 88
  %1146 = vbcast.lane.b32.xlu0 %v1100, %s1145
  %v1147 = vpop.permute.xlu0 %1146
  %s1149 = sor.u32 256, 96
  %1150 = vbcast.lane.b32.xlu0 %v1100, %s1149
  %v1151 = vpop.permute.xlu0 %1150
  %s1153 = sor.u32 256, 104
  %1154 = vbcast.lane.b32.xlu0 %v1100, %s1153
  %v1155 = vpop.permute.xlu0 %1154
  %s1157 = sor.u32 256, 112
  %1158 = vbcast.lane.b32.xlu0 %v1100, %s1157
  %v1159 = vpop.permute.xlu0 %1158
  %s1161 = sor.u32 256, 120
  %1162 = vbcast.lane.b32.xlu0 %v1100, %s1161
  %v1163 = vpop.permute.xlu0 %1162
  %v1164 = vlaneseq
  %v1165 = vshrl.u32 %v1164, 7
  %v1166 = vsub.s32 1, %v1165
  %v1167 = vrot.slane %v22, %v1166
  %1169 = vbcast.lane.b32.xlu0 %v1167, 256
  %v1170 = vpop.permute.xlu0 %1169
  %s1172 = sor.u32 256, 8
  %1173 = vbcast.lane.b32.xlu0 %v1167, %s1172
  %v1174 = vpop.permute.xlu0 %1173
  %s1176 = sor.u32 256, 16
  %1177 = vbcast.lane.b32.xlu0 %v1167, %s1176
  %v1178 = vpop.permute.xlu0 %1177
  %s1180 = sor.u32 256, 24
  %1181 = vbcast.lane.b32.xlu0 %v1167, %s1180
  %v1182 = vpop.permute.xlu0 %1181
  %s1184 = sor.u32 256, 32
  %1185 = vbcast.lane.b32.xlu0 %v1167, %s1184
  %v1186 = vpop.permute.xlu0 %1185
  %s1188 = sor.u32 256, 40
  %1189 = vbcast.lane.b32.xlu0 %v1167, %s1188
  %v1190 = vpop.permute.xlu0 %1189
  %s1192 = sor.u32 256, 48
  %1193 = vbcast.lane.b32.xlu0 %v1167, %s1192
  %v1194 = vpop.permute.xlu0 %1193
  %s1196 = sor.u32 256, 56
  %1197 = vbcast.lane.b32.xlu0 %v1167, %s1196
  %v1198 = vpop.permute.xlu0 %1197
  %s1200 = sor.u32 256, 64
  %1201 = vbcast.lane.b32.xlu0 %v1167, %s1200
  %v1202 = vpop.permute.xlu0 %1201
  %s1204 = sor.u32 256, 72
  %1205 = vbcast.lane.b32.xlu0 %v1167, %s1204
  %v1206 = vpop.permute.xlu0 %1205
  %s1208 = sor.u32 256, 80
  %1209 = vbcast.lane.b32.xlu0 %v1167, %s1208
  %v1210 = vpop.permute.xlu0 %1209
  %s1212 = sor.u32 256, 88
  %1213 = vbcast.lane.b32.xlu0 %v1167, %s1212
  %v1214 = vpop.permute.xlu0 %1213
  %s1216 = sor.u32 256, 96
  %1217 = vbcast.lane.b32.xlu0 %v1167, %s1216
  %v1218 = vpop.permute.xlu0 %1217
  %s1220 = sor.u32 256, 104
  %1221 = vbcast.lane.b32.xlu0 %v1167, %s1220
  %v1222 = vpop.permute.xlu0 %1221
  %s1224 = sor.u32 256, 112
  %1225 = vbcast.lane.b32.xlu0 %v1167, %s1224
  %v1226 = vpop.permute.xlu0 %1225
  %s1228 = sor.u32 256, 120
  %1229 = vbcast.lane.b32.xlu0 %v1167, %s1228
  %v1230 = vpop.permute.xlu0 %1229
  %v1231 = vlaneseq
  %v1232 = vshrl.u32 %v1231, 7
  %v1233 = vsub.s32 2, %v1232
  %v1234 = vrot.slane %v22, %v1233
  %1236 = vbcast.lane.b32.xlu0 %v1234, 256
  %v1237 = vpop.permute.xlu0 %1236
  %s1239 = sor.u32 256, 8
  %1240 = vbcast.lane.b32.xlu0 %v1234, %s1239
  %v1241 = vpop.permute.xlu0 %1240
  %s1243 = sor.u32 256, 16
  %1244 = vbcast.lane.b32.xlu0 %v1234, %s1243
  %v1245 = vpop.permute.xlu0 %1244
  %s1247 = sor.u32 256, 24
  %1248 = vbcast.lane.b32.xlu0 %v1234, %s1247
  %v1249 = vpop.permute.xlu0 %1248
  %s1251 = sor.u32 256, 32
  %1252 = vbcast.lane.b32.xlu0 %v1234, %s1251
  %v1253 = vpop.permute.xlu0 %1252
  %s1255 = sor.u32 256, 40
  %1256 = vbcast.lane.b32.xlu0 %v1234, %s1255
  %v1257 = vpop.permute.xlu0 %1256
  %s1259 = sor.u32 256, 48
  %1260 = vbcast.lane.b32.xlu0 %v1234, %s1259
  %v1261 = vpop.permute.xlu0 %1260
  %s1263 = sor.u32 256, 56
  %1264 = vbcast.lane.b32.xlu0 %v1234, %s1263
  %v1265 = vpop.permute.xlu0 %1264
  %s1267 = sor.u32 256, 64
  %1268 = vbcast.lane.b32.xlu0 %v1234, %s1267
  %v1269 = vpop.permute.xlu0 %1268
  %s1271 = sor.u32 256, 72
  %1272 = vbcast.lane.b32.xlu0 %v1234, %s1271
  %v1273 = vpop.permute.xlu0 %1272
  %s1275 = sor.u32 256, 80
  %1276 = vbcast.lane.b32.xlu0 %v1234, %s1275
  %v1277 = vpop.permute.xlu0 %1276
  %s1279 = sor.u32 256, 88
  %1280 = vbcast.lane.b32.xlu0 %v1234, %s1279
  %v1281 = vpop.permute.xlu0 %1280
  %s1283 = sor.u32 256, 96
  %1284 = vbcast.lane.b32.xlu0 %v1234, %s1283
  %v1285 = vpop.permute.xlu0 %1284
  %s1287 = sor.u32 256, 104
  %1288 = vbcast.lane.b32.xlu0 %v1234, %s1287
  %v1289 = vpop.permute.xlu0 %1288
  %s1291 = sor.u32 256, 112
  %1292 = vbcast.lane.b32.xlu0 %v1234, %s1291
  %v1293 = vpop.permute.xlu0 %1292
  %s1295 = sor.u32 256, 120
  %1296 = vbcast.lane.b32.xlu0 %v1234, %s1295
  %v1297 = vpop.permute.xlu0 %1296
  %v1298 = vlaneseq
  %v1299 = vshrl.u32 %v1298, 7
  %v1300 = vsub.s32 3, %v1299
  %v1301 = vrot.slane %v22, %v1300
  %1303 = vbcast.lane.b32.xlu0 %v1301, 256
  %v1304 = vpop.permute.xlu0 %1303
  %s1306 = sor.u32 256, 8
  %1307 = vbcast.lane.b32.xlu0 %v1301, %s1306
  %v1308 = vpop.permute.xlu0 %1307
  %s1310 = sor.u32 256, 16
  %1311 = vbcast.lane.b32.xlu0 %v1301, %s1310
  %v1312 = vpop.permute.xlu0 %1311
  %s1314 = sor.u32 256, 24
  %1315 = vbcast.lane.b32.xlu0 %v1301, %s1314
  %v1316 = vpop.permute.xlu0 %1315
  %s1318 = sor.u32 256, 32
  %1319 = vbcast.lane.b32.xlu0 %v1301, %s1318
  %v1320 = vpop.permute.xlu0 %1319
  %s1322 = sor.u32 256, 40
  %1323 = vbcast.lane.b32.xlu0 %v1301, %s1322
  %v1324 = vpop.permute.xlu0 %1323
  %s1326 = sor.u32 256, 48
  %1327 = vbcast.lane.b32.xlu0 %v1301, %s1326
  %v1328 = vpop.permute.xlu0 %1327
  %s1330 = sor.u32 256, 56
  %1331 = vbcast.lane.b32.xlu0 %v1301, %s1330
  %v1332 = vpop.permute.xlu0 %1331
  %s1334 = sor.u32 256, 64
  %1335 = vbcast.lane.b32.xlu0 %v1301, %s1334
  %v1336 = vpop.permute.xlu0 %1335
  %s1338 = sor.u32 256, 72
  %1339 = vbcast.lane.b32.xlu0 %v1301, %s1338
  %v1340 = vpop.permute.xlu0 %1339
  %s1342 = sor.u32 256, 80
  %1343 = vbcast.lane.b32.xlu0 %v1301, %s1342
  %v1344 = vpop.permute.xlu0 %1343
  %s1346 = sor.u32 256, 88
  %1347 = vbcast.lane.b32.xlu0 %v1301, %s1346
  %v1348 = vpop.permute.xlu0 %1347
  %s1350 = sor.u32 256, 96
  %1351 = vbcast.lane.b32.xlu0 %v1301, %s1350
  %v1352 = vpop.permute.xlu0 %1351
  %s1354 = sor.u32 256, 104
  %1355 = vbcast.lane.b32.xlu0 %v1301, %s1354
  %v1356 = vpop.permute.xlu0 %1355
  %s1358 = sor.u32 256, 112
  %1359 = vbcast.lane.b32.xlu0 %v1301, %s1358
  %v1360 = vpop.permute.xlu0 %1359
  %s1362 = sor.u32 256, 120
  %1363 = vbcast.lane.b32.xlu0 %v1301, %s1362
  %v1364 = vpop.permute.xlu0 %1363
  %v1365 = vlaneseq
  %v1366 = vshrl.u32 %v1365, 7
  %v1367 = vsub.s32 4, %v1366
  %v1368 = vrot.slane %v22, %v1367
  %1370 = vbcast.lane.b32.xlu0 %v1368, 256
  %v1371 = vpop.permute.xlu0 %1370
  %s1373 = sor.u32 256, 8
  %1374 = vbcast.lane.b32.xlu0 %v1368, %s1373
  %v1375 = vpop.permute.xlu0 %1374
  %s1377 = sor.u32 256, 16
  %1378 = vbcast.lane.b32.xlu0 %v1368, %s1377
  %v1379 = vpop.permute.xlu0 %1378
  %s1381 = sor.u32 256, 24
  %1382 = vbcast.lane.b32.xlu0 %v1368, %s1381
  %v1383 = vpop.permute.xlu0 %1382
  %s1385 = sor.u32 256, 32
  %1386 = vbcast.lane.b32.xlu0 %v1368, %s1385
  %v1387 = vpop.permute.xlu0 %1386
  %s1389 = sor.u32 256, 40
  %1390 = vbcast.lane.b32.xlu0 %v1368, %s1389
  %v1391 = vpop.permute.xlu0 %1390
  %s1393 = sor.u32 256, 48
  %1394 = vbcast.lane.b32.xlu0 %v1368, %s1393
  %v1395 = vpop.permute.xlu0 %1394
  %s1397 = sor.u32 256, 56
  %1398 = vbcast.lane.b32.xlu0 %v1368, %s1397
  %v1399 = vpop.permute.xlu0 %1398
  %s1401 = sor.u32 256, 64
  %1402 = vbcast.lane.b32.xlu0 %v1368, %s1401
  %v1403 = vpop.permute.xlu0 %1402
  %s1405 = sor.u32 256, 72
  %1406 = vbcast.lane.b32.xlu0 %v1368, %s1405
  %v1407 = vpop.permute.xlu0 %1406
  %s1409 = sor.u32 256, 80
  %1410 = vbcast.lane.b32.xlu0 %v1368, %s1409
  %v1411 = vpop.permute.xlu0 %1410
  %s1413 = sor.u32 256, 88
  %1414 = vbcast.lane.b32.xlu0 %v1368, %s1413
  %v1415 = vpop.permute.xlu0 %1414
  %s1417 = sor.u32 256, 96
  %1418 = vbcast.lane.b32.xlu0 %v1368, %s1417
  %v1419 = vpop.permute.xlu0 %1418
  %s1421 = sor.u32 256, 104
  %1422 = vbcast.lane.b32.xlu0 %v1368, %s1421
  %v1423 = vpop.permute.xlu0 %1422
  %s1425 = sor.u32 256, 112
  %1426 = vbcast.lane.b32.xlu0 %v1368, %s1425
  %v1427 = vpop.permute.xlu0 %1426
  %s1429 = sor.u32 256, 120
  %1430 = vbcast.lane.b32.xlu0 %v1368, %s1429
  %v1431 = vpop.permute.xlu0 %1430
  %vm1432 = vcmp.eq.s32.totalorder %v24, %v31
  %vm1433 = vcmp.eq.s32.totalorder %v24, %v35
  %vm1434 = vcmp.eq.s32.totalorder %v24, %v39
  %vm1435 = vcmp.eq.s32.totalorder %v24, %v43
  %vm1436 = vcmp.eq.s32.totalorder %v24, %v47
  %vm1437 = vcmp.eq.s32.totalorder %v24, %v51
  %vm1438 = vcmp.eq.s32.totalorder %v24, %v55
  %vm1439 = vcmp.eq.s32.totalorder %v24, %v59
  %vm1440 = vcmp.eq.s32.totalorder %v24, %v63
  %vm1441 = vcmp.eq.s32.totalorder %v24, %v67
  %vm1442 = vcmp.eq.s32.totalorder %v24, %v71
  %vm1443 = vcmp.eq.s32.totalorder %v24, %v75
  %vm1444 = vcmp.eq.s32.totalorder %v24, %v79
  %vm1445 = vcmp.eq.s32.totalorder %v24, %v83
  %vm1446 = vcmp.eq.s32.totalorder %v24, %v87
  %vm1447 = vcmp.eq.s32.totalorder %v24, %v91
  %vm1448 = vcmp.eq.s32.totalorder %v24, %v98
  %vm1449 = vcmp.eq.s32.totalorder %v24, %v102
  %vm1450 = vcmp.eq.s32.totalorder %v24, %v106
  %vm1451 = vcmp.eq.s32.totalorder %v24, %v110
  %vm1452 = vcmp.eq.s32.totalorder %v24, %v114
  %vm1453 = vcmp.eq.s32.totalorder %v24, %v118
  %vm1454 = vcmp.eq.s32.totalorder %v24, %v122
  %vm1455 = vcmp.eq.s32.totalorder %v24, %v126
  %vm1456 = vcmp.eq.s32.totalorder %v24, %v130
  %vm1457 = vcmp.eq.s32.totalorder %v24, %v134
  %vm1458 = vcmp.eq.s32.totalorder %v24, %v138
  %vm1459 = vcmp.eq.s32.totalorder %v24, %v142
  %vm1460 = vcmp.eq.s32.totalorder %v24, %v146
  %vm1461 = vcmp.eq.s32.totalorder %v24, %v150
  %vm1462 = vcmp.eq.s32.totalorder %v24, %v154
  %vm1463 = vcmp.eq.s32.totalorder %v24, %v158
  %vm1464 = vcmp.eq.s32.totalorder %v24, %v165
  %vm1465 = vcmp.eq.s32.totalorder %v24, %v169
  %vm1466 = vcmp.eq.s32.totalorder %v24, %v173
  %vm1467 = vcmp.eq.s32.totalorder %v24, %v177
  %vm1468 = vcmp.eq.s32.totalorder %v24, %v181
  %vm1469 = vcmp.eq.s32.totalorder %v24, %v185
  %vm1470 = vcmp.eq.s32.totalorder %v24, %v189
  %vm1471 = vcmp.eq.s32.totalorder %v24, %v193
  %vm1472 = vcmp.eq.s32.totalorder %v24, %v197
  %vm1473 = vcmp.eq.s32.totalorder %v24, %v201
  %vm1474 = vcmp.eq.s32.totalorder %v24, %v205
  %vm1475 = vcmp.eq.s32.totalorder %v24, %v209
  %vm1476 = vcmp.eq.s32.totalorder %v24, %v213
  %vm1477 = vcmp.eq.s32.totalorder %v24, %v217
  %vm1478 = vcmp.eq.s32.totalorder %v24, %v221
  %vm1479 = vcmp.eq.s32.totalorder %v24, %v225
  %vm1480 = vcmp.eq.s32.totalorder %v24, %v232
  %vm1481 = vcmp.eq.s32.totalorder %v24, %v236
  %vm1482 = vcmp.eq.s32.totalorder %v24, %v240
  %vm1483 = vcmp.eq.s32.totalorder %v24, %v244
  %vm1484 = vcmp.eq.s32.totalorder %v24, %v248
  %vm1485 = vcmp.eq.s32.totalorder %v24, %v252
  %vm1486 = vcmp.eq.s32.totalorder %v24, %v256
  %vm1487 = vcmp.eq.s32.totalorder %v24, %v260
  %vm1488 = vcmp.eq.s32.totalorder %v24, %v264
  %vm1489 = vcmp.eq.s32.totalorder %v24, %v268
  %vm1490 = vcmp.eq.s32.totalorder %v24, %v272
  %vm1491 = vcmp.eq.s32.totalorder %v24, %v276
  %vm1492 = vcmp.eq.s32.totalorder %v24, %v280
  %vm1493 = vcmp.eq.s32.totalorder %v24, %v284
  %vm1494 = vcmp.eq.s32.totalorder %v24, %v288
  %vm1495 = vcmp.eq.s32.totalorder %v24, %v292
  %vm1496 = vcmp.eq.s32.totalorder %v24, %v299
  %vm1497 = vcmp.eq.s32.totalorder %v24, %v303
  %vm1498 = vcmp.eq.s32.totalorder %v24, %v307
  %vm1499 = vcmp.eq.s32.totalorder %v24, %v311
  %vm1500 = vcmp.eq.s32.totalorder %v24, %v315
  %vm1501 = vcmp.eq.s32.totalorder %v24, %v319
  %vm1502 = vcmp.eq.s32.totalorder %v24, %v323
  %vm1503 = vcmp.eq.s32.totalorder %v24, %v327
  %vm1504 = vcmp.eq.s32.totalorder %v24, %v331
  %vm1505 = vcmp.eq.s32.totalorder %v24, %v335
  %vm1506 = vcmp.eq.s32.totalorder %v24, %v339
  %vm1507 = vcmp.eq.s32.totalorder %v24, %v343
  %vm1508 = vcmp.eq.s32.totalorder %v24, %v347
  %vm1509 = vcmp.eq.s32.totalorder %v24, %v351
  %vm1510 = vcmp.eq.s32.totalorder %v24, %v355
  %vm1511 = vcmp.eq.s32.totalorder %v24, %v359
  %vm1512 = vcmp.eq.s32.totalorder %v24, %v366
  %vm1513 = vcmp.eq.s32.totalorder %v24, %v370
  %vm1514 = vcmp.eq.s32.totalorder %v24, %v374
  %vm1515 = vcmp.eq.s32.totalorder %v24, %v378
  %vm1516 = vcmp.eq.s32.totalorder %v24, %v382
  %vm1517 = vcmp.eq.s32.totalorder %v24, %v386
  %vm1518 = vcmp.eq.s32.totalorder %v24, %v390
  %vm1519 = vcmp.eq.s32.totalorder %v24, %v394
  %vm1520 = vcmp.eq.s32.totalorder %v24, %v398
  %vm1521 = vcmp.eq.s32.totalorder %v24, %v402
  %vm1522 = vcmp.eq.s32.totalorder %v24, %v406
  %vm1523 = vcmp.eq.s32.totalorder %v24, %v410
  %vm1524 = vcmp.eq.s32.totalorder %v24, %v414
  %vm1525 = vcmp.eq.s32.totalorder %v24, %v418
  %vm1526 = vcmp.eq.s32.totalorder %v24, %v422
  %vm1527 = vcmp.eq.s32.totalorder %v24, %v426
  %vm1528 = vcmp.eq.s32.totalorder %v24, %v433
  %vm1529 = vcmp.eq.s32.totalorder %v24, %v437
  %vm1530 = vcmp.eq.s32.totalorder %v24, %v441
  %vm1531 = vcmp.eq.s32.totalorder %v24, %v445
  %vm1532 = vcmp.eq.s32.totalorder %v24, %v449
  %vm1533 = vcmp.eq.s32.totalorder %v24, %v453
  %vm1534 = vcmp.eq.s32.totalorder %v24, %v457
  %vm1535 = vcmp.eq.s32.totalorder %v24, %v461
  %vm1536 = vcmp.eq.s32.totalorder %v24, %v465
  %vm1537 = vcmp.eq.s32.totalorder %v24, %v469
  %vm1538 = vcmp.eq.s32.totalorder %v24, %v473
  %vm1539 = vcmp.eq.s32.totalorder %v24, %v477
  %vm1540 = vcmp.eq.s32.totalorder %v24, %v481
  %vm1541 = vcmp.eq.s32.totalorder %v24, %v485
  %vm1542 = vcmp.eq.s32.totalorder %v24, %v489
  %vm1543 = vcmp.eq.s32.totalorder %v24, %v493
  %vm1544 = vcmp.eq.s32.totalorder %v24, %v500
  %vm1545 = vcmp.eq.s32.totalorder %v24, %v504
  %vm1546 = vcmp.eq.s32.totalorder %v24, %v508
  %vm1547 = vcmp.eq.s32.totalorder %v24, %v512
  %vm1548 = vcmp.eq.s32.totalorder %v24, %v516
  %vm1549 = vcmp.eq.s32.totalorder %v24, %v520
  %vm1550 = vcmp.eq.s32.totalorder %v24, %v524
  %vm1551 = vcmp.eq.s32.totalorder %v24, %v528
  %vm1552 = vcmp.eq.s32.totalorder %v24, %v532
  %vm1553 = vcmp.eq.s32.totalorder %v24, %v536
  %vm1554 = vcmp.eq.s32.totalorder %v24, %v540
  %vm1555 = vcmp.eq.s32.totalorder %v24, %v544
  %vm1556 = vcmp.eq.s32.totalorder %v24, %v548
  %vm1557 = vcmp.eq.s32.totalorder %v24, %v552
  %vm1558 = vcmp.eq.s32.totalorder %v24, %v556
  %vm1559 = vcmp.eq.s32.totalorder %v24, %v560
  %vm1560 = vcmp.eq.s32.totalorder %v24, %v567
  %vm1561 = vcmp.eq.s32.totalorder %v24, %v571
  %vm1562 = vcmp.eq.s32.totalorder %v24, %v575
  %vm1563 = vcmp.eq.s32.totalorder %v24, %v579
  %vm1564 = vcmp.eq.s32.totalorder %v24, %v583
  %vm1565 = vcmp.eq.s32.totalorder %v24, %v587
  %vm1566 = vcmp.eq.s32.totalorder %v24, %v591
  %vm1567 = vcmp.eq.s32.totalorder %v24, %v595
  %vm1568 = vcmp.eq.s32.totalorder %v24, %v599
  %vm1569 = vcmp.eq.s32.totalorder %v24, %v603
  %vm1570 = vcmp.eq.s32.totalorder %v24, %v607
  %vm1571 = vcmp.eq.s32.totalorder %v24, %v611
  %vm1572 = vcmp.eq.s32.totalorder %v24, %v615
  %vm1573 = vcmp.eq.s32.totalorder %v24, %v619
  %vm1574 = vcmp.eq.s32.totalorder %v24, %v623
  %vm1575 = vcmp.eq.s32.totalorder %v24, %v627
  %vm1576 = vcmp.eq.s32.totalorder %v24, %v634
  %vm1577 = vcmp.eq.s32.totalorder %v24, %v638
  %vm1578 = vcmp.eq.s32.totalorder %v24, %v642
  %vm1579 = vcmp.eq.s32.totalorder %v24, %v646
  %vm1580 = vcmp.eq.s32.totalorder %v24, %v650
  %vm1581 = vcmp.eq.s32.totalorder %v24, %v654
  %vm1582 = vcmp.eq.s32.totalorder %v24, %v658
  %vm1583 = vcmp.eq.s32.totalorder %v24, %v662
  %vm1584 = vcmp.eq.s32.totalorder %v24, %v666
  %vm1585 = vcmp.eq.s32.totalorder %v24, %v670
  %vm1586 = vcmp.eq.s32.totalorder %v24, %v674
  %vm1587 = vcmp.eq.s32.totalorder %v24, %v678
  %vm1588 = vcmp.eq.s32.totalorder %v24, %v682
  %vm1589 = vcmp.eq.s32.totalorder %v24, %v686
  %vm1590 = vcmp.eq.s32.totalorder %v24, %v690
  %vm1591 = vcmp.eq.s32.totalorder %v24, %v694
  %vm1592 = vcmp.eq.s32.totalorder %v24, %v701
  %vm1593 = vcmp.eq.s32.totalorder %v24, %v705
  %vm1594 = vcmp.eq.s32.totalorder %v24, %v709
  %vm1595 = vcmp.eq.s32.totalorder %v24, %v713
  %vm1596 = vcmp.eq.s32.totalorder %v24, %v717
  %vm1597 = vcmp.eq.s32.totalorder %v24, %v721
  %vm1598 = vcmp.eq.s32.totalorder %v24, %v725
  %vm1599 = vcmp.eq.s32.totalorder %v24, %v729
  %vm1600 = vcmp.eq.s32.totalorder %v24, %v733
  %vm1601 = vcmp.eq.s32.totalorder %v24, %v737
  %vm1602 = vcmp.eq.s32.totalorder %v24, %v741
  %vm1603 = vcmp.eq.s32.totalorder %v24, %v745
  %vm1604 = vcmp.eq.s32.totalorder %v24, %v749
  %vm1605 = vcmp.eq.s32.totalorder %v24, %v753
  %vm1606 = vcmp.eq.s32.totalorder %v24, %v757
  %vm1607 = vcmp.eq.s32.totalorder %v24, %v761
  %vm1608 = vcmp.eq.s32.totalorder %v24, %v768
  %vm1609 = vcmp.eq.s32.totalorder %v24, %v772
  %vm1610 = vcmp.eq.s32.totalorder %v24, %v776
  %vm1611 = vcmp.eq.s32.totalorder %v24, %v780
  %vm1612 = vcmp.eq.s32.totalorder %v24, %v784
  %vm1613 = vcmp.eq.s32.totalorder %v24, %v788
  %vm1614 = vcmp.eq.s32.totalorder %v24, %v792
  %vm1615 = vcmp.eq.s32.totalorder %v24, %v796
  %vm1616 = vcmp.eq.s32.totalorder %v24, %v800
  %vm1617 = vcmp.eq.s32.totalorder %v24, %v804
  %vm1618 = vcmp.eq.s32.totalorder %v24, %v808
  %vm1619 = vcmp.eq.s32.totalorder %v24, %v812
  %vm1620 = vcmp.eq.s32.totalorder %v24, %v816
  %vm1621 = vcmp.eq.s32.totalorder %v24, %v820
  %vm1622 = vcmp.eq.s32.totalorder %v24, %v824
  %vm1623 = vcmp.eq.s32.totalorder %v24, %v828
  %vm1624 = vcmp.eq.s32.totalorder %v24, %v835
  %vm1625 = vcmp.eq.s32.totalorder %v24, %v839
  %vm1626 = vcmp.eq.s32.totalorder %v24, %v843
  %vm1627 = vcmp.eq.s32.totalorder %v24, %v847
  %vm1628 = vcmp.eq.s32.totalorder %v24, %v851
  %vm1629 = vcmp.eq.s32.totalorder %v24, %v855
  %vm1630 = vcmp.eq.s32.totalorder %v24, %v859
  %vm1631 = vcmp.eq.s32.totalorder %v24, %v863
  %vm1632 = vcmp.eq.s32.totalorder %v24, %v867
  %vm1633 = vcmp.eq.s32.totalorder %v24, %v871
  %vm1634 = vcmp.eq.s32.totalorder %v24, %v875
  %vm1635 = vcmp.eq.s32.totalorder %v24, %v879
  %vm1636 = vcmp.eq.s32.totalorder %v24, %v883
  %vm1637 = vcmp.eq.s32.totalorder %v24, %v887
  %vm1638 = vcmp.eq.s32.totalorder %v24, %v891
  %vm1639 = vcmp.eq.s32.totalorder %v24, %v895
  %vm1640 = vcmp.eq.s32.totalorder %v24, %v902
  %vm1641 = vcmp.eq.s32.totalorder %v24, %v906
  %vm1642 = vcmp.eq.s32.totalorder %v24, %v910
  %vm1643 = vcmp.eq.s32.totalorder %v24, %v914
  %vm1644 = vcmp.eq.s32.totalorder %v24, %v918
  %vm1645 = vcmp.eq.s32.totalorder %v24, %v922
  %vm1646 = vcmp.eq.s32.totalorder %v24, %v926
  %vm1647 = vcmp.eq.s32.totalorder %v24, %v930
  %vm1648 = vcmp.eq.s32.totalorder %v24, %v934
  %vm1649 = vcmp.eq.s32.totalorder %v24, %v938
  %vm1650 = vcmp.eq.s32.totalorder %v24, %v942
  %vm1651 = vcmp.eq.s32.totalorder %v24, %v946
  %vm1652 = vcmp.eq.s32.totalorder %v24, %v950
  %vm1653 = vcmp.eq.s32.totalorder %v24, %v954
  %vm1654 = vcmp.eq.s32.totalorder %v24, %v958
  %vm1655 = vcmp.eq.s32.totalorder %v24, %v962
  %vm1656 = vcmp.eq.s32.totalorder %v24, %v969
  %vm1657 = vcmp.eq.s32.totalorder %v24, %v973
  %vm1658 = vcmp.eq.s32.totalorder %v24, %v977
  %vm1659 = vcmp.eq.s32.totalorder %v24, %v981
  %vm1660 = vcmp.eq.s32.totalorder %v24, %v985
  %vm1661 = vcmp.eq.s32.totalorder %v24, %v989
  %vm1662 = vcmp.eq.s32.totalorder %v24, %v993
  %vm1663 = vcmp.eq.s32.totalorder %v24, %v997
  %vm1664 = vcmp.eq.s32.totalorder %v24, %v1001
  %vm1665 = vcmp.eq.s32.totalorder %v24, %v1005
  %vm1666 = vcmp.eq.s32.totalorder %v24, %v1009
  %vm1667 = vcmp.eq.s32.totalorder %v24, %v1013
  %vm1668 = vcmp.eq.s32.totalorder %v24, %v1017
  %vm1669 = vcmp.eq.s32.totalorder %v24, %v1021
  %vm1670 = vcmp.eq.s32.totalorder %v24, %v1025
  %vm1671 = vcmp.eq.s32.totalorder %v24, %v1029
  %vm1672 = vcmp.eq.s32.totalorder %v24, %v1036
  %vm1673 = vcmp.eq.s32.totalorder %v24, %v1040
  %vm1674 = vcmp.eq.s32.totalorder %v24, %v1044
  %vm1675 = vcmp.eq.s32.totalorder %v24, %v1048
  %vm1676 = vcmp.eq.s32.totalorder %v24, %v1052
  %vm1677 = vcmp.eq.s32.totalorder %v24, %v1056
  %vm1678 = vcmp.eq.s32.totalorder %v24, %v1060
  %vm1679 = vcmp.eq.s32.totalorder %v24, %v1064
  %vm1680 = vcmp.eq.s32.totalorder %v24, %v1068
  %vm1681 = vcmp.eq.s32.totalorder %v24, %v1072
  %vm1682 = vcmp.eq.s32.totalorder %v24, %v1076
  %vm1683 = vcmp.eq.s32.totalorder %v24, %v1080
  %vm1684 = vcmp.eq.s32.totalorder %v24, %v1084
  %vm1685 = vcmp.eq.s32.totalorder %v24, %v1088
  %vm1686 = vcmp.eq.s32.totalorder %v24, %v1092
  %vm1687 = vcmp.eq.s32.totalorder %v24, %v1096
  %vm1688 = vcmp.eq.s32.totalorder %v24, %v1103
  %vm1689 = vcmp.eq.s32.totalorder %v24, %v1107
  %vm1690 = vcmp.eq.s32.totalorder %v24, %v1111
  %vm1691 = vcmp.eq.s32.totalorder %v24, %v1115
  %vm1692 = vcmp.eq.s32.totalorder %v24, %v1119
  %vm1693 = vcmp.eq.s32.totalorder %v24, %v1123
  %vm1694 = vcmp.eq.s32.totalorder %v24, %v1127
  %vm1695 = vcmp.eq.s32.totalorder %v24, %v1131
  %vm1696 = vcmp.eq.s32.totalorder %v24, %v1135
  %vm1697 = vcmp.eq.s32.totalorder %v24, %v1139
  %vm1698 = vcmp.eq.s32.totalorder %v24, %v1143
  %vm1699 = vcmp.eq.s32.totalorder %v24, %v1147
  %vm1700 = vcmp.eq.s32.totalorder %v24, %v1151
  %vm1701 = vcmp.eq.s32.totalorder %v24, %v1155
  %vm1702 = vcmp.eq.s32.totalorder %v24, %v1159
  %vm1703 = vcmp.eq.s32.totalorder %v24, %v1163
  %vm1704 = vcmp.eq.s32.totalorder %v24, %v1170
  %vm1705 = vcmp.eq.s32.totalorder %v24, %v1174
  %vm1706 = vcmp.eq.s32.totalorder %v24, %v1178
  %vm1707 = vcmp.eq.s32.totalorder %v24, %v1182
  %vm1708 = vcmp.eq.s32.totalorder %v24, %v1186
  %vm1709 = vcmp.eq.s32.totalorder %v24, %v1190
  %vm1710 = vcmp.eq.s32.totalorder %v24, %v1194
  %vm1711 = vcmp.eq.s32.totalorder %v24, %v1198
  %vm1712 = vcmp.eq.s32.totalorder %v24, %v1202
  %vm1713 = vcmp.eq.s32.totalorder %v24, %v1206
  %vm1714 = vcmp.eq.s32.totalorder %v24, %v1210
  %vm1715 = vcmp.eq.s32.totalorder %v24, %v1214
  %vm1716 = vcmp.eq.s32.totalorder %v24, %v1218
  %vm1717 = vcmp.eq.s32.totalorder %v24, %v1222
  %vm1718 = vcmp.eq.s32.totalorder %v24, %v1226
  %vm1719 = vcmp.eq.s32.totalorder %v24, %v1230
  %vm1720 = vcmp.eq.s32.totalorder %v24, %v1237
  %vm1721 = vcmp.eq.s32.totalorder %v24, %v1241
  %vm1722 = vcmp.eq.s32.totalorder %v24, %v1245
  %vm1723 = vcmp.eq.s32.totalorder %v24, %v1249
  %vm1724 = vcmp.eq.s32.totalorder %v24, %v1253
  %vm1725 = vcmp.eq.s32.totalorder %v24, %v1257
  %vm1726 = vcmp.eq.s32.totalorder %v24, %v1261
  %vm1727 = vcmp.eq.s32.totalorder %v24, %v1265
  %vm1728 = vcmp.eq.s32.totalorder %v24, %v1269
  %vm1729 = vcmp.eq.s32.totalorder %v24, %v1273
  %vm1730 = vcmp.eq.s32.totalorder %v24, %v1277
  %vm1731 = vcmp.eq.s32.totalorder %v24, %v1281
  %vm1732 = vcmp.eq.s32.totalorder %v24, %v1285
  %vm1733 = vcmp.eq.s32.totalorder %v24, %v1289
  %vm1734 = vcmp.eq.s32.totalorder %v24, %v1293
  %vm1735 = vcmp.eq.s32.totalorder %v24, %v1297
  %vm1736 = vcmp.eq.s32.totalorder %v24, %v1304
  %vm1737 = vcmp.eq.s32.totalorder %v24, %v1308
  %vm1738 = vcmp.eq.s32.totalorder %v24, %v1312
  %vm1739 = vcmp.eq.s32.totalorder %v24, %v1316
  %vm1740 = vcmp.eq.s32.totalorder %v24, %v1320
  %vm1741 = vcmp.eq.s32.totalorder %v24, %v1324
  %vm1742 = vcmp.eq.s32.totalorder %v24, %v1328
  %vm1743 = vcmp.eq.s32.totalorder %v24, %v1332
  %vm1744 = vcmp.eq.s32.totalorder %v24, %v1336
  %vm1745 = vcmp.eq.s32.totalorder %v24, %v1340
  %vm1746 = vcmp.eq.s32.totalorder %v24, %v1344
  %vm1747 = vcmp.eq.s32.totalorder %v24, %v1348
  %vm1748 = vcmp.eq.s32.totalorder %v24, %v1352
  %vm1749 = vcmp.eq.s32.totalorder %v24, %v1356
  %vm1750 = vcmp.eq.s32.totalorder %v24, %v1360
  %vm1751 = vcmp.eq.s32.totalorder %v24, %v1364
  %vm1752 = vcmp.eq.s32.totalorder %v24, %v1371
  %vm1753 = vcmp.eq.s32.totalorder %v24, %v1375
  %vm1754 = vcmp.eq.s32.totalorder %v24, %v1379
  %vm1755 = vcmp.eq.s32.totalorder %v24, %v1383
  %vm1756 = vcmp.eq.s32.totalorder %v24, %v1387
  %vm1757 = vcmp.eq.s32.totalorder %v24, %v1391
  %vm1758 = vcmp.eq.s32.totalorder %v24, %v1395
  %vm1759 = vcmp.eq.s32.totalorder %v24, %v1399
  %vm1760 = vcmp.eq.s32.totalorder %v24, %v1403
  %vm1761 = vcmp.eq.s32.totalorder %v24, %v1407
  %vm1762 = vcmp.eq.s32.totalorder %v24, %v1411
  %vm1763 = vcmp.eq.s32.totalorder %v24, %v1415
  %vm1764 = vcmp.eq.s32.totalorder %v24, %v1419
  %vm1765 = vcmp.eq.s32.totalorder %v24, %v1423
  %vm1766 = vcmp.eq.s32.totalorder %v24, %v1427
  %vm1767 = vcmp.eq.s32.totalorder %v24, %v1431
  %v1768 = vsel %vm1432, 1, 0
  %v1769 = vsel %vm1433, 1, 0
  %v1770 = vsel %vm1434, 1, 0
  %v1771 = vsel %vm1435, 1, 0
  %v1772 = vsel %vm1436, 1, 0
  %v1773 = vsel %vm1437, 1, 0
  %v1774 = vsel %vm1438, 1, 0
  %v1775 = vsel %vm1439, 1, 0
  %v1776 = vsel %vm1440, 1, 0
  %v1777 = vsel %vm1441, 1, 0
  %v1778 = vsel %vm1442, 1, 0
  %v1779 = vsel %vm1443, 1, 0
  %v1780 = vsel %vm1444, 1, 0
  %v1781 = vsel %vm1445, 1, 0
  %v1782 = vsel %vm1446, 1, 0
  %v1783 = vsel %vm1447, 1, 0
  %v1784 = vsel %vm1448, 1, 0
  %v1785 = vsel %vm1449, 1, 0
  %v1786 = vsel %vm1450, 1, 0
  %v1787 = vsel %vm1451, 1, 0
  %v1788 = vsel %vm1452, 1, 0
  %v1789 = vsel %vm1453, 1, 0
  %v1790 = vsel %vm1454, 1, 0
  %v1791 = vsel %vm1455, 1, 0
  %v1792 = vsel %vm1456, 1, 0
  %v1793 = vsel %vm1457, 1, 0
  %v1794 = vsel %vm1458, 1, 0
  %v1795 = vsel %vm1459, 1, 0
  %v1796 = vsel %vm1460, 1, 0
  %v1797 = vsel %vm1461, 1, 0
  %v1798 = vsel %vm1462, 1, 0
  %v1799 = vsel %vm1463, 1, 0
  %v1800 = vsel %vm1464, 1, 0
  %v1801 = vsel %vm1465, 1, 0
  %v1802 = vsel %vm1466, 1, 0
  %v1803 = vsel %vm1467, 1, 0
  %v1804 = vsel %vm1468, 1, 0
  %v1805 = vsel %vm1469, 1, 0
  %v1806 = vsel %vm1470, 1, 0
  %v1807 = vsel %vm1471, 1, 0
  %v1808 = vsel %vm1472, 1, 0
  %v1809 = vsel %vm1473, 1, 0
  %v1810 = vsel %vm1474, 1, 0
  %v1811 = vsel %vm1475, 1, 0
  %v1812 = vsel %vm1476, 1, 0
  %v1813 = vsel %vm1477, 1, 0
  %v1814 = vsel %vm1478, 1, 0
  %v1815 = vsel %vm1479, 1, 0
  %v1816 = vsel %vm1480, 1, 0
  %v1817 = vsel %vm1481, 1, 0
  %v1818 = vsel %vm1482, 1, 0
  %v1819 = vsel %vm1483, 1, 0
  %v1820 = vsel %vm1484, 1, 0
  %v1821 = vsel %vm1485, 1, 0
  %v1822 = vsel %vm1486, 1, 0
  %v1823 = vsel %vm1487, 1, 0
  %v1824 = vsel %vm1488, 1, 0
  %v1825 = vsel %vm1489, 1, 0
  %v1826 = vsel %vm1490, 1, 0
  %v1827 = vsel %vm1491, 1, 0
  %v1828 = vsel %vm1492, 1, 0
  %v1829 = vsel %vm1493, 1, 0
  %v1830 = vsel %vm1494, 1, 0
  %v1831 = vsel %vm1495, 1, 0
  %v1832 = vsel %vm1496, 1, 0
  %v1833 = vsel %vm1497, 1, 0
  %v1834 = vsel %vm1498, 1, 0
  %v1835 = vsel %vm1499, 1, 0
  %v1836 = vsel %vm1500, 1, 0
  %v1837 = vsel %vm1501, 1, 0
  %v1838 = vsel %vm1502, 1, 0
  %v1839 = vsel %vm1503, 1, 0
  %v1840 = vsel %vm1504, 1, 0
  %v1841 = vsel %vm1505, 1, 0
  %v1842 = vsel %vm1506, 1, 0
  %v1843 = vsel %vm1507, 1, 0
  %v1844 = vsel %vm1508, 1, 0
  %v1845 = vsel %vm1509, 1, 0
  %v1846 = vsel %vm1510, 1, 0
  %v1847 = vsel %vm1511, 1, 0
  %v1848 = vsel %vm1512, 1, 0
  %v1849 = vsel %vm1513, 1, 0
  %v1850 = vsel %vm1514, 1, 0
  %v1851 = vsel %vm1515, 1, 0
  %v1852 = vsel %vm1516, 1, 0
  %v1853 = vsel %vm1517, 1, 0
  %v1854 = vsel %vm1518, 1, 0
  %v1855 = vsel %vm1519, 1, 0
  %v1856 = vsel %vm1520, 1, 0
  %v1857 = vsel %vm1521, 1, 0
  %v1858 = vsel %vm1522, 1, 0
  %v1859 = vsel %vm1523, 1, 0
  %v1860 = vsel %vm1524, 1, 0
  %v1861 = vsel %vm1525, 1, 0
  %v1862 = vsel %vm1526, 1, 0
  %v1863 = vsel %vm1527, 1, 0
  %v1864 = vsel %vm1528, 1, 0
  %v1865 = vsel %vm1529, 1, 0
  %v1866 = vsel %vm1530, 1, 0
  %v1867 = vsel %vm1531, 1, 0
  %v1868 = vsel %vm1532, 1, 0
  %v1869 = vsel %vm1533, 1, 0
  %v1870 = vsel %vm1534, 1, 0
  %v1871 = vsel %vm1535, 1, 0
  %v1872 = vsel %vm1536, 1, 0
  %v1873 = vsel %vm1537, 1, 0
  %v1874 = vsel %vm1538, 1, 0
  %v1875 = vsel %vm1539, 1, 0
  %v1876 = vsel %vm1540, 1, 0
  %v1877 = vsel %vm1541, 1, 0
  %v1878 = vsel %vm1542, 1, 0
  %v1879 = vsel %vm1543, 1, 0
  %v1880 = vsel %vm1544, 1, 0
  %v1881 = vsel %vm1545, 1, 0
  %v1882 = vsel %vm1546, 1, 0
  %v1883 = vsel %vm1547, 1, 0
  %v1884 = vsel %vm1548, 1, 0
  %v1885 = vsel %vm1549, 1, 0
  %v1886 = vsel %vm1550, 1, 0
  %v1887 = vsel %vm1551, 1, 0
  %v1888 = vsel %vm1552, 1, 0
  %v1889 = vsel %vm1553, 1, 0
  %v1890 = vsel %vm1554, 1, 0
  %v1891 = vsel %vm1555, 1, 0
  %v1892 = vsel %vm1556, 1, 0
  %v1893 = vsel %vm1557, 1, 0
  %v1894 = vsel %vm1558, 1, 0
  %v1895 = vsel %vm1559, 1, 0
  %v1896 = vsel %vm1560, 1, 0
  %v1897 = vsel %vm1561, 1, 0
  %v1898 = vsel %vm1562, 1, 0
  %v1899 = vsel %vm1563, 1, 0
  %v1900 = vsel %vm1564, 1, 0
  %v1901 = vsel %vm1565, 1, 0
  %v1902 = vsel %vm1566, 1, 0
  %v1903 = vsel %vm1567, 1, 0
  %v1904 = vsel %vm1568, 1, 0
  %v1905 = vsel %vm1569, 1, 0
  %v1906 = vsel %vm1570, 1, 0
  %v1907 = vsel %vm1571, 1, 0
  %v1908 = vsel %vm1572, 1, 0
  %v1909 = vsel %vm1573, 1, 0
  %v1910 = vsel %vm1574, 1, 0
  %v1911 = vsel %vm1575, 1, 0
  %v1912 = vsel %vm1576, 1, 0
  %v1913 = vsel %vm1577, 1, 0
  %v1914 = vsel %vm1578, 1, 0
  %v1915 = vsel %vm1579, 1, 0
  %v1916 = vsel %vm1580, 1, 0
  %v1917 = vsel %vm1581, 1, 0
  %v1918 = vsel %vm1582, 1, 0
  %v1919 = vsel %vm1583, 1, 0
  %v1920 = vsel %vm1584, 1, 0
  %v1921 = vsel %vm1585, 1, 0
  %v1922 = vsel %vm1586, 1, 0
  %v1923 = vsel %vm1587, 1, 0
  %v1924 = vsel %vm1588, 1, 0
  %v1925 = vsel %vm1589, 1, 0
  %v1926 = vsel %vm1590, 1, 0
  %v1927 = vsel %vm1591, 1, 0
  %v1928 = vsel %vm1592, 1, 0
  %v1929 = vsel %vm1593, 1, 0
  %v1930 = vsel %vm1594, 1, 0
  %v1931 = vsel %vm1595, 1, 0
  %v1932 = vsel %vm1596, 1, 0
  %v1933 = vsel %vm1597, 1, 0
  %v1934 = vsel %vm1598, 1, 0
  %v1935 = vsel %vm1599, 1, 0
  %v1936 = vsel %vm1600, 1, 0
  %v1937 = vsel %vm1601, 1, 0
  %v1938 = vsel %vm1602, 1, 0
  %v1939 = vsel %vm1603, 1, 0
  %v1940 = vsel %vm1604, 1, 0
  %v1941 = vsel %vm1605, 1, 0
  %v1942 = vsel %vm1606, 1, 0
  %v1943 = vsel %vm1607, 1, 0
  %v1944 = vsel %vm1608, 1, 0
  %v1945 = vsel %vm1609, 1, 0
  %v1946 = vsel %vm1610, 1, 0
  %v1947 = vsel %vm1611, 1, 0
  %v1948 = vsel %vm1612, 1, 0
  %v1949 = vsel %vm1613, 1, 0
  %v1950 = vsel %vm1614, 1, 0
  %v1951 = vsel %vm1615, 1, 0
  %v1952 = vsel %vm1616, 1, 0
  %v1953 = vsel %vm1617, 1, 0
  %v1954 = vsel %vm1618, 1, 0
  %v1955 = vsel %vm1619, 1, 0
  %v1956 = vsel %vm1620, 1, 0
  %v1957 = vsel %vm1621, 1, 0
  %v1958 = vsel %vm1622, 1, 0
  %v1959 = vsel %vm1623, 1, 0
  %v1960 = vsel %vm1624, 1, 0
  %v1961 = vsel %vm1625, 1, 0
  %v1962 = vsel %vm1626, 1, 0
  %v1963 = vsel %vm1627, 1, 0
  %v1964 = vsel %vm1628, 1, 0
  %v1965 = vsel %vm1629, 1, 0
  %v1966 = vsel %vm1630, 1, 0
  %v1967 = vsel %vm1631, 1, 0
  %v1968 = vsel %vm1632, 1, 0
  %v1969 = vsel %vm1633, 1, 0
  %v1970 = vsel %vm1634, 1, 0
  %v1971 = vsel %vm1635, 1, 0
  %v1972 = vsel %vm1636, 1, 0
  %v1973 = vsel %vm1637, 1, 0
  %v1974 = vsel %vm1638, 1, 0
  %v1975 = vsel %vm1639, 1, 0
  %v1976 = vsel %vm1640, 1, 0
  %v1977 = vsel %vm1641, 1, 0
  %v1978 = vsel %vm1642, 1, 0
  %v1979 = vsel %vm1643, 1, 0
  %v1980 = vsel %vm1644, 1, 0
  %v1981 = vsel %vm1645, 1, 0
  %v1982 = vsel %vm1646, 1, 0
  %v1983 = vsel %vm1647, 1, 0
  %v1984 = vsel %vm1648, 1, 0
  %v1985 = vsel %vm1649, 1, 0
  %v1986 = vsel %vm1650, 1, 0
  %v1987 = vsel %vm1651, 1, 0
  %v1988 = vsel %vm1652, 1, 0
  %v1989 = vsel %vm1653, 1, 0
  %v1990 = vsel %vm1654, 1, 0
  %v1991 = vsel %vm1655, 1, 0
  %v1992 = vsel %vm1656, 1, 0
  %v1993 = vsel %vm1657, 1, 0
  %v1994 = vsel %vm1658, 1, 0
  %v1995 = vsel %vm1659, 1, 0
  %v1996 = vsel %vm1660, 1, 0
  %v1997 = vsel %vm1661, 1, 0
  %v1998 = vsel %vm1662, 1, 0
  %v1999 = vsel %vm1663, 1, 0
  %v2000 = vsel %vm1664, 1, 0
  %v2001 = vsel %vm1665, 1, 0
  %v2002 = vsel %vm1666, 1, 0
  %v2003 = vsel %vm1667, 1, 0
  %v2004 = vsel %vm1668, 1, 0
  %v2005 = vsel %vm1669, 1, 0
  %v2006 = vsel %vm1670, 1, 0
  %v2007 = vsel %vm1671, 1, 0
  %v2008 = vsel %vm1672, 1, 0
  %v2009 = vsel %vm1673, 1, 0
  %v2010 = vsel %vm1674, 1, 0
  %v2011 = vsel %vm1675, 1, 0
  %v2012 = vsel %vm1676, 1, 0
  %v2013 = vsel %vm1677, 1, 0
  %v2014 = vsel %vm1678, 1, 0
  %v2015 = vsel %vm1679, 1, 0
  %v2016 = vsel %vm1680, 1, 0
  %v2017 = vsel %vm1681, 1, 0
  %v2018 = vsel %vm1682, 1, 0
  %v2019 = vsel %vm1683, 1, 0
  %v2020 = vsel %vm1684, 1, 0
  %v2021 = vsel %vm1685, 1, 0
  %v2022 = vsel %vm1686, 1, 0
  %v2023 = vsel %vm1687, 1, 0
  %v2024 = vsel %vm1688, 1, 0
  %v2025 = vsel %vm1689, 1, 0
  %v2026 = vsel %vm1690, 1, 0
  %v2027 = vsel %vm1691, 1, 0
  %v2028 = vsel %vm1692, 1, 0
  %v2029 = vsel %vm1693, 1, 0
  %v2030 = vsel %vm1694, 1, 0
  %v2031 = vsel %vm1695, 1, 0
  %v2032 = vsel %vm1696, 1, 0
  %v2033 = vsel %vm1697, 1, 0
  %v2034 = vsel %vm1698, 1, 0
  %v2035 = vsel %vm1699, 1, 0
  %v2036 = vsel %vm1700, 1, 0
  %v2037 = vsel %vm1701, 1, 0
  %v2038 = vsel %vm1702, 1, 0
  %v2039 = vsel %vm1703, 1, 0
  %v2040 = vsel %vm1704, 1, 0
  %v2041 = vsel %vm1705, 1, 0
  %v2042 = vsel %vm1706, 1, 0
  %v2043 = vsel %vm1707, 1, 0
  %v2044 = vsel %vm1708, 1, 0
  %v2045 = vsel %vm1709, 1, 0
  %v2046 = vsel %vm1710, 1, 0
  %v2047 = vsel %vm1711, 1, 0
  %v2048 = vsel %vm1712, 1, 0
  %v2049 = vsel %vm1713, 1, 0
  %v2050 = vsel %vm1714, 1, 0
  %v2051 = vsel %vm1715, 1, 0
  %v2052 = vsel %vm1716, 1, 0
  %v2053 = vsel %vm1717, 1, 0
  %v2054 = vsel %vm1718, 1, 0
  %v2055 = vsel %vm1719, 1, 0
  %v2056 = vsel %vm1720, 1, 0
  %v2057 = vsel %vm1721, 1, 0
  %v2058 = vsel %vm1722, 1, 0
  %v2059 = vsel %vm1723, 1, 0
  %v2060 = vsel %vm1724, 1, 0
  %v2061 = vsel %vm1725, 1, 0
  %v2062 = vsel %vm1726, 1, 0
  %v2063 = vsel %vm1727, 1, 0
  %v2064 = vsel %vm1728, 1, 0
  %v2065 = vsel %vm1729, 1, 0
  %v2066 = vsel %vm1730, 1, 0
  %v2067 = vsel %vm1731, 1, 0
  %v2068 = vsel %vm1732, 1, 0
  %v2069 = vsel %vm1733, 1, 0
  %v2070 = vsel %vm1734, 1, 0
  %v2071 = vsel %vm1735, 1, 0
  %v2072 = vsel %vm1736, 1, 0
  %v2073 = vsel %vm1737, 1, 0
  %v2074 = vsel %vm1738, 1, 0
  %v2075 = vsel %vm1739, 1, 0
  %v2076 = vsel %vm1740, 1, 0
  %v2077 = vsel %vm1741, 1, 0
  %v2078 = vsel %vm1742, 1, 0
  %v2079 = vsel %vm1743, 1, 0
  %v2080 = vsel %vm1744, 1, 0
  %v2081 = vsel %vm1745, 1, 0
  %v2082 = vsel %vm1746, 1, 0
  %v2083 = vsel %vm1747, 1, 0
  %v2084 = vsel %vm1748, 1, 0
  %v2085 = vsel %vm1749, 1, 0
  %v2086 = vsel %vm1750, 1, 0
  %v2087 = vsel %vm1751, 1, 0
  %v2088 = vsel %vm1752, 1, 0
  %v2089 = vsel %vm1753, 1, 0
  %v2090 = vsel %vm1754, 1, 0
  %v2091 = vsel %vm1755, 1, 0
  %v2092 = vsel %vm1756, 1, 0
  %v2093 = vsel %vm1757, 1, 0
  %v2094 = vsel %vm1758, 1, 0
  %v2095 = vsel %vm1759, 1, 0
  %v2096 = vsel %vm1760, 1, 0
  %v2097 = vsel %vm1761, 1, 0
  %v2098 = vsel %vm1762, 1, 0
  %v2099 = vsel %vm1763, 1, 0
  %v2100 = vsel %vm1764, 1, 0
  %v2101 = vsel %vm1765, 1, 0
  %v2102 = vsel %vm1766, 1, 0
  %v2103 = vsel %vm1767, 1, 0
  %v2104 = vcvt.s32.f32 %v1768
  %v2105 = vcvt.s32.f32 %v1769
  %v2106 = vcvt.s32.f32 %v1770
  %v2107 = vcvt.s32.f32 %v1771
  %v2108 = vcvt.s32.f32 %v1772
  %v2109 = vcvt.s32.f32 %v1773
  %v2110 = vcvt.s32.f32 %v1774
  %v2111 = vcvt.s32.f32 %v1775
  %v2112 = vcvt.s32.f32 %v1776
  %v2113 = vcvt.s32.f32 %v1777
  %v2114 = vcvt.s32.f32 %v1778
  %v2115 = vcvt.s32.f32 %v1779
  %v2116 = vcvt.s32.f32 %v1780
  %v2117 = vcvt.s32.f32 %v1781
  %v2118 = vcvt.s32.f32 %v1782
  %v2119 = vcvt.s32.f32 %v1783
  %v2120 = vcvt.s32.f32 %v1784
  %v2121 = vcvt.s32.f32 %v1785
  %v2122 = vcvt.s32.f32 %v1786
  %v2123 = vcvt.s32.f32 %v1787
  %v2124 = vcvt.s32.f32 %v1788
  %v2125 = vcvt.s32.f32 %v1789
  %v2126 = vcvt.s32.f32 %v1790
  %v2127 = vcvt.s32.f32 %v1791
  %v2128 = vcvt.s32.f32 %v1792
  %v2129 = vcvt.s32.f32 %v1793
  %v2130 = vcvt.s32.f32 %v1794
  %v2131 = vcvt.s32.f32 %v1795
  %v2132 = vcvt.s32.f32 %v1796
  %v2133 = vcvt.s32.f32 %v1797
  %v2134 = vcvt.s32.f32 %v1798
  %v2135 = vcvt.s32.f32 %v1799
  %v2136 = vcvt.s32.f32 %v1800
  %v2137 = vcvt.s32.f32 %v1801
  %v2138 = vcvt.s32.f32 %v1802
  %v2139 = vcvt.s32.f32 %v1803
  %v2140 = vcvt.s32.f32 %v1804
  %v2141 = vcvt.s32.f32 %v1805
  %v2142 = vcvt.s32.f32 %v1806
  %v2143 = vcvt.s32.f32 %v1807
  %v2144 = vcvt.s32.f32 %v1808
  %v2145 = vcvt.s32.f32 %v1809
  %v2146 = vcvt.s32.f32 %v1810
  %v2147 = vcvt.s32.f32 %v1811
  %v2148 = vcvt.s32.f32 %v1812
  %v2149 = vcvt.s32.f32 %v1813
  %v2150 = vcvt.s32.f32 %v1814
  %v2151 = vcvt.s32.f32 %v1815
  %v2152 = vcvt.s32.f32 %v1816
  %v2153 = vcvt.s32.f32 %v1817
  %v2154 = vcvt.s32.f32 %v1818
  %v2155 = vcvt.s32.f32 %v1819
  %v2156 = vcvt.s32.f32 %v1820
  %v2157 = vcvt.s32.f32 %v1821
  %v2158 = vcvt.s32.f32 %v1822
  %v2159 = vcvt.s32.f32 %v1823
  %v2160 = vcvt.s32.f32 %v1824
  %v2161 = vcvt.s32.f32 %v1825
  %v2162 = vcvt.s32.f32 %v1826
  %v2163 = vcvt.s32.f32 %v1827
  %v2164 = vcvt.s32.f32 %v1828
  %v2165 = vcvt.s32.f32 %v1829
  %v2166 = vcvt.s32.f32 %v1830
  %v2167 = vcvt.s32.f32 %v1831
  %v2168 = vcvt.s32.f32 %v1832
  %v2169 = vcvt.s32.f32 %v1833
  %v2170 = vcvt.s32.f32 %v1834
  %v2171 = vcvt.s32.f32 %v1835
  %v2172 = vcvt.s32.f32 %v1836
  %v2173 = vcvt.s32.f32 %v1837
  %v2174 = vcvt.s32.f32 %v1838
  %v2175 = vcvt.s32.f32 %v1839
  %v2176 = vcvt.s32.f32 %v1840
  %v2177 = vcvt.s32.f32 %v1841
  %v2178 = vcvt.s32.f32 %v1842
  %v2179 = vcvt.s32.f32 %v1843
  %v2180 = vcvt.s32.f32 %v1844
  %v2181 = vcvt.s32.f32 %v1845
  %v2182 = vcvt.s32.f32 %v1846
  %v2183 = vcvt.s32.f32 %v1847
  %v2184 = vcvt.s32.f32 %v1848
  %v2185 = vcvt.s32.f32 %v1849
  %v2186 = vcvt.s32.f32 %v1850
  %v2187 = vcvt.s32.f32 %v1851
  %v2188 = vcvt.s32.f32 %v1852
  %v2189 = vcvt.s32.f32 %v1853
  %v2190 = vcvt.s32.f32 %v1854
  %v2191 = vcvt.s32.f32 %v1855
  %v2192 = vcvt.s32.f32 %v1856
  %v2193 = vcvt.s32.f32 %v1857
  %v2194 = vcvt.s32.f32 %v1858
  %v2195 = vcvt.s32.f32 %v1859
  %v2196 = vcvt.s32.f32 %v1860
  %v2197 = vcvt.s32.f32 %v1861
  %v2198 = vcvt.s32.f32 %v1862
  %v2199 = vcvt.s32.f32 %v1863
  %v2200 = vcvt.s32.f32 %v1864
  %v2201 = vcvt.s32.f32 %v1865
  %v2202 = vcvt.s32.f32 %v1866
  %v2203 = vcvt.s32.f32 %v1867
  %v2204 = vcvt.s32.f32 %v1868
  %v2205 = vcvt.s32.f32 %v1869
  %v2206 = vcvt.s32.f32 %v1870
  %v2207 = vcvt.s32.f32 %v1871
  %v2208 = vcvt.s32.f32 %v1872
  %v2209 = vcvt.s32.f32 %v1873
  %v2210 = vcvt.s32.f32 %v1874
  %v2211 = vcvt.s32.f32 %v1875
  %v2212 = vcvt.s32.f32 %v1876
  %v2213 = vcvt.s32.f32 %v1877
  %v2214 = vcvt.s32.f32 %v1878
  %v2215 = vcvt.s32.f32 %v1879
  %v2216 = vcvt.s32.f32 %v1880
  %v2217 = vcvt.s32.f32 %v1881
  %v2218 = vcvt.s32.f32 %v1882
  %v2219 = vcvt.s32.f32 %v1883
  %v2220 = vcvt.s32.f32 %v1884
  %v2221 = vcvt.s32.f32 %v1885
  %v2222 = vcvt.s32.f32 %v1886
  %v2223 = vcvt.s32.f32 %v1887
  %v2224 = vcvt.s32.f32 %v1888
  %v2225 = vcvt.s32.f32 %v1889
  %v2226 = vcvt.s32.f32 %v1890
  %v2227 = vcvt.s32.f32 %v1891
  %v2228 = vcvt.s32.f32 %v1892
  %v2229 = vcvt.s32.f32 %v1893
  %v2230 = vcvt.s32.f32 %v1894
  %v2231 = vcvt.s32.f32 %v1895
  %v2232 = vcvt.s32.f32 %v1896
  %v2233 = vcvt.s32.f32 %v1897
  %v2234 = vcvt.s32.f32 %v1898
  %v2235 = vcvt.s32.f32 %v1899
  %v2236 = vcvt.s32.f32 %v1900
  %v2237 = vcvt.s32.f32 %v1901
  %v2238 = vcvt.s32.f32 %v1902
  %v2239 = vcvt.s32.f32 %v1903
  %v2240 = vcvt.s32.f32 %v1904
  %v2241 = vcvt.s32.f32 %v1905
  %v2242 = vcvt.s32.f32 %v1906
  %v2243 = vcvt.s32.f32 %v1907
  %v2244 = vcvt.s32.f32 %v1908
  %v2245 = vcvt.s32.f32 %v1909
  %v2246 = vcvt.s32.f32 %v1910
  %v2247 = vcvt.s32.f32 %v1911
  %v2248 = vcvt.s32.f32 %v1912
  %v2249 = vcvt.s32.f32 %v1913
  %v2250 = vcvt.s32.f32 %v1914
  %v2251 = vcvt.s32.f32 %v1915
  %v2252 = vcvt.s32.f32 %v1916
  %v2253 = vcvt.s32.f32 %v1917
  %v2254 = vcvt.s32.f32 %v1918
  %v2255 = vcvt.s32.f32 %v1919
  %v2256 = vcvt.s32.f32 %v1920
  %v2257 = vcvt.s32.f32 %v1921
  %v2258 = vcvt.s32.f32 %v1922
  %v2259 = vcvt.s32.f32 %v1923
  %v2260 = vcvt.s32.f32 %v1924
  %v2261 = vcvt.s32.f32 %v1925
  %v2262 = vcvt.s32.f32 %v1926
  %v2263 = vcvt.s32.f32 %v1927
  %v2264 = vcvt.s32.f32 %v1928
  %v2265 = vcvt.s32.f32 %v1929
  %v2266 = vcvt.s32.f32 %v1930
  %v2267 = vcvt.s32.f32 %v1931
  %v2268 = vcvt.s32.f32 %v1932
  %v2269 = vcvt.s32.f32 %v1933
  %v2270 = vcvt.s32.f32 %v1934
  %v2271 = vcvt.s32.f32 %v1935
  %v2272 = vcvt.s32.f32 %v1936
  %v2273 = vcvt.s32.f32 %v1937
  %v2274 = vcvt.s32.f32 %v1938
  %v2275 = vcvt.s32.f32 %v1939
  %v2276 = vcvt.s32.f32 %v1940
  %v2277 = vcvt.s32.f32 %v1941
  %v2278 = vcvt.s32.f32 %v1942
  %v2279 = vcvt.s32.f32 %v1943
  %v2280 = vcvt.s32.f32 %v1944
  %v2281 = vcvt.s32.f32 %v1945
  %v2282 = vcvt.s32.f32 %v1946
  %v2283 = vcvt.s32.f32 %v1947
  %v2284 = vcvt.s32.f32 %v1948
  %v2285 = vcvt.s32.f32 %v1949
  %v2286 = vcvt.s32.f32 %v1950
  %v2287 = vcvt.s32.f32 %v1951
  %v2288 = vcvt.s32.f32 %v1952
  %v2289 = vcvt.s32.f32 %v1953
  %v2290 = vcvt.s32.f32 %v1954
  %v2291 = vcvt.s32.f32 %v1955
  %v2292 = vcvt.s32.f32 %v1956
  %v2293 = vcvt.s32.f32 %v1957
  %v2294 = vcvt.s32.f32 %v1958
  %v2295 = vcvt.s32.f32 %v1959
  %v2296 = vcvt.s32.f32 %v1960
  %v2297 = vcvt.s32.f32 %v1961
  %v2298 = vcvt.s32.f32 %v1962
  %v2299 = vcvt.s32.f32 %v1963
  %v2300 = vcvt.s32.f32 %v1964
  %v2301 = vcvt.s32.f32 %v1965
  %v2302 = vcvt.s32.f32 %v1966
  %v2303 = vcvt.s32.f32 %v1967
  %v2304 = vcvt.s32.f32 %v1968
  %v2305 = vcvt.s32.f32 %v1969
  %v2306 = vcvt.s32.f32 %v1970
  %v2307 = vcvt.s32.f32 %v1971
  %v2308 = vcvt.s32.f32 %v1972
  %v2309 = vcvt.s32.f32 %v1973
  %v2310 = vcvt.s32.f32 %v1974
  %v2311 = vcvt.s32.f32 %v1975
  %v2312 = vcvt.s32.f32 %v1976
  %v2313 = vcvt.s32.f32 %v1977
  %v2314 = vcvt.s32.f32 %v1978
  %v2315 = vcvt.s32.f32 %v1979
  %v2316 = vcvt.s32.f32 %v1980
  %v2317 = vcvt.s32.f32 %v1981
  %v2318 = vcvt.s32.f32 %v1982
  %v2319 = vcvt.s32.f32 %v1983
  %v2320 = vcvt.s32.f32 %v1984
  %v2321 = vcvt.s32.f32 %v1985
  %v2322 = vcvt.s32.f32 %v1986
  %v2323 = vcvt.s32.f32 %v1987
  %v2324 = vcvt.s32.f32 %v1988
  %v2325 = vcvt.s32.f32 %v1989
  %v2326 = vcvt.s32.f32 %v1990
  %v2327 = vcvt.s32.f32 %v1991
  %v2328 = vcvt.s32.f32 %v1992
  %v2329 = vcvt.s32.f32 %v1993
  %v2330 = vcvt.s32.f32 %v1994
  %v2331 = vcvt.s32.f32 %v1995
  %v2332 = vcvt.s32.f32 %v1996
  %v2333 = vcvt.s32.f32 %v1997
  %v2334 = vcvt.s32.f32 %v1998
  %v2335 = vcvt.s32.f32 %v1999
  %v2336 = vcvt.s32.f32 %v2000
  %v2337 = vcvt.s32.f32 %v2001
  %v2338 = vcvt.s32.f32 %v2002
  %v2339 = vcvt.s32.f32 %v2003
  %v2340 = vcvt.s32.f32 %v2004
  %v2341 = vcvt.s32.f32 %v2005
  %v2342 = vcvt.s32.f32 %v2006
  %v2343 = vcvt.s32.f32 %v2007
  %v2344 = vcvt.s32.f32 %v2008
  %v2345 = vcvt.s32.f32 %v2009
  %v2346 = vcvt.s32.f32 %v2010
  %v2347 = vcvt.s32.f32 %v2011
  %v2348 = vcvt.s32.f32 %v2012
  %v2349 = vcvt.s32.f32 %v2013
  %v2350 = vcvt.s32.f32 %v2014
  %v2351 = vcvt.s32.f32 %v2015
  %v2352 = vcvt.s32.f32 %v2016
  %v2353 = vcvt.s32.f32 %v2017
  %v2354 = vcvt.s32.f32 %v2018
  %v2355 = vcvt.s32.f32 %v2019
  %v2356 = vcvt.s32.f32 %v2020
  %v2357 = vcvt.s32.f32 %v2021
  %v2358 = vcvt.s32.f32 %v2022
  %v2359 = vcvt.s32.f32 %v2023
  %v2360 = vcvt.s32.f32 %v2024
  %v2361 = vcvt.s32.f32 %v2025
  %v2362 = vcvt.s32.f32 %v2026
  %v2363 = vcvt.s32.f32 %v2027
  %v2364 = vcvt.s32.f32 %v2028
  %v2365 = vcvt.s32.f32 %v2029
  %v2366 = vcvt.s32.f32 %v2030
  %v2367 = vcvt.s32.f32 %v2031
  %v2368 = vcvt.s32.f32 %v2032
  %v2369 = vcvt.s32.f32 %v2033
  %v2370 = vcvt.s32.f32 %v2034
  %v2371 = vcvt.s32.f32 %v2035
  %v2372 = vcvt.s32.f32 %v2036
  %v2373 = vcvt.s32.f32 %v2037
  %v2374 = vcvt.s32.f32 %v2038
  %v2375 = vcvt.s32.f32 %v2039
  %v2376 = vcvt.s32.f32 %v2040
  %v2377 = vcvt.s32.f32 %v2041
  %v2378 = vcvt.s32.f32 %v2042
  %v2379 = vcvt.s32.f32 %v2043
  %v2380 = vcvt.s32.f32 %v2044
  %v2381 = vcvt.s32.f32 %v2045
  %v2382 = vcvt.s32.f32 %v2046
  %v2383 = vcvt.s32.f32 %v2047
  %v2384 = vcvt.s32.f32 %v2048
  %v2385 = vcvt.s32.f32 %v2049
  %v2386 = vcvt.s32.f32 %v2050
  %v2387 = vcvt.s32.f32 %v2051
  %v2388 = vcvt.s32.f32 %v2052
  %v2389 = vcvt.s32.f32 %v2053
  %v2390 = vcvt.s32.f32 %v2054
  %v2391 = vcvt.s32.f32 %v2055
  %v2392 = vcvt.s32.f32 %v2056
  %v2393 = vcvt.s32.f32 %v2057
  %v2394 = vcvt.s32.f32 %v2058
  %v2395 = vcvt.s32.f32 %v2059
  %v2396 = vcvt.s32.f32 %v2060
  %v2397 = vcvt.s32.f32 %v2061
  %v2398 = vcvt.s32.f32 %v2062
  %v2399 = vcvt.s32.f32 %v2063
  %v2400 = vcvt.s32.f32 %v2064
  %v2401 = vcvt.s32.f32 %v2065
  %v2402 = vcvt.s32.f32 %v2066
  %v2403 = vcvt.s32.f32 %v2067
  %v2404 = vcvt.s32.f32 %v2068
  %v2405 = vcvt.s32.f32 %v2069
  %v2406 = vcvt.s32.f32 %v2070
  %v2407 = vcvt.s32.f32 %v2071
  %v2408 = vcvt.s32.f32 %v2072
  %v2409 = vcvt.s32.f32 %v2073
  %v2410 = vcvt.s32.f32 %v2074
  %v2411 = vcvt.s32.f32 %v2075
  %v2412 = vcvt.s32.f32 %v2076
  %v2413 = vcvt.s32.f32 %v2077
  %v2414 = vcvt.s32.f32 %v2078
  %v2415 = vcvt.s32.f32 %v2079
  %v2416 = vcvt.s32.f32 %v2080
  %v2417 = vcvt.s32.f32 %v2081
  %v2418 = vcvt.s32.f32 %v2082
  %v2419 = vcvt.s32.f32 %v2083
  %v2420 = vcvt.s32.f32 %v2084
  %v2421 = vcvt.s32.f32 %v2085
  %v2422 = vcvt.s32.f32 %v2086
  %v2423 = vcvt.s32.f32 %v2087
  %v2424 = vcvt.s32.f32 %v2088
  %v2425 = vcvt.s32.f32 %v2089
  %v2426 = vcvt.s32.f32 %v2090
  %v2427 = vcvt.s32.f32 %v2091
  %v2428 = vcvt.s32.f32 %v2092
  %v2429 = vcvt.s32.f32 %v2093
  %v2430 = vcvt.s32.f32 %v2094
  %v2431 = vcvt.s32.f32 %v2095
  %v2432 = vcvt.s32.f32 %v2096
  %v2433 = vcvt.s32.f32 %v2097
  %v2434 = vcvt.s32.f32 %v2098
  %v2435 = vcvt.s32.f32 %v2099
  %v2436 = vcvt.s32.f32 %v2100
  %v2437 = vcvt.s32.f32 %v2101
  %v2438 = vcvt.s32.f32 %v2102
  %v2439 = vcvt.s32.f32 %v2103
  %v2440 = vld [vmem:[%s1] sm:$0xff]
  %v2441 = vld [vmem:[%s1 + $0x8] sm:$0xff]
  %v2442 = vld [vmem:[%s1 + $0x10] sm:$0xff]
  %v2443 = vld [vmem:[%s1 + $0x18] sm:$0x3f]
  %s2444 = scalar_lea.vmem %s1, 32
  %v2445 = vld [vmem:[%s2444] sm:$0xff]
  %v2446 = vld [vmem:[%s2444 + $0x8] sm:$0xff]
  %v2447 = vld [vmem:[%s2444 + $0x10] sm:$0xff]
  %v2448 = vld [vmem:[%s2444 + $0x18] sm:$0x3f]
  %vm2449 = vcmask 244736
  %v2451 = vsel %vm2449, %v2120, 0
  %v2454 = vsel %vm2449, %v2121, 0
  %v2457 = vsel %vm2449, %v2122, 0
  %v2460 = vsel %vm2449, %v2123, 0
  %v2463 = vsel %vm2449, %v2124, 0
  %v2466 = vsel %vm2449, %v2125, 0
  %v2469 = vsel %vm2449, %v2126, 0
  %v2472 = vsel %vm2449, %v2127, 0
  %v2475 = vsel %vm2449, %v2128, 0
  %v2478 = vsel %vm2449, %v2129, 0
  %v2481 = vsel %vm2449, %v2130, 0
  %v2484 = vsel %vm2449, %v2131, 0
  %v2487 = vsel %vm2449, %v2132, 0
  %v2490 = vsel %vm2449, %v2133, 0
  %v2493 = vsel %vm2449, %v2134, 0
  %v2496 = vsel %vm2449, %v2135, 0
  %v2499 = vsel %vm2449, %v2136, 0
  %v2502 = vsel %vm2449, %v2137, 0
  %v2505 = vsel %vm2449, %v2138, 0
  %v2508 = vsel %vm2449, %v2139, 0
  %v2511 = vsel %vm2449, %v2140, 0
  %v2514 = vsel %vm2449, %v2141, 0
  %v2517 = vsel %vm2449, %v2142, 0
  %v2520 = vsel %vm2449, %v2143, 0
  %v2523 = vsel %vm2449, %v2144, 0
  %v2526 = vsel %vm2449, %v2145, 0
  %v2529 = vsel %vm2449, %v2146, 0
  %v2532 = vsel %vm2449, %v2147, 0
  %v2535 = vsel %vm2449, %v2148, 0
  %v2538 = vsel %vm2449, %v2149, 0
  %v2541 = vsel %vm2449, %v2150, 0
  %v2544 = vsel %vm2449, %v2151, 0
  %v2547 = vsel %vm2449, %v2152, 0
  %v2550 = vsel %vm2449, %v2153, 0
  %v2553 = vsel %vm2449, %v2154, 0
  %v2556 = vsel %vm2449, %v2155, 0
  %v2559 = vsel %vm2449, %v2156, 0
  %v2562 = vsel %vm2449, %v2157, 0
  %v2565 = vsel %vm2449, %v2158, 0
  %v2568 = vsel %vm2449, %v2159, 0
  %v2571 = vsel %vm2449, %v2160, 0
  %v2574 = vsel %vm2449, %v2161, 0
  %v2577 = vsel %vm2449, %v2162, 0
  %v2580 = vsel %vm2449, %v2163, 0
  %v2583 = vsel %vm2449, %v2164, 0
  %v2586 = vsel %vm2449, %v2165, 0
  %v2589 = vsel %vm2449, %v2166, 0
  %v2592 = vsel %vm2449, %v2167, 0
  %v2595 = vsel %vm2449, %v2168, 0
  %v2598 = vsel %vm2449, %v2169, 0
  %v2601 = vsel %vm2449, %v2170, 0
  %v2604 = vsel %vm2449, %v2171, 0
  %v2607 = vsel %vm2449, %v2172, 0
  %v2610 = vsel %vm2449, %v2173, 0
  %v2613 = vsel %vm2449, %v2174, 0
  %v2616 = vsel %vm2449, %v2175, 0
  %v2619 = vsel %vm2449, %v2176, 0
  %v2622 = vsel %vm2449, %v2177, 0
  %v2625 = vsel %vm2449, %v2178, 0
  %v2628 = vsel %vm2449, %v2179, 0
  %v2631 = vsel %vm2449, %v2180, 0
  %v2634 = vsel %vm2449, %v2181, 0
  %v2637 = vsel %vm2449, %v2182, 0
  %v2640 = vsel %vm2449, %v2183, 0
  %v2643 = vsel %vm2449, %v2184, 0
  %v2646 = vsel %vm2449, %v2185, 0
  %v2649 = vsel %vm2449, %v2186, 0
  %v2652 = vsel %vm2449, %v2187, 0
  %v2655 = vsel %vm2449, %v2188, 0
  %v2658 = vsel %vm2449, %v2189, 0
  %v2661 = vsel %vm2449, %v2190, 0
  %v2664 = vsel %vm2449, %v2191, 0
  %v2667 = vsel %vm2449, %v2192, 0
  %v2670 = vsel %vm2449, %v2193, 0
  %v2673 = vsel %vm2449, %v2194, 0
  %v2676 = vsel %vm2449, %v2195, 0
  %v2679 = vsel %vm2449, %v2196, 0
  %v2682 = vsel %vm2449, %v2197, 0
  %v2685 = vsel %vm2449, %v2198, 0
  %v2688 = vsel %vm2449, %v2199, 0
  %v2691 = vsel %vm2449, %v2200, 0
  %v2694 = vsel %vm2449, %v2201, 0
  %v2697 = vsel %vm2449, %v2202, 0
  %v2700 = vsel %vm2449, %v2203, 0
  %v2703 = vsel %vm2449, %v2204, 0
  %v2706 = vsel %vm2449, %v2205, 0
  %v2709 = vsel %vm2449, %v2206, 0
  %v2712 = vsel %vm2449, %v2207, 0
  %v2715 = vsel %vm2449, %v2208, 0
  %v2718 = vsel %vm2449, %v2209, 0
  %v2721 = vsel %vm2449, %v2210, 0
  %v2724 = vsel %vm2449, %v2211, 0
  %v2727 = vsel %vm2449, %v2212, 0
  %v2730 = vsel %vm2449, %v2213, 0
  %v2733 = vsel %vm2449, %v2214, 0
  %v2736 = vsel %vm2449, %v2215, 0
  %v2739 = vsel %vm2449, %v2216, 0
  %v2742 = vsel %vm2449, %v2217, 0
  %v2745 = vsel %vm2449, %v2218, 0
  %v2748 = vsel %vm2449, %v2219, 0
  %v2751 = vsel %vm2449, %v2220, 0
  %v2754 = vsel %vm2449, %v2221, 0
  %v2757 = vsel %vm2449, %v2222, 0
  %v2760 = vsel %vm2449, %v2223, 0
  %v2763 = vsel %vm2449, %v2224, 0
  %v2766 = vsel %vm2449, %v2225, 0
  %v2769 = vsel %vm2449, %v2226, 0
  %v2772 = vsel %vm2449, %v2227, 0
  %v2775 = vsel %vm2449, %v2228, 0
  %v2778 = vsel %vm2449, %v2229, 0
  %v2781 = vsel %vm2449, %v2230, 0
  %v2784 = vsel %vm2449, %v2231, 0
  %v2787 = vsel %vm2449, %v2232, 0
  %v2790 = vsel %vm2449, %v2233, 0
  %v2793 = vsel %vm2449, %v2234, 0
  %v2796 = vsel %vm2449, %v2235, 0
  %v2799 = vsel %vm2449, %v2236, 0
  %v2802 = vsel %vm2449, %v2237, 0
  %v2805 = vsel %vm2449, %v2238, 0
  %v2808 = vsel %vm2449, %v2239, 0
  %v2811 = vsel %vm2449, %v2240, 0
  %v2814 = vsel %vm2449, %v2241, 0
  %v2817 = vsel %vm2449, %v2242, 0
  %v2820 = vsel %vm2449, %v2243, 0
  %v2823 = vsel %vm2449, %v2244, 0
  %v2826 = vsel %vm2449, %v2245, 0
  %v2829 = vsel %vm2449, %v2246, 0
  %v2832 = vsel %vm2449, %v2247, 0
  %v2835 = vsel %vm2449, %v2248, 0
  %v2838 = vsel %vm2449, %v2249, 0
  %v2841 = vsel %vm2449, %v2250, 0
  %v2844 = vsel %vm2449, %v2251, 0
  %v2847 = vsel %vm2449, %v2252, 0
  %v2850 = vsel %vm2449, %v2253, 0
  %v2853 = vsel %vm2449, %v2254, 0
  %v2856 = vsel %vm2449, %v2255, 0
  %v2859 = vsel %vm2449, %v2256, 0
  %v2862 = vsel %vm2449, %v2257, 0
  %v2865 = vsel %vm2449, %v2258, 0
  %v2868 = vsel %vm2449, %v2259, 0
  %v2871 = vsel %vm2449, %v2260, 0
  %v2874 = vsel %vm2449, %v2261, 0
  %v2877 = vsel %vm2449, %v2262, 0
  %v2880 = vsel %vm2449, %v2263, 0
  %v2883 = vsel %vm2449, %v2264, 0
  %v2886 = vsel %vm2449, %v2265, 0
  %v2889 = vsel %vm2449, %v2266, 0
  %v2892 = vsel %vm2449, %v2267, 0
  %v2895 = vsel %vm2449, %v2268, 0
  %v2898 = vsel %vm2449, %v2269, 0
  %v2901 = vsel %vm2449, %v2270, 0
  %v2904 = vsel %vm2449, %v2271, 0
  %v2907 = vsel %vm2449, %v2272, 0
  %v2910 = vsel %vm2449, %v2273, 0
  %v2913 = vsel %vm2449, %v2274, 0
  %v2916 = vsel %vm2449, %v2275, 0
  %v2919 = vsel %vm2449, %v2276, 0
  %v2922 = vsel %vm2449, %v2277, 0
  %v2925 = vsel %vm2449, %v2278, 0
  %v2928 = vsel %vm2449, %v2279, 0
  %v2931 = vsel %vm2449, %v2280, 0
  %v2934 = vsel %vm2449, %v2281, 0
  %v2937 = vsel %vm2449, %v2282, 0
  %v2940 = vsel %vm2449, %v2283, 0
  %v2943 = vsel %vm2449, %v2284, 0
  %v2946 = vsel %vm2449, %v2285, 0
  %v2949 = vsel %vm2449, %v2286, 0
  %v2952 = vsel %vm2449, %v2287, 0
  %v2955 = vsel %vm2449, %v2288, 0
  %v2958 = vsel %vm2449, %v2289, 0
  %v2961 = vsel %vm2449, %v2290, 0
  %v2964 = vsel %vm2449, %v2291, 0
  %v2967 = vsel %vm2449, %v2292, 0
  %v2970 = vsel %vm2449, %v2293, 0
  %v2973 = vsel %vm2449, %v2294, 0
  %v2976 = vsel %vm2449, %v2295, 0
  %v2979 = vsel %vm2449, %v2296, 0
  %v2982 = vsel %vm2449, %v2297, 0
  %v2985 = vsel %vm2449, %v2298, 0
  %v2988 = vsel %vm2449, %v2299, 0
  %v2991 = vsel %vm2449, %v2300, 0
  %v2994 = vsel %vm2449, %v2301, 0
  %v2997 = vsel %vm2449, %v2302, 0
  %v3000 = vsel %vm2449, %v2303, 0
  %v3003 = vsel %vm2449, %v2304, 0
  %v3006 = vsel %vm2449, %v2305, 0
  %v3009 = vsel %vm2449, %v2306, 0
  %v3012 = vsel %vm2449, %v2307, 0
  %v3015 = vsel %vm2449, %v2308, 0
  %v3018 = vsel %vm2449, %v2309, 0
  %v3021 = vsel %vm2449, %v2310, 0
  %v3024 = vsel %vm2449, %v2311, 0
  %v3027 = vsel %vm2449, %v2312, 0
  %v3030 = vsel %vm2449, %v2313, 0
  %v3033 = vsel %vm2449, %v2314, 0
  %v3036 = vsel %vm2449, %v2315, 0
  %v3039 = vsel %vm2449, %v2316, 0
  %v3042 = vsel %vm2449, %v2317, 0
  %v3045 = vsel %vm2449, %v2318, 0
  %v3048 = vsel %vm2449, %v2319, 0
  %v3051 = vsel %vm2449, %v2320, 0
  %v3054 = vsel %vm2449, %v2321, 0
  %v3057 = vsel %vm2449, %v2322, 0
  %v3060 = vsel %vm2449, %v2323, 0
  %v3063 = vsel %vm2449, %v2324, 0
  %v3066 = vsel %vm2449, %v2325, 0
  %v3069 = vsel %vm2449, %v2326, 0
  %v3072 = vsel %vm2449, %v2327, 0
  %v3075 = vsel %vm2449, %v2328, 0
  %v3078 = vsel %vm2449, %v2329, 0
  %v3081 = vsel %vm2449, %v2330, 0
  %v3084 = vsel %vm2449, %v2331, 0
  %v3087 = vsel %vm2449, %v2332, 0
  %v3090 = vsel %vm2449, %v2333, 0
  %v3093 = vsel %vm2449, %v2334, 0
  %v3096 = vsel %vm2449, %v2335, 0
  %v3099 = vsel %vm2449, %v2336, 0
  %v3102 = vsel %vm2449, %v2337, 0
  %v3105 = vsel %vm2449, %v2338, 0
  %v3108 = vsel %vm2449, %v2339, 0
  %v3111 = vsel %vm2449, %v2340, 0
  %v3114 = vsel %vm2449, %v2341, 0
  %v3117 = vsel %vm2449, %v2342, 0
  %v3120 = vsel %vm2449, %v2343, 0
  %v3123 = vsel %vm2449, %v2344, 0
  %v3126 = vsel %vm2449, %v2345, 0
  %v3129 = vsel %vm2449, %v2346, 0
  %v3132 = vsel %vm2449, %v2347, 0
  %v3135 = vsel %vm2449, %v2348, 0
  %v3138 = vsel %vm2449, %v2349, 0
  %v3141 = vsel %vm2449, %v2350, 0
  %v3144 = vsel %vm2449, %v2351, 0
  %v3147 = vsel %vm2449, %v2352, 0
  %v3150 = vsel %vm2449, %v2353, 0
  %v3153 = vsel %vm2449, %v2354, 0
  %v3156 = vsel %vm2449, %v2355, 0
  %v3159 = vsel %vm2449, %v2356, 0
  %v3162 = vsel %vm2449, %v2357, 0
  %v3165 = vsel %vm2449, %v2358, 0
  %v3168 = vsel %vm2449, %v2359, 0
  %v3171 = vsel %vm2449, %v2360, 0
  %v3174 = vsel %vm2449, %v2361, 0
  %v3177 = vsel %vm2449, %v2362, 0
  %v3180 = vsel %vm2449, %v2363, 0
  %v3183 = vsel %vm2449, %v2364, 0
  %v3186 = vsel %vm2449, %v2365, 0
  %v3189 = vsel %vm2449, %v2366, 0
  %v3192 = vsel %vm2449, %v2367, 0
  %v3195 = vsel %vm2449, %v2368, 0
  %v3198 = vsel %vm2449, %v2369, 0
  %v3201 = vsel %vm2449, %v2370, 0
  %v3204 = vsel %vm2449, %v2371, 0
  %v3207 = vsel %vm2449, %v2372, 0
  %v3210 = vsel %vm2449, %v2373, 0
  %v3213 = vsel %vm2449, %v2374, 0
  %v3216 = vsel %vm2449, %v2375, 0
  %v3219 = vsel %vm2449, %v2376, 0
  %v3222 = vsel %vm2449, %v2377, 0
  %v3225 = vsel %vm2449, %v2378, 0
  %v3228 = vsel %vm2449, %v2379, 0
  %v3231 = vsel %vm2449, %v2380, 0
  %v3234 = vsel %vm2449, %v2381, 0
  %v3237 = vsel %vm2449, %v2382, 0
  %v3240 = vsel %vm2449, %v2383, 0
  %v3243 = vsel %vm2449, %v2384, 0
  %v3246 = vsel %vm2449, %v2385, 0
  %v3249 = vsel %vm2449, %v2386, 0
  %v3252 = vsel %vm2449, %v2387, 0
  %v3255 = vsel %vm2449, %v2388, 0
  %v3258 = vsel %vm2449, %v2389, 0
  %v3261 = vsel %vm2449, %v2390, 0
  %v3264 = vsel %vm2449, %v2391, 0
  %vm3266 = vcmask 1045504
  %v3268 = vsel %vm3266, %v2448, 0
  %3270 = vmatprep.subr.mxu0 0.0
  %3271 = vmatpush1.msra.mxu0 0.0
  %3272 = vmatprep.subr.mxu0 0.0
  %3273 = vmatpush1.msra.mxu0 0.0
  %3274 = vmatprep.subr.mxu0 0.0
  %3275 = vmatpush1.msra.mxu0 0.0
  %3276 = vmatprep.subr.mxu0 0.0
  %3277 = vmatpush1.msra.mxu0 0.0
  %3278 = vmatprep.subr.mxu0 0.0
  %3279 = vmatpush1.msra.mxu0 0.0
  %3280 = vmatprep.subr.mxu0 0.0
  %3281 = vmatpush1.msra.mxu0 0.0
  %3282 = vmatprep.subr.mxu0 0.0
  %3283 = vmatpush1.msra.mxu0 0.0
  %3284 = vmatprep.subr.mxu0 0.0
  %3285 = vmatpush1.msra.mxu0 0.0
  %3286 = vmatprep.subr.mxu0 0.0
  %3287 = vmatpush1.msra.mxu0 0.0
  %3288 = vmatprep.subr.mxu0 0.0
  %3289 = vmatpush1.msra.mxu0 0.0
  %3290 = vmatprep.subr.mxu0 0.0
  %3291 = vmatpush1.msra.mxu0 0.0
  %3292 = vmatprep.subr.mxu0 0.0
  %3293 = vmatpush1.msra.mxu0 0.0
  %3294 = vmatprep.subr.mxu0 0.0
  %3295 = vmatpush1.msra.mxu0 %v3268
  %3296 = vmatprep.subr.mxu0 0.0
  %3297 = vmatpush1.msra.mxu0 %v2447
  %3298 = vmatprep.subr.mxu0 0.0
  %3299 = vmatpush1.msra.mxu0 %v2446
  %3300 = vmatprep.subr.mxu0 0.0
  %3301 = vmatpush1.msra.mxu0 %v2445
  %3302 = vmatprep.subr.mxu0 0.0
  %3303 = vmatpush2.msra.mxu0 0.0
  %3304 = vmatprep.subr.mxu0 0.0
  %3305 = vmatpush2.msra.mxu0 0.0
  %3306 = vmatprep.subr.mxu0 0.0
  %3307 = vmatpush2.msra.mxu0 0.0
  %3308 = vmatprep.subr.mxu0 0.0
  %3309 = vmatpush2.msra.mxu0 0.0
  %3310 = vmatprep.subr.mxu0 0.0
  %3311 = vmatpush2.msra.mxu0 0.0
  %3312 = vmatprep.subr.mxu0 0.0
  %3313 = vmatpush2.msra.mxu0 0.0
  %3314 = vmatprep.subr.mxu0 0.0
  %3315 = vmatpush2.msra.mxu0 0.0
  %3316 = vmatprep.subr.mxu0 0.0
  %3317 = vmatpush2.msra.mxu0 0.0
  %3318 = vmatprep.subr.mxu0 0.0
  %3319 = vmatpush2.msra.mxu0 0.0
  %3320 = vmatprep.subr.mxu0 0.0
  %3321 = vmatpush2.msra.mxu0 0.0
  %3322 = vmatprep.subr.mxu0 0.0
  %3323 = vmatpush2.msra.mxu0 0.0
  %3324 = vmatprep.subr.mxu0 0.0
  %3325 = vmatpush2.msra.mxu0 0.0
  %3326 = vmatprep.subr.mxu0 0.0
  %3327 = vmatpush2.msra.mxu0 0.0
  %3328 = vmatprep.subr.mxu0 0.0
  %3329 = vmatpush2.msra.mxu0 0.0
  %3330 = vmatprep.subr.mxu0 0.0
  %3331 = vmatpush2.msra.mxu0 0.0
  %3332 = vmatprep.subr.mxu0 0.0
  %3333 = vmatpush2.msra.mxu0 0.0
  %3334 = vmatprep.mubr.f32.mxu0 0.0
  %3335 = vmatmul.mubr.f32.gmra.mxu0 %v2451
  %v3336 = vpop.f32.mrf.mxu0
  %v3337 = vadd.f32 0.0, %v3336
  %v3338 = vpop.f32.mrf.mxu0
  %3339 = vmatprep.mubr.f32.mxu0 0.0
  %3340 = vmatmul.mubr.f32.gmra.mxu0 %v2454
  %v3341 = vpop.f32.mrf.mxu0
  %v3342 = vadd.f32 0.0, %v3341
  %v3343 = vpop.f32.mrf.mxu0
  %3344 = vmatprep.mubr.f32.mxu0 0.0
  %3345 = vmatmul.mubr.f32.gmra.mxu0 %v2457
  %v3346 = vpop.f32.mrf.mxu0
  %v3347 = vadd.f32 0.0, %v3346
  %v3348 = vpop.f32.mrf.mxu0
  %3349 = vmatprep.mubr.f32.mxu0 0.0
  %3350 = vmatmul.mubr.f32.gmra.mxu0 %v2460
  %v3351 = vpop.f32.mrf.mxu0
  %v3352 = vadd.f32 0.0, %v3351
  %v3353 = vpop.f32.mrf.mxu0
  %3354 = vmatprep.mubr.f32.mxu0 0.0
  %3355 = vmatmul.mubr.f32.gmra.mxu0 %v2463
  %v3356 = vpop.f32.mrf.mxu0
  %v3357 = vadd.f32 0.0, %v3356
  %v3358 = vpop.f32.mrf.mxu0
  %3359 = vmatprep.mubr.f32.mxu0 0.0
  %3360 = vmatmul.mubr.f32.gmra.mxu0 %v2466
  %v3361 = vpop.f32.mrf.mxu0
  %v3362 = vadd.f32 0.0, %v3361
  %v3363 = vpop.f32.mrf.mxu0
  %3364 = vmatprep.mubr.f32.mxu0 0.0
  %3365 = vmatmul.mubr.f32.gmra.mxu0 %v2469
  %v3366 = vpop.f32.mrf.mxu0
  %v3367 = vadd.f32 0.0, %v3366
  %v3368 = vpop.f32.mrf.mxu0
  %3369 = vmatprep.mubr.f32.mxu0 0.0
  %3370 = vmatmul.mubr.f32.gmra.mxu0 %v2472
  %v3371 = vpop.f32.mrf.mxu0
  %v3372 = vadd.f32 0.0, %v3371
  %v3373 = vpop.f32.mrf.mxu0
  %3374 = vmatprep.mubr.f32.mxu0 0.0
  %3375 = vmatmul.mubr.f32.gmra.mxu0 %v2475
  %v3376 = vpop.f32.mrf.mxu0
  %v3377 = vadd.f32 0.0, %v3376
  %v3378 = vpop.f32.mrf.mxu0
  %3379 = vmatprep.mubr.f32.mxu0 0.0
  %3380 = vmatmul.mubr.f32.gmra.mxu0 %v2478
  %v3381 = vpop.f32.mrf.mxu0
  %v3382 = vadd.f32 0.0, %v3381
  %v3383 = vpop.f32.mrf.mxu0
  %3384 = vmatprep.mubr.f32.mxu0 0.0
  %3385 = vmatmul.mubr.f32.gmra.mxu0 %v2481
  %v3386 = vpop.f32.mrf.mxu0
  %v3387 = vadd.f32 0.0, %v3386
  %v3388 = vpop.f32.mrf.mxu0
  %3389 = vmatprep.mubr.f32.mxu0 0.0
  %3390 = vmatmul.mubr.f32.gmra.mxu0 %v2484
  %v3391 = vpop.f32.mrf.mxu0
  %v3392 = vadd.f32 0.0, %v3391
  %v3393 = vpop.f32.mrf.mxu0
  %3394 = vmatprep.mubr.f32.mxu0 0.0
  %3395 = vmatmul.mubr.f32.gmra.mxu0 %v2487
  %v3396 = vpop.f32.mrf.mxu0
  %v3397 = vadd.f32 0.0, %v3396
  %v3398 = vpop.f32.mrf.mxu0
  %3399 = vmatprep.mubr.f32.mxu0 0.0
  %3400 = vmatmul.mubr.f32.gmra.mxu0 %v2490
  %v3401 = vpop.f32.mrf.mxu0
  %v3402 = vadd.f32 0.0, %v3401
  %v3403 = vpop.f32.mrf.mxu0
  %3404 = vmatprep.mubr.f32.mxu0 0.0
  %3405 = vmatmul.mubr.f32.gmra.mxu0 %v2493
  %v3406 = vpop.f32.mrf.mxu0
  %v3407 = vadd.f32 0.0, %v3406
  %v3408 = vpop.f32.mrf.mxu0
  %3409 = vmatprep.mubr.f32.mxu0 0.0
  %3410 = vmatmul.mubr.f32.gmra.mxu0 %v2496
  %v3411 = vpop.f32.mrf.mxu0
  %v3412 = vadd.f32 0.0, %v3411
  %v3413 = vpop.f32.mrf.mxu0
  %3414 = vmatprep.mubr.f32.mxu0 0.0
  %3415 = vmatmul.mubr.f32.gmra.mxu0 %v2499
  %v3416 = vpop.f32.mrf.mxu0
  %v3417 = vadd.f32 0.0, %v3416
  %v3418 = vpop.f32.mrf.mxu0
  %3419 = vmatprep.mubr.f32.mxu0 0.0
  %3420 = vmatmul.mubr.f32.gmra.mxu0 %v2502
  %v3421 = vpop.f32.mrf.mxu0
  %v3422 = vadd.f32 0.0, %v3421
  %v3423 = vpop.f32.mrf.mxu0
  %3424 = vmatprep.mubr.f32.mxu0 0.0
  %3425 = vmatmul.mubr.f32.gmra.mxu0 %v2505
  %v3426 = vpop.f32.mrf.mxu0
  %v3427 = vadd.f32 0.0, %v3426
  %v3428 = vpop.f32.mrf.mxu0
  %3429 = vmatprep.mubr.f32.mxu0 0.0
  %3430 = vmatmul.mubr.f32.gmra.mxu0 %v2508
  %v3431 = vpop.f32.mrf.mxu0
  %v3432 = vadd.f32 0.0, %v3431
  %v3433 = vpop.f32.mrf.mxu0
  %3434 = vmatprep.mubr.f32.mxu0 0.0
  %3435 = vmatmul.mubr.f32.gmra.mxu0 %v2511
  %v3436 = vpop.f32.mrf.mxu0
  %v3437 = vadd.f32 0.0, %v3436
  %v3438 = vpop.f32.mrf.mxu0
  %3439 = vmatprep.mubr.f32.mxu0 0.0
  %3440 = vmatmul.mubr.f32.gmra.mxu0 %v2514
  %v3441 = vpop.f32.mrf.mxu0
  %v3442 = vadd.f32 0.0, %v3441
  %v3443 = vpop.f32.mrf.mxu0
  %3444 = vmatprep.mubr.f32.mxu0 0.0
  %3445 = vmatmul.mubr.f32.gmra.mxu0 %v2517
  %v3446 = vpop.f32.mrf.mxu0
  %v3447 = vadd.f32 0.0, %v3446
  %v3448 = vpop.f32.mrf.mxu0
  %3449 = vmatprep.mubr.f32.mxu0 0.0
  %3450 = vmatmul.mubr.f32.gmra.mxu0 %v2520
  %v3451 = vpop.f32.mrf.mxu0
  %v3452 = vadd.f32 0.0, %v3451
  %v3453 = vpop.f32.mrf.mxu0
  %3454 = vmatprep.mubr.f32.mxu0 0.0
  %3455 = vmatmul.mubr.f32.gmra.mxu0 %v2523
  %v3456 = vpop.f32.mrf.mxu0
  %v3457 = vadd.f32 0.0, %v3456
  %v3458 = vpop.f32.mrf.mxu0
  %3459 = vmatprep.mubr.f32.mxu0 0.0
  %3460 = vmatmul.mubr.f32.gmra.mxu0 %v2526
  %v3461 = vpop.f32.mrf.mxu0
  %v3462 = vadd.f32 0.0, %v3461
  %v3463 = vpop.f32.mrf.mxu0
  %3464 = vmatprep.mubr.f32.mxu0 0.0
  %3465 = vmatmul.mubr.f32.gmra.mxu0 %v2529
  %v3466 = vpop.f32.mrf.mxu0
  %v3467 = vadd.f32 0.0, %v3466
  %v3468 = vpop.f32.mrf.mxu0
  %3469 = vmatprep.mubr.f32.mxu0 0.0
  %3470 = vmatmul.mubr.f32.gmra.mxu0 %v2532
  %v3471 = vpop.f32.mrf.mxu0
  %v3472 = vadd.f32 0.0, %v3471
  %v3473 = vpop.f32.mrf.mxu0
  %3474 = vmatprep.mubr.f32.mxu0 0.0
  %3475 = vmatmul.mubr.f32.gmra.mxu0 %v2535
  %v3476 = vpop.f32.mrf.mxu0
  %v3477 = vadd.f32 0.0, %v3476
  %v3478 = vpop.f32.mrf.mxu0
  %3479 = vmatprep.mubr.f32.mxu0 0.0
  %3480 = vmatmul.mubr.f32.gmra.mxu0 %v2538
  %v3481 = vpop.f32.mrf.mxu0
  %v3482 = vadd.f32 0.0, %v3481
  %v3483 = vpop.f32.mrf.mxu0
  %3484 = vmatprep.mubr.f32.mxu0 0.0
  %3485 = vmatmul.mubr.f32.gmra.mxu0 %v2541
  %v3486 = vpop.f32.mrf.mxu0
  %v3487 = vadd.f32 0.0, %v3486
  %v3488 = vpop.f32.mrf.mxu0
  %3489 = vmatprep.mubr.f32.mxu0 0.0
  %3490 = vmatmul.mubr.f32.gmra.mxu0 %v2544
  %v3491 = vpop.f32.mrf.mxu0
  %v3492 = vadd.f32 0.0, %v3491
  %v3493 = vpop.f32.mrf.mxu0
  %3494 = vmatprep.mubr.f32.mxu0 0.0
  %3495 = vmatmul.mubr.f32.gmra.mxu0 %v2547
  %v3496 = vpop.f32.mrf.mxu0
  %v3497 = vadd.f32 0.0, %v3496
  %v3498 = vpop.f32.mrf.mxu0
  %3499 = vmatprep.mubr.f32.mxu0 0.0
  %3500 = vmatmul.mubr.f32.gmra.mxu0 %v2550
  %v3501 = vpop.f32.mrf.mxu0
  %v3502 = vadd.f32 0.0, %v3501
  %v3503 = vpop.f32.mrf.mxu0
  %3504 = vmatprep.mubr.f32.mxu0 0.0
  %3505 = vmatmul.mubr.f32.gmra.mxu0 %v2553
  %v3506 = vpop.f32.mrf.mxu0
  %v3507 = vadd.f32 0.0, %v3506
  %v3508 = vpop.f32.mrf.mxu0
  %3509 = vmatprep.mubr.f32.mxu0 0.0
  %3510 = vmatmul.mubr.f32.gmra.mxu0 %v2556
  %v3511 = vpop.f32.mrf.mxu0
  %v3512 = vadd.f32 0.0, %v3511
  %v3513 = vpop.f32.mrf.mxu0
  %3514 = vmatprep.mubr.f32.mxu0 0.0
  %3515 = vmatmul.mubr.f32.gmra.mxu0 %v2559
  %v3516 = vpop.f32.mrf.mxu0
  %v3517 = vadd.f32 0.0, %v3516
  %v3518 = vpop.f32.mrf.mxu0
  %3519 = vmatprep.mubr.f32.mxu0 0.0
  %3520 = vmatmul.mubr.f32.gmra.mxu0 %v2562
  %v3521 = vpop.f32.mrf.mxu0
  %v3522 = vadd.f32 0.0, %v3521
  %v3523 = vpop.f32.mrf.mxu0
  %3524 = vmatprep.mubr.f32.mxu0 0.0
  %3525 = vmatmul.mubr.f32.gmra.mxu0 %v2565
  %v3526 = vpop.f32.mrf.mxu0
  %v3527 = vadd.f32 0.0, %v3526
  %v3528 = vpop.f32.mrf.mxu0
  %3529 = vmatprep.mubr.f32.mxu0 0.0
  %3530 = vmatmul.mubr.f32.gmra.mxu0 %v2568
  %v3531 = vpop.f32.mrf.mxu0
  %v3532 = vadd.f32 0.0, %v3531
  %v3533 = vpop.f32.mrf.mxu0
  %3534 = vmatprep.mubr.f32.mxu0 0.0
  %3535 = vmatmul.mubr.f32.gmra.mxu0 %v2571
  %v3536 = vpop.f32.mrf.mxu0
  %v3537 = vadd.f32 0.0, %v3536
  %v3538 = vpop.f32.mrf.mxu0
  %3539 = vmatprep.mubr.f32.mxu0 0.0
  %3540 = vmatmul.mubr.f32.gmra.mxu0 %v2574
  %v3541 = vpop.f32.mrf.mxu0
  %v3542 = vadd.f32 0.0, %v3541
  %v3543 = vpop.f32.mrf.mxu0
  %3544 = vmatprep.mubr.f32.mxu0 0.0
  %3545 = vmatmul.mubr.f32.gmra.mxu0 %v2577
  %v3546 = vpop.f32.mrf.mxu0
  %v3547 = vadd.f32 0.0, %v3546
  %v3548 = vpop.f32.mrf.mxu0
  %3549 = vmatprep.mubr.f32.mxu0 0.0
  %3550 = vmatmul.mubr.f32.gmra.mxu0 %v2580
  %v3551 = vpop.f32.mrf.mxu0
  %v3552 = vadd.f32 0.0, %v3551
  %v3553 = vpop.f32.mrf.mxu0
  %3554 = vmatprep.mubr.f32.mxu0 0.0
  %3555 = vmatmul.mubr.f32.gmra.mxu0 %v2583
  %v3556 = vpop.f32.mrf.mxu0
  %v3557 = vadd.f32 0.0, %v3556
  %v3558 = vpop.f32.mrf.mxu0
  %3559 = vmatprep.mubr.f32.mxu0 0.0
  %3560 = vmatmul.mubr.f32.gmra.mxu0 %v2586
  %v3561 = vpop.f32.mrf.mxu0
  %v3562 = vadd.f32 0.0, %v3561
  %v3563 = vpop.f32.mrf.mxu0
  %3564 = vmatprep.mubr.f32.mxu0 0.0
  %3565 = vmatmul.mubr.f32.gmra.mxu0 %v2589
  %v3566 = vpop.f32.mrf.mxu0
  %v3567 = vadd.f32 0.0, %v3566
  %v3568 = vpop.f32.mrf.mxu0
  %3569 = vmatprep.mubr.f32.mxu0 0.0
  %3570 = vmatmul.mubr.f32.gmra.mxu0 %v2592
  %v3571 = vpop.f32.mrf.mxu0
  %v3572 = vadd.f32 0.0, %v3571
  %v3573 = vpop.f32.mrf.mxu0
  %3574 = vmatprep.mubr.f32.mxu0 0.0
  %3575 = vmatmul.mubr.f32.gmra.mxu0 %v2595
  %v3576 = vpop.f32.mrf.mxu0
  %v3577 = vadd.f32 0.0, %v3576
  %v3578 = vpop.f32.mrf.mxu0
  %3579 = vmatprep.mubr.f32.mxu0 0.0
  %3580 = vmatmul.mubr.f32.gmra.mxu0 %v2598
  %v3581 = vpop.f32.mrf.mxu0
  %v3582 = vadd.f32 0.0, %v3581
  %v3583 = vpop.f32.mrf.mxu0
  %3584 = vmatprep.mubr.f32.mxu0 0.0
  %3585 = vmatmul.mubr.f32.gmra.mxu0 %v2601
  %v3586 = vpop.f32.mrf.mxu0
  %v3587 = vadd.f32 0.0, %v3586
  %v3588 = vpop.f32.mrf.mxu0
  %3589 = vmatprep.mubr.f32.mxu0 0.0
  %3590 = vmatmul.mubr.f32.gmra.mxu0 %v2604
  %v3591 = vpop.f32.mrf.mxu0
  %v3592 = vadd.f32 0.0, %v3591
  %v3593 = vpop.f32.mrf.mxu0
  %3594 = vmatprep.mubr.f32.mxu0 0.0
  %3595 = vmatmul.mubr.f32.gmra.mxu0 %v2607
  %v3596 = vpop.f32.mrf.mxu0
  %v3597 = vadd.f32 0.0, %v3596
  %v3598 = vpop.f32.mrf.mxu0
  %3599 = vmatprep.mubr.f32.mxu0 0.0
  %3600 = vmatmul.mubr.f32.gmra.mxu0 %v2610
  %v3601 = vpop.f32.mrf.mxu0
  %v3602 = vadd.f32 0.0, %v3601
  %v3603 = vpop.f32.mrf.mxu0
  %3604 = vmatprep.mubr.f32.mxu0 0.0
  %3605 = vmatmul.mubr.f32.gmra.mxu0 %v2613
  %v3606 = vpop.f32.mrf.mxu0
  %v3607 = vadd.f32 0.0, %v3606
  %v3608 = vpop.f32.mrf.mxu0
  %3609 = vmatprep.mubr.f32.mxu0 0.0
  %3610 = vmatmul.mubr.f32.gmra.mxu0 %v2616
  %v3611 = vpop.f32.mrf.mxu0
  %v3612 = vadd.f32 0.0, %v3611
  %v3613 = vpop.f32.mrf.mxu0
  %3614 = vmatprep.mubr.f32.mxu0 0.0
  %3615 = vmatmul.mubr.f32.gmra.mxu0 %v2619
  %v3616 = vpop.f32.mrf.mxu0
  %v3617 = vadd.f32 0.0, %v3616
  %v3618 = vpop.f32.mrf.mxu0
  %3619 = vmatprep.mubr.f32.mxu0 0.0
  %3620 = vmatmul.mubr.f32.gmra.mxu0 %v2622
  %v3621 = vpop.f32.mrf.mxu0
  %v3622 = vadd.f32 0.0, %v3621
  %v3623 = vpop.f32.mrf.mxu0
  %3624 = vmatprep.mubr.f32.mxu0 0.0
  %3625 = vmatmul.mubr.f32.gmra.mxu0 %v2625
  %v3626 = vpop.f32.mrf.mxu0
  %v3627 = vadd.f32 0.0, %v3626
  %v3628 = vpop.f32.mrf.mxu0
  %3629 = vmatprep.mubr.f32.mxu0 0.0
  %3630 = vmatmul.mubr.f32.gmra.mxu0 %v2628
  %v3631 = vpop.f32.mrf.mxu0
  %v3632 = vadd.f32 0.0, %v3631
  %v3633 = vpop.f32.mrf.mxu0
  %3634 = vmatprep.mubr.f32.mxu0 0.0
  %3635 = vmatmul.mubr.f32.gmra.mxu0 %v2631
  %v3636 = vpop.f32.mrf.mxu0
  %v3637 = vadd.f32 0.0, %v3636
  %v3638 = vpop.f32.mrf.mxu0
  %3639 = vmatprep.mubr.f32.mxu0 0.0
  %3640 = vmatmul.mubr.f32.gmra.mxu0 %v2634
  %v3641 = vpop.f32.mrf.mxu0
  %v3642 = vadd.f32 0.0, %v3641
  %v3643 = vpop.f32.mrf.mxu0
  %3644 = vmatprep.mubr.f32.mxu0 0.0
  %3645 = vmatmul.mubr.f32.gmra.mxu0 %v2637
  %v3646 = vpop.f32.mrf.mxu0
  %v3647 = vadd.f32 0.0, %v3646
  %v3648 = vpop.f32.mrf.mxu0
  %3649 = vmatprep.mubr.f32.mxu0 0.0
  %3650 = vmatmul.mubr.f32.gmra.mxu0 %v2640
  %v3651 = vpop.f32.mrf.mxu0
  %v3652 = vadd.f32 0.0, %v3651
  %v3653 = vpop.f32.mrf.mxu0
  %3654 = vmatprep.mubr.f32.mxu0 0.0
  %3655 = vmatmul.mubr.f32.gmra.mxu0 %v2643
  %v3656 = vpop.f32.mrf.mxu0
  %v3657 = vadd.f32 0.0, %v3656
  %v3658 = vpop.f32.mrf.mxu0
  %3659 = vmatprep.mubr.f32.mxu0 0.0
  %3660 = vmatmul.mubr.f32.gmra.mxu0 %v2646
  %v3661 = vpop.f32.mrf.mxu0
  %v3662 = vadd.f32 0.0, %v3661
  %v3663 = vpop.f32.mrf.mxu0
  %3664 = vmatprep.mubr.f32.mxu0 0.0
  %3665 = vmatmul.mubr.f32.gmra.mxu0 %v2649
  %v3666 = vpop.f32.mrf.mxu0
  %v3667 = vadd.f32 0.0, %v3666
  %v3668 = vpop.f32.mrf.mxu0
  %3669 = vmatprep.mubr.f32.mxu0 0.0
  %3670 = vmatmul.mubr.f32.gmra.mxu0 %v2652
  %v3671 = vpop.f32.mrf.mxu0
  %v3672 = vadd.f32 0.0, %v3671
  %v3673 = vpop.f32.mrf.mxu0
  %3674 = vmatprep.mubr.f32.mxu0 0.0
  %3675 = vmatmul.mubr.f32.gmra.mxu0 %v2655
  %v3676 = vpop.f32.mrf.mxu0
  %v3677 = vadd.f32 0.0, %v3676
  %v3678 = vpop.f32.mrf.mxu0
  %3679 = vmatprep.mubr.f32.mxu0 0.0
  %3680 = vmatmul.mubr.f32.gmra.mxu0 %v2658
  %v3681 = vpop.f32.mrf.mxu0
  %v3682 = vadd.f32 0.0, %v3681
  %v3683 = vpop.f32.mrf.mxu0
  %3684 = vmatprep.mubr.f32.mxu0 0.0
  %3685 = vmatmul.mubr.f32.gmra.mxu0 %v2661
  %v3686 = vpop.f32.mrf.mxu0
  %v3687 = vadd.f32 0.0, %v3686
  %v3688 = vpop.f32.mrf.mxu0
  %3689 = vmatprep.mubr.f32.mxu0 0.0
  %3690 = vmatmul.mubr.f32.gmra.mxu0 %v2664
  %v3691 = vpop.f32.mrf.mxu0
  %v3692 = vadd.f32 0.0, %v3691
  %v3693 = vpop.f32.mrf.mxu0
  %3694 = vmatprep.mubr.f32.mxu0 0.0
  %3695 = vmatmul.mubr.f32.gmra.mxu0 %v2667
  %v3696 = vpop.f32.mrf.mxu0
  %v3697 = vadd.f32 0.0, %v3696
  %v3698 = vpop.f32.mrf.mxu0
  %3699 = vmatprep.mubr.f32.mxu0 0.0
  %3700 = vmatmul.mubr.f32.gmra.mxu0 %v2670
  %v3701 = vpop.f32.mrf.mxu0
  %v3702 = vadd.f32 0.0, %v3701
  %v3703 = vpop.f32.mrf.mxu0
  %3704 = vmatprep.mubr.f32.mxu0 0.0
  %3705 = vmatmul.mubr.f32.gmra.mxu0 %v2673
  %v3706 = vpop.f32.mrf.mxu0
  %v3707 = vadd.f32 0.0, %v3706
  %v3708 = vpop.f32.mrf.mxu0
  %3709 = vmatprep.mubr.f32.mxu0 0.0
  %3710 = vmatmul.mubr.f32.gmra.mxu0 %v2676
  %v3711 = vpop.f32.mrf.mxu0
  %v3712 = vadd.f32 0.0, %v3711
  %v3713 = vpop.f32.mrf.mxu0
  %3714 = vmatprep.mubr.f32.mxu0 0.0
  %3715 = vmatmul.mubr.f32.gmra.mxu0 %v2679
  %v3716 = vpop.f32.mrf.mxu0
  %v3717 = vadd.f32 0.0, %v3716
  %v3718 = vpop.f32.mrf.mxu0
  %3719 = vmatprep.mubr.f32.mxu0 0.0
  %3720 = vmatmul.mubr.f32.gmra.mxu0 %v2682
  %v3721 = vpop.f32.mrf.mxu0
  %v3722 = vadd.f32 0.0, %v3721
  %v3723 = vpop.f32.mrf.mxu0
  %3724 = vmatprep.mubr.f32.mxu0 0.0
  %3725 = vmatmul.mubr.f32.gmra.mxu0 %v2685
  %v3726 = vpop.f32.mrf.mxu0
  %v3727 = vadd.f32 0.0, %v3726
  %v3728 = vpop.f32.mrf.mxu0
  %3729 = vmatprep.mubr.f32.mxu0 0.0
  %3730 = vmatmul.mubr.f32.gmra.mxu0 %v2688
  %v3731 = vpop.f32.mrf.mxu0
  %v3732 = vadd.f32 0.0, %v3731
  %v3733 = vpop.f32.mrf.mxu0
  %3734 = vmatprep.mubr.f32.mxu0 0.0
  %3735 = vmatmul.mubr.f32.gmra.mxu0 %v2691
  %v3736 = vpop.f32.mrf.mxu0
  %v3737 = vadd.f32 0.0, %v3736
  %v3738 = vpop.f32.mrf.mxu0
  %3739 = vmatprep.mubr.f32.mxu0 0.0
  %3740 = vmatmul.mubr.f32.gmra.mxu0 %v2694
  %v3741 = vpop.f32.mrf.mxu0
  %v3742 = vadd.f32 0.0, %v3741
  %v3743 = vpop.f32.mrf.mxu0
  %3744 = vmatprep.mubr.f32.mxu0 0.0
  %3745 = vmatmul.mubr.f32.gmra.mxu0 %v2697
  %v3746 = vpop.f32.mrf.mxu0
  %v3747 = vadd.f32 0.0, %v3746
  %v3748 = vpop.f32.mrf.mxu0
  %3749 = vmatprep.mubr.f32.mxu0 0.0
  %3750 = vmatmul.mubr.f32.gmra.mxu0 %v2700
  %v3751 = vpop.f32.mrf.mxu0
  %v3752 = vadd.f32 0.0, %v3751
  %v3753 = vpop.f32.mrf.mxu0
  %3754 = vmatprep.mubr.f32.mxu0 0.0
  %3755 = vmatmul.mubr.f32.gmra.mxu0 %v2703
  %v3756 = vpop.f32.mrf.mxu0
  %v3757 = vadd.f32 0.0, %v3756
  %v3758 = vpop.f32.mrf.mxu0
  %3759 = vmatprep.mubr.f32.mxu0 0.0
  %3760 = vmatmul.mubr.f32.gmra.mxu0 %v2706
  %v3761 = vpop.f32.mrf.mxu0
  %v3762 = vadd.f32 0.0, %v3761
  %v3763 = vpop.f32.mrf.mxu0
  %3764 = vmatprep.mubr.f32.mxu0 0.0
  %3765 = vmatmul.mubr.f32.gmra.mxu0 %v2709
  %v3766 = vpop.f32.mrf.mxu0
  %v3767 = vadd.f32 0.0, %v3766
  %v3768 = vpop.f32.mrf.mxu0
  %3769 = vmatprep.mubr.f32.mxu0 0.0
  %3770 = vmatmul.mubr.f32.gmra.mxu0 %v2712
  %v3771 = vpop.f32.mrf.mxu0
  %v3772 = vadd.f32 0.0, %v3771
  %v3773 = vpop.f32.mrf.mxu0
  %3774 = vmatprep.mubr.f32.mxu0 0.0
  %3775 = vmatmul.mubr.f32.gmra.mxu0 %v2715
  %v3776 = vpop.f32.mrf.mxu0
  %v3777 = vadd.f32 0.0, %v3776
  %v3778 = vpop.f32.mrf.mxu0
  %3779 = vmatprep.mubr.f32.mxu0 0.0
  %3780 = vmatmul.mubr.f32.gmra.mxu0 %v2718
  %v3781 = vpop.f32.mrf.mxu0
  %v3782 = vadd.f32 0.0, %v3781
  %v3783 = vpop.f32.mrf.mxu0
  %3784 = vmatprep.mubr.f32.mxu0 0.0
  %3785 = vmatmul.mubr.f32.gmra.mxu0 %v2721
  %v3786 = vpop.f32.mrf.mxu0
  %v3787 = vadd.f32 0.0, %v3786
  %v3788 = vpop.f32.mrf.mxu0
  %3789 = vmatprep.mubr.f32.mxu0 0.0
  %3790 = vmatmul.mubr.f32.gmra.mxu0 %v2724
  %v3791 = vpop.f32.mrf.mxu0
  %v3792 = vadd.f32 0.0, %v3791
  %v3793 = vpop.f32.mrf.mxu0
  %3794 = vmatprep.mubr.f32.mxu0 0.0
  %3795 = vmatmul.mubr.f32.gmra.mxu0 %v2727
  %v3796 = vpop.f32.mrf.mxu0
  %v3797 = vadd.f32 0.0, %v3796
  %v3798 = vpop.f32.mrf.mxu0
  %3799 = vmatprep.mubr.f32.mxu0 0.0
  %3800 = vmatmul.mubr.f32.gmra.mxu0 %v2730
  %v3801 = vpop.f32.mrf.mxu0
  %v3802 = vadd.f32 0.0, %v3801
  %v3803 = vpop.f32.mrf.mxu0
  %3804 = vmatprep.mubr.f32.mxu0 0.0
  %3805 = vmatmul.mubr.f32.gmra.mxu0 %v2733
  %v3806 = vpop.f32.mrf.mxu0
  %v3807 = vadd.f32 0.0, %v3806
  %v3808 = vpop.f32.mrf.mxu0
  %3809 = vmatprep.mubr.f32.mxu0 0.0
  %3810 = vmatmul.mubr.f32.gmra.mxu0 %v2736
  %v3811 = vpop.f32.mrf.mxu0
  %v3812 = vadd.f32 0.0, %v3811
  %v3813 = vpop.f32.mrf.mxu0
  %3814 = vmatprep.mubr.f32.mxu0 0.0
  %3815 = vmatmul.mubr.f32.gmra.mxu0 %v2739
  %v3816 = vpop.f32.mrf.mxu0
  %v3817 = vadd.f32 0.0, %v3816
  %v3818 = vpop.f32.mrf.mxu0
  %3819 = vmatprep.mubr.f32.mxu0 0.0
  %3820 = vmatmul.mubr.f32.gmra.mxu0 %v2742
  %v3821 = vpop.f32.mrf.mxu0
  %v3822 = vadd.f32 0.0, %v3821
  %v3823 = vpop.f32.mrf.mxu0
  %3824 = vmatprep.mubr.f32.mxu0 0.0
  %3825 = vmatmul.mubr.f32.gmra.mxu0 %v2745
  %v3826 = vpop.f32.mrf.mxu0
  %v3827 = vadd.f32 0.0, %v3826
  %v3828 = vpop.f32.mrf.mxu0
  %3829 = vmatprep.mubr.f32.mxu0 0.0
  %3830 = vmatmul.mubr.f32.gmra.mxu0 %v2748
  %v3831 = vpop.f32.mrf.mxu0
  %v3832 = vadd.f32 0.0, %v3831
  %v3833 = vpop.f32.mrf.mxu0
  %3834 = vmatprep.mubr.f32.mxu0 0.0
  %3835 = vmatmul.mubr.f32.gmra.mxu0 %v2751
  %v3836 = vpop.f32.mrf.mxu0
  %v3837 = vadd.f32 0.0, %v3836
  %v3838 = vpop.f32.mrf.mxu0
  %3839 = vmatprep.mubr.f32.mxu0 0.0
  %3840 = vmatmul.mubr.f32.gmra.mxu0 %v2754
  %v3841 = vpop.f32.mrf.mxu0
  %v3842 = vadd.f32 0.0, %v3841
  %v3843 = vpop.f32.mrf.mxu0
  %3844 = vmatprep.mubr.f32.mxu0 0.0
  %3845 = vmatmul.mubr.f32.gmra.mxu0 %v2757
  %v3846 = vpop.f32.mrf.mxu0
  %v3847 = vadd.f32 0.0, %v3846
  %v3848 = vpop.f32.mrf.mxu0
  %3849 = vmatprep.mubr.f32.mxu0 0.0
  %3850 = vmatmul.mubr.f32.gmra.mxu0 %v2760
  %v3851 = vpop.f32.mrf.mxu0
  %v3852 = vadd.f32 0.0, %v3851
  %v3853 = vpop.f32.mrf.mxu0
  %3854 = vmatprep.mubr.f32.mxu0 0.0
  %3855 = vmatmul.mubr.f32.gmra.mxu0 %v2763
  %v3856 = vpop.f32.mrf.mxu0
  %v3857 = vadd.f32 0.0, %v3856
  %v3858 = vpop.f32.mrf.mxu0
  %3859 = vmatprep.mubr.f32.mxu0 0.0
  %3860 = vmatmul.mubr.f32.gmra.mxu0 %v2766
  %v3861 = vpop.f32.mrf.mxu0
  %v3862 = vadd.f32 0.0, %v3861
  %v3863 = vpop.f32.mrf.mxu0
  %3864 = vmatprep.mubr.f32.mxu0 0.0
  %3865 = vmatmul.mubr.f32.gmra.mxu0 %v2769
  %v3866 = vpop.f32.mrf.mxu0
  %v3867 = vadd.f32 0.0, %v3866
  %v3868 = vpop.f32.mrf.mxu0
  %3869 = vmatprep.mubr.f32.mxu0 0.0
  %3870 = vmatmul.mubr.f32.gmra.mxu0 %v2772
  %v3871 = vpop.f32.mrf.mxu0
  %v3872 = vadd.f32 0.0, %v3871
  %v3873 = vpop.f32.mrf.mxu0
  %3874 = vmatprep.mubr.f32.mxu0 0.0
  %3875 = vmatmul.mubr.f32.gmra.mxu0 %v2775
  %v3876 = vpop.f32.mrf.mxu0
  %v3877 = vadd.f32 0.0, %v3876
  %v3878 = vpop.f32.mrf.mxu0
  %3879 = vmatprep.mubr.f32.mxu0 0.0
  %3880 = vmatmul.mubr.f32.gmra.mxu0 %v2778
  %v3881 = vpop.f32.mrf.mxu0
  %v3882 = vadd.f32 0.0, %v3881
  %v3883 = vpop.f32.mrf.mxu0
  %3884 = vmatprep.mubr.f32.mxu0 0.0
  %3885 = vmatmul.mubr.f32.gmra.mxu0 %v2781
  %v3886 = vpop.f32.mrf.mxu0
  %v3887 = vadd.f32 0.0, %v3886
  %v3888 = vpop.f32.mrf.mxu0
  %3889 = vmatprep.mubr.f32.mxu0 0.0
  %3890 = vmatmul.mubr.f32.gmra.mxu0 %v2784
  %v3891 = vpop.f32.mrf.mxu0
  %v3892 = vadd.f32 0.0, %v3891
  %v3893 = vpop.f32.mrf.mxu0
  %3894 = vmatprep.mubr.f32.mxu0 0.0
  %3895 = vmatmul.mubr.f32.gmra.mxu0 %v2787
  %v3896 = vpop.f32.mrf.mxu0
  %v3897 = vadd.f32 0.0, %v3896
  %v3898 = vpop.f32.mrf.mxu0
  %3899 = vmatprep.mubr.f32.mxu0 0.0
  %3900 = vmatmul.mubr.f32.gmra.mxu0 %v2790
  %v3901 = vpop.f32.mrf.mxu0
  %v3902 = vadd.f32 0.0, %v3901
  %v3903 = vpop.f32.mrf.mxu0
  %3904 = vmatprep.mubr.f32.mxu0 0.0
  %3905 = vmatmul.mubr.f32.gmra.mxu0 %v2793
  %v3906 = vpop.f32.mrf.mxu0
  %v3907 = vadd.f32 0.0, %v3906
  %v3908 = vpop.f32.mrf.mxu0
  %3909 = vmatprep.mubr.f32.mxu0 0.0
  %3910 = vmatmul.mubr.f32.gmra.mxu0 %v2796
  %v3911 = vpop.f32.mrf.mxu0
  %v3912 = vadd.f32 0.0, %v3911
  %v3913 = vpop.f32.mrf.mxu0
  %3914 = vmatprep.mubr.f32.mxu0 0.0
  %3915 = vmatmul.mubr.f32.gmra.mxu0 %v2799
  %v3916 = vpop.f32.mrf.mxu0
  %v3917 = vadd.f32 0.0, %v3916
  %v3918 = vpop.f32.mrf.mxu0
  %3919 = vmatprep.mubr.f32.mxu0 0.0
  %3920 = vmatmul.mubr.f32.gmra.mxu0 %v2802
  %v3921 = vpop.f32.mrf.mxu0
  %v3922 = vadd.f32 0.0, %v3921
  %v3923 = vpop.f32.mrf.mxu0
  %3924 = vmatprep.mubr.f32.mxu0 0.0
  %3925 = vmatmul.mubr.f32.gmra.mxu0 %v2805
  %v3926 = vpop.f32.mrf.mxu0
  %v3927 = vadd.f32 0.0, %v3926
  %v3928 = vpop.f32.mrf.mxu0
  %3929 = vmatprep.mubr.f32.mxu0 0.0
  %3930 = vmatmul.mubr.f32.gmra.mxu0 %v2808
  %v3931 = vpop.f32.mrf.mxu0
  %v3932 = vadd.f32 0.0, %v3931
  %v3933 = vpop.f32.mrf.mxu0
  %3934 = vmatprep.mubr.f32.mxu0 0.0
  %3935 = vmatmul.mubr.f32.gmra.mxu0 %v2811
  %v3936 = vpop.f32.mrf.mxu0
  %v3937 = vadd.f32 0.0, %v3936
  %v3938 = vpop.f32.mrf.mxu0
  %3939 = vmatprep.mubr.f32.mxu0 0.0
  %3940 = vmatmul.mubr.f32.gmra.mxu0 %v2814
  %v3941 = vpop.f32.mrf.mxu0
  %v3942 = vadd.f32 0.0, %v3941
  %v3943 = vpop.f32.mrf.mxu0
  %3944 = vmatprep.mubr.f32.mxu0 0.0
  %3945 = vmatmul.mubr.f32.gmra.mxu0 %v2817
  %v3946 = vpop.f32.mrf.mxu0
  %v3947 = vadd.f32 0.0, %v3946
  %v3948 = vpop.f32.mrf.mxu0
  %3949 = vmatprep.mubr.f32.mxu0 0.0
  %3950 = vmatmul.mubr.f32.gmra.mxu0 %v2820
  %v3951 = vpop.f32.mrf.mxu0
  %v3952 = vadd.f32 0.0, %v3951
  %v3953 = vpop.f32.mrf.mxu0
  %3954 = vmatprep.mubr.f32.mxu0 0.0
  %3955 = vmatmul.mubr.f32.gmra.mxu0 %v2823
  %v3956 = vpop.f32.mrf.mxu0
  %v3957 = vadd.f32 0.0, %v3956
  %v3958 = vpop.f32.mrf.mxu0
  %3959 = vmatprep.mubr.f32.mxu0 0.0
  %3960 = vmatmul.mubr.f32.gmra.mxu0 %v2826
  %v3961 = vpop.f32.mrf.mxu0
  %v3962 = vadd.f32 0.0, %v3961
  %v3963 = vpop.f32.mrf.mxu0
  %3964 = vmatprep.mubr.f32.mxu0 0.0
  %3965 = vmatmul.mubr.f32.gmra.mxu0 %v2829
  %v3966 = vpop.f32.mrf.mxu0
  %v3967 = vadd.f32 0.0, %v3966
  %v3968 = vpop.f32.mrf.mxu0
  %3969 = vmatprep.mubr.f32.mxu0 0.0
  %3970 = vmatmul.mubr.f32.gmra.mxu0 %v2832
  %v3971 = vpop.f32.mrf.mxu0
  %v3972 = vadd.f32 0.0, %v3971
  %v3973 = vpop.f32.mrf.mxu0
  %3974 = vmatprep.mubr.f32.mxu0 0.0
  %3975 = vmatmul.mubr.f32.gmra.mxu0 %v2835
  %v3976 = vpop.f32.mrf.mxu0
  %v3977 = vadd.f32 0.0, %v3976
  %v3978 = vpop.f32.mrf.mxu0
  %3979 = vmatprep.mubr.f32.mxu0 0.0
  %3980 = vmatmul.mubr.f32.gmra.mxu0 %v2838
  %v3981 = vpop.f32.mrf.mxu0
  %v3982 = vadd.f32 0.0, %v3981
  %v3983 = vpop.f32.mrf.mxu0
  %3984 = vmatprep.mubr.f32.mxu0 0.0
  %3985 = vmatmul.mubr.f32.gmra.mxu0 %v2841
  %v3986 = vpop.f32.mrf.mxu0
  %v3987 = vadd.f32 0.0, %v3986
  %v3988 = vpop.f32.mrf.mxu0
  %3989 = vmatprep.mubr.f32.mxu0 0.0
  %3990 = vmatmul.mubr.f32.gmra.mxu0 %v2844
  %v3991 = vpop.f32.mrf.mxu0
  %v3992 = vadd.f32 0.0, %v3991
  %v3993 = vpop.f32.mrf.mxu0
  %3994 = vmatprep.mubr.f32.mxu0 0.0
  %3995 = vmatmul.mubr.f32.gmra.mxu0 %v2847
  %v3996 = vpop.f32.mrf.mxu0
  %v3997 = vadd.f32 0.0, %v3996
  %v3998 = vpop.f32.mrf.mxu0
  %3999 = vmatprep.mubr.f32.mxu0 0.0
  %4000 = vmatmul.mubr.f32.gmra.mxu0 %v2850
  %v4001 = vpop.f32.mrf.mxu0
  %v4002 = vadd.f32 0.0, %v4001
  %v4003 = vpop.f32.mrf.mxu0
  %4004 = vmatprep.mubr.f32.mxu0 0.0
  %4005 = vmatmul.mubr.f32.gmra.mxu0 %v2853
  %v4006 = vpop.f32.mrf.mxu0
  %v4007 = vadd.f32 0.0, %v4006
  %v4008 = vpop.f32.mrf.mxu0
  %4009 = vmatprep.mubr.f32.mxu0 0.0
  %4010 = vmatmul.mubr.f32.gmra.mxu0 %v2856
  %v4011 = vpop.f32.mrf.mxu0
  %v4012 = vadd.f32 0.0, %v4011
  %v4013 = vpop.f32.mrf.mxu0
  %4014 = vmatprep.mubr.f32.mxu0 0.0
  %4015 = vmatmul.mubr.f32.gmra.mxu0 %v2859
  %v4016 = vpop.f32.mrf.mxu0
  %v4017 = vadd.f32 0.0, %v4016
  %v4018 = vpop.f32.mrf.mxu0
  %4019 = vmatprep.mubr.f32.mxu0 0.0
  %4020 = vmatmul.mubr.f32.gmra.mxu0 %v2862
  %v4021 = vpop.f32.mrf.mxu0
  %v4022 = vadd.f32 0.0, %v4021
  %v4023 = vpop.f32.mrf.mxu0
  %4024 = vmatprep.mubr.f32.mxu0 0.0
  %4025 = vmatmul.mubr.f32.gmra.mxu0 %v2865
  %v4026 = vpop.f32.mrf.mxu0
  %v4027 = vadd.f32 0.0, %v4026
  %v4028 = vpop.f32.mrf.mxu0
  %4029 = vmatprep.mubr.f32.mxu0 0.0
  %4030 = vmatmul.mubr.f32.gmra.mxu0 %v2868
  %v4031 = vpop.f32.mrf.mxu0
  %v4032 = vadd.f32 0.0, %v4031
  %v4033 = vpop.f32.mrf.mxu0
  %4034 = vmatprep.mubr.f32.mxu0 0.0
  %4035 = vmatmul.mubr.f32.gmra.mxu0 %v2871
  %v4036 = vpop.f32.mrf.mxu0
  %v4037 = vadd.f32 0.0, %v4036
  %v4038 = vpop.f32.mrf.mxu0
  %4039 = vmatprep.mubr.f32.mxu0 0.0
  %4040 = vmatmul.mubr.f32.gmra.mxu0 %v2874
  %v4041 = vpop.f32.mrf.mxu0
  %v4042 = vadd.f32 0.0, %v4041
  %v4043 = vpop.f32.mrf.mxu0
  %4044 = vmatprep.mubr.f32.mxu0 0.0
  %4045 = vmatmul.mubr.f32.gmra.mxu0 %v2877
  %v4046 = vpop.f32.mrf.mxu0
  %v4047 = vadd.f32 0.0, %v4046
  %v4048 = vpop.f32.mrf.mxu0
  %4049 = vmatprep.mubr.f32.mxu0 0.0
  %4050 = vmatmul.mubr.f32.gmra.mxu0 %v2880
  %v4051 = vpop.f32.mrf.mxu0
  %v4052 = vadd.f32 0.0, %v4051
  %v4053 = vpop.f32.mrf.mxu0
  %4054 = vmatprep.mubr.f32.mxu0 0.0
  %4055 = vmatmul.mubr.f32.gmra.mxu0 %v2883
  %v4056 = vpop.f32.mrf.mxu0
  %v4057 = vadd.f32 0.0, %v4056
  %v4058 = vpop.f32.mrf.mxu0
  %4059 = vmatprep.mubr.f32.mxu0 0.0
  %4060 = vmatmul.mubr.f32.gmra.mxu0 %v2886
  %v4061 = vpop.f32.mrf.mxu0
  %v4062 = vadd.f32 0.0, %v4061
  %v4063 = vpop.f32.mrf.mxu0
  %4064 = vmatprep.mubr.f32.mxu0 0.0
  %4065 = vmatmul.mubr.f32.gmra.mxu0 %v2889
  %v4066 = vpop.f32.mrf.mxu0
  %v4067 = vadd.f32 0.0, %v4066
  %v4068 = vpop.f32.mrf.mxu0
  %4069 = vmatprep.mubr.f32.mxu0 0.0
  %4070 = vmatmul.mubr.f32.gmra.mxu0 %v2892
  %v4071 = vpop.f32.mrf.mxu0
  %v4072 = vadd.f32 0.0, %v4071
  %v4073 = vpop.f32.mrf.mxu0
  %4074 = vmatprep.mubr.f32.mxu0 0.0
  %4075 = vmatmul.mubr.f32.gmra.mxu0 %v2895
  %v4076 = vpop.f32.mrf.mxu0
  %v4077 = vadd.f32 0.0, %v4076
  %v4078 = vpop.f32.mrf.mxu0
  %4079 = vmatprep.mubr.f32.mxu0 0.0
  %4080 = vmatmul.mubr.f32.gmra.mxu0 %v2898
  %v4081 = vpop.f32.mrf.mxu0
  %v4082 = vadd.f32 0.0, %v4081
  %v4083 = vpop.f32.mrf.mxu0
  %4084 = vmatprep.mubr.f32.mxu0 0.0
  %4085 = vmatmul.mubr.f32.gmra.mxu0 %v2901
  %v4086 = vpop.f32.mrf.mxu0
  %v4087 = vadd.f32 0.0, %v4086
  %v4088 = vpop.f32.mrf.mxu0
  %4089 = vmatprep.mubr.f32.mxu0 0.0
  %4090 = vmatmul.mubr.f32.gmra.mxu0 %v2904
  %v4091 = vpop.f32.mrf.mxu0
  %v4092 = vadd.f32 0.0, %v4091
  %v4093 = vpop.f32.mrf.mxu0
  %4094 = vmatprep.mubr.f32.mxu0 0.0
  %4095 = vmatmul.mubr.f32.gmra.mxu0 %v2907
  %v4096 = vpop.f32.mrf.mxu0
  %v4097 = vadd.f32 0.0, %v4096
  %v4098 = vpop.f32.mrf.mxu0
  %4099 = vmatprep.mubr.f32.mxu0 0.0
  %4100 = vmatmul.mubr.f32.gmra.mxu0 %v2910
  %v4101 = vpop.f32.mrf.mxu0
  %v4102 = vadd.f32 0.0, %v4101
  %v4103 = vpop.f32.mrf.mxu0
  %4104 = vmatprep.mubr.f32.mxu0 0.0
  %4105 = vmatmul.mubr.f32.gmra.mxu0 %v2913
  %v4106 = vpop.f32.mrf.mxu0
  %v4107 = vadd.f32 0.0, %v4106
  %v4108 = vpop.f32.mrf.mxu0
  %4109 = vmatprep.mubr.f32.mxu0 0.0
  %4110 = vmatmul.mubr.f32.gmra.mxu0 %v2916
  %v4111 = vpop.f32.mrf.mxu0
  %v4112 = vadd.f32 0.0, %v4111
  %v4113 = vpop.f32.mrf.mxu0
  %4114 = vmatprep.mubr.f32.mxu0 0.0
  %4115 = vmatmul.mubr.f32.gmra.mxu0 %v2919
  %v4116 = vpop.f32.mrf.mxu0
  %v4117 = vadd.f32 0.0, %v4116
  %v4118 = vpop.f32.mrf.mxu0
  %4119 = vmatprep.mubr.f32.mxu0 0.0
  %4120 = vmatmul.mubr.f32.gmra.mxu0 %v2922
  %v4121 = vpop.f32.mrf.mxu0
  %v4122 = vadd.f32 0.0, %v4121
  %v4123 = vpop.f32.mrf.mxu0
  %4124 = vmatprep.mubr.f32.mxu0 0.0
  %4125 = vmatmul.mubr.f32.gmra.mxu0 %v2925
  %v4126 = vpop.f32.mrf.mxu0
  %v4127 = vadd.f32 0.0, %v4126
  %v4128 = vpop.f32.mrf.mxu0
  %4129 = vmatprep.mubr.f32.mxu0 0.0
  %4130 = vmatmul.mubr.f32.gmra.mxu0 %v2928
  %v4131 = vpop.f32.mrf.mxu0
  %v4132 = vadd.f32 0.0, %v4131
  %v4133 = vpop.f32.mrf.mxu0
  %4134 = vmatprep.mubr.f32.mxu0 0.0
  %4135 = vmatmul.mubr.f32.gmra.mxu0 %v2931
  %v4136 = vpop.f32.mrf.mxu0
  %v4137 = vadd.f32 0.0, %v4136
  %v4138 = vpop.f32.mrf.mxu0
  %4139 = vmatprep.mubr.f32.mxu0 0.0
  %4140 = vmatmul.mubr.f32.gmra.mxu0 %v2934
  %v4141 = vpop.f32.mrf.mxu0
  %v4142 = vadd.f32 0.0, %v4141
  %v4143 = vpop.f32.mrf.mxu0
  %4144 = vmatprep.mubr.f32.mxu0 0.0
  %4145 = vmatmul.mubr.f32.gmra.mxu0 %v2937
  %v4146 = vpop.f32.mrf.mxu0
  %v4147 = vadd.f32 0.0, %v4146
  %v4148 = vpop.f32.mrf.mxu0
  %4149 = vmatprep.mubr.f32.mxu0 0.0
  %4150 = vmatmul.mubr.f32.gmra.mxu0 %v2940
  %v4151 = vpop.f32.mrf.mxu0
  %v4152 = vadd.f32 0.0, %v4151
  %v4153 = vpop.f32.mrf.mxu0
  %4154 = vmatprep.mubr.f32.mxu0 0.0
  %4155 = vmatmul.mubr.f32.gmra.mxu0 %v2943
  %v4156 = vpop.f32.mrf.mxu0
  %v4157 = vadd.f32 0.0, %v4156
  %v4158 = vpop.f32.mrf.mxu0
  %4159 = vmatprep.mubr.f32.mxu0 0.0
  %4160 = vmatmul.mubr.f32.gmra.mxu0 %v2946
  %v4161 = vpop.f32.mrf.mxu0
  %v4162 = vadd.f32 0.0, %v4161
  %v4163 = vpop.f32.mrf.mxu0
  %4164 = vmatprep.mubr.f32.mxu0 0.0
  %4165 = vmatmul.mubr.f32.gmra.mxu0 %v2949
  %v4166 = vpop.f32.mrf.mxu0
  %v4167 = vadd.f32 0.0, %v4166
  %v4168 = vpop.f32.mrf.mxu0
  %4169 = vmatprep.mubr.f32.mxu0 0.0
  %4170 = vmatmul.mubr.f32.gmra.mxu0 %v2952
  %v4171 = vpop.f32.mrf.mxu0
  %v4172 = vadd.f32 0.0, %v4171
  %v4173 = vpop.f32.mrf.mxu0
  %4174 = vmatprep.mubr.f32.mxu0 0.0
  %4175 = vmatmul.mubr.f32.gmra.mxu0 %v2955
  %v4176 = vpop.f32.mrf.mxu0
  %v4177 = vadd.f32 0.0, %v4176
  %v4178 = vpop.f32.mrf.mxu0
  %4179 = vmatprep.mubr.f32.mxu0 0.0
  %4180 = vmatmul.mubr.f32.gmra.mxu0 %v2958
  %v4181 = vpop.f32.mrf.mxu0
  %v4182 = vadd.f32 0.0, %v4181
  %v4183 = vpop.f32.mrf.mxu0
  %4184 = vmatprep.mubr.f32.mxu0 0.0
  %4185 = vmatmul.mubr.f32.gmra.mxu0 %v2961
  %v4186 = vpop.f32.mrf.mxu0
  %v4187 = vadd.f32 0.0, %v4186
  %v4188 = vpop.f32.mrf.mxu0
  %4189 = vmatprep.mubr.f32.mxu0 0.0
  %4190 = vmatmul.mubr.f32.gmra.mxu0 %v2964
  %v4191 = vpop.f32.mrf.mxu0
  %v4192 = vadd.f32 0.0, %v4191
  %v4193 = vpop.f32.mrf.mxu0
  %4194 = vmatprep.mubr.f32.mxu0 0.0
  %4195 = vmatmul.mubr.f32.gmra.mxu0 %v2967
  %v4196 = vpop.f32.mrf.mxu0
  %v4197 = vadd.f32 0.0, %v4196
  %v4198 = vpop.f32.mrf.mxu0
  %4199 = vmatprep.mubr.f32.mxu0 0.0
  %4200 = vmatmul.mubr.f32.gmra.mxu0 %v2970
  %v4201 = vpop.f32.mrf.mxu0
  %v4202 = vadd.f32 0.0, %v4201
  %v4203 = vpop.f32.mrf.mxu0
  %4204 = vmatprep.mubr.f32.mxu0 0.0
  %4205 = vmatmul.mubr.f32.gmra.mxu0 %v2973
  %v4206 = vpop.f32.mrf.mxu0
  %v4207 = vadd.f32 0.0, %v4206
  %v4208 = vpop.f32.mrf.mxu0
  %4209 = vmatprep.mubr.f32.mxu0 0.0
  %4210 = vmatmul.mubr.f32.gmra.mxu0 %v2976
  %v4211 = vpop.f32.mrf.mxu0
  %v4212 = vadd.f32 0.0, %v4211
  %v4213 = vpop.f32.mrf.mxu0
  %4214 = vmatprep.mubr.f32.mxu0 0.0
  %4215 = vmatmul.mubr.f32.gmra.mxu0 %v2979
  %v4216 = vpop.f32.mrf.mxu0
  %v4217 = vadd.f32 0.0, %v4216
  %v4218 = vpop.f32.mrf.mxu0
  %4219 = vmatprep.mubr.f32.mxu0 0.0
  %4220 = vmatmul.mubr.f32.gmra.mxu0 %v2982
  %v4221 = vpop.f32.mrf.mxu0
  %v4222 = vadd.f32 0.0, %v4221
  %v4223 = vpop.f32.mrf.mxu0
  %4224 = vmatprep.mubr.f32.mxu0 0.0
  %4225 = vmatmul.mubr.f32.gmra.mxu0 %v2985
  %v4226 = vpop.f32.mrf.mxu0
  %v4227 = vadd.f32 0.0, %v4226
  %v4228 = vpop.f32.mrf.mxu0
  %4229 = vmatprep.mubr.f32.mxu0 0.0
  %4230 = vmatmul.mubr.f32.gmra.mxu0 %v2988
  %v4231 = vpop.f32.mrf.mxu0
  %v4232 = vadd.f32 0.0, %v4231
  %v4233 = vpop.f32.mrf.mxu0
  %4234 = vmatprep.mubr.f32.mxu0 0.0
  %4235 = vmatmul.mubr.f32.gmra.mxu0 %v2991
  %v4236 = vpop.f32.mrf.mxu0
  %v4237 = vadd.f32 0.0, %v4236
  %v4238 = vpop.f32.mrf.mxu0
  %4239 = vmatprep.mubr.f32.mxu0 0.0
  %4240 = vmatmul.mubr.f32.gmra.mxu0 %v2994
  %v4241 = vpop.f32.mrf.mxu0
  %v4242 = vadd.f32 0.0, %v4241
  %v4243 = vpop.f32.mrf.mxu0
  %4244 = vmatprep.mubr.f32.mxu0 0.0
  %4245 = vmatmul.mubr.f32.gmra.mxu0 %v2997
  %v4246 = vpop.f32.mrf.mxu0
  %v4247 = vadd.f32 0.0, %v4246
  %v4248 = vpop.f32.mrf.mxu0
  %4249 = vmatprep.mubr.f32.mxu0 0.0
  %4250 = vmatmul.mubr.f32.gmra.mxu0 %v3000
  %v4251 = vpop.f32.mrf.mxu0
  %v4252 = vadd.f32 0.0, %v4251
  %v4253 = vpop.f32.mrf.mxu0
  %4254 = vmatprep.mubr.f32.mxu0 0.0
  %4255 = vmatmul.mubr.f32.gmra.mxu0 %v3003
  %v4256 = vpop.f32.mrf.mxu0
  %v4257 = vadd.f32 0.0, %v4256
  %v4258 = vpop.f32.mrf.mxu0
  %4259 = vmatprep.mubr.f32.mxu0 0.0
  %4260 = vmatmul.mubr.f32.gmra.mxu0 %v3006
  %v4261 = vpop.f32.mrf.mxu0
  %v4262 = vadd.f32 0.0, %v4261
  %v4263 = vpop.f32.mrf.mxu0
  %4264 = vmatprep.mubr.f32.mxu0 0.0
  %4265 = vmatmul.mubr.f32.gmra.mxu0 %v3009
  %v4266 = vpop.f32.mrf.mxu0
  %v4267 = vadd.f32 0.0, %v4266
  %v4268 = vpop.f32.mrf.mxu0
  %4269 = vmatprep.mubr.f32.mxu0 0.0
  %4270 = vmatmul.mubr.f32.gmra.mxu0 %v3012
  %v4271 = vpop.f32.mrf.mxu0
  %v4272 = vadd.f32 0.0, %v4271
  %v4273 = vpop.f32.mrf.mxu0
  %4274 = vmatprep.mubr.f32.mxu0 0.0
  %4275 = vmatmul.mubr.f32.gmra.mxu0 %v3015
  %v4276 = vpop.f32.mrf.mxu0
  %v4277 = vadd.f32 0.0, %v4276
  %v4278 = vpop.f32.mrf.mxu0
  %4279 = vmatprep.mubr.f32.mxu0 0.0
  %4280 = vmatmul.mubr.f32.gmra.mxu0 %v3018
  %v4281 = vpop.f32.mrf.mxu0
  %v4282 = vadd.f32 0.0, %v4281
  %v4283 = vpop.f32.mrf.mxu0
  %4284 = vmatprep.mubr.f32.mxu0 0.0
  %4285 = vmatmul.mubr.f32.gmra.mxu0 %v3021
  %v4286 = vpop.f32.mrf.mxu0
  %v4287 = vadd.f32 0.0, %v4286
  %v4288 = vpop.f32.mrf.mxu0
  %4289 = vmatprep.mubr.f32.mxu0 0.0
  %4290 = vmatmul.mubr.f32.gmra.mxu0 %v3024
  %v4291 = vpop.f32.mrf.mxu0
  %v4292 = vadd.f32 0.0, %v4291
  %v4293 = vpop.f32.mrf.mxu0
  %4294 = vmatprep.mubr.f32.mxu0 0.0
  %4295 = vmatmul.mubr.f32.gmra.mxu0 %v3027
  %v4296 = vpop.f32.mrf.mxu0
  %v4297 = vadd.f32 0.0, %v4296
  %v4298 = vpop.f32.mrf.mxu0
  %4299 = vmatprep.mubr.f32.mxu0 0.0
  %4300 = vmatmul.mubr.f32.gmra.mxu0 %v3030
  %v4301 = vpop.f32.mrf.mxu0
  %v4302 = vadd.f32 0.0, %v4301
  %v4303 = vpop.f32.mrf.mxu0
  %4304 = vmatprep.mubr.f32.mxu0 0.0
  %4305 = vmatmul.mubr.f32.gmra.mxu0 %v3033
  %v4306 = vpop.f32.mrf.mxu0
  %v4307 = vadd.f32 0.0, %v4306
  %v4308 = vpop.f32.mrf.mxu0
  %4309 = vmatprep.mubr.f32.mxu0 0.0
  %4310 = vmatmul.mubr.f32.gmra.mxu0 %v3036
  %v4311 = vpop.f32.mrf.mxu0
  %v4312 = vadd.f32 0.0, %v4311
  %v4313 = vpop.f32.mrf.mxu0
  %4314 = vmatprep.mubr.f32.mxu0 0.0
  %4315 = vmatmul.mubr.f32.gmra.mxu0 %v3039
  %v4316 = vpop.f32.mrf.mxu0
  %v4317 = vadd.f32 0.0, %v4316
  %v4318 = vpop.f32.mrf.mxu0
  %4319 = vmatprep.mubr.f32.mxu0 0.0
  %4320 = vmatmul.mubr.f32.gmra.mxu0 %v3042
  %v4321 = vpop.f32.mrf.mxu0
  %v4322 = vadd.f32 0.0, %v4321
  %v4323 = vpop.f32.mrf.mxu0
  %4324 = vmatprep.mubr.f32.mxu0 0.0
  %4325 = vmatmul.mubr.f32.gmra.mxu0 %v3045
  %v4326 = vpop.f32.mrf.mxu0
  %v4327 = vadd.f32 0.0, %v4326
  %v4328 = vpop.f32.mrf.mxu0
  %4329 = vmatprep.mubr.f32.mxu0 0.0
  %4330 = vmatmul.mubr.f32.gmra.mxu0 %v3048
  %v4331 = vpop.f32.mrf.mxu0
  %v4332 = vadd.f32 0.0, %v4331
  %v4333 = vpop.f32.mrf.mxu0
  %4334 = vmatprep.mubr.f32.mxu0 0.0
  %4335 = vmatmul.mubr.f32.gmra.mxu0 %v3051
  %v4336 = vpop.f32.mrf.mxu0
  %v4337 = vadd.f32 0.0, %v4336
  %v4338 = vpop.f32.mrf.mxu0
  %4339 = vmatprep.mubr.f32.mxu0 0.0
  %4340 = vmatmul.mubr.f32.gmra.mxu0 %v3054
  %v4341 = vpop.f32.mrf.mxu0
  %v4342 = vadd.f32 0.0, %v4341
  %v4343 = vpop.f32.mrf.mxu0
  %4344 = vmatprep.mubr.f32.mxu0 0.0
  %4345 = vmatmul.mubr.f32.gmra.mxu0 %v3057
  %v4346 = vpop.f32.mrf.mxu0
  %v4347 = vadd.f32 0.0, %v4346
  %v4348 = vpop.f32.mrf.mxu0
  %4349 = vmatprep.mubr.f32.mxu0 0.0
  %4350 = vmatmul.mubr.f32.gmra.mxu0 %v3060
  %v4351 = vpop.f32.mrf.mxu0
  %v4352 = vadd.f32 0.0, %v4351
  %v4353 = vpop.f32.mrf.mxu0
  %4354 = vmatprep.mubr.f32.mxu0 0.0
  %4355 = vmatmul.mubr.f32.gmra.mxu0 %v3063
  %v4356 = vpop.f32.mrf.mxu0
  %v4357 = vadd.f32 0.0, %v4356
  %v4358 = vpop.f32.mrf.mxu0
  %4359 = vmatprep.mubr.f32.mxu0 0.0
  %4360 = vmatmul.mubr.f32.gmra.mxu0 %v3066
  %v4361 = vpop.f32.mrf.mxu0
  %v4362 = vadd.f32 0.0, %v4361
  %v4363 = vpop.f32.mrf.mxu0
  %4364 = vmatprep.mubr.f32.mxu0 0.0
  %4365 = vmatmul.mubr.f32.gmra.mxu0 %v3069
  %v4366 = vpop.f32.mrf.mxu0
  %v4367 = vadd.f32 0.0, %v4366
  %v4368 = vpop.f32.mrf.mxu0
  %4369 = vmatprep.mubr.f32.mxu0 0.0
  %4370 = vmatmul.mubr.f32.gmra.mxu0 %v3072
  %v4371 = vpop.f32.mrf.mxu0
  %v4372 = vadd.f32 0.0, %v4371
  %v4373 = vpop.f32.mrf.mxu0
  %4374 = vmatprep.mubr.f32.mxu0 0.0
  %4375 = vmatmul.mubr.f32.gmra.mxu0 %v3075
  %v4376 = vpop.f32.mrf.mxu0
  %v4377 = vadd.f32 0.0, %v4376
  %v4378 = vpop.f32.mrf.mxu0
  %4379 = vmatprep.mubr.f32.mxu0 0.0
  %4380 = vmatmul.mubr.f32.gmra.mxu0 %v3078
  %v4381 = vpop.f32.mrf.mxu0
  %v4382 = vadd.f32 0.0, %v4381
  %v4383 = vpop.f32.mrf.mxu0
  %4384 = vmatprep.mubr.f32.mxu0 0.0
  %4385 = vmatmul.mubr.f32.gmra.mxu0 %v3081
  %v4386 = vpop.f32.mrf.mxu0
  %v4387 = vadd.f32 0.0, %v4386
  %v4388 = vpop.f32.mrf.mxu0
  %4389 = vmatprep.mubr.f32.mxu0 0.0
  %4390 = vmatmul.mubr.f32.gmra.mxu0 %v3084
  %v4391 = vpop.f32.mrf.mxu0
  %v4392 = vadd.f32 0.0, %v4391
  %v4393 = vpop.f32.mrf.mxu0
  %4394 = vmatprep.mubr.f32.mxu0 0.0
  %4395 = vmatmul.mubr.f32.gmra.mxu0 %v3087
  %v4396 = vpop.f32.mrf.mxu0
  %v4397 = vadd.f32 0.0, %v4396
  %v4398 = vpop.f32.mrf.mxu0
  %4399 = vmatprep.mubr.f32.mxu0 0.0
  %4400 = vmatmul.mubr.f32.gmra.mxu0 %v3090
  %v4401 = vpop.f32.mrf.mxu0
  %v4402 = vadd.f32 0.0, %v4401
  %v4403 = vpop.f32.mrf.mxu0
  %4404 = vmatprep.mubr.f32.mxu0 0.0
  %4405 = vmatmul.mubr.f32.gmra.mxu0 %v3093
  %v4406 = vpop.f32.mrf.mxu0
  %v4407 = vadd.f32 0.0, %v4406
  %v4408 = vpop.f32.mrf.mxu0
  %4409 = vmatprep.mubr.f32.mxu0 0.0
  %4410 = vmatmul.mubr.f32.gmra.mxu0 %v3096
  %v4411 = vpop.f32.mrf.mxu0
  %v4412 = vadd.f32 0.0, %v4411
  %v4413 = vpop.f32.mrf.mxu0
  %4414 = vmatprep.mubr.f32.mxu0 0.0
  %4415 = vmatmul.mubr.f32.gmra.mxu0 %v3099
  %v4416 = vpop.f32.mrf.mxu0
  %v4417 = vadd.f32 0.0, %v4416
  %v4418 = vpop.f32.mrf.mxu0
  %4419 = vmatprep.mubr.f32.mxu0 0.0
  %4420 = vmatmul.mubr.f32.gmra.mxu0 %v3102
  %v4421 = vpop.f32.mrf.mxu0
  %v4422 = vadd.f32 0.0, %v4421
  %v4423 = vpop.f32.mrf.mxu0
  %4424 = vmatprep.mubr.f32.mxu0 0.0
  %4425 = vmatmul.mubr.f32.gmra.mxu0 %v3105
  %v4426 = vpop.f32.mrf.mxu0
  %v4427 = vadd.f32 0.0, %v4426
  %v4428 = vpop.f32.mrf.mxu0
  %4429 = vmatprep.mubr.f32.mxu0 0.0
  %4430 = vmatmul.mubr.f32.gmra.mxu0 %v3108
  %v4431 = vpop.f32.mrf.mxu0
  %v4432 = vadd.f32 0.0, %v4431
  %v4433 = vpop.f32.mrf.mxu0
  %4434 = vmatprep.mubr.f32.mxu0 0.0
  %4435 = vmatmul.mubr.f32.gmra.mxu0 %v3111
  %v4436 = vpop.f32.mrf.mxu0
  %v4437 = vadd.f32 0.0, %v4436
  %v4438 = vpop.f32.mrf.mxu0
  %4439 = vmatprep.mubr.f32.mxu0 0.0
  %4440 = vmatmul.mubr.f32.gmra.mxu0 %v3114
  %v4441 = vpop.f32.mrf.mxu0
  %v4442 = vadd.f32 0.0, %v4441
  %v4443 = vpop.f32.mrf.mxu0
  %4444 = vmatprep.mubr.f32.mxu0 0.0
  %4445 = vmatmul.mubr.f32.gmra.mxu0 %v3117
  %v4446 = vpop.f32.mrf.mxu0
  %v4447 = vadd.f32 0.0, %v4446
  %v4448 = vpop.f32.mrf.mxu0
  %4449 = vmatprep.mubr.f32.mxu0 0.0
  %4450 = vmatmul.mubr.f32.gmra.mxu0 %v3120
  %v4451 = vpop.f32.mrf.mxu0
  %v4452 = vadd.f32 0.0, %v4451
  %v4453 = vpop.f32.mrf.mxu0
  %4454 = vmatprep.mubr.f32.mxu0 0.0
  %4455 = vmatmul.mubr.f32.gmra.mxu0 %v3123
  %v4456 = vpop.f32.mrf.mxu0
  %v4457 = vadd.f32 0.0, %v4456
  %v4458 = vpop.f32.mrf.mxu0
  %4459 = vmatprep.mubr.f32.mxu0 0.0
  %4460 = vmatmul.mubr.f32.gmra.mxu0 %v3126
  %v4461 = vpop.f32.mrf.mxu0
  %v4462 = vadd.f32 0.0, %v4461
  %v4463 = vpop.f32.mrf.mxu0
  %4464 = vmatprep.mubr.f32.mxu0 0.0
  %4465 = vmatmul.mubr.f32.gmra.mxu0 %v3129
  %v4466 = vpop.f32.mrf.mxu0
  %v4467 = vadd.f32 0.0, %v4466
  %v4468 = vpop.f32.mrf.mxu0
  %4469 = vmatprep.mubr.f32.mxu0 0.0
  %4470 = vmatmul.mubr.f32.gmra.mxu0 %v3132
  %v4471 = vpop.f32.mrf.mxu0
  %v4472 = vadd.f32 0.0, %v4471
  %v4473 = vpop.f32.mrf.mxu0
  %4474 = vmatprep.mubr.f32.mxu0 0.0
  %4475 = vmatmul.mubr.f32.gmra.mxu0 %v3135
  %v4476 = vpop.f32.mrf.mxu0
  %v4477 = vadd.f32 0.0, %v4476
  %v4478 = vpop.f32.mrf.mxu0
  %4479 = vmatprep.mubr.f32.mxu0 0.0
  %4480 = vmatmul.mubr.f32.gmra.mxu0 %v3138
  %v4481 = vpop.f32.mrf.mxu0
  %v4482 = vadd.f32 0.0, %v4481
  %v4483 = vpop.f32.mrf.mxu0
  %4484 = vmatprep.mubr.f32.mxu0 0.0
  %4485 = vmatmul.mubr.f32.gmra.mxu0 %v3141
  %v4486 = vpop.f32.mrf.mxu0
  %v4487 = vadd.f32 0.0, %v4486
  %v4488 = vpop.f32.mrf.mxu0
  %4489 = vmatprep.mubr.f32.mxu0 0.0
  %4490 = vmatmul.mubr.f32.gmra.mxu0 %v3144
  %v4491 = vpop.f32.mrf.mxu0
  %v4492 = vadd.f32 0.0, %v4491
  %v4493 = vpop.f32.mrf.mxu0
  %4494 = vmatprep.mubr.f32.mxu0 0.0
  %4495 = vmatmul.mubr.f32.gmra.mxu0 %v3147
  %v4496 = vpop.f32.mrf.mxu0
  %v4497 = vadd.f32 0.0, %v4496
  %v4498 = vpop.f32.mrf.mxu0
  %4499 = vmatprep.mubr.f32.mxu0 0.0
  %4500 = vmatmul.mubr.f32.gmra.mxu0 %v3150
  %v4501 = vpop.f32.mrf.mxu0
  %v4502 = vadd.f32 0.0, %v4501
  %v4503 = vpop.f32.mrf.mxu0
  %4504 = vmatprep.mubr.f32.mxu0 0.0
  %4505 = vmatmul.mubr.f32.gmra.mxu0 %v3153
  %v4506 = vpop.f32.mrf.mxu0
  %v4507 = vadd.f32 0.0, %v4506
  %v4508 = vpop.f32.mrf.mxu0
  %4509 = vmatprep.mubr.f32.mxu0 0.0
  %4510 = vmatmul.mubr.f32.gmra.mxu0 %v3156
  %v4511 = vpop.f32.mrf.mxu0
  %v4512 = vadd.f32 0.0, %v4511
  %v4513 = vpop.f32.mrf.mxu0
  %4514 = vmatprep.mubr.f32.mxu0 0.0
  %4515 = vmatmul.mubr.f32.gmra.mxu0 %v3159
  %v4516 = vpop.f32.mrf.mxu0
  %v4517 = vadd.f32 0.0, %v4516
  %v4518 = vpop.f32.mrf.mxu0
  %4519 = vmatprep.mubr.f32.mxu0 0.0
  %4520 = vmatmul.mubr.f32.gmra.mxu0 %v3162
  %v4521 = vpop.f32.mrf.mxu0
  %v4522 = vadd.f32 0.0, %v4521
  %v4523 = vpop.f32.mrf.mxu0
  %4524 = vmatprep.mubr.f32.mxu0 0.0
  %4525 = vmatmul.mubr.f32.gmra.mxu0 %v3165
  %v4526 = vpop.f32.mrf.mxu0
  %v4527 = vadd.f32 0.0, %v4526
  %v4528 = vpop.f32.mrf.mxu0
  %4529 = vmatprep.mubr.f32.mxu0 0.0
  %4530 = vmatmul.mubr.f32.gmra.mxu0 %v3168
  %v4531 = vpop.f32.mrf.mxu0
  %v4532 = vadd.f32 0.0, %v4531
  %v4533 = vpop.f32.mrf.mxu0
  %4534 = vmatprep.mubr.f32.mxu0 0.0
  %4535 = vmatmul.mubr.f32.gmra.mxu0 %v3171
  %v4536 = vpop.f32.mrf.mxu0
  %v4537 = vadd.f32 0.0, %v4536
  %v4538 = vpop.f32.mrf.mxu0
  %4539 = vmatprep.mubr.f32.mxu0 0.0
  %4540 = vmatmul.mubr.f32.gmra.mxu0 %v3174
  %v4541 = vpop.f32.mrf.mxu0
  %v4542 = vadd.f32 0.0, %v4541
  %v4543 = vpop.f32.mrf.mxu0
  %4544 = vmatprep.mubr.f32.mxu0 0.0
  %4545 = vmatmul.mubr.f32.gmra.mxu0 %v3177
  %v4546 = vpop.f32.mrf.mxu0
  %v4547 = vadd.f32 0.0, %v4546
  %v4548 = vpop.f32.mrf.mxu0
  %4549 = vmatprep.mubr.f32.mxu0 0.0
  %4550 = vmatmul.mubr.f32.gmra.mxu0 %v3180
  %v4551 = vpop.f32.mrf.mxu0
  %v4552 = vadd.f32 0.0, %v4551
  %v4553 = vpop.f32.mrf.mxu0
  %4554 = vmatprep.mubr.f32.mxu0 0.0
  %4555 = vmatmul.mubr.f32.gmra.mxu0 %v3183
  %v4556 = vpop.f32.mrf.mxu0
  %v4557 = vadd.f32 0.0, %v4556
  %v4558 = vpop.f32.mrf.mxu0
  %4559 = vmatprep.mubr.f32.mxu0 0.0
  %4560 = vmatmul.mubr.f32.gmra.mxu0 %v3186
  %v4561 = vpop.f32.mrf.mxu0
  %v4562 = vadd.f32 0.0, %v4561
  %v4563 = vpop.f32.mrf.mxu0
  %4564 = vmatprep.mubr.f32.mxu0 0.0
  %4565 = vmatmul.mubr.f32.gmra.mxu0 %v3189
  %v4566 = vpop.f32.mrf.mxu0
  %v4567 = vadd.f32 0.0, %v4566
  %v4568 = vpop.f32.mrf.mxu0
  %4569 = vmatprep.mubr.f32.mxu0 0.0
  %4570 = vmatmul.mubr.f32.gmra.mxu0 %v3192
  %v4571 = vpop.f32.mrf.mxu0
  %v4572 = vadd.f32 0.0, %v4571
  %v4573 = vpop.f32.mrf.mxu0
  %4574 = vmatprep.mubr.f32.mxu0 0.0
  %4575 = vmatmul.mubr.f32.gmra.mxu0 %v3195
  %v4576 = vpop.f32.mrf.mxu0
  %v4577 = vadd.f32 0.0, %v4576
  %v4578 = vpop.f32.mrf.mxu0
  %4579 = vmatprep.mubr.f32.mxu0 0.0
  %4580 = vmatmul.mubr.f32.gmra.mxu0 %v3198
  %v4581 = vpop.f32.mrf.mxu0
  %v4582 = vadd.f32 0.0, %v4581
  %v4583 = vpop.f32.mrf.mxu0
  %4584 = vmatprep.mubr.f32.mxu0 0.0
  %4585 = vmatmul.mubr.f32.gmra.mxu0 %v3201
  %v4586 = vpop.f32.mrf.mxu0
  %v4587 = vadd.f32 0.0, %v4586
  %v4588 = vpop.f32.mrf.mxu0
  %4589 = vmatprep.mubr.f32.mxu0 0.0
  %4590 = vmatmul.mubr.f32.gmra.mxu0 %v3204
  %v4591 = vpop.f32.mrf.mxu0
  %v4592 = vadd.f32 0.0, %v4591
  %v4593 = vpop.f32.mrf.mxu0
  %4594 = vmatprep.mubr.f32.mxu0 0.0
  %4595 = vmatmul.mubr.f32.gmra.mxu0 %v3207
  %v4596 = vpop.f32.mrf.mxu0
  %v4597 = vadd.f32 0.0, %v4596
  %v4598 = vpop.f32.mrf.mxu0
  %4599 = vmatprep.mubr.f32.mxu0 0.0
  %4600 = vmatmul.mubr.f32.gmra.mxu0 %v3210
  %v4601 = vpop.f32.mrf.mxu0
  %v4602 = vadd.f32 0.0, %v4601
  %v4603 = vpop.f32.mrf.mxu0
  %4604 = vmatprep.mubr.f32.mxu0 0.0
  %4605 = vmatmul.mubr.f32.gmra.mxu0 %v3213
  %v4606 = vpop.f32.mrf.mxu0
  %v4607 = vadd.f32 0.0, %v4606
  %v4608 = vpop.f32.mrf.mxu0
  %4609 = vmatprep.mubr.f32.mxu0 0.0
  %4610 = vmatmul.mubr.f32.gmra.mxu0 %v3216
  %v4611 = vpop.f32.mrf.mxu0
  %v4612 = vadd.f32 0.0, %v4611
  %v4613 = vpop.f32.mrf.mxu0
  %4614 = vmatprep.mubr.f32.mxu0 0.0
  %4615 = vmatmul.mubr.f32.gmra.mxu0 %v3219
  %v4616 = vpop.f32.mrf.mxu0
  %v4617 = vadd.f32 0.0, %v4616
  %v4618 = vpop.f32.mrf.mxu0
  %4619 = vmatprep.mubr.f32.mxu0 0.0
  %4620 = vmatmul.mubr.f32.gmra.mxu0 %v3222
  %v4621 = vpop.f32.mrf.mxu0
  %v4622 = vadd.f32 0.0, %v4621
  %v4623 = vpop.f32.mrf.mxu0
  %4624 = vmatprep.mubr.f32.mxu0 0.0
  %4625 = vmatmul.mubr.f32.gmra.mxu0 %v3225
  %v4626 = vpop.f32.mrf.mxu0
  %v4627 = vadd.f32 0.0, %v4626
  %v4628 = vpop.f32.mrf.mxu0
  %4629 = vmatprep.mubr.f32.mxu0 0.0
  %4630 = vmatmul.mubr.f32.gmra.mxu0 %v3228
  %v4631 = vpop.f32.mrf.mxu0
  %v4632 = vadd.f32 0.0, %v4631
  %v4633 = vpop.f32.mrf.mxu0
  %4634 = vmatprep.mubr.f32.mxu0 0.0
  %4635 = vmatmul.mubr.f32.gmra.mxu0 %v3231
  %v4636 = vpop.f32.mrf.mxu0
  %v4637 = vadd.f32 0.0, %v4636
  %v4638 = vpop.f32.mrf.mxu0
  %4639 = vmatprep.mubr.f32.mxu0 0.0
  %4640 = vmatmul.mubr.f32.gmra.mxu0 %v3234
  %v4641 = vpop.f32.mrf.mxu0
  %v4642 = vadd.f32 0.0, %v4641
  %v4643 = vpop.f32.mrf.mxu0
  %4644 = vmatprep.mubr.f32.mxu0 0.0
  %4645 = vmatmul.mubr.f32.gmra.mxu0 %v3237
  %v4646 = vpop.f32.mrf.mxu0
  %v4647 = vadd.f32 0.0, %v4646
  %v4648 = vpop.f32.mrf.mxu0
  %4649 = vmatprep.mubr.f32.mxu0 0.0
  %4650 = vmatmul.mubr.f32.gmra.mxu0 %v3240
  %v4651 = vpop.f32.mrf.mxu0
  %v4652 = vadd.f32 0.0, %v4651
  %v4653 = vpop.f32.mrf.mxu0
  %4654 = vmatprep.mubr.f32.mxu0 0.0
  %4655 = vmatmul.mubr.f32.gmra.mxu0 %v3243
  %v4656 = vpop.f32.mrf.mxu0
  %v4657 = vadd.f32 0.0, %v4656
  %v4658 = vpop.f32.mrf.mxu0
  %4659 = vmatprep.mubr.f32.mxu0 0.0
  %4660 = vmatmul.mubr.f32.gmra.mxu0 %v3246
  %v4661 = vpop.f32.mrf.mxu0
  %v4662 = vadd.f32 0.0, %v4661
  %v4663 = vpop.f32.mrf.mxu0
  %4664 = vmatprep.mubr.f32.mxu0 0.0
  %4665 = vmatmul.mubr.f32.gmra.mxu0 %v3249
  %v4666 = vpop.f32.mrf.mxu0
  %v4667 = vadd.f32 0.0, %v4666
  %v4668 = vpop.f32.mrf.mxu0
  %4669 = vmatprep.mubr.f32.mxu0 0.0
  %4670 = vmatmul.mubr.f32.gmra.mxu0 %v3252
  %v4671 = vpop.f32.mrf.mxu0
  %v4672 = vadd.f32 0.0, %v4671
  %v4673 = vpop.f32.mrf.mxu0
  %4674 = vmatprep.mubr.f32.mxu0 0.0
  %4675 = vmatmul.mubr.f32.gmra.mxu0 %v3255
  %v4676 = vpop.f32.mrf.mxu0
  %v4677 = vadd.f32 0.0, %v4676
  %v4678 = vpop.f32.mrf.mxu0
  %4679 = vmatprep.mubr.f32.mxu0 0.0
  %4680 = vmatmul.mubr.f32.gmra.mxu0 %v3258
  %v4681 = vpop.f32.mrf.mxu0
  %v4682 = vadd.f32 0.0, %v4681
  %v4683 = vpop.f32.mrf.mxu0
  %4684 = vmatprep.mubr.f32.mxu0 0.0
  %4685 = vmatmul.mubr.f32.gmra.mxu0 %v3261
  %v4686 = vpop.f32.mrf.mxu0
  %v4687 = vadd.f32 0.0, %v4686
  %v4688 = vpop.f32.mrf.mxu0
  %4689 = vmatprep.mubr.f32.mxu0 0.0
  %4690 = vmatmul.mubr.f32.gmra.mxu0 %v3264
  %v4691 = vpop.f32.mrf.mxu0
  %v4692 = vadd.f32 0.0, %v4691
  %v4693 = vpop.f32.mrf.mxu0
  %4694 = vdwg.mxu0
  %v4696 = vsel %vm2449, %v2104, 0
  %v4699 = vsel %vm2449, %v2105, 0
  %v4702 = vsel %vm2449, %v2106, 0
  %v4705 = vsel %vm2449, %v2107, 0
  %v4708 = vsel %vm2449, %v2108, 0
  %v4711 = vsel %vm2449, %v2109, 0
  %v4714 = vsel %vm2449, %v2110, 0
  %v4717 = vsel %vm2449, %v2111, 0
  %v4720 = vsel %vm2449, %v2112, 0
  %v4723 = vsel %vm2449, %v2113, 0
  %v4726 = vsel %vm2449, %v2114, 0
  %v4729 = vsel %vm2449, %v2115, 0
  %v4732 = vsel %vm2449, %v2116, 0
  %v4735 = vsel %vm2449, %v2117, 0
  %v4738 = vsel %vm2449, %v2118, 0
  %v4741 = vsel %vm2449, %v2119, 0
  %v4744 = vsel %vm3266, %v2443, 0
  %4746 = vmatprep.subr.mxu0 0.0
  %4747 = vmatpush1.msra.mxu0 0.0
  %4748 = vmatprep.subr.mxu0 0.0
  %4749 = vmatpush1.msra.mxu0 0.0
  %4750 = vmatprep.subr.mxu0 0.0
  %4751 = vmatpush1.msra.mxu0 0.0
  %4752 = vmatprep.subr.mxu0 0.0
  %4753 = vmatpush1.msra.mxu0 0.0
  %4754 = vmatprep.subr.mxu0 0.0
  %4755 = vmatpush1.msra.mxu0 0.0
  %4756 = vmatprep.subr.mxu0 0.0
  %4757 = vmatpush1.msra.mxu0 0.0
  %4758 = vmatprep.subr.mxu0 0.0
  %4759 = vmatpush1.msra.mxu0 0.0
  %4760 = vmatprep.subr.mxu0 0.0
  %4761 = vmatpush1.msra.mxu0 0.0
  %4762 = vmatprep.subr.mxu0 0.0
  %4763 = vmatpush1.msra.mxu0 0.0
  %4764 = vmatprep.subr.mxu0 0.0
  %4765 = vmatpush1.msra.mxu0 0.0
  %4766 = vmatprep.subr.mxu0 0.0
  %4767 = vmatpush1.msra.mxu0 0.0
  %4768 = vmatprep.subr.mxu0 0.0
  %4769 = vmatpush1.msra.mxu0 0.0
  %4770 = vmatprep.subr.mxu0 0.0
  %4771 = vmatpush1.msra.mxu0 %v4744
  %4772 = vmatprep.subr.mxu0 0.0
  %4773 = vmatpush1.msra.mxu0 %v2442
  %4774 = vmatprep.subr.mxu0 0.0
  %4775 = vmatpush1.msra.mxu0 %v2441
  %4776 = vmatprep.subr.mxu0 0.0
  %4777 = vmatpush1.msra.mxu0 %v2440
  %4778 = vmatprep.subr.mxu0 0.0
  %4779 = vmatpush2.msra.mxu0 0.0
  %4780 = vmatprep.subr.mxu0 0.0
  %4781 = vmatpush2.msra.mxu0 0.0
  %4782 = vmatprep.subr.mxu0 0.0
  %4783 = vmatpush2.msra.mxu0 0.0
  %4784 = vmatprep.subr.mxu0 0.0
  %4785 = vmatpush2.msra.mxu0 0.0
  %4786 = vmatprep.subr.mxu0 0.0
  %4787 = vmatpush2.msra.mxu0 0.0
  %4788 = vmatprep.subr.mxu0 0.0
  %4789 = vmatpush2.msra.mxu0 0.0
  %4790 = vmatprep.subr.mxu0 0.0
  %4791 = vmatpush2.msra.mxu0 0.0
  %4792 = vmatprep.subr.mxu0 0.0
  %4793 = vmatpush2.msra.mxu0 0.0
  %4794 = vmatprep.subr.mxu0 0.0
  %4795 = vmatpush2.msra.mxu0 0.0
  %4796 = vmatprep.subr.mxu0 0.0
  %4797 = vmatpush2.msra.mxu0 0.0
  %4798 = vmatprep.subr.mxu0 0.0
  %4799 = vmatpush2.msra.mxu0 0.0
  %4800 = vmatprep.subr.mxu0 0.0
  %4801 = vmatpush2.msra.mxu0 0.0
  %4802 = vmatprep.subr.mxu0 0.0
  %4803 = vmatpush2.msra.mxu0 0.0
  %4804 = vmatprep.subr.mxu0 0.0
  %4805 = vmatpush2.msra.mxu0 0.0
  %4806 = vmatprep.subr.mxu0 0.0
  %4807 = vmatpush2.msra.mxu0 0.0
  %4808 = vmatprep.subr.mxu0 0.0
  %4809 = vmatpush2.msra.mxu0 0.0
  %4810 = vmatprep.mubr.f32.mxu0 0.0
  %4811 = vmatmul.mubr.f32.gmra.mxu0 %v4696
  %v4812 = vpop.f32.mrf.mxu0
  %v4813 = vadd.f32 %v3337, %v4812
  %v4814 = vpop.f32.mrf.mxu0
  %4815 = vmatprep.mubr.f32.mxu0 0.0
  %4816 = vmatmul.mubr.f32.gmra.mxu0 %v4699
  %v4817 = vpop.f32.mrf.mxu0
  %v4818 = vadd.f32 %v3342, %v4817
  %v4819 = vpop.f32.mrf.mxu0
  %4820 = vmatprep.mubr.f32.mxu0 0.0
  %4821 = vmatmul.mubr.f32.gmra.mxu0 %v4702
  %v4822 = vpop.f32.mrf.mxu0
  %v4823 = vadd.f32 %v3347, %v4822
  %v4824 = vpop.f32.mrf.mxu0
  %4825 = vmatprep.mubr.f32.mxu0 0.0
  %4826 = vmatmul.mubr.f32.gmra.mxu0 %v4705
  %v4827 = vpop.f32.mrf.mxu0
  %v4828 = vadd.f32 %v3352, %v4827
  %v4829 = vpop.f32.mrf.mxu0
  %4830 = vmatprep.mubr.f32.mxu0 0.0
  %4831 = vmatmul.mubr.f32.gmra.mxu0 %v4708
  %v4832 = vpop.f32.mrf.mxu0
  %v4833 = vadd.f32 %v3357, %v4832
  %v4834 = vpop.f32.mrf.mxu0
  %4835 = vmatprep.mubr.f32.mxu0 0.0
  %4836 = vmatmul.mubr.f32.gmra.mxu0 %v4711
  %v4837 = vpop.f32.mrf.mxu0
  %v4838 = vadd.f32 %v3362, %v4837
  %v4839 = vpop.f32.mrf.mxu0
  %4840 = vmatprep.mubr.f32.mxu0 0.0
  %4841 = vmatmul.mubr.f32.gmra.mxu0 %v4714
  %v4842 = vpop.f32.mrf.mxu0
  %v4843 = vadd.f32 %v3367, %v4842
  %v4844 = vpop.f32.mrf.mxu0
  %4845 = vmatprep.mubr.f32.mxu0 0.0
  %4846 = vmatmul.mubr.f32.gmra.mxu0 %v4717
  %v4847 = vpop.f32.mrf.mxu0
  %v4848 = vadd.f32 %v3372, %v4847
  %v4849 = vpop.f32.mrf.mxu0
  %4850 = vmatprep.mubr.f32.mxu0 0.0
  %4851 = vmatmul.mubr.f32.gmra.mxu0 %v4720
  %v4852 = vpop.f32.mrf.mxu0
  %v4853 = vadd.f32 %v3377, %v4852
  %v4854 = vpop.f32.mrf.mxu0
  %4855 = vmatprep.mubr.f32.mxu0 0.0
  %4856 = vmatmul.mubr.f32.gmra.mxu0 %v4723
  %v4857 = vpop.f32.mrf.mxu0
  %v4858 = vadd.f32 %v3382, %v4857
  %v4859 = vpop.f32.mrf.mxu0
  %4860 = vmatprep.mubr.f32.mxu0 0.0
  %4861 = vmatmul.mubr.f32.gmra.mxu0 %v4726
  %v4862 = vpop.f32.mrf.mxu0
  %v4863 = vadd.f32 %v3387, %v4862
  %v4864 = vpop.f32.mrf.mxu0
  %4865 = vmatprep.mubr.f32.mxu0 0.0
  %4866 = vmatmul.mubr.f32.gmra.mxu0 %v4729
  %v4867 = vpop.f32.mrf.mxu0
  %v4868 = vadd.f32 %v3392, %v4867
  %v4869 = vpop.f32.mrf.mxu0
  %4870 = vmatprep.mubr.f32.mxu0 0.0
  %4871 = vmatmul.mubr.f32.gmra.mxu0 %v4732
  %v4872 = vpop.f32.mrf.mxu0
  %v4873 = vadd.f32 %v3397, %v4872
  %v4874 = vpop.f32.mrf.mxu0
  %4875 = vmatprep.mubr.f32.mxu0 0.0
  %4876 = vmatmul.mubr.f32.gmra.mxu0 %v4735
  %v4877 = vpop.f32.mrf.mxu0
  %v4878 = vadd.f32 %v3402, %v4877
  %v4879 = vpop.f32.mrf.mxu0
  %4880 = vmatprep.mubr.f32.mxu0 0.0
  %4881 = vmatmul.mubr.f32.gmra.mxu0 %v4738
  %v4882 = vpop.f32.mrf.mxu0
  %v4883 = vadd.f32 %v3407, %v4882
  %v4884 = vpop.f32.mrf.mxu0
  %4885 = vmatprep.mubr.f32.mxu0 0.0
  %4886 = vmatmul.mubr.f32.gmra.mxu0 %v4741
  %v4887 = vpop.f32.mrf.mxu0
  %v4888 = vadd.f32 %v3412, %v4887
  %v4889 = vpop.f32.mrf.mxu0
  %4890 = vmatprep.mubr.f32.mxu0 0.0
  %4891 = vmatmul.mubr.f32.gmra.mxu0 %v2451
  %v4892 = vpop.f32.mrf.mxu0
  %v4893 = vadd.f32 %v3417, %v4892
  %v4894 = vpop.f32.mrf.mxu0
  %4895 = vmatprep.mubr.f32.mxu0 0.0
  %4896 = vmatmul.mubr.f32.gmra.mxu0 %v2454
  %v4897 = vpop.f32.mrf.mxu0
  %v4898 = vadd.f32 %v3422, %v4897
  %v4899 = vpop.f32.mrf.mxu0
  %4900 = vmatprep.mubr.f32.mxu0 0.0
  %4901 = vmatmul.mubr.f32.gmra.mxu0 %v2457
  %v4902 = vpop.f32.mrf.mxu0
  %v4903 = vadd.f32 %v3427, %v4902
  %v4904 = vpop.f32.mrf.mxu0
  %4905 = vmatprep.mubr.f32.mxu0 0.0
  %4906 = vmatmul.mubr.f32.gmra.mxu0 %v2460
  %v4907 = vpop.f32.mrf.mxu0
  %v4908 = vadd.f32 %v3432, %v4907
  %v4909 = vpop.f32.mrf.mxu0
  %4910 = vmatprep.mubr.f32.mxu0 0.0
  %4911 = vmatmul.mubr.f32.gmra.mxu0 %v2463
  %v4912 = vpop.f32.mrf.mxu0
  %v4913 = vadd.f32 %v3437, %v4912
  %v4914 = vpop.f32.mrf.mxu0
  %4915 = vmatprep.mubr.f32.mxu0 0.0
  %4916 = vmatmul.mubr.f32.gmra.mxu0 %v2466
  %v4917 = vpop.f32.mrf.mxu0
  %v4918 = vadd.f32 %v3442, %v4917
  %v4919 = vpop.f32.mrf.mxu0
  %4920 = vmatprep.mubr.f32.mxu0 0.0
  %4921 = vmatmul.mubr.f32.gmra.mxu0 %v2469
  %v4922 = vpop.f32.mrf.mxu0
  %v4923 = vadd.f32 %v3447, %v4922
  %v4924 = vpop.f32.mrf.mxu0
  %4925 = vmatprep.mubr.f32.mxu0 0.0
  %4926 = vmatmul.mubr.f32.gmra.mxu0 %v2472
  %v4927 = vpop.f32.mrf.mxu0
  %v4928 = vadd.f32 %v3452, %v4927
  %v4929 = vpop.f32.mrf.mxu0
  %4930 = vmatprep.mubr.f32.mxu0 0.0
  %4931 = vmatmul.mubr.f32.gmra.mxu0 %v2475
  %v4932 = vpop.f32.mrf.mxu0
  %v4933 = vadd.f32 %v3457, %v4932
  %v4934 = vpop.f32.mrf.mxu0
  %4935 = vmatprep.mubr.f32.mxu0 0.0
  %4936 = vmatmul.mubr.f32.gmra.mxu0 %v2478
  %v4937 = vpop.f32.mrf.mxu0
  %v4938 = vadd.f32 %v3462, %v4937
  %v4939 = vpop.f32.mrf.mxu0
  %4940 = vmatprep.mubr.f32.mxu0 0.0
  %4941 = vmatmul.mubr.f32.gmra.mxu0 %v2481
  %v4942 = vpop.f32.mrf.mxu0
  %v4943 = vadd.f32 %v3467, %v4942
  %v4944 = vpop.f32.mrf.mxu0
  %4945 = vmatprep.mubr.f32.mxu0 0.0
  %4946 = vmatmul.mubr.f32.gmra.mxu0 %v2484
  %v4947 = vpop.f32.mrf.mxu0
  %v4948 = vadd.f32 %v3472, %v4947
  %v4949 = vpop.f32.mrf.mxu0
  %4950 = vmatprep.mubr.f32.mxu0 0.0
  %4951 = vmatmul.mubr.f32.gmra.mxu0 %v2487
  %v4952 = vpop.f32.mrf.mxu0
  %v4953 = vadd.f32 %v3477, %v4952
  %v4954 = vpop.f32.mrf.mxu0
  %4955 = vmatprep.mubr.f32.mxu0 0.0
  %4956 = vmatmul.mubr.f32.gmra.mxu0 %v2490
  %v4957 = vpop.f32.mrf.mxu0
  %v4958 = vadd.f32 %v3482, %v4957
  %v4959 = vpop.f32.mrf.mxu0
  %4960 = vmatprep.mubr.f32.mxu0 0.0
  %4961 = vmatmul.mubr.f32.gmra.mxu0 %v2493
  %v4962 = vpop.f32.mrf.mxu0
  %v4963 = vadd.f32 %v3487, %v4962
  %v4964 = vpop.f32.mrf.mxu0
  %4965 = vmatprep.mubr.f32.mxu0 0.0
  %4966 = vmatmul.mubr.f32.gmra.mxu0 %v2496
  %v4967 = vpop.f32.mrf.mxu0
  %v4968 = vadd.f32 %v3492, %v4967
  %v4969 = vpop.f32.mrf.mxu0
  %4970 = vmatprep.mubr.f32.mxu0 0.0
  %4971 = vmatmul.mubr.f32.gmra.mxu0 %v2499
  %v4972 = vpop.f32.mrf.mxu0
  %v4973 = vadd.f32 %v3497, %v4972
  %v4974 = vpop.f32.mrf.mxu0
  %4975 = vmatprep.mubr.f32.mxu0 0.0
  %4976 = vmatmul.mubr.f32.gmra.mxu0 %v2502
  %v4977 = vpop.f32.mrf.mxu0
  %v4978 = vadd.f32 %v3502, %v4977
  %v4979 = vpop.f32.mrf.mxu0
  %4980 = vmatprep.mubr.f32.mxu0 0.0
  %4981 = vmatmul.mubr.f32.gmra.mxu0 %v2505
  %v4982 = vpop.f32.mrf.mxu0
  %v4983 = vadd.f32 %v3507, %v4982
  %v4984 = vpop.f32.mrf.mxu0
  %4985 = vmatprep.mubr.f32.mxu0 0.0
  %4986 = vmatmul.mubr.f32.gmra.mxu0 %v2508
  %v4987 = vpop.f32.mrf.mxu0
  %v4988 = vadd.f32 %v3512, %v4987
  %v4989 = vpop.f32.mrf.mxu0
  %4990 = vmatprep.mubr.f32.mxu0 0.0
  %4991 = vmatmul.mubr.f32.gmra.mxu0 %v2511
  %v4992 = vpop.f32.mrf.mxu0
  %v4993 = vadd.f32 %v3517, %v4992
  %v4994 = vpop.f32.mrf.mxu0
  %4995 = vmatprep.mubr.f32.mxu0 0.0
  %4996 = vmatmul.mubr.f32.gmra.mxu0 %v2514
  %v4997 = vpop.f32.mrf.mxu0
  %v4998 = vadd.f32 %v3522, %v4997
  %v4999 = vpop.f32.mrf.mxu0
  %5000 = vmatprep.mubr.f32.mxu0 0.0
  %5001 = vmatmul.mubr.f32.gmra.mxu0 %v2517
  %v5002 = vpop.f32.mrf.mxu0
  %v5003 = vadd.f32 %v3527, %v5002
  %v5004 = vpop.f32.mrf.mxu0
  %5005 = vmatprep.mubr.f32.mxu0 0.0
  %5006 = vmatmul.mubr.f32.gmra.mxu0 %v2520
  %v5007 = vpop.f32.mrf.mxu0
  %v5008 = vadd.f32 %v3532, %v5007
  %v5009 = vpop.f32.mrf.mxu0
  %5010 = vmatprep.mubr.f32.mxu0 0.0
  %5011 = vmatmul.mubr.f32.gmra.mxu0 %v2523
  %v5012 = vpop.f32.mrf.mxu0
  %v5013 = vadd.f32 %v3537, %v5012
  %v5014 = vpop.f32.mrf.mxu0
  %5015 = vmatprep.mubr.f32.mxu0 0.0
  %5016 = vmatmul.mubr.f32.gmra.mxu0 %v2526
  %v5017 = vpop.f32.mrf.mxu0
  %v5018 = vadd.f32 %v3542, %v5017
  %v5019 = vpop.f32.mrf.mxu0
  %5020 = vmatprep.mubr.f32.mxu0 0.0
  %5021 = vmatmul.mubr.f32.gmra.mxu0 %v2529
  %v5022 = vpop.f32.mrf.mxu0
  %v5023 = vadd.f32 %v3547, %v5022
  %v5024 = vpop.f32.mrf.mxu0
  %5025 = vmatprep.mubr.f32.mxu0 0.0
  %5026 = vmatmul.mubr.f32.gmra.mxu0 %v2532
  %v5027 = vpop.f32.mrf.mxu0
  %v5028 = vadd.f32 %v3552, %v5027
  %v5029 = vpop.f32.mrf.mxu0
  %5030 = vmatprep.mubr.f32.mxu0 0.0
  %5031 = vmatmul.mubr.f32.gmra.mxu0 %v2535
  %v5032 = vpop.f32.mrf.mxu0
  %v5033 = vadd.f32 %v3557, %v5032
  %v5034 = vpop.f32.mrf.mxu0
  %5035 = vmatprep.mubr.f32.mxu0 0.0
  %5036 = vmatmul.mubr.f32.gmra.mxu0 %v2538
  %v5037 = vpop.f32.mrf.mxu0
  %v5038 = vadd.f32 %v3562, %v5037
  %v5039 = vpop.f32.mrf.mxu0
  %5040 = vmatprep.mubr.f32.mxu0 0.0
  %5041 = vmatmul.mubr.f32.gmra.mxu0 %v2541
  %v5042 = vpop.f32.mrf.mxu0
  %v5043 = vadd.f32 %v3567, %v5042
  %v5044 = vpop.f32.mrf.mxu0
  %5045 = vmatprep.mubr.f32.mxu0 0.0
  %5046 = vmatmul.mubr.f32.gmra.mxu0 %v2544
  %v5047 = vpop.f32.mrf.mxu0
  %v5048 = vadd.f32 %v3572, %v5047
  %v5049 = vpop.f32.mrf.mxu0
  %5050 = vmatprep.mubr.f32.mxu0 0.0
  %5051 = vmatmul.mubr.f32.gmra.mxu0 %v2547
  %v5052 = vpop.f32.mrf.mxu0
  %v5053 = vadd.f32 %v3577, %v5052
  %v5054 = vpop.f32.mrf.mxu0
  %5055 = vmatprep.mubr.f32.mxu0 0.0
  %5056 = vmatmul.mubr.f32.gmra.mxu0 %v2550
  %v5057 = vpop.f32.mrf.mxu0
  %v5058 = vadd.f32 %v3582, %v5057
  %v5059 = vpop.f32.mrf.mxu0
  %5060 = vmatprep.mubr.f32.mxu0 0.0
  %5061 = vmatmul.mubr.f32.gmra.mxu0 %v2553
  %v5062 = vpop.f32.mrf.mxu0
  %v5063 = vadd.f32 %v3587, %v5062
  %v5064 = vpop.f32.mrf.mxu0
  %5065 = vmatprep.mubr.f32.mxu0 0.0
  %5066 = vmatmul.mubr.f32.gmra.mxu0 %v2556
  %v5067 = vpop.f32.mrf.mxu0
  %v5068 = vadd.f32 %v3592, %v5067
  %v5069 = vpop.f32.mrf.mxu0
  %5070 = vmatprep.mubr.f32.mxu0 0.0
  %5071 = vmatmul.mubr.f32.gmra.mxu0 %v2559
  %v5072 = vpop.f32.mrf.mxu0
  %v5073 = vadd.f32 %v3597, %v5072
  %v5074 = vpop.f32.mrf.mxu0
  %5075 = vmatprep.mubr.f32.mxu0 0.0
  %5076 = vmatmul.mubr.f32.gmra.mxu0 %v2562
  %v5077 = vpop.f32.mrf.mxu0
  %v5078 = vadd.f32 %v3602, %v5077
  %v5079 = vpop.f32.mrf.mxu0
  %5080 = vmatprep.mubr.f32.mxu0 0.0
  %5081 = vmatmul.mubr.f32.gmra.mxu0 %v2565
  %v5082 = vpop.f32.mrf.mxu0
  %v5083 = vadd.f32 %v3607, %v5082
  %v5084 = vpop.f32.mrf.mxu0
  %5085 = vmatprep.mubr.f32.mxu0 0.0
  %5086 = vmatmul.mubr.f32.gmra.mxu0 %v2568
  %v5087 = vpop.f32.mrf.mxu0
  %v5088 = vadd.f32 %v3612, %v5087
  %v5089 = vpop.f32.mrf.mxu0
  %5090 = vmatprep.mubr.f32.mxu0 0.0
  %5091 = vmatmul.mubr.f32.gmra.mxu0 %v2571
  %v5092 = vpop.f32.mrf.mxu0
  %v5093 = vadd.f32 %v3617, %v5092
  %v5094 = vpop.f32.mrf.mxu0
  %5095 = vmatprep.mubr.f32.mxu0 0.0
  %5096 = vmatmul.mubr.f32.gmra.mxu0 %v2574
  %v5097 = vpop.f32.mrf.mxu0
  %v5098 = vadd.f32 %v3622, %v5097
  %v5099 = vpop.f32.mrf.mxu0
  %5100 = vmatprep.mubr.f32.mxu0 0.0
  %5101 = vmatmul.mubr.f32.gmra.mxu0 %v2577
  %v5102 = vpop.f32.mrf.mxu0
  %v5103 = vadd.f32 %v3627, %v5102
  %v5104 = vpop.f32.mrf.mxu0
  %5105 = vmatprep.mubr.f32.mxu0 0.0
  %5106 = vmatmul.mubr.f32.gmra.mxu0 %v2580
  %v5107 = vpop.f32.mrf.mxu0
  %v5108 = vadd.f32 %v3632, %v5107
  %v5109 = vpop.f32.mrf.mxu0
  %5110 = vmatprep.mubr.f32.mxu0 0.0
  %5111 = vmatmul.mubr.f32.gmra.mxu0 %v2583
  %v5112 = vpop.f32.mrf.mxu0
  %v5113 = vadd.f32 %v3637, %v5112
  %v5114 = vpop.f32.mrf.mxu0
  %5115 = vmatprep.mubr.f32.mxu0 0.0
  %5116 = vmatmul.mubr.f32.gmra.mxu0 %v2586
  %v5117 = vpop.f32.mrf.mxu0
  %v5118 = vadd.f32 %v3642, %v5117
  %v5119 = vpop.f32.mrf.mxu0
  %5120 = vmatprep.mubr.f32.mxu0 0.0
  %5121 = vmatmul.mubr.f32.gmra.mxu0 %v2589
  %v5122 = vpop.f32.mrf.mxu0
  %v5123 = vadd.f32 %v3647, %v5122
  %v5124 = vpop.f32.mrf.mxu0
  %5125 = vmatprep.mubr.f32.mxu0 0.0
  %5126 = vmatmul.mubr.f32.gmra.mxu0 %v2592
  %v5127 = vpop.f32.mrf.mxu0
  %v5128 = vadd.f32 %v3652, %v5127
  %v5129 = vpop.f32.mrf.mxu0
  %5130 = vmatprep.mubr.f32.mxu0 0.0
  %5131 = vmatmul.mubr.f32.gmra.mxu0 %v2595
  %v5132 = vpop.f32.mrf.mxu0
  %v5133 = vadd.f32 %v3657, %v5132
  %v5134 = vpop.f32.mrf.mxu0
  %5135 = vmatprep.mubr.f32.mxu0 0.0
  %5136 = vmatmul.mubr.f32.gmra.mxu0 %v2598
  %v5137 = vpop.f32.mrf.mxu0
  %v5138 = vadd.f32 %v3662, %v5137
  %v5139 = vpop.f32.mrf.mxu0
  %5140 = vmatprep.mubr.f32.mxu0 0.0
  %5141 = vmatmul.mubr.f32.gmra.mxu0 %v2601
  %v5142 = vpop.f32.mrf.mxu0
  %v5143 = vadd.f32 %v3667, %v5142
  %v5144 = vpop.f32.mrf.mxu0
  %5145 = vmatprep.mubr.f32.mxu0 0.0
  %5146 = vmatmul.mubr.f32.gmra.mxu0 %v2604
  %v5147 = vpop.f32.mrf.mxu0
  %v5148 = vadd.f32 %v3672, %v5147
  %v5149 = vpop.f32.mrf.mxu0
  %5150 = vmatprep.mubr.f32.mxu0 0.0
  %5151 = vmatmul.mubr.f32.gmra.mxu0 %v2607
  %v5152 = vpop.f32.mrf.mxu0
  %v5153 = vadd.f32 %v3677, %v5152
  %v5154 = vpop.f32.mrf.mxu0
  %5155 = vmatprep.mubr.f32.mxu0 0.0
  %5156 = vmatmul.mubr.f32.gmra.mxu0 %v2610
  %v5157 = vpop.f32.mrf.mxu0
  %v5158 = vadd.f32 %v3682, %v5157
  %v5159 = vpop.f32.mrf.mxu0
  %5160 = vmatprep.mubr.f32.mxu0 0.0
  %5161 = vmatmul.mubr.f32.gmra.mxu0 %v2613
  %v5162 = vpop.f32.mrf.mxu0
  %v5163 = vadd.f32 %v3687, %v5162
  %v5164 = vpop.f32.mrf.mxu0
  %5165 = vmatprep.mubr.f32.mxu0 0.0
  %5166 = vmatmul.mubr.f32.gmra.mxu0 %v2616
  %v5167 = vpop.f32.mrf.mxu0
  %v5168 = vadd.f32 %v3692, %v5167
  %v5169 = vpop.f32.mrf.mxu0
  %5170 = vmatprep.mubr.f32.mxu0 0.0
  %5171 = vmatmul.mubr.f32.gmra.mxu0 %v2619
  %v5172 = vpop.f32.mrf.mxu0
  %v5173 = vadd.f32 %v3697, %v5172
  %v5174 = vpop.f32.mrf.mxu0
  %5175 = vmatprep.mubr.f32.mxu0 0.0
  %5176 = vmatmul.mubr.f32.gmra.mxu0 %v2622
  %v5177 = vpop.f32.mrf.mxu0
  %v5178 = vadd.f32 %v3702, %v5177
  %v5179 = vpop.f32.mrf.mxu0
  %5180 = vmatprep.mubr.f32.mxu0 0.0
  %5181 = vmatmul.mubr.f32.gmra.mxu0 %v2625
  %v5182 = vpop.f32.mrf.mxu0
  %v5183 = vadd.f32 %v3707, %v5182
  %v5184 = vpop.f32.mrf.mxu0
  %5185 = vmatprep.mubr.f32.mxu0 0.0
  %5186 = vmatmul.mubr.f32.gmra.mxu0 %v2628
  %v5187 = vpop.f32.mrf.mxu0
  %v5188 = vadd.f32 %v3712, %v5187
  %v5189 = vpop.f32.mrf.mxu0
  %5190 = vmatprep.mubr.f32.mxu0 0.0
  %5191 = vmatmul.mubr.f32.gmra.mxu0 %v2631
  %v5192 = vpop.f32.mrf.mxu0
  %v5193 = vadd.f32 %v3717, %v5192
  %v5194 = vpop.f32.mrf.mxu0
  %5195 = vmatprep.mubr.f32.mxu0 0.0
  %5196 = vmatmul.mubr.f32.gmra.mxu0 %v2634
  %v5197 = vpop.f32.mrf.mxu0
  %v5198 = vadd.f32 %v3722, %v5197
  %v5199 = vpop.f32.mrf.mxu0
  %5200 = vmatprep.mubr.f32.mxu0 0.0
  %5201 = vmatmul.mubr.f32.gmra.mxu0 %v2637
  %v5202 = vpop.f32.mrf.mxu0
  %v5203 = vadd.f32 %v3727, %v5202
  %v5204 = vpop.f32.mrf.mxu0
  %5205 = vmatprep.mubr.f32.mxu0 0.0
  %5206 = vmatmul.mubr.f32.gmra.mxu0 %v2640
  %v5207 = vpop.f32.mrf.mxu0
  %v5208 = vadd.f32 %v3732, %v5207
  %v5209 = vpop.f32.mrf.mxu0
  %5210 = vmatprep.mubr.f32.mxu0 0.0
  %5211 = vmatmul.mubr.f32.gmra.mxu0 %v2643
  %v5212 = vpop.f32.mrf.mxu0
  %v5213 = vadd.f32 %v3737, %v5212
  %v5214 = vpop.f32.mrf.mxu0
  %5215 = vmatprep.mubr.f32.mxu0 0.0
  %5216 = vmatmul.mubr.f32.gmra.mxu0 %v2646
  %v5217 = vpop.f32.mrf.mxu0
  %v5218 = vadd.f32 %v3742, %v5217
  %v5219 = vpop.f32.mrf.mxu0
  %5220 = vmatprep.mubr.f32.mxu0 0.0
  %5221 = vmatmul.mubr.f32.gmra.mxu0 %v2649
  %v5222 = vpop.f32.mrf.mxu0
  %v5223 = vadd.f32 %v3747, %v5222
  %v5224 = vpop.f32.mrf.mxu0
  %5225 = vmatprep.mubr.f32.mxu0 0.0
  %5226 = vmatmul.mubr.f32.gmra.mxu0 %v2652
  %v5227 = vpop.f32.mrf.mxu0
  %v5228 = vadd.f32 %v3752, %v5227
  %v5229 = vpop.f32.mrf.mxu0
  %5230 = vmatprep.mubr.f32.mxu0 0.0
  %5231 = vmatmul.mubr.f32.gmra.mxu0 %v2655
  %v5232 = vpop.f32.mrf.mxu0
  %v5233 = vadd.f32 %v3757, %v5232
  %v5234 = vpop.f32.mrf.mxu0
  %5235 = vmatprep.mubr.f32.mxu0 0.0
  %5236 = vmatmul.mubr.f32.gmra.mxu0 %v2658
  %v5237 = vpop.f32.mrf.mxu0
  %v5238 = vadd.f32 %v3762, %v5237
  %v5239 = vpop.f32.mrf.mxu0
  %5240 = vmatprep.mubr.f32.mxu0 0.0
  %5241 = vmatmul.mubr.f32.gmra.mxu0 %v2661
  %v5242 = vpop.f32.mrf.mxu0
  %v5243 = vadd.f32 %v3767, %v5242
  %v5244 = vpop.f32.mrf.mxu0
  %5245 = vmatprep.mubr.f32.mxu0 0.0
  %5246 = vmatmul.mubr.f32.gmra.mxu0 %v2664
  %v5247 = vpop.f32.mrf.mxu0
  %v5248 = vadd.f32 %v3772, %v5247
  %v5249 = vpop.f32.mrf.mxu0
  %5250 = vmatprep.mubr.f32.mxu0 0.0
  %5251 = vmatmul.mubr.f32.gmra.mxu0 %v2667
  %v5252 = vpop.f32.mrf.mxu0
  %v5253 = vadd.f32 %v3777, %v5252
  %v5254 = vpop.f32.mrf.mxu0
  %5255 = vmatprep.mubr.f32.mxu0 0.0
  %5256 = vmatmul.mubr.f32.gmra.mxu0 %v2670
  %v5257 = vpop.f32.mrf.mxu0
  %v5258 = vadd.f32 %v3782, %v5257
  %v5259 = vpop.f32.mrf.mxu0
  %5260 = vmatprep.mubr.f32.mxu0 0.0
  %5261 = vmatmul.mubr.f32.gmra.mxu0 %v2673
  %v5262 = vpop.f32.mrf.mxu0
  %v5263 = vadd.f32 %v3787, %v5262
  %v5264 = vpop.f32.mrf.mxu0
  %5265 = vmatprep.mubr.f32.mxu0 0.0
  %5266 = vmatmul.mubr.f32.gmra.mxu0 %v2676
  %v5267 = vpop.f32.mrf.mxu0
  %v5268 = vadd.f32 %v3792, %v5267
  %v5269 = vpop.f32.mrf.mxu0
  %5270 = vmatprep.mubr.f32.mxu0 0.0
  %5271 = vmatmul.mubr.f32.gmra.mxu0 %v2679
  %v5272 = vpop.f32.mrf.mxu0
  %v5273 = vadd.f32 %v3797, %v5272
  %v5274 = vpop.f32.mrf.mxu0
  %5275 = vmatprep.mubr.f32.mxu0 0.0
  %5276 = vmatmul.mubr.f32.gmra.mxu0 %v2682
  %v5277 = vpop.f32.mrf.mxu0
  %v5278 = vadd.f32 %v3802, %v5277
  %v5279 = vpop.f32.mrf.mxu0
  %5280 = vmatprep.mubr.f32.mxu0 0.0
  %5281 = vmatmul.mubr.f32.gmra.mxu0 %v2685
  %v5282 = vpop.f32.mrf.mxu0
  %v5283 = vadd.f32 %v3807, %v5282
  %v5284 = vpop.f32.mrf.mxu0
  %5285 = vmatprep.mubr.f32.mxu0 0.0
  %5286 = vmatmul.mubr.f32.gmra.mxu0 %v2688
  %v5287 = vpop.f32.mrf.mxu0
  %v5288 = vadd.f32 %v3812, %v5287
  %v5289 = vpop.f32.mrf.mxu0
  %5290 = vmatprep.mubr.f32.mxu0 0.0
  %5291 = vmatmul.mubr.f32.gmra.mxu0 %v2691
  %v5292 = vpop.f32.mrf.mxu0
  %v5293 = vadd.f32 %v3817, %v5292
  %v5294 = vpop.f32.mrf.mxu0
  %5295 = vmatprep.mubr.f32.mxu0 0.0
  %5296 = vmatmul.mubr.f32.gmra.mxu0 %v2694
  %v5297 = vpop.f32.mrf.mxu0
  %v5298 = vadd.f32 %v3822, %v5297
  %v5299 = vpop.f32.mrf.mxu0
  %5300 = vmatprep.mubr.f32.mxu0 0.0
  %5301 = vmatmul.mubr.f32.gmra.mxu0 %v2697
  %v5302 = vpop.f32.mrf.mxu0
  %v5303 = vadd.f32 %v3827, %v5302
  %v5304 = vpop.f32.mrf.mxu0
  %5305 = vmatprep.mubr.f32.mxu0 0.0
  %5306 = vmatmul.mubr.f32.gmra.mxu0 %v2700
  %v5307 = vpop.f32.mrf.mxu0
  %v5308 = vadd.f32 %v3832, %v5307
  %v5309 = vpop.f32.mrf.mxu0
  %5310 = vmatprep.mubr.f32.mxu0 0.0
  %5311 = vmatmul.mubr.f32.gmra.mxu0 %v2703
  %v5312 = vpop.f32.mrf.mxu0
  %v5313 = vadd.f32 %v3837, %v5312
  %v5314 = vpop.f32.mrf.mxu0
  %5315 = vmatprep.mubr.f32.mxu0 0.0
  %5316 = vmatmul.mubr.f32.gmra.mxu0 %v2706
  %v5317 = vpop.f32.mrf.mxu0
  %v5318 = vadd.f32 %v3842, %v5317
  %v5319 = vpop.f32.mrf.mxu0
  %5320 = vmatprep.mubr.f32.mxu0 0.0
  %5321 = vmatmul.mubr.f32.gmra.mxu0 %v2709
  %v5322 = vpop.f32.mrf.mxu0
  %v5323 = vadd.f32 %v3847, %v5322
  %v5324 = vpop.f32.mrf.mxu0
  %5325 = vmatprep.mubr.f32.mxu0 0.0
  %5326 = vmatmul.mubr.f32.gmra.mxu0 %v2712
  %v5327 = vpop.f32.mrf.mxu0
  %v5328 = vadd.f32 %v3852, %v5327
  %v5329 = vpop.f32.mrf.mxu0
  %5330 = vmatprep.mubr.f32.mxu0 0.0
  %5331 = vmatmul.mubr.f32.gmra.mxu0 %v2715
  %v5332 = vpop.f32.mrf.mxu0
  %v5333 = vadd.f32 %v3857, %v5332
  %v5334 = vpop.f32.mrf.mxu0
  %5335 = vmatprep.mubr.f32.mxu0 0.0
  %5336 = vmatmul.mubr.f32.gmra.mxu0 %v2718
  %v5337 = vpop.f32.mrf.mxu0
  %v5338 = vadd.f32 %v3862, %v5337
  %v5339 = vpop.f32.mrf.mxu0
  %5340 = vmatprep.mubr.f32.mxu0 0.0
  %5341 = vmatmul.mubr.f32.gmra.mxu0 %v2721
  %v5342 = vpop.f32.mrf.mxu0
  %v5343 = vadd.f32 %v3867, %v5342
  %v5344 = vpop.f32.mrf.mxu0
  %5345 = vmatprep.mubr.f32.mxu0 0.0
  %5346 = vmatmul.mubr.f32.gmra.mxu0 %v2724
  %v5347 = vpop.f32.mrf.mxu0
  %v5348 = vadd.f32 %v3872, %v5347
  %v5349 = vpop.f32.mrf.mxu0
  %5350 = vmatprep.mubr.f32.mxu0 0.0
  %5351 = vmatmul.mubr.f32.gmra.mxu0 %v2727
  %v5352 = vpop.f32.mrf.mxu0
  %v5353 = vadd.f32 %v3877, %v5352
  %v5354 = vpop.f32.mrf.mxu0
  %5355 = vmatprep.mubr.f32.mxu0 0.0
  %5356 = vmatmul.mubr.f32.gmra.mxu0 %v2730
  %v5357 = vpop.f32.mrf.mxu0
  %v5358 = vadd.f32 %v3882, %v5357
  %v5359 = vpop.f32.mrf.mxu0
  %5360 = vmatprep.mubr.f32.mxu0 0.0
  %5361 = vmatmul.mubr.f32.gmra.mxu0 %v2733
  %v5362 = vpop.f32.mrf.mxu0
  %v5363 = vadd.f32 %v3887, %v5362
  %v5364 = vpop.f32.mrf.mxu0
  %5365 = vmatprep.mubr.f32.mxu0 0.0
  %5366 = vmatmul.mubr.f32.gmra.mxu0 %v2736
  %v5367 = vpop.f32.mrf.mxu0
  %v5368 = vadd.f32 %v3892, %v5367
  %v5369 = vpop.f32.mrf.mxu0
  %5370 = vmatprep.mubr.f32.mxu0 0.0
  %5371 = vmatmul.mubr.f32.gmra.mxu0 %v2739
  %v5372 = vpop.f32.mrf.mxu0
  %v5373 = vadd.f32 %v3897, %v5372
  %v5374 = vpop.f32.mrf.mxu0
  %5375 = vmatprep.mubr.f32.mxu0 0.0
  %5376 = vmatmul.mubr.f32.gmra.mxu0 %v2742
  %v5377 = vpop.f32.mrf.mxu0
  %v5378 = vadd.f32 %v3902, %v5377
  %v5379 = vpop.f32.mrf.mxu0
  %5380 = vmatprep.mubr.f32.mxu0 0.0
  %5381 = vmatmul.mubr.f32.gmra.mxu0 %v2745
  %v5382 = vpop.f32.mrf.mxu0
  %v5383 = vadd.f32 %v3907, %v5382
  %v5384 = vpop.f32.mrf.mxu0
  %5385 = vmatprep.mubr.f32.mxu0 0.0
  %5386 = vmatmul.mubr.f32.gmra.mxu0 %v2748
  %v5387 = vpop.f32.mrf.mxu0
  %v5388 = vadd.f32 %v3912, %v5387
  %v5389 = vpop.f32.mrf.mxu0
  %5390 = vmatprep.mubr.f32.mxu0 0.0
  %5391 = vmatmul.mubr.f32.gmra.mxu0 %v2751
  %v5392 = vpop.f32.mrf.mxu0
  %v5393 = vadd.f32 %v3917, %v5392
  %v5394 = vpop.f32.mrf.mxu0
  %5395 = vmatprep.mubr.f32.mxu0 0.0
  %5396 = vmatmul.mubr.f32.gmra.mxu0 %v2754
  %v5397 = vpop.f32.mrf.mxu0
  %v5398 = vadd.f32 %v3922, %v5397
  %v5399 = vpop.f32.mrf.mxu0
  %5400 = vmatprep.mubr.f32.mxu0 0.0
  %5401 = vmatmul.mubr.f32.gmra.mxu0 %v2757
  %v5402 = vpop.f32.mrf.mxu0
  %v5403 = vadd.f32 %v3927, %v5402
  %v5404 = vpop.f32.mrf.mxu0
  %5405 = vmatprep.mubr.f32.mxu0 0.0
  %5406 = vmatmul.mubr.f32.gmra.mxu0 %v2760
  %v5407 = vpop.f32.mrf.mxu0
  %v5408 = vadd.f32 %v3932, %v5407
  %v5409 = vpop.f32.mrf.mxu0
  %5410 = vmatprep.mubr.f32.mxu0 0.0
  %5411 = vmatmul.mubr.f32.gmra.mxu0 %v2763
  %v5412 = vpop.f32.mrf.mxu0
  %v5413 = vadd.f32 %v3937, %v5412
  %v5414 = vpop.f32.mrf.mxu0
  %5415 = vmatprep.mubr.f32.mxu0 0.0
  %5416 = vmatmul.mubr.f32.gmra.mxu0 %v2766
  %v5417 = vpop.f32.mrf.mxu0
  %v5418 = vadd.f32 %v3942, %v5417
  %v5419 = vpop.f32.mrf.mxu0
  %5420 = vmatprep.mubr.f32.mxu0 0.0
  %5421 = vmatmul.mubr.f32.gmra.mxu0 %v2769
  %v5422 = vpop.f32.mrf.mxu0
  %v5423 = vadd.f32 %v3947, %v5422
  %v5424 = vpop.f32.mrf.mxu0
  %5425 = vmatprep.mubr.f32.mxu0 0.0
  %5426 = vmatmul.mubr.f32.gmra.mxu0 %v2772
  %v5427 = vpop.f32.mrf.mxu0
  %v5428 = vadd.f32 %v3952, %v5427
  %v5429 = vpop.f32.mrf.mxu0
  %5430 = vmatprep.mubr.f32.mxu0 0.0
  %5431 = vmatmul.mubr.f32.gmra.mxu0 %v2775
  %v5432 = vpop.f32.mrf.mxu0
  %v5433 = vadd.f32 %v3957, %v5432
  %v5434 = vpop.f32.mrf.mxu0
  %5435 = vmatprep.mubr.f32.mxu0 0.0
  %5436 = vmatmul.mubr.f32.gmra.mxu0 %v2778
  %v5437 = vpop.f32.mrf.mxu0
  %v5438 = vadd.f32 %v3962, %v5437
  %v5439 = vpop.f32.mrf.mxu0
  %5440 = vmatprep.mubr.f32.mxu0 0.0
  %5441 = vmatmul.mubr.f32.gmra.mxu0 %v2781
  %v5442 = vpop.f32.mrf.mxu0
  %v5443 = vadd.f32 %v3967, %v5442
  %v5444 = vpop.f32.mrf.mxu0
  %5445 = vmatprep.mubr.f32.mxu0 0.0
  %5446 = vmatmul.mubr.f32.gmra.mxu0 %v2784
  %v5447 = vpop.f32.mrf.mxu0
  %v5448 = vadd.f32 %v3972, %v5447
  %v5449 = vpop.f32.mrf.mxu0
  %5450 = vmatprep.mubr.f32.mxu0 0.0
  %5451 = vmatmul.mubr.f32.gmra.mxu0 %v2787
  %v5452 = vpop.f32.mrf.mxu0
  %v5453 = vadd.f32 %v3977, %v5452
  %v5454 = vpop.f32.mrf.mxu0
  %5455 = vmatprep.mubr.f32.mxu0 0.0
  %5456 = vmatmul.mubr.f32.gmra.mxu0 %v2790
  %v5457 = vpop.f32.mrf.mxu0
  %v5458 = vadd.f32 %v3982, %v5457
  %v5459 = vpop.f32.mrf.mxu0
  %5460 = vmatprep.mubr.f32.mxu0 0.0
  %5461 = vmatmul.mubr.f32.gmra.mxu0 %v2793
  %v5462 = vpop.f32.mrf.mxu0
  %v5463 = vadd.f32 %v3987, %v5462
  %v5464 = vpop.f32.mrf.mxu0
  %5465 = vmatprep.mubr.f32.mxu0 0.0
  %5466 = vmatmul.mubr.f32.gmra.mxu0 %v2796
  %v5467 = vpop.f32.mrf.mxu0
  %v5468 = vadd.f32 %v3992, %v5467
  %v5469 = vpop.f32.mrf.mxu0
  %5470 = vmatprep.mubr.f32.mxu0 0.0
  %5471 = vmatmul.mubr.f32.gmra.mxu0 %v2799
  %v5472 = vpop.f32.mrf.mxu0
  %v5473 = vadd.f32 %v3997, %v5472
  %v5474 = vpop.f32.mrf.mxu0
  %5475 = vmatprep.mubr.f32.mxu0 0.0
  %5476 = vmatmul.mubr.f32.gmra.mxu0 %v2802
  %v5477 = vpop.f32.mrf.mxu0
  %v5478 = vadd.f32 %v4002, %v5477
  %v5479 = vpop.f32.mrf.mxu0
  %5480 = vmatprep.mubr.f32.mxu0 0.0
  %5481 = vmatmul.mubr.f32.gmra.mxu0 %v2805
  %v5482 = vpop.f32.mrf.mxu0
  %v5483 = vadd.f32 %v4007, %v5482
  %v5484 = vpop.f32.mrf.mxu0
  %5485 = vmatprep.mubr.f32.mxu0 0.0
  %5486 = vmatmul.mubr.f32.gmra.mxu0 %v2808
  %v5487 = vpop.f32.mrf.mxu0
  %v5488 = vadd.f32 %v4012, %v5487
  %v5489 = vpop.f32.mrf.mxu0
  %5490 = vmatprep.mubr.f32.mxu0 0.0
  %5491 = vmatmul.mubr.f32.gmra.mxu0 %v2811
  %v5492 = vpop.f32.mrf.mxu0
  %v5493 = vadd.f32 %v4017, %v5492
  %v5494 = vpop.f32.mrf.mxu0
  %5495 = vmatprep.mubr.f32.mxu0 0.0
  %5496 = vmatmul.mubr.f32.gmra.mxu0 %v2814
  %v5497 = vpop.f32.mrf.mxu0
  %v5498 = vadd.f32 %v4022, %v5497
  %v5499 = vpop.f32.mrf.mxu0
  %5500 = vmatprep.mubr.f32.mxu0 0.0
  %5501 = vmatmul.mubr.f32.gmra.mxu0 %v2817
  %v5502 = vpop.f32.mrf.mxu0
  %v5503 = vadd.f32 %v4027, %v5502
  %v5504 = vpop.f32.mrf.mxu0
  %5505 = vmatprep.mubr.f32.mxu0 0.0
  %5506 = vmatmul.mubr.f32.gmra.mxu0 %v2820
  %v5507 = vpop.f32.mrf.mxu0
  %v5508 = vadd.f32 %v4032, %v5507
  %v5509 = vpop.f32.mrf.mxu0
  %5510 = vmatprep.mubr.f32.mxu0 0.0
  %5511 = vmatmul.mubr.f32.gmra.mxu0 %v2823
  %v5512 = vpop.f32.mrf.mxu0
  %v5513 = vadd.f32 %v4037, %v5512
  %v5514 = vpop.f32.mrf.mxu0
  %5515 = vmatprep.mubr.f32.mxu0 0.0
  %5516 = vmatmul.mubr.f32.gmra.mxu0 %v2826
  %v5517 = vpop.f32.mrf.mxu0
  %v5518 = vadd.f32 %v4042, %v5517
  %v5519 = vpop.f32.mrf.mxu0
  %5520 = vmatprep.mubr.f32.mxu0 0.0
  %5521 = vmatmul.mubr.f32.gmra.mxu0 %v2829
  %v5522 = vpop.f32.mrf.mxu0
  %v5523 = vadd.f32 %v4047, %v5522
  %v5524 = vpop.f32.mrf.mxu0
  %5525 = vmatprep.mubr.f32.mxu0 0.0
  %5526 = vmatmul.mubr.f32.gmra.mxu0 %v2832
  %v5527 = vpop.f32.mrf.mxu0
  %v5528 = vadd.f32 %v4052, %v5527
  %v5529 = vpop.f32.mrf.mxu0
  %5530 = vmatprep.mubr.f32.mxu0 0.0
  %5531 = vmatmul.mubr.f32.gmra.mxu0 %v2835
  %v5532 = vpop.f32.mrf.mxu0
  %v5533 = vadd.f32 %v4057, %v5532
  %v5534 = vpop.f32.mrf.mxu0
  %5535 = vmatprep.mubr.f32.mxu0 0.0
  %5536 = vmatmul.mubr.f32.gmra.mxu0 %v2838
  %v5537 = vpop.f32.mrf.mxu0
  %v5538 = vadd.f32 %v4062, %v5537
  %v5539 = vpop.f32.mrf.mxu0
  %5540 = vmatprep.mubr.f32.mxu0 0.0
  %5541 = vmatmul.mubr.f32.gmra.mxu0 %v2841
  %v5542 = vpop.f32.mrf.mxu0
  %v5543 = vadd.f32 %v4067, %v5542
  %v5544 = vpop.f32.mrf.mxu0
  %5545 = vmatprep.mubr.f32.mxu0 0.0
  %5546 = vmatmul.mubr.f32.gmra.mxu0 %v2844
  %v5547 = vpop.f32.mrf.mxu0
  %v5548 = vadd.f32 %v4072, %v5547
  %v5549 = vpop.f32.mrf.mxu0
  %5550 = vmatprep.mubr.f32.mxu0 0.0
  %5551 = vmatmul.mubr.f32.gmra.mxu0 %v2847
  %v5552 = vpop.f32.mrf.mxu0
  %v5553 = vadd.f32 %v4077, %v5552
  %v5554 = vpop.f32.mrf.mxu0
  %5555 = vmatprep.mubr.f32.mxu0 0.0
  %5556 = vmatmul.mubr.f32.gmra.mxu0 %v2850
  %v5557 = vpop.f32.mrf.mxu0
  %v5558 = vadd.f32 %v4082, %v5557
  %v5559 = vpop.f32.mrf.mxu0
  %5560 = vmatprep.mubr.f32.mxu0 0.0
  %5561 = vmatmul.mubr.f32.gmra.mxu0 %v2853
  %v5562 = vpop.f32.mrf.mxu0
  %v5563 = vadd.f32 %v4087, %v5562
  %v5564 = vpop.f32.mrf.mxu0
  %5565 = vmatprep.mubr.f32.mxu0 0.0
  %5566 = vmatmul.mubr.f32.gmra.mxu0 %v2856
  %v5567 = vpop.f32.mrf.mxu0
  %v5568 = vadd.f32 %v4092, %v5567
  %v5569 = vpop.f32.mrf.mxu0
  %5570 = vmatprep.mubr.f32.mxu0 0.0
  %5571 = vmatmul.mubr.f32.gmra.mxu0 %v2859
  %v5572 = vpop.f32.mrf.mxu0
  %v5573 = vadd.f32 %v4097, %v5572
  %v5574 = vpop.f32.mrf.mxu0
  %5575 = vmatprep.mubr.f32.mxu0 0.0
  %5576 = vmatmul.mubr.f32.gmra.mxu0 %v2862
  %v5577 = vpop.f32.mrf.mxu0
  %v5578 = vadd.f32 %v4102, %v5577
  %v5579 = vpop.f32.mrf.mxu0
  %5580 = vmatprep.mubr.f32.mxu0 0.0
  %5581 = vmatmul.mubr.f32.gmra.mxu0 %v2865
  %v5582 = vpop.f32.mrf.mxu0
  %v5583 = vadd.f32 %v4107, %v5582
  %v5584 = vpop.f32.mrf.mxu0
  %5585 = vmatprep.mubr.f32.mxu0 0.0
  %5586 = vmatmul.mubr.f32.gmra.mxu0 %v2868
  %v5587 = vpop.f32.mrf.mxu0
  %v5588 = vadd.f32 %v4112, %v5587
  %v5589 = vpop.f32.mrf.mxu0
  %5590 = vmatprep.mubr.f32.mxu0 0.0
  %5591 = vmatmul.mubr.f32.gmra.mxu0 %v2871
  %v5592 = vpop.f32.mrf.mxu0
  %v5593 = vadd.f32 %v4117, %v5592
  %v5594 = vpop.f32.mrf.mxu0
  %5595 = vmatprep.mubr.f32.mxu0 0.0
  %5596 = vmatmul.mubr.f32.gmra.mxu0 %v2874
  %v5597 = vpop.f32.mrf.mxu0
  %v5598 = vadd.f32 %v4122, %v5597
  %v5599 = vpop.f32.mrf.mxu0
  %5600 = vmatprep.mubr.f32.mxu0 0.0
  %5601 = vmatmul.mubr.f32.gmra.mxu0 %v2877
  %v5602 = vpop.f32.mrf.mxu0
  %v5603 = vadd.f32 %v4127, %v5602
  %v5604 = vpop.f32.mrf.mxu0
  %5605 = vmatprep.mubr.f32.mxu0 0.0
  %5606 = vmatmul.mubr.f32.gmra.mxu0 %v2880
  %v5607 = vpop.f32.mrf.mxu0
  %v5608 = vadd.f32 %v4132, %v5607
  %v5609 = vpop.f32.mrf.mxu0
  %5610 = vmatprep.mubr.f32.mxu0 0.0
  %5611 = vmatmul.mubr.f32.gmra.mxu0 %v2883
  %v5612 = vpop.f32.mrf.mxu0
  %v5613 = vadd.f32 %v4137, %v5612
  %v5614 = vpop.f32.mrf.mxu0
  %5615 = vmatprep.mubr.f32.mxu0 0.0
  %5616 = vmatmul.mubr.f32.gmra.mxu0 %v2886
  %v5617 = vpop.f32.mrf.mxu0
  %v5618 = vadd.f32 %v4142, %v5617
  %v5619 = vpop.f32.mrf.mxu0
  %5620 = vmatprep.mubr.f32.mxu0 0.0
  %5621 = vmatmul.mubr.f32.gmra.mxu0 %v2889
  %v5622 = vpop.f32.mrf.mxu0
  %v5623 = vadd.f32 %v4147, %v5622
  %v5624 = vpop.f32.mrf.mxu0
  %5625 = vmatprep.mubr.f32.mxu0 0.0
  %5626 = vmatmul.mubr.f32.gmra.mxu0 %v2892
  %v5627 = vpop.f32.mrf.mxu0
  %v5628 = vadd.f32 %v4152, %v5627
  %v5629 = vpop.f32.mrf.mxu0
  %5630 = vmatprep.mubr.f32.mxu0 0.0
  %5631 = vmatmul.mubr.f32.gmra.mxu0 %v2895
  %v5632 = vpop.f32.mrf.mxu0
  %v5633 = vadd.f32 %v4157, %v5632
  %v5634 = vpop.f32.mrf.mxu0
  %5635 = vmatprep.mubr.f32.mxu0 0.0
  %5636 = vmatmul.mubr.f32.gmra.mxu0 %v2898
  %v5637 = vpop.f32.mrf.mxu0
  %v5638 = vadd.f32 %v4162, %v5637
  %v5639 = vpop.f32.mrf.mxu0
  %5640 = vmatprep.mubr.f32.mxu0 0.0
  %5641 = vmatmul.mubr.f32.gmra.mxu0 %v2901
  %v5642 = vpop.f32.mrf.mxu0
  %v5643 = vadd.f32 %v4167, %v5642
  %v5644 = vpop.f32.mrf.mxu0
  %5645 = vmatprep.mubr.f32.mxu0 0.0
  %5646 = vmatmul.mubr.f32.gmra.mxu0 %v2904
  %v5647 = vpop.f32.mrf.mxu0
  %v5648 = vadd.f32 %v4172, %v5647
  %v5649 = vpop.f32.mrf.mxu0
  %5650 = vmatprep.mubr.f32.mxu0 0.0
  %5651 = vmatmul.mubr.f32.gmra.mxu0 %v2907
  %v5652 = vpop.f32.mrf.mxu0
  %v5653 = vadd.f32 %v4177, %v5652
  %v5654 = vpop.f32.mrf.mxu0
  %5655 = vmatprep.mubr.f32.mxu0 0.0
  %5656 = vmatmul.mubr.f32.gmra.mxu0 %v2910
  %v5657 = vpop.f32.mrf.mxu0
  %v5658 = vadd.f32 %v4182, %v5657
  %v5659 = vpop.f32.mrf.mxu0
  %5660 = vmatprep.mubr.f32.mxu0 0.0
  %5661 = vmatmul.mubr.f32.gmra.mxu0 %v2913
  %v5662 = vpop.f32.mrf.mxu0
  %v5663 = vadd.f32 %v4187, %v5662
  %v5664 = vpop.f32.mrf.mxu0
  %5665 = vmatprep.mubr.f32.mxu0 0.0
  %5666 = vmatmul.mubr.f32.gmra.mxu0 %v2916
  %v5667 = vpop.f32.mrf.mxu0
  %v5668 = vadd.f32 %v4192, %v5667
  %v5669 = vpop.f32.mrf.mxu0
  %5670 = vmatprep.mubr.f32.mxu0 0.0
  %5671 = vmatmul.mubr.f32.gmra.mxu0 %v2919
  %v5672 = vpop.f32.mrf.mxu0
  %v5673 = vadd.f32 %v4197, %v5672
  %v5674 = vpop.f32.mrf.mxu0
  %5675 = vmatprep.mubr.f32.mxu0 0.0
  %5676 = vmatmul.mubr.f32.gmra.mxu0 %v2922
  %v5677 = vpop.f32.mrf.mxu0
  %v5678 = vadd.f32 %v4202, %v5677
  %v5679 = vpop.f32.mrf.mxu0
  %5680 = vmatprep.mubr.f32.mxu0 0.0
  %5681 = vmatmul.mubr.f32.gmra.mxu0 %v2925
  %v5682 = vpop.f32.mrf.mxu0
  %v5683 = vadd.f32 %v4207, %v5682
  %v5684 = vpop.f32.mrf.mxu0
  %5685 = vmatprep.mubr.f32.mxu0 0.0
  %5686 = vmatmul.mubr.f32.gmra.mxu0 %v2928
  %v5687 = vpop.f32.mrf.mxu0
  %v5688 = vadd.f32 %v4212, %v5687
  %v5689 = vpop.f32.mrf.mxu0
  %5690 = vmatprep.mubr.f32.mxu0 0.0
  %5691 = vmatmul.mubr.f32.gmra.mxu0 %v2931
  %v5692 = vpop.f32.mrf.mxu0
  %v5693 = vadd.f32 %v4217, %v5692
  %v5694 = vpop.f32.mrf.mxu0
  %5695 = vmatprep.mubr.f32.mxu0 0.0
  %5696 = vmatmul.mubr.f32.gmra.mxu0 %v2934
  %v5697 = vpop.f32.mrf.mxu0
  %v5698 = vadd.f32 %v4222, %v5697
  %v5699 = vpop.f32.mrf.mxu0
  %5700 = vmatprep.mubr.f32.mxu0 0.0
  %5701 = vmatmul.mubr.f32.gmra.mxu0 %v2937
  %v5702 = vpop.f32.mrf.mxu0
  %v5703 = vadd.f32 %v4227, %v5702
  %v5704 = vpop.f32.mrf.mxu0
  %5705 = vmatprep.mubr.f32.mxu0 0.0
  %5706 = vmatmul.mubr.f32.gmra.mxu0 %v2940
  %v5707 = vpop.f32.mrf.mxu0
  %v5708 = vadd.f32 %v4232, %v5707
  %v5709 = vpop.f32.mrf.mxu0
  %5710 = vmatprep.mubr.f32.mxu0 0.0
  %5711 = vmatmul.mubr.f32.gmra.mxu0 %v2943
  %v5712 = vpop.f32.mrf.mxu0
  %v5713 = vadd.f32 %v4237, %v5712
  %v5714 = vpop.f32.mrf.mxu0
  %5715 = vmatprep.mubr.f32.mxu0 0.0
  %5716 = vmatmul.mubr.f32.gmra.mxu0 %v2946
  %v5717 = vpop.f32.mrf.mxu0
  %v5718 = vadd.f32 %v4242, %v5717
  %v5719 = vpop.f32.mrf.mxu0
  %5720 = vmatprep.mubr.f32.mxu0 0.0
  %5721 = vmatmul.mubr.f32.gmra.mxu0 %v2949
  %v5722 = vpop.f32.mrf.mxu0
  %v5723 = vadd.f32 %v4247, %v5722
  %v5724 = vpop.f32.mrf.mxu0
  %5725 = vmatprep.mubr.f32.mxu0 0.0
  %5726 = vmatmul.mubr.f32.gmra.mxu0 %v2952
  %v5727 = vpop.f32.mrf.mxu0
  %v5728 = vadd.f32 %v4252, %v5727
  %v5729 = vpop.f32.mrf.mxu0
  %5730 = vmatprep.mubr.f32.mxu0 0.0
  %5731 = vmatmul.mubr.f32.gmra.mxu0 %v2955
  %v5732 = vpop.f32.mrf.mxu0
  %v5733 = vadd.f32 %v4257, %v5732
  %v5734 = vpop.f32.mrf.mxu0
  %5735 = vmatprep.mubr.f32.mxu0 0.0
  %5736 = vmatmul.mubr.f32.gmra.mxu0 %v2958
  %v5737 = vpop.f32.mrf.mxu0
  %v5738 = vadd.f32 %v4262, %v5737
  %v5739 = vpop.f32.mrf.mxu0
  %5740 = vmatprep.mubr.f32.mxu0 0.0
  %5741 = vmatmul.mubr.f32.gmra.mxu0 %v2961
  %v5742 = vpop.f32.mrf.mxu0
  %v5743 = vadd.f32 %v4267, %v5742
  %v5744 = vpop.f32.mrf.mxu0
  %5745 = vmatprep.mubr.f32.mxu0 0.0
  %5746 = vmatmul.mubr.f32.gmra.mxu0 %v2964
  %v5747 = vpop.f32.mrf.mxu0
  %v5748 = vadd.f32 %v4272, %v5747
  %v5749 = vpop.f32.mrf.mxu0
  %5750 = vmatprep.mubr.f32.mxu0 0.0
  %5751 = vmatmul.mubr.f32.gmra.mxu0 %v2967
  %v5752 = vpop.f32.mrf.mxu0
  %v5753 = vadd.f32 %v4277, %v5752
  %v5754 = vpop.f32.mrf.mxu0
  %5755 = vmatprep.mubr.f32.mxu0 0.0
  %5756 = vmatmul.mubr.f32.gmra.mxu0 %v2970
  %v5757 = vpop.f32.mrf.mxu0
  %v5758 = vadd.f32 %v4282, %v5757
  %v5759 = vpop.f32.mrf.mxu0
  %5760 = vmatprep.mubr.f32.mxu0 0.0
  %5761 = vmatmul.mubr.f32.gmra.mxu0 %v2973
  %v5762 = vpop.f32.mrf.mxu0
  %v5763 = vadd.f32 %v4287, %v5762
  %v5764 = vpop.f32.mrf.mxu0
  %5765 = vmatprep.mubr.f32.mxu0 0.0
  %5766 = vmatmul.mubr.f32.gmra.mxu0 %v2976
  %v5767 = vpop.f32.mrf.mxu0
  %v5768 = vadd.f32 %v4292, %v5767
  %v5769 = vpop.f32.mrf.mxu0
  %5770 = vmatprep.mubr.f32.mxu0 0.0
  %5771 = vmatmul.mubr.f32.gmra.mxu0 %v2979
  %v5772 = vpop.f32.mrf.mxu0
  %v5773 = vadd.f32 %v4297, %v5772
  %v5774 = vpop.f32.mrf.mxu0
  %5775 = vmatprep.mubr.f32.mxu0 0.0
  %5776 = vmatmul.mubr.f32.gmra.mxu0 %v2982
  %v5777 = vpop.f32.mrf.mxu0
  %v5778 = vadd.f32 %v4302, %v5777
  %v5779 = vpop.f32.mrf.mxu0
  %5780 = vmatprep.mubr.f32.mxu0 0.0
  %5781 = vmatmul.mubr.f32.gmra.mxu0 %v2985
  %v5782 = vpop.f32.mrf.mxu0
  %v5783 = vadd.f32 %v4307, %v5782
  %v5784 = vpop.f32.mrf.mxu0
  %5785 = vmatprep.mubr.f32.mxu0 0.0
  %5786 = vmatmul.mubr.f32.gmra.mxu0 %v2988
  %v5787 = vpop.f32.mrf.mxu0
  %v5788 = vadd.f32 %v4312, %v5787
  %v5789 = vpop.f32.mrf.mxu0
  %5790 = vmatprep.mubr.f32.mxu0 0.0
  %5791 = vmatmul.mubr.f32.gmra.mxu0 %v2991
  %v5792 = vpop.f32.mrf.mxu0
  %v5793 = vadd.f32 %v4317, %v5792
  %v5794 = vpop.f32.mrf.mxu0
  %5795 = vmatprep.mubr.f32.mxu0 0.0
  %5796 = vmatmul.mubr.f32.gmra.mxu0 %v2994
  %v5797 = vpop.f32.mrf.mxu0
  %v5798 = vadd.f32 %v4322, %v5797
  %v5799 = vpop.f32.mrf.mxu0
  %5800 = vmatprep.mubr.f32.mxu0 0.0
  %5801 = vmatmul.mubr.f32.gmra.mxu0 %v2997
  %v5802 = vpop.f32.mrf.mxu0
  %v5803 = vadd.f32 %v4327, %v5802
  %v5804 = vpop.f32.mrf.mxu0
  %5805 = vmatprep.mubr.f32.mxu0 0.0
  %5806 = vmatmul.mubr.f32.gmra.mxu0 %v3000
  %v5807 = vpop.f32.mrf.mxu0
  %v5808 = vadd.f32 %v4332, %v5807
  %v5809 = vpop.f32.mrf.mxu0
  %5810 = vmatprep.mubr.f32.mxu0 0.0
  %5811 = vmatmul.mubr.f32.gmra.mxu0 %v3003
  %v5812 = vpop.f32.mrf.mxu0
  %v5813 = vadd.f32 %v4337, %v5812
  %v5814 = vpop.f32.mrf.mxu0
  %5815 = vmatprep.mubr.f32.mxu0 0.0
  %5816 = vmatmul.mubr.f32.gmra.mxu0 %v3006
  %v5817 = vpop.f32.mrf.mxu0
  %v5818 = vadd.f32 %v4342, %v5817
  %v5819 = vpop.f32.mrf.mxu0
  %5820 = vmatprep.mubr.f32.mxu0 0.0
  %5821 = vmatmul.mubr.f32.gmra.mxu0 %v3009
  %v5822 = vpop.f32.mrf.mxu0
  %v5823 = vadd.f32 %v4347, %v5822
  %v5824 = vpop.f32.mrf.mxu0
  %5825 = vmatprep.mubr.f32.mxu0 0.0
  %5826 = vmatmul.mubr.f32.gmra.mxu0 %v3012
  %v5827 = vpop.f32.mrf.mxu0
  %v5828 = vadd.f32 %v4352, %v5827
  %v5829 = vpop.f32.mrf.mxu0
  %5830 = vmatprep.mubr.f32.mxu0 0.0
  %5831 = vmatmul.mubr.f32.gmra.mxu0 %v3015
  %v5832 = vpop.f32.mrf.mxu0
  %v5833 = vadd.f32 %v4357, %v5832
  %v5834 = vpop.f32.mrf.mxu0
  %5835 = vmatprep.mubr.f32.mxu0 0.0
  %5836 = vmatmul.mubr.f32.gmra.mxu0 %v3018
  %v5837 = vpop.f32.mrf.mxu0
  %v5838 = vadd.f32 %v4362, %v5837
  %v5839 = vpop.f32.mrf.mxu0
  %5840 = vmatprep.mubr.f32.mxu0 0.0
  %5841 = vmatmul.mubr.f32.gmra.mxu0 %v3021
  %v5842 = vpop.f32.mrf.mxu0
  %v5843 = vadd.f32 %v4367, %v5842
  %v5844 = vpop.f32.mrf.mxu0
  %5845 = vmatprep.mubr.f32.mxu0 0.0
  %5846 = vmatmul.mubr.f32.gmra.mxu0 %v3024
  %v5847 = vpop.f32.mrf.mxu0
  %v5848 = vadd.f32 %v4372, %v5847
  %v5849 = vpop.f32.mrf.mxu0
  %5850 = vmatprep.mubr.f32.mxu0 0.0
  %5851 = vmatmul.mubr.f32.gmra.mxu0 %v3027
  %v5852 = vpop.f32.mrf.mxu0
  %v5853 = vadd.f32 %v4377, %v5852
  %v5854 = vpop.f32.mrf.mxu0
  %5855 = vmatprep.mubr.f32.mxu0 0.0
  %5856 = vmatmul.mubr.f32.gmra.mxu0 %v3030
  %v5857 = vpop.f32.mrf.mxu0
  %v5858 = vadd.f32 %v4382, %v5857
  %v5859 = vpop.f32.mrf.mxu0
  %5860 = vmatprep.mubr.f32.mxu0 0.0
  %5861 = vmatmul.mubr.f32.gmra.mxu0 %v3033
  %v5862 = vpop.f32.mrf.mxu0
  %v5863 = vadd.f32 %v4387, %v5862
  %v5864 = vpop.f32.mrf.mxu0
  %5865 = vmatprep.mubr.f32.mxu0 0.0
  %5866 = vmatmul.mubr.f32.gmra.mxu0 %v3036
  %v5867 = vpop.f32.mrf.mxu0
  %v5868 = vadd.f32 %v4392, %v5867
  %v5869 = vpop.f32.mrf.mxu0
  %5870 = vmatprep.mubr.f32.mxu0 0.0
  %5871 = vmatmul.mubr.f32.gmra.mxu0 %v3039
  %v5872 = vpop.f32.mrf.mxu0
  %v5873 = vadd.f32 %v4397, %v5872
  %v5874 = vpop.f32.mrf.mxu0
  %5875 = vmatprep.mubr.f32.mxu0 0.0
  %5876 = vmatmul.mubr.f32.gmra.mxu0 %v3042
  %v5877 = vpop.f32.mrf.mxu0
  %v5878 = vadd.f32 %v4402, %v5877
  %v5879 = vpop.f32.mrf.mxu0
  %5880 = vmatprep.mubr.f32.mxu0 0.0
  %5881 = vmatmul.mubr.f32.gmra.mxu0 %v3045
  %v5882 = vpop.f32.mrf.mxu0
  %v5883 = vadd.f32 %v4407, %v5882
  %v5884 = vpop.f32.mrf.mxu0
  %5885 = vmatprep.mubr.f32.mxu0 0.0
  %5886 = vmatmul.mubr.f32.gmra.mxu0 %v3048
  %v5887 = vpop.f32.mrf.mxu0
  %v5888 = vadd.f32 %v4412, %v5887
  %v5889 = vpop.f32.mrf.mxu0
  %5890 = vmatprep.mubr.f32.mxu0 0.0
  %5891 = vmatmul.mubr.f32.gmra.mxu0 %v3051
  %v5892 = vpop.f32.mrf.mxu0
  %v5893 = vadd.f32 %v4417, %v5892
  %v5894 = vpop.f32.mrf.mxu0
  %5895 = vmatprep.mubr.f32.mxu0 0.0
  %5896 = vmatmul.mubr.f32.gmra.mxu0 %v3054
  %v5897 = vpop.f32.mrf.mxu0
  %v5898 = vadd.f32 %v4422, %v5897
  %v5899 = vpop.f32.mrf.mxu0
  %5900 = vmatprep.mubr.f32.mxu0 0.0
  %5901 = vmatmul.mubr.f32.gmra.mxu0 %v3057
  %v5902 = vpop.f32.mrf.mxu0
  %v5903 = vadd.f32 %v4427, %v5902
  %v5904 = vpop.f32.mrf.mxu0
  %5905 = vmatprep.mubr.f32.mxu0 0.0
  %5906 = vmatmul.mubr.f32.gmra.mxu0 %v3060
  %v5907 = vpop.f32.mrf.mxu0
  %v5908 = vadd.f32 %v4432, %v5907
  %v5909 = vpop.f32.mrf.mxu0
  %5910 = vmatprep.mubr.f32.mxu0 0.0
  %5911 = vmatmul.mubr.f32.gmra.mxu0 %v3063
  %v5912 = vpop.f32.mrf.mxu0
  %v5913 = vadd.f32 %v4437, %v5912
  %v5914 = vpop.f32.mrf.mxu0
  %5915 = vmatprep.mubr.f32.mxu0 0.0
  %5916 = vmatmul.mubr.f32.gmra.mxu0 %v3066
  %v5917 = vpop.f32.mrf.mxu0
  %v5918 = vadd.f32 %v4442, %v5917
  %v5919 = vpop.f32.mrf.mxu0
  %5920 = vmatprep.mubr.f32.mxu0 0.0
  %5921 = vmatmul.mubr.f32.gmra.mxu0 %v3069
  %v5922 = vpop.f32.mrf.mxu0
  %v5923 = vadd.f32 %v4447, %v5922
  %v5924 = vpop.f32.mrf.mxu0
  %5925 = vmatprep.mubr.f32.mxu0 0.0
  %5926 = vmatmul.mubr.f32.gmra.mxu0 %v3072
  %v5927 = vpop.f32.mrf.mxu0
  %v5928 = vadd.f32 %v4452, %v5927
  %v5929 = vpop.f32.mrf.mxu0
  %5930 = vmatprep.mubr.f32.mxu0 0.0
  %5931 = vmatmul.mubr.f32.gmra.mxu0 %v3075
  %v5932 = vpop.f32.mrf.mxu0
  %v5933 = vadd.f32 %v4457, %v5932
  %v5934 = vpop.f32.mrf.mxu0
  %5935 = vmatprep.mubr.f32.mxu0 0.0
  %5936 = vmatmul.mubr.f32.gmra.mxu0 %v3078
  %v5937 = vpop.f32.mrf.mxu0
  %v5938 = vadd.f32 %v4462, %v5937
  %v5939 = vpop.f32.mrf.mxu0
  %5940 = vmatprep.mubr.f32.mxu0 0.0
  %5941 = vmatmul.mubr.f32.gmra.mxu0 %v3081
  %v5942 = vpop.f32.mrf.mxu0
  %v5943 = vadd.f32 %v4467, %v5942
  %v5944 = vpop.f32.mrf.mxu0
  %5945 = vmatprep.mubr.f32.mxu0 0.0
  %5946 = vmatmul.mubr.f32.gmra.mxu0 %v3084
  %v5947 = vpop.f32.mrf.mxu0
  %v5948 = vadd.f32 %v4472, %v5947
  %v5949 = vpop.f32.mrf.mxu0
  %5950 = vmatprep.mubr.f32.mxu0 0.0
  %5951 = vmatmul.mubr.f32.gmra.mxu0 %v3087
  %v5952 = vpop.f32.mrf.mxu0
  %v5953 = vadd.f32 %v4477, %v5952
  %v5954 = vpop.f32.mrf.mxu0
  %5955 = vmatprep.mubr.f32.mxu0 0.0
  %5956 = vmatmul.mubr.f32.gmra.mxu0 %v3090
  %v5957 = vpop.f32.mrf.mxu0
  %v5958 = vadd.f32 %v4482, %v5957
  %v5959 = vpop.f32.mrf.mxu0
  %5960 = vmatprep.mubr.f32.mxu0 0.0
  %5961 = vmatmul.mubr.f32.gmra.mxu0 %v3093
  %v5962 = vpop.f32.mrf.mxu0
  %v5963 = vadd.f32 %v4487, %v5962
  %v5964 = vpop.f32.mrf.mxu0
  %5965 = vmatprep.mubr.f32.mxu0 0.0
  %5966 = vmatmul.mubr.f32.gmra.mxu0 %v3096
  %v5967 = vpop.f32.mrf.mxu0
  %v5968 = vadd.f32 %v4492, %v5967
  %v5969 = vpop.f32.mrf.mxu0
  %5970 = vmatprep.mubr.f32.mxu0 0.0
  %5971 = vmatmul.mubr.f32.gmra.mxu0 %v3099
  %v5972 = vpop.f32.mrf.mxu0
  %v5973 = vadd.f32 %v4497, %v5972
  %v5974 = vpop.f32.mrf.mxu0
  %5975 = vmatprep.mubr.f32.mxu0 0.0
  %5976 = vmatmul.mubr.f32.gmra.mxu0 %v3102
  %v5977 = vpop.f32.mrf.mxu0
  %v5978 = vadd.f32 %v4502, %v5977
  %v5979 = vpop.f32.mrf.mxu0
  %5980 = vmatprep.mubr.f32.mxu0 0.0
  %5981 = vmatmul.mubr.f32.gmra.mxu0 %v3105
  %v5982 = vpop.f32.mrf.mxu0
  %v5983 = vadd.f32 %v4507, %v5982
  %v5984 = vpop.f32.mrf.mxu0
  %5985 = vmatprep.mubr.f32.mxu0 0.0
  %5986 = vmatmul.mubr.f32.gmra.mxu0 %v3108
  %v5987 = vpop.f32.mrf.mxu0
  %v5988 = vadd.f32 %v4512, %v5987
  %v5989 = vpop.f32.mrf.mxu0
  %5990 = vmatprep.mubr.f32.mxu0 0.0
  %5991 = vmatmul.mubr.f32.gmra.mxu0 %v3111
  %v5992 = vpop.f32.mrf.mxu0
  %v5993 = vadd.f32 %v4517, %v5992
  %v5994 = vpop.f32.mrf.mxu0
  %5995 = vmatprep.mubr.f32.mxu0 0.0
  %5996 = vmatmul.mubr.f32.gmra.mxu0 %v3114
  %v5997 = vpop.f32.mrf.mxu0
  %v5998 = vadd.f32 %v4522, %v5997
  %v5999 = vpop.f32.mrf.mxu0
  %6000 = vmatprep.mubr.f32.mxu0 0.0
  %6001 = vmatmul.mubr.f32.gmra.mxu0 %v3117
  %v6002 = vpop.f32.mrf.mxu0
  %v6003 = vadd.f32 %v4527, %v6002
  %v6004 = vpop.f32.mrf.mxu0
  %6005 = vmatprep.mubr.f32.mxu0 0.0
  %6006 = vmatmul.mubr.f32.gmra.mxu0 %v3120
  %v6007 = vpop.f32.mrf.mxu0
  %v6008 = vadd.f32 %v4532, %v6007
  %v6009 = vpop.f32.mrf.mxu0
  %6010 = vmatprep.mubr.f32.mxu0 0.0
  %6011 = vmatmul.mubr.f32.gmra.mxu0 %v3123
  %v6012 = vpop.f32.mrf.mxu0
  %v6013 = vadd.f32 %v4537, %v6012
  %v6014 = vpop.f32.mrf.mxu0
  %6015 = vmatprep.mubr.f32.mxu0 0.0
  %6016 = vmatmul.mubr.f32.gmra.mxu0 %v3126
  %v6017 = vpop.f32.mrf.mxu0
  %v6018 = vadd.f32 %v4542, %v6017
  %v6019 = vpop.f32.mrf.mxu0
  %6020 = vmatprep.mubr.f32.mxu0 0.0
  %6021 = vmatmul.mubr.f32.gmra.mxu0 %v3129
  %v6022 = vpop.f32.mrf.mxu0
  %v6023 = vadd.f32 %v4547, %v6022
  %v6024 = vpop.f32.mrf.mxu0
  %6025 = vmatprep.mubr.f32.mxu0 0.0
  %6026 = vmatmul.mubr.f32.gmra.mxu0 %v3132
  %v6027 = vpop.f32.mrf.mxu0
  %v6028 = vadd.f32 %v4552, %v6027
  %v6029 = vpop.f32.mrf.mxu0
  %6030 = vmatprep.mubr.f32.mxu0 0.0
  %6031 = vmatmul.mubr.f32.gmra.mxu0 %v3135
  %v6032 = vpop.f32.mrf.mxu0
  %v6033 = vadd.f32 %v4557, %v6032
  %v6034 = vpop.f32.mrf.mxu0
  %6035 = vmatprep.mubr.f32.mxu0 0.0
  %6036 = vmatmul.mubr.f32.gmra.mxu0 %v3138
  %v6037 = vpop.f32.mrf.mxu0
  %v6038 = vadd.f32 %v4562, %v6037
  %v6039 = vpop.f32.mrf.mxu0
  %6040 = vmatprep.mubr.f32.mxu0 0.0
  %6041 = vmatmul.mubr.f32.gmra.mxu0 %v3141
  %v6042 = vpop.f32.mrf.mxu0
  %v6043 = vadd.f32 %v4567, %v6042
  %v6044 = vpop.f32.mrf.mxu0
  %6045 = vmatprep.mubr.f32.mxu0 0.0
  %6046 = vmatmul.mubr.f32.gmra.mxu0 %v3144
  %v6047 = vpop.f32.mrf.mxu0
  %v6048 = vadd.f32 %v4572, %v6047
  %v6049 = vpop.f32.mrf.mxu0
  %6050 = vmatprep.mubr.f32.mxu0 0.0
  %6051 = vmatmul.mubr.f32.gmra.mxu0 %v3147
  %v6052 = vpop.f32.mrf.mxu0
  %v6053 = vadd.f32 %v4577, %v6052
  %v6054 = vpop.f32.mrf.mxu0
  %6055 = vmatprep.mubr.f32.mxu0 0.0
  %6056 = vmatmul.mubr.f32.gmra.mxu0 %v3150
  %v6057 = vpop.f32.mrf.mxu0
  %v6058 = vadd.f32 %v4582, %v6057
  %v6059 = vpop.f32.mrf.mxu0
  %6060 = vmatprep.mubr.f32.mxu0 0.0
  %6061 = vmatmul.mubr.f32.gmra.mxu0 %v3153
  %v6062 = vpop.f32.mrf.mxu0
  %v6063 = vadd.f32 %v4587, %v6062
  %v6064 = vpop.f32.mrf.mxu0
  %6065 = vmatprep.mubr.f32.mxu0 0.0
  %6066 = vmatmul.mubr.f32.gmra.mxu0 %v3156
  %v6067 = vpop.f32.mrf.mxu0
  %v6068 = vadd.f32 %v4592, %v6067
  %v6069 = vpop.f32.mrf.mxu0
  %6070 = vmatprep.mubr.f32.mxu0 0.0
  %6071 = vmatmul.mubr.f32.gmra.mxu0 %v3159
  %v6072 = vpop.f32.mrf.mxu0
  %v6073 = vadd.f32 %v4597, %v6072
  %v6074 = vpop.f32.mrf.mxu0
  %6075 = vmatprep.mubr.f32.mxu0 0.0
  %6076 = vmatmul.mubr.f32.gmra.mxu0 %v3162
  %v6077 = vpop.f32.mrf.mxu0
  %v6078 = vadd.f32 %v4602, %v6077
  %v6079 = vpop.f32.mrf.mxu0
  %6080 = vmatprep.mubr.f32.mxu0 0.0
  %6081 = vmatmul.mubr.f32.gmra.mxu0 %v3165
  %v6082 = vpop.f32.mrf.mxu0
  %v6083 = vadd.f32 %v4607, %v6082
  %v6084 = vpop.f32.mrf.mxu0
  %6085 = vmatprep.mubr.f32.mxu0 0.0
  %6086 = vmatmul.mubr.f32.gmra.mxu0 %v3168
  %v6087 = vpop.f32.mrf.mxu0
  %v6088 = vadd.f32 %v4612, %v6087
  %v6089 = vpop.f32.mrf.mxu0
  %6090 = vmatprep.mubr.f32.mxu0 0.0
  %6091 = vmatmul.mubr.f32.gmra.mxu0 %v3171
  %v6092 = vpop.f32.mrf.mxu0
  %v6093 = vadd.f32 %v4617, %v6092
  %v6094 = vpop.f32.mrf.mxu0
  %6095 = vmatprep.mubr.f32.mxu0 0.0
  %6096 = vmatmul.mubr.f32.gmra.mxu0 %v3174
  %v6097 = vpop.f32.mrf.mxu0
  %v6098 = vadd.f32 %v4622, %v6097
  %v6099 = vpop.f32.mrf.mxu0
  %6100 = vmatprep.mubr.f32.mxu0 0.0
  %6101 = vmatmul.mubr.f32.gmra.mxu0 %v3177
  %v6102 = vpop.f32.mrf.mxu0
  %v6103 = vadd.f32 %v4627, %v6102
  %v6104 = vpop.f32.mrf.mxu0
  %6105 = vmatprep.mubr.f32.mxu0 0.0
  %6106 = vmatmul.mubr.f32.gmra.mxu0 %v3180
  %v6107 = vpop.f32.mrf.mxu0
  %v6108 = vadd.f32 %v4632, %v6107
  %v6109 = vpop.f32.mrf.mxu0
  %6110 = vmatprep.mubr.f32.mxu0 0.0
  %6111 = vmatmul.mubr.f32.gmra.mxu0 %v3183
  %v6112 = vpop.f32.mrf.mxu0
  %v6113 = vadd.f32 %v4637, %v6112
  %v6114 = vpop.f32.mrf.mxu0
  %6115 = vmatprep.mubr.f32.mxu0 0.0
  %6116 = vmatmul.mubr.f32.gmra.mxu0 %v3186
  %v6117 = vpop.f32.mrf.mxu0
  %v6118 = vadd.f32 %v4642, %v6117
  %v6119 = vpop.f32.mrf.mxu0
  %6120 = vmatprep.mubr.f32.mxu0 0.0
  %6121 = vmatmul.mubr.f32.gmra.mxu0 %v3189
  %v6122 = vpop.f32.mrf.mxu0
  %v6123 = vadd.f32 %v4647, %v6122
  %v6124 = vpop.f32.mrf.mxu0
  %6125 = vmatprep.mubr.f32.mxu0 0.0
  %6126 = vmatmul.mubr.f32.gmra.mxu0 %v3192
  %v6127 = vpop.f32.mrf.mxu0
  %v6128 = vadd.f32 %v4652, %v6127
  %v6129 = vpop.f32.mrf.mxu0
  %6130 = vmatprep.mubr.f32.mxu0 0.0
  %6131 = vmatmul.mubr.f32.gmra.mxu0 %v3195
  %v6132 = vpop.f32.mrf.mxu0
  %v6133 = vadd.f32 %v4657, %v6132
  %v6134 = vpop.f32.mrf.mxu0
  %6135 = vmatprep.mubr.f32.mxu0 0.0
  %6136 = vmatmul.mubr.f32.gmra.mxu0 %v3198
  %v6137 = vpop.f32.mrf.mxu0
  %v6138 = vadd.f32 %v4662, %v6137
  %v6139 = vpop.f32.mrf.mxu0
  %6140 = vmatprep.mubr.f32.mxu0 0.0
  %6141 = vmatmul.mubr.f32.gmra.mxu0 %v3201
  %v6142 = vpop.f32.mrf.mxu0
  %v6143 = vadd.f32 %v4667, %v6142
  %v6144 = vpop.f32.mrf.mxu0
  %6145 = vmatprep.mubr.f32.mxu0 0.0
  %6146 = vmatmul.mubr.f32.gmra.mxu0 %v3204
  %v6147 = vpop.f32.mrf.mxu0
  %v6148 = vadd.f32 %v4672, %v6147
  %v6149 = vpop.f32.mrf.mxu0
  %6150 = vmatprep.mubr.f32.mxu0 0.0
  %6151 = vmatmul.mubr.f32.gmra.mxu0 %v3207
  %v6152 = vpop.f32.mrf.mxu0
  %v6153 = vadd.f32 %v4677, %v6152
  %v6154 = vpop.f32.mrf.mxu0
  %6155 = vmatprep.mubr.f32.mxu0 0.0
  %6156 = vmatmul.mubr.f32.gmra.mxu0 %v3210
  %v6157 = vpop.f32.mrf.mxu0
  %v6158 = vadd.f32 %v4682, %v6157
  %v6159 = vpop.f32.mrf.mxu0
  %6160 = vmatprep.mubr.f32.mxu0 0.0
  %6161 = vmatmul.mubr.f32.gmra.mxu0 %v3213
  %v6162 = vpop.f32.mrf.mxu0
  %v6163 = vadd.f32 %v4687, %v6162
  %v6164 = vpop.f32.mrf.mxu0
  %6165 = vmatprep.mubr.f32.mxu0 0.0
  %6166 = vmatmul.mubr.f32.gmra.mxu0 %v3216
  %v6167 = vpop.f32.mrf.mxu0
  %v6168 = vadd.f32 %v4692, %v6167
  %v6169 = vpop.f32.mrf.mxu0
  %6170 = vdwg.mxu0
  %s6171 = scalar_lea.vmem %s1, 64
  %v6172 = vld [vmem:[%s6171] sm:$0xff]
  %v6173 = vld [vmem:[%s6171 + $0x8] sm:$0xff]
  %v6174 = vld [vmem:[%s6171 + $0x10] sm:$0xff]
  %v6175 = vld [vmem:[%s6171 + $0x18] sm:$0x3f]
  %v6177 = vsel %vm2449, %v2392, 0
  %v6180 = vsel %vm2449, %v2393, 0
  %v6183 = vsel %vm2449, %v2394, 0
  %v6186 = vsel %vm2449, %v2395, 0
  %v6189 = vsel %vm2449, %v2396, 0
  %v6192 = vsel %vm2449, %v2397, 0
  %v6195 = vsel %vm2449, %v2398, 0
  %v6198 = vsel %vm2449, %v2399, 0
  %v6201 = vsel %vm2449, %v2400, 0
  %v6204 = vsel %vm2449, %v2401, 0
  %v6207 = vsel %vm2449, %v2402, 0
  %v6210 = vsel %vm2449, %v2403, 0
  %v6213 = vsel %vm2449, %v2404, 0
  %v6216 = vsel %vm2449, %v2405, 0
  %v6219 = vsel %vm2449, %v2406, 0
  %v6222 = vsel %vm2449, %v2407, 0
  %v6225 = vsel %vm3266, %v6175, 0
  %6227 = vmatprep.subr.mxu0 0.0
  %6228 = vmatpush1.msra.mxu0 0.0
  %6229 = vmatprep.subr.mxu0 0.0
  %6230 = vmatpush1.msra.mxu0 0.0
  %6231 = vmatprep.subr.mxu0 0.0
  %6232 = vmatpush1.msra.mxu0 0.0
  %6233 = vmatprep.subr.mxu0 0.0
  %6234 = vmatpush1.msra.mxu0 0.0
  %6235 = vmatprep.subr.mxu0 0.0
  %6236 = vmatpush1.msra.mxu0 0.0
  %6237 = vmatprep.subr.mxu0 0.0
  %6238 = vmatpush1.msra.mxu0 0.0
  %6239 = vmatprep.subr.mxu0 0.0
  %6240 = vmatpush1.msra.mxu0 0.0
  %6241 = vmatprep.subr.mxu0 0.0
  %6242 = vmatpush1.msra.mxu0 0.0
  %6243 = vmatprep.subr.mxu0 0.0
  %6244 = vmatpush1.msra.mxu0 0.0
  %6245 = vmatprep.subr.mxu0 0.0
  %6246 = vmatpush1.msra.mxu0 0.0
  %6247 = vmatprep.subr.mxu0 0.0
  %6248 = vmatpush1.msra.mxu0 0.0
  %6249 = vmatprep.subr.mxu0 0.0
  %6250 = vmatpush1.msra.mxu0 0.0
  %6251 = vmatprep.subr.mxu0 0.0
  %6252 = vmatpush1.msra.mxu0 %v6225
  %6253 = vmatprep.subr.mxu0 0.0
  %6254 = vmatpush1.msra.mxu0 %v6174
  %6255 = vmatprep.subr.mxu0 0.0
  %6256 = vmatpush1.msra.mxu0 %v6173
  %6257 = vmatprep.subr.mxu0 0.0
  %6258 = vmatpush1.msra.mxu0 %v6172
  %6259 = vmatprep.subr.mxu0 0.0
  %6260 = vmatpush2.msra.mxu0 0.0
  %6261 = vmatprep.subr.mxu0 0.0
  %6262 = vmatpush2.msra.mxu0 0.0
  %6263 = vmatprep.subr.mxu0 0.0
  %6264 = vmatpush2.msra.mxu0 0.0
  %6265 = vmatprep.subr.mxu0 0.0
  %6266 = vmatpush2.msra.mxu0 0.0
  %6267 = vmatprep.subr.mxu0 0.0
  %6268 = vmatpush2.msra.mxu0 0.0
  %6269 = vmatprep.subr.mxu0 0.0
  %6270 = vmatpush2.msra.mxu0 0.0
  %6271 = vmatprep.subr.mxu0 0.0
  %6272 = vmatpush2.msra.mxu0 0.0
  %6273 = vmatprep.subr.mxu0 0.0
  %6274 = vmatpush2.msra.mxu0 0.0
  %6275 = vmatprep.subr.mxu0 0.0
  %6276 = vmatpush2.msra.mxu0 0.0
  %6277 = vmatprep.subr.mxu0 0.0
  %6278 = vmatpush2.msra.mxu0 0.0
  %6279 = vmatprep.subr.mxu0 0.0
  %6280 = vmatpush2.msra.mxu0 0.0
  %6281 = vmatprep.subr.mxu0 0.0
  %6282 = vmatpush2.msra.mxu0 0.0
  %6283 = vmatprep.subr.mxu0 0.0
  %6284 = vmatpush2.msra.mxu0 0.0
  %6285 = vmatprep.subr.mxu0 0.0
  %6286 = vmatpush2.msra.mxu0 0.0
  %6287 = vmatprep.subr.mxu0 0.0
  %6288 = vmatpush2.msra.mxu0 0.0
  %6289 = vmatprep.subr.mxu0 0.0
  %6290 = vmatpush2.msra.mxu0 0.0
  %6291 = vmatprep.mubr.f32.mxu0 0.0
  %6292 = vmatmul.mubr.f32.gmra.mxu0 %v2499
  %v6293 = vpop.f32.mrf.mxu0
  %v6294 = vadd.f32 0.0, %v6293
  %v6295 = vpop.f32.mrf.mxu0
  %6296 = vmatprep.mubr.f32.mxu0 0.0
  %6297 = vmatmul.mubr.f32.gmra.mxu0 %v2502
  %v6298 = vpop.f32.mrf.mxu0
  %v6299 = vadd.f32 0.0, %v6298
  %v6300 = vpop.f32.mrf.mxu0
  %6301 = vmatprep.mubr.f32.mxu0 0.0
  %6302 = vmatmul.mubr.f32.gmra.mxu0 %v2505
  %v6303 = vpop.f32.mrf.mxu0
  %v6304 = vadd.f32 0.0, %v6303
  %v6305 = vpop.f32.mrf.mxu0
  %6306 = vmatprep.mubr.f32.mxu0 0.0
  %6307 = vmatmul.mubr.f32.gmra.mxu0 %v2508
  %v6308 = vpop.f32.mrf.mxu0
  %v6309 = vadd.f32 0.0, %v6308
  %v6310 = vpop.f32.mrf.mxu0
  %6311 = vmatprep.mubr.f32.mxu0 0.0
  %6312 = vmatmul.mubr.f32.gmra.mxu0 %v2511
  %v6313 = vpop.f32.mrf.mxu0
  %v6314 = vadd.f32 0.0, %v6313
  %v6315 = vpop.f32.mrf.mxu0
  %6316 = vmatprep.mubr.f32.mxu0 0.0
  %6317 = vmatmul.mubr.f32.gmra.mxu0 %v2514
  %v6318 = vpop.f32.mrf.mxu0
  %v6319 = vadd.f32 0.0, %v6318
  %v6320 = vpop.f32.mrf.mxu0
  %6321 = vmatprep.mubr.f32.mxu0 0.0
  %6322 = vmatmul.mubr.f32.gmra.mxu0 %v2517
  %v6323 = vpop.f32.mrf.mxu0
  %v6324 = vadd.f32 0.0, %v6323
  %v6325 = vpop.f32.mrf.mxu0
  %6326 = vmatprep.mubr.f32.mxu0 0.0
  %6327 = vmatmul.mubr.f32.gmra.mxu0 %v2520
  %v6328 = vpop.f32.mrf.mxu0
  %v6329 = vadd.f32 0.0, %v6328
  %v6330 = vpop.f32.mrf.mxu0
  %6331 = vmatprep.mubr.f32.mxu0 0.0
  %6332 = vmatmul.mubr.f32.gmra.mxu0 %v2523
  %v6333 = vpop.f32.mrf.mxu0
  %v6334 = vadd.f32 0.0, %v6333
  %v6335 = vpop.f32.mrf.mxu0
  %6336 = vmatprep.mubr.f32.mxu0 0.0
  %6337 = vmatmul.mubr.f32.gmra.mxu0 %v2526
  %v6338 = vpop.f32.mrf.mxu0
  %v6339 = vadd.f32 0.0, %v6338
  %v6340 = vpop.f32.mrf.mxu0
  %6341 = vmatprep.mubr.f32.mxu0 0.0
  %6342 = vmatmul.mubr.f32.gmra.mxu0 %v2529
  %v6343 = vpop.f32.mrf.mxu0
  %v6344 = vadd.f32 0.0, %v6343
  %v6345 = vpop.f32.mrf.mxu0
  %6346 = vmatprep.mubr.f32.mxu0 0.0
  %6347 = vmatmul.mubr.f32.gmra.mxu0 %v2532
  %v6348 = vpop.f32.mrf.mxu0
  %v6349 = vadd.f32 0.0, %v6348
  %v6350 = vpop.f32.mrf.mxu0
  %6351 = vmatprep.mubr.f32.mxu0 0.0
  %6352 = vmatmul.mubr.f32.gmra.mxu0 %v2535
  %v6353 = vpop.f32.mrf.mxu0
  %v6354 = vadd.f32 0.0, %v6353
  %v6355 = vpop.f32.mrf.mxu0
  %6356 = vmatprep.mubr.f32.mxu0 0.0
  %6357 = vmatmul.mubr.f32.gmra.mxu0 %v2538
  %v6358 = vpop.f32.mrf.mxu0
  %v6359 = vadd.f32 0.0, %v6358
  %v6360 = vpop.f32.mrf.mxu0
  %6361 = vmatprep.mubr.f32.mxu0 0.0
  %6362 = vmatmul.mubr.f32.gmra.mxu0 %v2541
  %v6363 = vpop.f32.mrf.mxu0
  %v6364 = vadd.f32 0.0, %v6363
  %v6365 = vpop.f32.mrf.mxu0
  %6366 = vmatprep.mubr.f32.mxu0 0.0
  %6367 = vmatmul.mubr.f32.gmra.mxu0 %v2544
  %v6368 = vpop.f32.mrf.mxu0
  %v6369 = vadd.f32 0.0, %v6368
  %v6370 = vpop.f32.mrf.mxu0
  %6371 = vmatprep.mubr.f32.mxu0 0.0
  %6372 = vmatmul.mubr.f32.gmra.mxu0 %v2547
  %v6373 = vpop.f32.mrf.mxu0
  %v6374 = vadd.f32 0.0, %v6373
  %v6375 = vpop.f32.mrf.mxu0
  %6376 = vmatprep.mubr.f32.mxu0 0.0
  %6377 = vmatmul.mubr.f32.gmra.mxu0 %v2550
  %v6378 = vpop.f32.mrf.mxu0
  %v6379 = vadd.f32 0.0, %v6378
  %v6380 = vpop.f32.mrf.mxu0
  %6381 = vmatprep.mubr.f32.mxu0 0.0
  %6382 = vmatmul.mubr.f32.gmra.mxu0 %v2553
  %v6383 = vpop.f32.mrf.mxu0
  %v6384 = vadd.f32 0.0, %v6383
  %v6385 = vpop.f32.mrf.mxu0
  %6386 = vmatprep.mubr.f32.mxu0 0.0
  %6387 = vmatmul.mubr.f32.gmra.mxu0 %v2556
  %v6388 = vpop.f32.mrf.mxu0
  %v6389 = vadd.f32 0.0, %v6388
  %v6390 = vpop.f32.mrf.mxu0
  %6391 = vmatprep.mubr.f32.mxu0 0.0
  %6392 = vmatmul.mubr.f32.gmra.mxu0 %v2559
  %v6393 = vpop.f32.mrf.mxu0
  %v6394 = vadd.f32 0.0, %v6393
  %v6395 = vpop.f32.mrf.mxu0
  %6396 = vmatprep.mubr.f32.mxu0 0.0
  %6397 = vmatmul.mubr.f32.gmra.mxu0 %v2562
  %v6398 = vpop.f32.mrf.mxu0
  %v6399 = vadd.f32 0.0, %v6398
  %v6400 = vpop.f32.mrf.mxu0
  %6401 = vmatprep.mubr.f32.mxu0 0.0
  %6402 = vmatmul.mubr.f32.gmra.mxu0 %v2565
  %v6403 = vpop.f32.mrf.mxu0
  %v6404 = vadd.f32 0.0, %v6403
  %v6405 = vpop.f32.mrf.mxu0
  %6406 = vmatprep.mubr.f32.mxu0 0.0
  %6407 = vmatmul.mubr.f32.gmra.mxu0 %v2568
  %v6408 = vpop.f32.mrf.mxu0
  %v6409 = vadd.f32 0.0, %v6408
  %v6410 = vpop.f32.mrf.mxu0
  %6411 = vmatprep.mubr.f32.mxu0 0.0
  %6412 = vmatmul.mubr.f32.gmra.mxu0 %v2571
  %v6413 = vpop.f32.mrf.mxu0
  %v6414 = vadd.f32 0.0, %v6413
  %v6415 = vpop.f32.mrf.mxu0
  %6416 = vmatprep.mubr.f32.mxu0 0.0
  %6417 = vmatmul.mubr.f32.gmra.mxu0 %v2574
  %v6418 = vpop.f32.mrf.mxu0
  %v6419 = vadd.f32 0.0, %v6418
  %v6420 = vpop.f32.mrf.mxu0
  %6421 = vmatprep.mubr.f32.mxu0 0.0
  %6422 = vmatmul.mubr.f32.gmra.mxu0 %v2577
  %v6423 = vpop.f32.mrf.mxu0
  %v6424 = vadd.f32 0.0, %v6423
  %v6425 = vpop.f32.mrf.mxu0
  %6426 = vmatprep.mubr.f32.mxu0 0.0
  %6427 = vmatmul.mubr.f32.gmra.mxu0 %v2580
  %v6428 = vpop.f32.mrf.mxu0
  %v6429 = vadd.f32 0.0, %v6428
  %v6430 = vpop.f32.mrf.mxu0
  %6431 = vmatprep.mubr.f32.mxu0 0.0
  %6432 = vmatmul.mubr.f32.gmra.mxu0 %v2583
  %v6433 = vpop.f32.mrf.mxu0
  %v6434 = vadd.f32 0.0, %v6433
  %v6435 = vpop.f32.mrf.mxu0
  %6436 = vmatprep.mubr.f32.mxu0 0.0
  %6437 = vmatmul.mubr.f32.gmra.mxu0 %v2586
  %v6438 = vpop.f32.mrf.mxu0
  %v6439 = vadd.f32 0.0, %v6438
  %v6440 = vpop.f32.mrf.mxu0
  %6441 = vmatprep.mubr.f32.mxu0 0.0
  %6442 = vmatmul.mubr.f32.gmra.mxu0 %v2589
  %v6443 = vpop.f32.mrf.mxu0
  %v6444 = vadd.f32 0.0, %v6443
  %v6445 = vpop.f32.mrf.mxu0
  %6446 = vmatprep.mubr.f32.mxu0 0.0
  %6447 = vmatmul.mubr.f32.gmra.mxu0 %v2592
  %v6448 = vpop.f32.mrf.mxu0
  %v6449 = vadd.f32 0.0, %v6448
  %v6450 = vpop.f32.mrf.mxu0
  %6451 = vmatprep.mubr.f32.mxu0 0.0
  %6452 = vmatmul.mubr.f32.gmra.mxu0 %v2595
  %v6453 = vpop.f32.mrf.mxu0
  %v6454 = vadd.f32 0.0, %v6453
  %v6455 = vpop.f32.mrf.mxu0
  %6456 = vmatprep.mubr.f32.mxu0 0.0
  %6457 = vmatmul.mubr.f32.gmra.mxu0 %v2598
  %v6458 = vpop.f32.mrf.mxu0
  %v6459 = vadd.f32 0.0, %v6458
  %v6460 = vpop.f32.mrf.mxu0
  %6461 = vmatprep.mubr.f32.mxu0 0.0
  %6462 = vmatmul.mubr.f32.gmra.mxu0 %v2601
  %v6463 = vpop.f32.mrf.mxu0
  %v6464 = vadd.f32 0.0, %v6463
  %v6465 = vpop.f32.mrf.mxu0
  %6466 = vmatprep.mubr.f32.mxu0 0.0
  %6467 = vmatmul.mubr.f32.gmra.mxu0 %v2604
  %v6468 = vpop.f32.mrf.mxu0
  %v6469 = vadd.f32 0.0, %v6468
  %v6470 = vpop.f32.mrf.mxu0
  %6471 = vmatprep.mubr.f32.mxu0 0.0
  %6472 = vmatmul.mubr.f32.gmra.mxu0 %v2607
  %v6473 = vpop.f32.mrf.mxu0
  %v6474 = vadd.f32 0.0, %v6473
  %v6475 = vpop.f32.mrf.mxu0
  %6476 = vmatprep.mubr.f32.mxu0 0.0
  %6477 = vmatmul.mubr.f32.gmra.mxu0 %v2610
  %v6478 = vpop.f32.mrf.mxu0
  %v6479 = vadd.f32 0.0, %v6478
  %v6480 = vpop.f32.mrf.mxu0
  %6481 = vmatprep.mubr.f32.mxu0 0.0
  %6482 = vmatmul.mubr.f32.gmra.mxu0 %v2613
  %v6483 = vpop.f32.mrf.mxu0
  %v6484 = vadd.f32 0.0, %v6483
  %v6485 = vpop.f32.mrf.mxu0
  %6486 = vmatprep.mubr.f32.mxu0 0.0
  %6487 = vmatmul.mubr.f32.gmra.mxu0 %v2616
  %v6488 = vpop.f32.mrf.mxu0
  %v6489 = vadd.f32 0.0, %v6488
  %v6490 = vpop.f32.mrf.mxu0
  %6491 = vmatprep.mubr.f32.mxu0 0.0
  %6492 = vmatmul.mubr.f32.gmra.mxu0 %v2619
  %v6493 = vpop.f32.mrf.mxu0
  %v6494 = vadd.f32 0.0, %v6493
  %v6495 = vpop.f32.mrf.mxu0
  %6496 = vmatprep.mubr.f32.mxu0 0.0
  %6497 = vmatmul.mubr.f32.gmra.mxu0 %v2622
  %v6498 = vpop.f32.mrf.mxu0
  %v6499 = vadd.f32 0.0, %v6498
  %v6500 = vpop.f32.mrf.mxu0
  %6501 = vmatprep.mubr.f32.mxu0 0.0
  %6502 = vmatmul.mubr.f32.gmra.mxu0 %v2625
  %v6503 = vpop.f32.mrf.mxu0
  %v6504 = vadd.f32 0.0, %v6503
  %v6505 = vpop.f32.mrf.mxu0
  %6506 = vmatprep.mubr.f32.mxu0 0.0
  %6507 = vmatmul.mubr.f32.gmra.mxu0 %v2628
  %v6508 = vpop.f32.mrf.mxu0
  %v6509 = vadd.f32 0.0, %v6508
  %v6510 = vpop.f32.mrf.mxu0
  %6511 = vmatprep.mubr.f32.mxu0 0.0
  %6512 = vmatmul.mubr.f32.gmra.mxu0 %v2631
  %v6513 = vpop.f32.mrf.mxu0
  %v6514 = vadd.f32 0.0, %v6513
  %v6515 = vpop.f32.mrf.mxu0
  %6516 = vmatprep.mubr.f32.mxu0 0.0
  %6517 = vmatmul.mubr.f32.gmra.mxu0 %v2634
  %v6518 = vpop.f32.mrf.mxu0
  %v6519 = vadd.f32 0.0, %v6518
  %v6520 = vpop.f32.mrf.mxu0
  %6521 = vmatprep.mubr.f32.mxu0 0.0
  %6522 = vmatmul.mubr.f32.gmra.mxu0 %v2637
  %v6523 = vpop.f32.mrf.mxu0
  %v6524 = vadd.f32 0.0, %v6523
  %v6525 = vpop.f32.mrf.mxu0
  %6526 = vmatprep.mubr.f32.mxu0 0.0
  %6527 = vmatmul.mubr.f32.gmra.mxu0 %v2640
  %v6528 = vpop.f32.mrf.mxu0
  %v6529 = vadd.f32 0.0, %v6528
  %v6530 = vpop.f32.mrf.mxu0
  %6531 = vmatprep.mubr.f32.mxu0 0.0
  %6532 = vmatmul.mubr.f32.gmra.mxu0 %v2643
  %v6533 = vpop.f32.mrf.mxu0
  %v6534 = vadd.f32 0.0, %v6533
  %v6535 = vpop.f32.mrf.mxu0
  %6536 = vmatprep.mubr.f32.mxu0 0.0
  %6537 = vmatmul.mubr.f32.gmra.mxu0 %v2646
  %v6538 = vpop.f32.mrf.mxu0
  %v6539 = vadd.f32 0.0, %v6538
  %v6540 = vpop.f32.mrf.mxu0
  %6541 = vmatprep.mubr.f32.mxu0 0.0
  %6542 = vmatmul.mubr.f32.gmra.mxu0 %v2649
  %v6543 = vpop.f32.mrf.mxu0
  %v6544 = vadd.f32 0.0, %v6543
  %v6545 = vpop.f32.mrf.mxu0
  %6546 = vmatprep.mubr.f32.mxu0 0.0
  %6547 = vmatmul.mubr.f32.gmra.mxu0 %v2652
  %v6548 = vpop.f32.mrf.mxu0
  %v6549 = vadd.f32 0.0, %v6548
  %v6550 = vpop.f32.mrf.mxu0
  %6551 = vmatprep.mubr.f32.mxu0 0.0
  %6552 = vmatmul.mubr.f32.gmra.mxu0 %v2655
  %v6553 = vpop.f32.mrf.mxu0
  %v6554 = vadd.f32 0.0, %v6553
  %v6555 = vpop.f32.mrf.mxu0
  %6556 = vmatprep.mubr.f32.mxu0 0.0
  %6557 = vmatmul.mubr.f32.gmra.mxu0 %v2658
  %v6558 = vpop.f32.mrf.mxu0
  %v6559 = vadd.f32 0.0, %v6558
  %v6560 = vpop.f32.mrf.mxu0
  %6561 = vmatprep.mubr.f32.mxu0 0.0
  %6562 = vmatmul.mubr.f32.gmra.mxu0 %v2661
  %v6563 = vpop.f32.mrf.mxu0
  %v6564 = vadd.f32 0.0, %v6563
  %v6565 = vpop.f32.mrf.mxu0
  %6566 = vmatprep.mubr.f32.mxu0 0.0
  %6567 = vmatmul.mubr.f32.gmra.mxu0 %v2664
  %v6568 = vpop.f32.mrf.mxu0
  %v6569 = vadd.f32 0.0, %v6568
  %v6570 = vpop.f32.mrf.mxu0
  %6571 = vmatprep.mubr.f32.mxu0 0.0
  %6572 = vmatmul.mubr.f32.gmra.mxu0 %v2667
  %v6573 = vpop.f32.mrf.mxu0
  %v6574 = vadd.f32 0.0, %v6573
  %v6575 = vpop.f32.mrf.mxu0
  %6576 = vmatprep.mubr.f32.mxu0 0.0
  %6577 = vmatmul.mubr.f32.gmra.mxu0 %v2670
  %v6578 = vpop.f32.mrf.mxu0
  %v6579 = vadd.f32 0.0, %v6578
  %v6580 = vpop.f32.mrf.mxu0
  %6581 = vmatprep.mubr.f32.mxu0 0.0
  %6582 = vmatmul.mubr.f32.gmra.mxu0 %v2673
  %v6583 = vpop.f32.mrf.mxu0
  %v6584 = vadd.f32 0.0, %v6583
  %v6585 = vpop.f32.mrf.mxu0
  %6586 = vmatprep.mubr.f32.mxu0 0.0
  %6587 = vmatmul.mubr.f32.gmra.mxu0 %v2676
  %v6588 = vpop.f32.mrf.mxu0
  %v6589 = vadd.f32 0.0, %v6588
  %v6590 = vpop.f32.mrf.mxu0
  %6591 = vmatprep.mubr.f32.mxu0 0.0
  %6592 = vmatmul.mubr.f32.gmra.mxu0 %v2679
  %v6593 = vpop.f32.mrf.mxu0
  %v6594 = vadd.f32 0.0, %v6593
  %v6595 = vpop.f32.mrf.mxu0
  %6596 = vmatprep.mubr.f32.mxu0 0.0
  %6597 = vmatmul.mubr.f32.gmra.mxu0 %v2682
  %v6598 = vpop.f32.mrf.mxu0
  %v6599 = vadd.f32 0.0, %v6598
  %v6600 = vpop.f32.mrf.mxu0
  %6601 = vmatprep.mubr.f32.mxu0 0.0
  %6602 = vmatmul.mubr.f32.gmra.mxu0 %v2685
  %v6603 = vpop.f32.mrf.mxu0
  %v6604 = vadd.f32 0.0, %v6603
  %v6605 = vpop.f32.mrf.mxu0
  %6606 = vmatprep.mubr.f32.mxu0 0.0
  %6607 = vmatmul.mubr.f32.gmra.mxu0 %v2688
  %v6608 = vpop.f32.mrf.mxu0
  %v6609 = vadd.f32 0.0, %v6608
  %v6610 = vpop.f32.mrf.mxu0
  %6611 = vmatprep.mubr.f32.mxu0 0.0
  %6612 = vmatmul.mubr.f32.gmra.mxu0 %v2691
  %v6613 = vpop.f32.mrf.mxu0
  %v6614 = vadd.f32 0.0, %v6613
  %v6615 = vpop.f32.mrf.mxu0
  %6616 = vmatprep.mubr.f32.mxu0 0.0
  %6617 = vmatmul.mubr.f32.gmra.mxu0 %v2694
  %v6618 = vpop.f32.mrf.mxu0
  %v6619 = vadd.f32 0.0, %v6618
  %v6620 = vpop.f32.mrf.mxu0
  %6621 = vmatprep.mubr.f32.mxu0 0.0
  %6622 = vmatmul.mubr.f32.gmra.mxu0 %v2697
  %v6623 = vpop.f32.mrf.mxu0
  %v6624 = vadd.f32 0.0, %v6623
  %v6625 = vpop.f32.mrf.mxu0
  %6626 = vmatprep.mubr.f32.mxu0 0.0
  %6627 = vmatmul.mubr.f32.gmra.mxu0 %v2700
  %v6628 = vpop.f32.mrf.mxu0
  %v6629 = vadd.f32 0.0, %v6628
  %v6630 = vpop.f32.mrf.mxu0
  %6631 = vmatprep.mubr.f32.mxu0 0.0
  %6632 = vmatmul.mubr.f32.gmra.mxu0 %v2703
  %v6633 = vpop.f32.mrf.mxu0
  %v6634 = vadd.f32 0.0, %v6633
  %v6635 = vpop.f32.mrf.mxu0
  %6636 = vmatprep.mubr.f32.mxu0 0.0
  %6637 = vmatmul.mubr.f32.gmra.mxu0 %v2706
  %v6638 = vpop.f32.mrf.mxu0
  %v6639 = vadd.f32 0.0, %v6638
  %v6640 = vpop.f32.mrf.mxu0
  %6641 = vmatprep.mubr.f32.mxu0 0.0
  %6642 = vmatmul.mubr.f32.gmra.mxu0 %v2709
  %v6643 = vpop.f32.mrf.mxu0
  %v6644 = vadd.f32 0.0, %v6643
  %v6645 = vpop.f32.mrf.mxu0
  %6646 = vmatprep.mubr.f32.mxu0 0.0
  %6647 = vmatmul.mubr.f32.gmra.mxu0 %v2712
  %v6648 = vpop.f32.mrf.mxu0
  %v6649 = vadd.f32 0.0, %v6648
  %v6650 = vpop.f32.mrf.mxu0
  %6651 = vmatprep.mubr.f32.mxu0 0.0
  %6652 = vmatmul.mubr.f32.gmra.mxu0 %v2715
  %v6653 = vpop.f32.mrf.mxu0
  %v6654 = vadd.f32 0.0, %v6653
  %v6655 = vpop.f32.mrf.mxu0
  %6656 = vmatprep.mubr.f32.mxu0 0.0
  %6657 = vmatmul.mubr.f32.gmra.mxu0 %v2718
  %v6658 = vpop.f32.mrf.mxu0
  %v6659 = vadd.f32 0.0, %v6658
  %v6660 = vpop.f32.mrf.mxu0
  %6661 = vmatprep.mubr.f32.mxu0 0.0
  %6662 = vmatmul.mubr.f32.gmra.mxu0 %v2721
  %v6663 = vpop.f32.mrf.mxu0
  %v6664 = vadd.f32 0.0, %v6663
  %v6665 = vpop.f32.mrf.mxu0
  %6666 = vmatprep.mubr.f32.mxu0 0.0
  %6667 = vmatmul.mubr.f32.gmra.mxu0 %v2724
  %v6668 = vpop.f32.mrf.mxu0
  %v6669 = vadd.f32 0.0, %v6668
  %v6670 = vpop.f32.mrf.mxu0
  %6671 = vmatprep.mubr.f32.mxu0 0.0
  %6672 = vmatmul.mubr.f32.gmra.mxu0 %v2727
  %v6673 = vpop.f32.mrf.mxu0
  %v6674 = vadd.f32 0.0, %v6673
  %v6675 = vpop.f32.mrf.mxu0
  %6676 = vmatprep.mubr.f32.mxu0 0.0
  %6677 = vmatmul.mubr.f32.gmra.mxu0 %v2730
  %v6678 = vpop.f32.mrf.mxu0
  %v6679 = vadd.f32 0.0, %v6678
  %v6680 = vpop.f32.mrf.mxu0
  %6681 = vmatprep.mubr.f32.mxu0 0.0
  %6682 = vmatmul.mubr.f32.gmra.mxu0 %v2733
  %v6683 = vpop.f32.mrf.mxu0
  %v6684 = vadd.f32 0.0, %v6683
  %v6685 = vpop.f32.mrf.mxu0
  %6686 = vmatprep.mubr.f32.mxu0 0.0
  %6687 = vmatmul.mubr.f32.gmra.mxu0 %v2736
  %v6688 = vpop.f32.mrf.mxu0
  %v6689 = vadd.f32 0.0, %v6688
  %v6690 = vpop.f32.mrf.mxu0
  %6691 = vmatprep.mubr.f32.mxu0 0.0
  %6692 = vmatmul.mubr.f32.gmra.mxu0 %v2739
  %v6693 = vpop.f32.mrf.mxu0
  %v6694 = vadd.f32 0.0, %v6693
  %v6695 = vpop.f32.mrf.mxu0
  %6696 = vmatprep.mubr.f32.mxu0 0.0
  %6697 = vmatmul.mubr.f32.gmra.mxu0 %v2742
  %v6698 = vpop.f32.mrf.mxu0
  %v6699 = vadd.f32 0.0, %v6698
  %v6700 = vpop.f32.mrf.mxu0
  %6701 = vmatprep.mubr.f32.mxu0 0.0
  %6702 = vmatmul.mubr.f32.gmra.mxu0 %v2745
  %v6703 = vpop.f32.mrf.mxu0
  %v6704 = vadd.f32 0.0, %v6703
  %v6705 = vpop.f32.mrf.mxu0
  %6706 = vmatprep.mubr.f32.mxu0 0.0
  %6707 = vmatmul.mubr.f32.gmra.mxu0 %v2748
  %v6708 = vpop.f32.mrf.mxu0
  %v6709 = vadd.f32 0.0, %v6708
  %v6710 = vpop.f32.mrf.mxu0
  %6711 = vmatprep.mubr.f32.mxu0 0.0
  %6712 = vmatmul.mubr.f32.gmra.mxu0 %v2751
  %v6713 = vpop.f32.mrf.mxu0
  %v6714 = vadd.f32 0.0, %v6713
  %v6715 = vpop.f32.mrf.mxu0
  %6716 = vmatprep.mubr.f32.mxu0 0.0
  %6717 = vmatmul.mubr.f32.gmra.mxu0 %v2754
  %v6718 = vpop.f32.mrf.mxu0
  %v6719 = vadd.f32 0.0, %v6718
  %v6720 = vpop.f32.mrf.mxu0
  %6721 = vmatprep.mubr.f32.mxu0 0.0
  %6722 = vmatmul.mubr.f32.gmra.mxu0 %v2757
  %v6723 = vpop.f32.mrf.mxu0
  %v6724 = vadd.f32 0.0, %v6723
  %v6725 = vpop.f32.mrf.mxu0
  %6726 = vmatprep.mubr.f32.mxu0 0.0
  %6727 = vmatmul.mubr.f32.gmra.mxu0 %v2760
  %v6728 = vpop.f32.mrf.mxu0
  %v6729 = vadd.f32 0.0, %v6728
  %v6730 = vpop.f32.mrf.mxu0
  %6731 = vmatprep.mubr.f32.mxu0 0.0
  %6732 = vmatmul.mubr.f32.gmra.mxu0 %v2763
  %v6733 = vpop.f32.mrf.mxu0
  %v6734 = vadd.f32 0.0, %v6733
  %v6735 = vpop.f32.mrf.mxu0
  %6736 = vmatprep.mubr.f32.mxu0 0.0
  %6737 = vmatmul.mubr.f32.gmra.mxu0 %v2766
  %v6738 = vpop.f32.mrf.mxu0
  %v6739 = vadd.f32 0.0, %v6738
  %v6740 = vpop.f32.mrf.mxu0
  %6741 = vmatprep.mubr.f32.mxu0 0.0
  %6742 = vmatmul.mubr.f32.gmra.mxu0 %v2769
  %v6743 = vpop.f32.mrf.mxu0
  %v6744 = vadd.f32 0.0, %v6743
  %v6745 = vpop.f32.mrf.mxu0
  %6746 = vmatprep.mubr.f32.mxu0 0.0
  %6747 = vmatmul.mubr.f32.gmra.mxu0 %v2772
  %v6748 = vpop.f32.mrf.mxu0
  %v6749 = vadd.f32 0.0, %v6748
  %v6750 = vpop.f32.mrf.mxu0
  %6751 = vmatprep.mubr.f32.mxu0 0.0
  %6752 = vmatmul.mubr.f32.gmra.mxu0 %v2775
  %v6753 = vpop.f32.mrf.mxu0
  %v6754 = vadd.f32 0.0, %v6753
  %v6755 = vpop.f32.mrf.mxu0
  %6756 = vmatprep.mubr.f32.mxu0 0.0
  %6757 = vmatmul.mubr.f32.gmra.mxu0 %v2778
  %v6758 = vpop.f32.mrf.mxu0
  %v6759 = vadd.f32 0.0, %v6758
  %v6760 = vpop.f32.mrf.mxu0
  %6761 = vmatprep.mubr.f32.mxu0 0.0
  %6762 = vmatmul.mubr.f32.gmra.mxu0 %v2781
  %v6763 = vpop.f32.mrf.mxu0
  %v6764 = vadd.f32 0.0, %v6763
  %v6765 = vpop.f32.mrf.mxu0
  %6766 = vmatprep.mubr.f32.mxu0 0.0
  %6767 = vmatmul.mubr.f32.gmra.mxu0 %v2784
  %v6768 = vpop.f32.mrf.mxu0
  %v6769 = vadd.f32 0.0, %v6768
  %v6770 = vpop.f32.mrf.mxu0
  %6771 = vmatprep.mubr.f32.mxu0 0.0
  %6772 = vmatmul.mubr.f32.gmra.mxu0 %v2787
  %v6773 = vpop.f32.mrf.mxu0
  %v6774 = vadd.f32 0.0, %v6773
  %v6775 = vpop.f32.mrf.mxu0
  %6776 = vmatprep.mubr.f32.mxu0 0.0
  %6777 = vmatmul.mubr.f32.gmra.mxu0 %v2790
  %v6778 = vpop.f32.mrf.mxu0
  %v6779 = vadd.f32 0.0, %v6778
  %v6780 = vpop.f32.mrf.mxu0
  %6781 = vmatprep.mubr.f32.mxu0 0.0
  %6782 = vmatmul.mubr.f32.gmra.mxu0 %v2793
  %v6783 = vpop.f32.mrf.mxu0
  %v6784 = vadd.f32 0.0, %v6783
  %v6785 = vpop.f32.mrf.mxu0
  %6786 = vmatprep.mubr.f32.mxu0 0.0
  %6787 = vmatmul.mubr.f32.gmra.mxu0 %v2796
  %v6788 = vpop.f32.mrf.mxu0
  %v6789 = vadd.f32 0.0, %v6788
  %v6790 = vpop.f32.mrf.mxu0
  %6791 = vmatprep.mubr.f32.mxu0 0.0
  %6792 = vmatmul.mubr.f32.gmra.mxu0 %v2799
  %v6793 = vpop.f32.mrf.mxu0
  %v6794 = vadd.f32 0.0, %v6793
  %v6795 = vpop.f32.mrf.mxu0
  %6796 = vmatprep.mubr.f32.mxu0 0.0
  %6797 = vmatmul.mubr.f32.gmra.mxu0 %v2802
  %v6798 = vpop.f32.mrf.mxu0
  %v6799 = vadd.f32 0.0, %v6798
  %v6800 = vpop.f32.mrf.mxu0
  %6801 = vmatprep.mubr.f32.mxu0 0.0
  %6802 = vmatmul.mubr.f32.gmra.mxu0 %v2805
  %v6803 = vpop.f32.mrf.mxu0
  %v6804 = vadd.f32 0.0, %v6803
  %v6805 = vpop.f32.mrf.mxu0
  %6806 = vmatprep.mubr.f32.mxu0 0.0
  %6807 = vmatmul.mubr.f32.gmra.mxu0 %v2808
  %v6808 = vpop.f32.mrf.mxu0
  %v6809 = vadd.f32 0.0, %v6808
  %v6810 = vpop.f32.mrf.mxu0
  %6811 = vmatprep.mubr.f32.mxu0 0.0
  %6812 = vmatmul.mubr.f32.gmra.mxu0 %v2811
  %v6813 = vpop.f32.mrf.mxu0
  %v6814 = vadd.f32 0.0, %v6813
  %v6815 = vpop.f32.mrf.mxu0
  %6816 = vmatprep.mubr.f32.mxu0 0.0
  %6817 = vmatmul.mubr.f32.gmra.mxu0 %v2814
  %v6818 = vpop.f32.mrf.mxu0
  %v6819 = vadd.f32 0.0, %v6818
  %v6820 = vpop.f32.mrf.mxu0
  %6821 = vmatprep.mubr.f32.mxu0 0.0
  %6822 = vmatmul.mubr.f32.gmra.mxu0 %v2817
  %v6823 = vpop.f32.mrf.mxu0
  %v6824 = vadd.f32 0.0, %v6823
  %v6825 = vpop.f32.mrf.mxu0
  %6826 = vmatprep.mubr.f32.mxu0 0.0
  %6827 = vmatmul.mubr.f32.gmra.mxu0 %v2820
  %v6828 = vpop.f32.mrf.mxu0
  %v6829 = vadd.f32 0.0, %v6828
  %v6830 = vpop.f32.mrf.mxu0
  %6831 = vmatprep.mubr.f32.mxu0 0.0
  %6832 = vmatmul.mubr.f32.gmra.mxu0 %v2823
  %v6833 = vpop.f32.mrf.mxu0
  %v6834 = vadd.f32 0.0, %v6833
  %v6835 = vpop.f32.mrf.mxu0
  %6836 = vmatprep.mubr.f32.mxu0 0.0
  %6837 = vmatmul.mubr.f32.gmra.mxu0 %v2826
  %v6838 = vpop.f32.mrf.mxu0
  %v6839 = vadd.f32 0.0, %v6838
  %v6840 = vpop.f32.mrf.mxu0
  %6841 = vmatprep.mubr.f32.mxu0 0.0
  %6842 = vmatmul.mubr.f32.gmra.mxu0 %v2829
  %v6843 = vpop.f32.mrf.mxu0
  %v6844 = vadd.f32 0.0, %v6843
  %v6845 = vpop.f32.mrf.mxu0
  %6846 = vmatprep.mubr.f32.mxu0 0.0
  %6847 = vmatmul.mubr.f32.gmra.mxu0 %v2832
  %v6848 = vpop.f32.mrf.mxu0
  %v6849 = vadd.f32 0.0, %v6848
  %v6850 = vpop.f32.mrf.mxu0
  %6851 = vmatprep.mubr.f32.mxu0 0.0
  %6852 = vmatmul.mubr.f32.gmra.mxu0 %v2835
  %v6853 = vpop.f32.mrf.mxu0
  %v6854 = vadd.f32 0.0, %v6853
  %v6855 = vpop.f32.mrf.mxu0
  %6856 = vmatprep.mubr.f32.mxu0 0.0
  %6857 = vmatmul.mubr.f32.gmra.mxu0 %v2838
  %v6858 = vpop.f32.mrf.mxu0
  %v6859 = vadd.f32 0.0, %v6858
  %v6860 = vpop.f32.mrf.mxu0
  %6861 = vmatprep.mubr.f32.mxu0 0.0
  %6862 = vmatmul.mubr.f32.gmra.mxu0 %v2841
  %v6863 = vpop.f32.mrf.mxu0
  %v6864 = vadd.f32 0.0, %v6863
  %v6865 = vpop.f32.mrf.mxu0
  %6866 = vmatprep.mubr.f32.mxu0 0.0
  %6867 = vmatmul.mubr.f32.gmra.mxu0 %v2844
  %v6868 = vpop.f32.mrf.mxu0
  %v6869 = vadd.f32 0.0, %v6868
  %v6870 = vpop.f32.mrf.mxu0
  %6871 = vmatprep.mubr.f32.mxu0 0.0
  %6872 = vmatmul.mubr.f32.gmra.mxu0 %v2847
  %v6873 = vpop.f32.mrf.mxu0
  %v6874 = vadd.f32 0.0, %v6873
  %v6875 = vpop.f32.mrf.mxu0
  %6876 = vmatprep.mubr.f32.mxu0 0.0
  %6877 = vmatmul.mubr.f32.gmra.mxu0 %v2850
  %v6878 = vpop.f32.mrf.mxu0
  %v6879 = vadd.f32 0.0, %v6878
  %v6880 = vpop.f32.mrf.mxu0
  %6881 = vmatprep.mubr.f32.mxu0 0.0
  %6882 = vmatmul.mubr.f32.gmra.mxu0 %v2853
  %v6883 = vpop.f32.mrf.mxu0
  %v6884 = vadd.f32 0.0, %v6883
  %v6885 = vpop.f32.mrf.mxu0
  %6886 = vmatprep.mubr.f32.mxu0 0.0
  %6887 = vmatmul.mubr.f32.gmra.mxu0 %v2856
  %v6888 = vpop.f32.mrf.mxu0
  %v6889 = vadd.f32 0.0, %v6888
  %v6890 = vpop.f32.mrf.mxu0
  %6891 = vmatprep.mubr.f32.mxu0 0.0
  %6892 = vmatmul.mubr.f32.gmra.mxu0 %v2859
  %v6893 = vpop.f32.mrf.mxu0
  %v6894 = vadd.f32 0.0, %v6893
  %v6895 = vpop.f32.mrf.mxu0
  %6896 = vmatprep.mubr.f32.mxu0 0.0
  %6897 = vmatmul.mubr.f32.gmra.mxu0 %v2862
  %v6898 = vpop.f32.mrf.mxu0
  %v6899 = vadd.f32 0.0, %v6898
  %v6900 = vpop.f32.mrf.mxu0
  %6901 = vmatprep.mubr.f32.mxu0 0.0
  %6902 = vmatmul.mubr.f32.gmra.mxu0 %v2865
  %v6903 = vpop.f32.mrf.mxu0
  %v6904 = vadd.f32 0.0, %v6903
  %v6905 = vpop.f32.mrf.mxu0
  %6906 = vmatprep.mubr.f32.mxu0 0.0
  %6907 = vmatmul.mubr.f32.gmra.mxu0 %v2868
  %v6908 = vpop.f32.mrf.mxu0
  %v6909 = vadd.f32 0.0, %v6908
  %v6910 = vpop.f32.mrf.mxu0
  %6911 = vmatprep.mubr.f32.mxu0 0.0
  %6912 = vmatmul.mubr.f32.gmra.mxu0 %v2871
  %v6913 = vpop.f32.mrf.mxu0
  %v6914 = vadd.f32 0.0, %v6913
  %v6915 = vpop.f32.mrf.mxu0
  %6916 = vmatprep.mubr.f32.mxu0 0.0
  %6917 = vmatmul.mubr.f32.gmra.mxu0 %v2874
  %v6918 = vpop.f32.mrf.mxu0
  %v6919 = vadd.f32 0.0, %v6918
  %v6920 = vpop.f32.mrf.mxu0
  %6921 = vmatprep.mubr.f32.mxu0 0.0
  %6922 = vmatmul.mubr.f32.gmra.mxu0 %v2877
  %v6923 = vpop.f32.mrf.mxu0
  %v6924 = vadd.f32 0.0, %v6923
  %v6925 = vpop.f32.mrf.mxu0
  %6926 = vmatprep.mubr.f32.mxu0 0.0
  %6927 = vmatmul.mubr.f32.gmra.mxu0 %v2880
  %v6928 = vpop.f32.mrf.mxu0
  %v6929 = vadd.f32 0.0, %v6928
  %v6930 = vpop.f32.mrf.mxu0
  %6931 = vmatprep.mubr.f32.mxu0 0.0
  %6932 = vmatmul.mubr.f32.gmra.mxu0 %v2883
  %v6933 = vpop.f32.mrf.mxu0
  %v6934 = vadd.f32 0.0, %v6933
  %v6935 = vpop.f32.mrf.mxu0
  %6936 = vmatprep.mubr.f32.mxu0 0.0
  %6937 = vmatmul.mubr.f32.gmra.mxu0 %v2886
  %v6938 = vpop.f32.mrf.mxu0
  %v6939 = vadd.f32 0.0, %v6938
  %v6940 = vpop.f32.mrf.mxu0
  %6941 = vmatprep.mubr.f32.mxu0 0.0
  %6942 = vmatmul.mubr.f32.gmra.mxu0 %v2889
  %v6943 = vpop.f32.mrf.mxu0
  %v6944 = vadd.f32 0.0, %v6943
  %v6945 = vpop.f32.mrf.mxu0
  %6946 = vmatprep.mubr.f32.mxu0 0.0
  %6947 = vmatmul.mubr.f32.gmra.mxu0 %v2892
  %v6948 = vpop.f32.mrf.mxu0
  %v6949 = vadd.f32 0.0, %v6948
  %v6950 = vpop.f32.mrf.mxu0
  %6951 = vmatprep.mubr.f32.mxu0 0.0
  %6952 = vmatmul.mubr.f32.gmra.mxu0 %v2895
  %v6953 = vpop.f32.mrf.mxu0
  %v6954 = vadd.f32 0.0, %v6953
  %v6955 = vpop.f32.mrf.mxu0
  %6956 = vmatprep.mubr.f32.mxu0 0.0
  %6957 = vmatmul.mubr.f32.gmra.mxu0 %v2898
  %v6958 = vpop.f32.mrf.mxu0
  %v6959 = vadd.f32 0.0, %v6958
  %v6960 = vpop.f32.mrf.mxu0
  %6961 = vmatprep.mubr.f32.mxu0 0.0
  %6962 = vmatmul.mubr.f32.gmra.mxu0 %v2901
  %v6963 = vpop.f32.mrf.mxu0
  %v6964 = vadd.f32 0.0, %v6963
  %v6965 = vpop.f32.mrf.mxu0
  %6966 = vmatprep.mubr.f32.mxu0 0.0
  %6967 = vmatmul.mubr.f32.gmra.mxu0 %v2904
  %v6968 = vpop.f32.mrf.mxu0
  %v6969 = vadd.f32 0.0, %v6968
  %v6970 = vpop.f32.mrf.mxu0
  %6971 = vmatprep.mubr.f32.mxu0 0.0
  %6972 = vmatmul.mubr.f32.gmra.mxu0 %v2907
  %v6973 = vpop.f32.mrf.mxu0
  %v6974 = vadd.f32 0.0, %v6973
  %v6975 = vpop.f32.mrf.mxu0
  %6976 = vmatprep.mubr.f32.mxu0 0.0
  %6977 = vmatmul.mubr.f32.gmra.mxu0 %v2910
  %v6978 = vpop.f32.mrf.mxu0
  %v6979 = vadd.f32 0.0, %v6978
  %v6980 = vpop.f32.mrf.mxu0
  %6981 = vmatprep.mubr.f32.mxu0 0.0
  %6982 = vmatmul.mubr.f32.gmra.mxu0 %v2913
  %v6983 = vpop.f32.mrf.mxu0
  %v6984 = vadd.f32 0.0, %v6983
  %v6985 = vpop.f32.mrf.mxu0
  %6986 = vmatprep.mubr.f32.mxu0 0.0
  %6987 = vmatmul.mubr.f32.gmra.mxu0 %v2916
  %v6988 = vpop.f32.mrf.mxu0
  %v6989 = vadd.f32 0.0, %v6988
  %v6990 = vpop.f32.mrf.mxu0
  %6991 = vmatprep.mubr.f32.mxu0 0.0
  %6992 = vmatmul.mubr.f32.gmra.mxu0 %v2919
  %v6993 = vpop.f32.mrf.mxu0
  %v6994 = vadd.f32 0.0, %v6993
  %v6995 = vpop.f32.mrf.mxu0
  %6996 = vmatprep.mubr.f32.mxu0 0.0
  %6997 = vmatmul.mubr.f32.gmra.mxu0 %v2922
  %v6998 = vpop.f32.mrf.mxu0
  %v6999 = vadd.f32 0.0, %v6998
  %v7000 = vpop.f32.mrf.mxu0
  %7001 = vmatprep.mubr.f32.mxu0 0.0
  %7002 = vmatmul.mubr.f32.gmra.mxu0 %v2925
  %v7003 = vpop.f32.mrf.mxu0
  %v7004 = vadd.f32 0.0, %v7003
  %v7005 = vpop.f32.mrf.mxu0
  %7006 = vmatprep.mubr.f32.mxu0 0.0
  %7007 = vmatmul.mubr.f32.gmra.mxu0 %v2928
  %v7008 = vpop.f32.mrf.mxu0
  %v7009 = vadd.f32 0.0, %v7008
  %v7010 = vpop.f32.mrf.mxu0
  %7011 = vmatprep.mubr.f32.mxu0 0.0
  %7012 = vmatmul.mubr.f32.gmra.mxu0 %v2931
  %v7013 = vpop.f32.mrf.mxu0
  %v7014 = vadd.f32 0.0, %v7013
  %v7015 = vpop.f32.mrf.mxu0
  %7016 = vmatprep.mubr.f32.mxu0 0.0
  %7017 = vmatmul.mubr.f32.gmra.mxu0 %v2934
  %v7018 = vpop.f32.mrf.mxu0
  %v7019 = vadd.f32 0.0, %v7018
  %v7020 = vpop.f32.mrf.mxu0
  %7021 = vmatprep.mubr.f32.mxu0 0.0
  %7022 = vmatmul.mubr.f32.gmra.mxu0 %v2937
  %v7023 = vpop.f32.mrf.mxu0
  %v7024 = vadd.f32 0.0, %v7023
  %v7025 = vpop.f32.mrf.mxu0
  %7026 = vmatprep.mubr.f32.mxu0 0.0
  %7027 = vmatmul.mubr.f32.gmra.mxu0 %v2940
  %v7028 = vpop.f32.mrf.mxu0
  %v7029 = vadd.f32 0.0, %v7028
  %v7030 = vpop.f32.mrf.mxu0
  %7031 = vmatprep.mubr.f32.mxu0 0.0
  %7032 = vmatmul.mubr.f32.gmra.mxu0 %v2943
  %v7033 = vpop.f32.mrf.mxu0
  %v7034 = vadd.f32 0.0, %v7033
  %v7035 = vpop.f32.mrf.mxu0
  %7036 = vmatprep.mubr.f32.mxu0 0.0
  %7037 = vmatmul.mubr.f32.gmra.mxu0 %v2946
  %v7038 = vpop.f32.mrf.mxu0
  %v7039 = vadd.f32 0.0, %v7038
  %v7040 = vpop.f32.mrf.mxu0
  %7041 = vmatprep.mubr.f32.mxu0 0.0
  %7042 = vmatmul.mubr.f32.gmra.mxu0 %v2949
  %v7043 = vpop.f32.mrf.mxu0
  %v7044 = vadd.f32 0.0, %v7043
  %v7045 = vpop.f32.mrf.mxu0
  %7046 = vmatprep.mubr.f32.mxu0 0.0
  %7047 = vmatmul.mubr.f32.gmra.mxu0 %v2952
  %v7048 = vpop.f32.mrf.mxu0
  %v7049 = vadd.f32 0.0, %v7048
  %v7050 = vpop.f32.mrf.mxu0
  %7051 = vmatprep.mubr.f32.mxu0 0.0
  %7052 = vmatmul.mubr.f32.gmra.mxu0 %v2955
  %v7053 = vpop.f32.mrf.mxu0
  %v7054 = vadd.f32 0.0, %v7053
  %v7055 = vpop.f32.mrf.mxu0
  %7056 = vmatprep.mubr.f32.mxu0 0.0
  %7057 = vmatmul.mubr.f32.gmra.mxu0 %v2958
  %v7058 = vpop.f32.mrf.mxu0
  %v7059 = vadd.f32 0.0, %v7058
  %v7060 = vpop.f32.mrf.mxu0
  %7061 = vmatprep.mubr.f32.mxu0 0.0
  %7062 = vmatmul.mubr.f32.gmra.mxu0 %v2961
  %v7063 = vpop.f32.mrf.mxu0
  %v7064 = vadd.f32 0.0, %v7063
  %v7065 = vpop.f32.mrf.mxu0
  %7066 = vmatprep.mubr.f32.mxu0 0.0
  %7067 = vmatmul.mubr.f32.gmra.mxu0 %v2964
  %v7068 = vpop.f32.mrf.mxu0
  %v7069 = vadd.f32 0.0, %v7068
  %v7070 = vpop.f32.mrf.mxu0
  %7071 = vmatprep.mubr.f32.mxu0 0.0
  %7072 = vmatmul.mubr.f32.gmra.mxu0 %v2967
  %v7073 = vpop.f32.mrf.mxu0
  %v7074 = vadd.f32 0.0, %v7073
  %v7075 = vpop.f32.mrf.mxu0
  %7076 = vmatprep.mubr.f32.mxu0 0.0
  %7077 = vmatmul.mubr.f32.gmra.mxu0 %v2970
  %v7078 = vpop.f32.mrf.mxu0
  %v7079 = vadd.f32 0.0, %v7078
  %v7080 = vpop.f32.mrf.mxu0
  %7081 = vmatprep.mubr.f32.mxu0 0.0
  %7082 = vmatmul.mubr.f32.gmra.mxu0 %v2973
  %v7083 = vpop.f32.mrf.mxu0
  %v7084 = vadd.f32 0.0, %v7083
  %v7085 = vpop.f32.mrf.mxu0
  %7086 = vmatprep.mubr.f32.mxu0 0.0
  %7087 = vmatmul.mubr.f32.gmra.mxu0 %v2976
  %v7088 = vpop.f32.mrf.mxu0
  %v7089 = vadd.f32 0.0, %v7088
  %v7090 = vpop.f32.mrf.mxu0
  %7091 = vmatprep.mubr.f32.mxu0 0.0
  %7092 = vmatmul.mubr.f32.gmra.mxu0 %v2979
  %v7093 = vpop.f32.mrf.mxu0
  %v7094 = vadd.f32 0.0, %v7093
  %v7095 = vpop.f32.mrf.mxu0
  %7096 = vmatprep.mubr.f32.mxu0 0.0
  %7097 = vmatmul.mubr.f32.gmra.mxu0 %v2982
  %v7098 = vpop.f32.mrf.mxu0
  %v7099 = vadd.f32 0.0, %v7098
  %v7100 = vpop.f32.mrf.mxu0
  %7101 = vmatprep.mubr.f32.mxu0 0.0
  %7102 = vmatmul.mubr.f32.gmra.mxu0 %v2985
  %v7103 = vpop.f32.mrf.mxu0
  %v7104 = vadd.f32 0.0, %v7103
  %v7105 = vpop.f32.mrf.mxu0
  %7106 = vmatprep.mubr.f32.mxu0 0.0
  %7107 = vmatmul.mubr.f32.gmra.mxu0 %v2988
  %v7108 = vpop.f32.mrf.mxu0
  %v7109 = vadd.f32 0.0, %v7108
  %v7110 = vpop.f32.mrf.mxu0
  %7111 = vmatprep.mubr.f32.mxu0 0.0
  %7112 = vmatmul.mubr.f32.gmra.mxu0 %v2991
  %v7113 = vpop.f32.mrf.mxu0
  %v7114 = vadd.f32 0.0, %v7113
  %v7115 = vpop.f32.mrf.mxu0
  %7116 = vmatprep.mubr.f32.mxu0 0.0
  %7117 = vmatmul.mubr.f32.gmra.mxu0 %v2994
  %v7118 = vpop.f32.mrf.mxu0
  %v7119 = vadd.f32 0.0, %v7118
  %v7120 = vpop.f32.mrf.mxu0
  %7121 = vmatprep.mubr.f32.mxu0 0.0
  %7122 = vmatmul.mubr.f32.gmra.mxu0 %v2997
  %v7123 = vpop.f32.mrf.mxu0
  %v7124 = vadd.f32 0.0, %v7123
  %v7125 = vpop.f32.mrf.mxu0
  %7126 = vmatprep.mubr.f32.mxu0 0.0
  %7127 = vmatmul.mubr.f32.gmra.mxu0 %v3000
  %v7128 = vpop.f32.mrf.mxu0
  %v7129 = vadd.f32 0.0, %v7128
  %v7130 = vpop.f32.mrf.mxu0
  %7131 = vmatprep.mubr.f32.mxu0 0.0
  %7132 = vmatmul.mubr.f32.gmra.mxu0 %v3003
  %v7133 = vpop.f32.mrf.mxu0
  %v7134 = vadd.f32 0.0, %v7133
  %v7135 = vpop.f32.mrf.mxu0
  %7136 = vmatprep.mubr.f32.mxu0 0.0
  %7137 = vmatmul.mubr.f32.gmra.mxu0 %v3006
  %v7138 = vpop.f32.mrf.mxu0
  %v7139 = vadd.f32 0.0, %v7138
  %v7140 = vpop.f32.mrf.mxu0
  %7141 = vmatprep.mubr.f32.mxu0 0.0
  %7142 = vmatmul.mubr.f32.gmra.mxu0 %v3009
  %v7143 = vpop.f32.mrf.mxu0
  %v7144 = vadd.f32 0.0, %v7143
  %v7145 = vpop.f32.mrf.mxu0
  %7146 = vmatprep.mubr.f32.mxu0 0.0
  %7147 = vmatmul.mubr.f32.gmra.mxu0 %v3012
  %v7148 = vpop.f32.mrf.mxu0
  %v7149 = vadd.f32 0.0, %v7148
  %v7150 = vpop.f32.mrf.mxu0
  %7151 = vmatprep.mubr.f32.mxu0 0.0
  %7152 = vmatmul.mubr.f32.gmra.mxu0 %v3015
  %v7153 = vpop.f32.mrf.mxu0
  %v7154 = vadd.f32 0.0, %v7153
  %v7155 = vpop.f32.mrf.mxu0
  %7156 = vmatprep.mubr.f32.mxu0 0.0
  %7157 = vmatmul.mubr.f32.gmra.mxu0 %v3018
  %v7158 = vpop.f32.mrf.mxu0
  %v7159 = vadd.f32 0.0, %v7158
  %v7160 = vpop.f32.mrf.mxu0
  %7161 = vmatprep.mubr.f32.mxu0 0.0
  %7162 = vmatmul.mubr.f32.gmra.mxu0 %v3021
  %v7163 = vpop.f32.mrf.mxu0
  %v7164 = vadd.f32 0.0, %v7163
  %v7165 = vpop.f32.mrf.mxu0
  %7166 = vmatprep.mubr.f32.mxu0 0.0
  %7167 = vmatmul.mubr.f32.gmra.mxu0 %v3024
  %v7168 = vpop.f32.mrf.mxu0
  %v7169 = vadd.f32 0.0, %v7168
  %v7170 = vpop.f32.mrf.mxu0
  %7171 = vmatprep.mubr.f32.mxu0 0.0
  %7172 = vmatmul.mubr.f32.gmra.mxu0 %v3027
  %v7173 = vpop.f32.mrf.mxu0
  %v7174 = vadd.f32 0.0, %v7173
  %v7175 = vpop.f32.mrf.mxu0
  %7176 = vmatprep.mubr.f32.mxu0 0.0
  %7177 = vmatmul.mubr.f32.gmra.mxu0 %v3030
  %v7178 = vpop.f32.mrf.mxu0
  %v7179 = vadd.f32 0.0, %v7178
  %v7180 = vpop.f32.mrf.mxu0
  %7181 = vmatprep.mubr.f32.mxu0 0.0
  %7182 = vmatmul.mubr.f32.gmra.mxu0 %v3033
  %v7183 = vpop.f32.mrf.mxu0
  %v7184 = vadd.f32 0.0, %v7183
  %v7185 = vpop.f32.mrf.mxu0
  %7186 = vmatprep.mubr.f32.mxu0 0.0
  %7187 = vmatmul.mubr.f32.gmra.mxu0 %v3036
  %v7188 = vpop.f32.mrf.mxu0
  %v7189 = vadd.f32 0.0, %v7188
  %v7190 = vpop.f32.mrf.mxu0
  %7191 = vmatprep.mubr.f32.mxu0 0.0
  %7192 = vmatmul.mubr.f32.gmra.mxu0 %v3039
  %v7193 = vpop.f32.mrf.mxu0
  %v7194 = vadd.f32 0.0, %v7193
  %v7195 = vpop.f32.mrf.mxu0
  %7196 = vmatprep.mubr.f32.mxu0 0.0
  %7197 = vmatmul.mubr.f32.gmra.mxu0 %v3042
  %v7198 = vpop.f32.mrf.mxu0
  %v7199 = vadd.f32 0.0, %v7198
  %v7200 = vpop.f32.mrf.mxu0
  %7201 = vmatprep.mubr.f32.mxu0 0.0
  %7202 = vmatmul.mubr.f32.gmra.mxu0 %v3045
  %v7203 = vpop.f32.mrf.mxu0
  %v7204 = vadd.f32 0.0, %v7203
  %v7205 = vpop.f32.mrf.mxu0
  %7206 = vmatprep.mubr.f32.mxu0 0.0
  %7207 = vmatmul.mubr.f32.gmra.mxu0 %v3048
  %v7208 = vpop.f32.mrf.mxu0
  %v7209 = vadd.f32 0.0, %v7208
  %v7210 = vpop.f32.mrf.mxu0
  %7211 = vmatprep.mubr.f32.mxu0 0.0
  %7212 = vmatmul.mubr.f32.gmra.mxu0 %v3051
  %v7213 = vpop.f32.mrf.mxu0
  %v7214 = vadd.f32 0.0, %v7213
  %v7215 = vpop.f32.mrf.mxu0
  %7216 = vmatprep.mubr.f32.mxu0 0.0
  %7217 = vmatmul.mubr.f32.gmra.mxu0 %v3054
  %v7218 = vpop.f32.mrf.mxu0
  %v7219 = vadd.f32 0.0, %v7218
  %v7220 = vpop.f32.mrf.mxu0
  %7221 = vmatprep.mubr.f32.mxu0 0.0
  %7222 = vmatmul.mubr.f32.gmra.mxu0 %v3057
  %v7223 = vpop.f32.mrf.mxu0
  %v7224 = vadd.f32 0.0, %v7223
  %v7225 = vpop.f32.mrf.mxu0
  %7226 = vmatprep.mubr.f32.mxu0 0.0
  %7227 = vmatmul.mubr.f32.gmra.mxu0 %v3060
  %v7228 = vpop.f32.mrf.mxu0
  %v7229 = vadd.f32 0.0, %v7228
  %v7230 = vpop.f32.mrf.mxu0
  %7231 = vmatprep.mubr.f32.mxu0 0.0
  %7232 = vmatmul.mubr.f32.gmra.mxu0 %v3063
  %v7233 = vpop.f32.mrf.mxu0
  %v7234 = vadd.f32 0.0, %v7233
  %v7235 = vpop.f32.mrf.mxu0
  %7236 = vmatprep.mubr.f32.mxu0 0.0
  %7237 = vmatmul.mubr.f32.gmra.mxu0 %v3066
  %v7238 = vpop.f32.mrf.mxu0
  %v7239 = vadd.f32 0.0, %v7238
  %v7240 = vpop.f32.mrf.mxu0
  %7241 = vmatprep.mubr.f32.mxu0 0.0
  %7242 = vmatmul.mubr.f32.gmra.mxu0 %v3069
  %v7243 = vpop.f32.mrf.mxu0
  %v7244 = vadd.f32 0.0, %v7243
  %v7245 = vpop.f32.mrf.mxu0
  %7246 = vmatprep.mubr.f32.mxu0 0.0
  %7247 = vmatmul.mubr.f32.gmra.mxu0 %v3072
  %v7248 = vpop.f32.mrf.mxu0
  %v7249 = vadd.f32 0.0, %v7248
  %v7250 = vpop.f32.mrf.mxu0
  %7251 = vmatprep.mubr.f32.mxu0 0.0
  %7252 = vmatmul.mubr.f32.gmra.mxu0 %v3075
  %v7253 = vpop.f32.mrf.mxu0
  %v7254 = vadd.f32 0.0, %v7253
  %v7255 = vpop.f32.mrf.mxu0
  %7256 = vmatprep.mubr.f32.mxu0 0.0
  %7257 = vmatmul.mubr.f32.gmra.mxu0 %v3078
  %v7258 = vpop.f32.mrf.mxu0
  %v7259 = vadd.f32 0.0, %v7258
  %v7260 = vpop.f32.mrf.mxu0
  %7261 = vmatprep.mubr.f32.mxu0 0.0
  %7262 = vmatmul.mubr.f32.gmra.mxu0 %v3081
  %v7263 = vpop.f32.mrf.mxu0
  %v7264 = vadd.f32 0.0, %v7263
  %v7265 = vpop.f32.mrf.mxu0
  %7266 = vmatprep.mubr.f32.mxu0 0.0
  %7267 = vmatmul.mubr.f32.gmra.mxu0 %v3084
  %v7268 = vpop.f32.mrf.mxu0
  %v7269 = vadd.f32 0.0, %v7268
  %v7270 = vpop.f32.mrf.mxu0
  %7271 = vmatprep.mubr.f32.mxu0 0.0
  %7272 = vmatmul.mubr.f32.gmra.mxu0 %v3087
  %v7273 = vpop.f32.mrf.mxu0
  %v7274 = vadd.f32 0.0, %v7273
  %v7275 = vpop.f32.mrf.mxu0
  %7276 = vmatprep.mubr.f32.mxu0 0.0
  %7277 = vmatmul.mubr.f32.gmra.mxu0 %v3090
  %v7278 = vpop.f32.mrf.mxu0
  %v7279 = vadd.f32 0.0, %v7278
  %v7280 = vpop.f32.mrf.mxu0
  %7281 = vmatprep.mubr.f32.mxu0 0.0
  %7282 = vmatmul.mubr.f32.gmra.mxu0 %v3093
  %v7283 = vpop.f32.mrf.mxu0
  %v7284 = vadd.f32 0.0, %v7283
  %v7285 = vpop.f32.mrf.mxu0
  %7286 = vmatprep.mubr.f32.mxu0 0.0
  %7287 = vmatmul.mubr.f32.gmra.mxu0 %v3096
  %v7288 = vpop.f32.mrf.mxu0
  %v7289 = vadd.f32 0.0, %v7288
  %v7290 = vpop.f32.mrf.mxu0
  %7291 = vmatprep.mubr.f32.mxu0 0.0
  %7292 = vmatmul.mubr.f32.gmra.mxu0 %v3099
  %v7293 = vpop.f32.mrf.mxu0
  %v7294 = vadd.f32 0.0, %v7293
  %v7295 = vpop.f32.mrf.mxu0
  %7296 = vmatprep.mubr.f32.mxu0 0.0
  %7297 = vmatmul.mubr.f32.gmra.mxu0 %v3102
  %v7298 = vpop.f32.mrf.mxu0
  %v7299 = vadd.f32 0.0, %v7298
  %v7300 = vpop.f32.mrf.mxu0
  %7301 = vmatprep.mubr.f32.mxu0 0.0
  %7302 = vmatmul.mubr.f32.gmra.mxu0 %v3105
  %v7303 = vpop.f32.mrf.mxu0
  %v7304 = vadd.f32 0.0, %v7303
  %v7305 = vpop.f32.mrf.mxu0
  %7306 = vmatprep.mubr.f32.mxu0 0.0
  %7307 = vmatmul.mubr.f32.gmra.mxu0 %v3108
  %v7308 = vpop.f32.mrf.mxu0
  %v7309 = vadd.f32 0.0, %v7308
  %v7310 = vpop.f32.mrf.mxu0
  %7311 = vmatprep.mubr.f32.mxu0 0.0
  %7312 = vmatmul.mubr.f32.gmra.mxu0 %v3111
  %v7313 = vpop.f32.mrf.mxu0
  %v7314 = vadd.f32 0.0, %v7313
  %v7315 = vpop.f32.mrf.mxu0
  %7316 = vmatprep.mubr.f32.mxu0 0.0
  %7317 = vmatmul.mubr.f32.gmra.mxu0 %v3114
  %v7318 = vpop.f32.mrf.mxu0
  %v7319 = vadd.f32 0.0, %v7318
  %v7320 = vpop.f32.mrf.mxu0
  %7321 = vmatprep.mubr.f32.mxu0 0.0
  %7322 = vmatmul.mubr.f32.gmra.mxu0 %v3117
  %v7323 = vpop.f32.mrf.mxu0
  %v7324 = vadd.f32 0.0, %v7323
  %v7325 = vpop.f32.mrf.mxu0
  %7326 = vmatprep.mubr.f32.mxu0 0.0
  %7327 = vmatmul.mubr.f32.gmra.mxu0 %v3120
  %v7328 = vpop.f32.mrf.mxu0
  %v7329 = vadd.f32 0.0, %v7328
  %v7330 = vpop.f32.mrf.mxu0
  %7331 = vmatprep.mubr.f32.mxu0 0.0
  %7332 = vmatmul.mubr.f32.gmra.mxu0 %v3123
  %v7333 = vpop.f32.mrf.mxu0
  %v7334 = vadd.f32 0.0, %v7333
  %v7335 = vpop.f32.mrf.mxu0
  %7336 = vmatprep.mubr.f32.mxu0 0.0
  %7337 = vmatmul.mubr.f32.gmra.mxu0 %v3126
  %v7338 = vpop.f32.mrf.mxu0
  %v7339 = vadd.f32 0.0, %v7338
  %v7340 = vpop.f32.mrf.mxu0
  %7341 = vmatprep.mubr.f32.mxu0 0.0
  %7342 = vmatmul.mubr.f32.gmra.mxu0 %v3129
  %v7343 = vpop.f32.mrf.mxu0
  %v7344 = vadd.f32 0.0, %v7343
  %v7345 = vpop.f32.mrf.mxu0
  %7346 = vmatprep.mubr.f32.mxu0 0.0
  %7347 = vmatmul.mubr.f32.gmra.mxu0 %v3132
  %v7348 = vpop.f32.mrf.mxu0
  %v7349 = vadd.f32 0.0, %v7348
  %v7350 = vpop.f32.mrf.mxu0
  %7351 = vmatprep.mubr.f32.mxu0 0.0
  %7352 = vmatmul.mubr.f32.gmra.mxu0 %v3135
  %v7353 = vpop.f32.mrf.mxu0
  %v7354 = vadd.f32 0.0, %v7353
  %v7355 = vpop.f32.mrf.mxu0
  %7356 = vmatprep.mubr.f32.mxu0 0.0
  %7357 = vmatmul.mubr.f32.gmra.mxu0 %v3138
  %v7358 = vpop.f32.mrf.mxu0
  %v7359 = vadd.f32 0.0, %v7358
  %v7360 = vpop.f32.mrf.mxu0
  %7361 = vmatprep.mubr.f32.mxu0 0.0
  %7362 = vmatmul.mubr.f32.gmra.mxu0 %v3141
  %v7363 = vpop.f32.mrf.mxu0
  %v7364 = vadd.f32 0.0, %v7363
  %v7365 = vpop.f32.mrf.mxu0
  %7366 = vmatprep.mubr.f32.mxu0 0.0
  %7367 = vmatmul.mubr.f32.gmra.mxu0 %v3144
  %v7368 = vpop.f32.mrf.mxu0
  %v7369 = vadd.f32 0.0, %v7368
  %v7370 = vpop.f32.mrf.mxu0
  %7371 = vmatprep.mubr.f32.mxu0 0.0
  %7372 = vmatmul.mubr.f32.gmra.mxu0 %v3147
  %v7373 = vpop.f32.mrf.mxu0
  %v7374 = vadd.f32 0.0, %v7373
  %v7375 = vpop.f32.mrf.mxu0
  %7376 = vmatprep.mubr.f32.mxu0 0.0
  %7377 = vmatmul.mubr.f32.gmra.mxu0 %v3150
  %v7378 = vpop.f32.mrf.mxu0
  %v7379 = vadd.f32 0.0, %v7378
  %v7380 = vpop.f32.mrf.mxu0
  %7381 = vmatprep.mubr.f32.mxu0 0.0
  %7382 = vmatmul.mubr.f32.gmra.mxu0 %v3153
  %v7383 = vpop.f32.mrf.mxu0
  %v7384 = vadd.f32 0.0, %v7383
  %v7385 = vpop.f32.mrf.mxu0
  %7386 = vmatprep.mubr.f32.mxu0 0.0
  %7387 = vmatmul.mubr.f32.gmra.mxu0 %v3156
  %v7388 = vpop.f32.mrf.mxu0
  %v7389 = vadd.f32 0.0, %v7388
  %v7390 = vpop.f32.mrf.mxu0
  %7391 = vmatprep.mubr.f32.mxu0 0.0
  %7392 = vmatmul.mubr.f32.gmra.mxu0 %v3159
  %v7393 = vpop.f32.mrf.mxu0
  %v7394 = vadd.f32 0.0, %v7393
  %v7395 = vpop.f32.mrf.mxu0
  %7396 = vmatprep.mubr.f32.mxu0 0.0
  %7397 = vmatmul.mubr.f32.gmra.mxu0 %v3162
  %v7398 = vpop.f32.mrf.mxu0
  %v7399 = vadd.f32 0.0, %v7398
  %v7400 = vpop.f32.mrf.mxu0
  %7401 = vmatprep.mubr.f32.mxu0 0.0
  %7402 = vmatmul.mubr.f32.gmra.mxu0 %v3165
  %v7403 = vpop.f32.mrf.mxu0
  %v7404 = vadd.f32 0.0, %v7403
  %v7405 = vpop.f32.mrf.mxu0
  %7406 = vmatprep.mubr.f32.mxu0 0.0
  %7407 = vmatmul.mubr.f32.gmra.mxu0 %v3168
  %v7408 = vpop.f32.mrf.mxu0
  %v7409 = vadd.f32 0.0, %v7408
  %v7410 = vpop.f32.mrf.mxu0
  %7411 = vmatprep.mubr.f32.mxu0 0.0
  %7412 = vmatmul.mubr.f32.gmra.mxu0 %v3171
  %v7413 = vpop.f32.mrf.mxu0
  %v7414 = vadd.f32 0.0, %v7413
  %v7415 = vpop.f32.mrf.mxu0
  %7416 = vmatprep.mubr.f32.mxu0 0.0
  %7417 = vmatmul.mubr.f32.gmra.mxu0 %v3174
  %v7418 = vpop.f32.mrf.mxu0
  %v7419 = vadd.f32 0.0, %v7418
  %v7420 = vpop.f32.mrf.mxu0
  %7421 = vmatprep.mubr.f32.mxu0 0.0
  %7422 = vmatmul.mubr.f32.gmra.mxu0 %v3177
  %v7423 = vpop.f32.mrf.mxu0
  %v7424 = vadd.f32 0.0, %v7423
  %v7425 = vpop.f32.mrf.mxu0
  %7426 = vmatprep.mubr.f32.mxu0 0.0
  %7427 = vmatmul.mubr.f32.gmra.mxu0 %v3180
  %v7428 = vpop.f32.mrf.mxu0
  %v7429 = vadd.f32 0.0, %v7428
  %v7430 = vpop.f32.mrf.mxu0
  %7431 = vmatprep.mubr.f32.mxu0 0.0
  %7432 = vmatmul.mubr.f32.gmra.mxu0 %v3183
  %v7433 = vpop.f32.mrf.mxu0
  %v7434 = vadd.f32 0.0, %v7433
  %v7435 = vpop.f32.mrf.mxu0
  %7436 = vmatprep.mubr.f32.mxu0 0.0
  %7437 = vmatmul.mubr.f32.gmra.mxu0 %v3186
  %v7438 = vpop.f32.mrf.mxu0
  %v7439 = vadd.f32 0.0, %v7438
  %v7440 = vpop.f32.mrf.mxu0
  %7441 = vmatprep.mubr.f32.mxu0 0.0
  %7442 = vmatmul.mubr.f32.gmra.mxu0 %v3189
  %v7443 = vpop.f32.mrf.mxu0
  %v7444 = vadd.f32 0.0, %v7443
  %v7445 = vpop.f32.mrf.mxu0
  %7446 = vmatprep.mubr.f32.mxu0 0.0
  %7447 = vmatmul.mubr.f32.gmra.mxu0 %v3192
  %v7448 = vpop.f32.mrf.mxu0
  %v7449 = vadd.f32 0.0, %v7448
  %v7450 = vpop.f32.mrf.mxu0
  %7451 = vmatprep.mubr.f32.mxu0 0.0
  %7452 = vmatmul.mubr.f32.gmra.mxu0 %v3195
  %v7453 = vpop.f32.mrf.mxu0
  %v7454 = vadd.f32 0.0, %v7453
  %v7455 = vpop.f32.mrf.mxu0
  %7456 = vmatprep.mubr.f32.mxu0 0.0
  %7457 = vmatmul.mubr.f32.gmra.mxu0 %v3198
  %v7458 = vpop.f32.mrf.mxu0
  %v7459 = vadd.f32 0.0, %v7458
  %v7460 = vpop.f32.mrf.mxu0
  %7461 = vmatprep.mubr.f32.mxu0 0.0
  %7462 = vmatmul.mubr.f32.gmra.mxu0 %v3201
  %v7463 = vpop.f32.mrf.mxu0
  %v7464 = vadd.f32 0.0, %v7463
  %v7465 = vpop.f32.mrf.mxu0
  %7466 = vmatprep.mubr.f32.mxu0 0.0
  %7467 = vmatmul.mubr.f32.gmra.mxu0 %v3204
  %v7468 = vpop.f32.mrf.mxu0
  %v7469 = vadd.f32 0.0, %v7468
  %v7470 = vpop.f32.mrf.mxu0
  %7471 = vmatprep.mubr.f32.mxu0 0.0
  %7472 = vmatmul.mubr.f32.gmra.mxu0 %v3207
  %v7473 = vpop.f32.mrf.mxu0
  %v7474 = vadd.f32 0.0, %v7473
  %v7475 = vpop.f32.mrf.mxu0
  %7476 = vmatprep.mubr.f32.mxu0 0.0
  %7477 = vmatmul.mubr.f32.gmra.mxu0 %v3210
  %v7478 = vpop.f32.mrf.mxu0
  %v7479 = vadd.f32 0.0, %v7478
  %v7480 = vpop.f32.mrf.mxu0
  %7481 = vmatprep.mubr.f32.mxu0 0.0
  %7482 = vmatmul.mubr.f32.gmra.mxu0 %v3213
  %v7483 = vpop.f32.mrf.mxu0
  %v7484 = vadd.f32 0.0, %v7483
  %v7485 = vpop.f32.mrf.mxu0
  %7486 = vmatprep.mubr.f32.mxu0 0.0
  %7487 = vmatmul.mubr.f32.gmra.mxu0 %v3216
  %v7488 = vpop.f32.mrf.mxu0
  %v7489 = vadd.f32 0.0, %v7488
  %v7490 = vpop.f32.mrf.mxu0
  %7491 = vmatprep.mubr.f32.mxu0 0.0
  %7492 = vmatmul.mubr.f32.gmra.mxu0 %v3219
  %v7493 = vpop.f32.mrf.mxu0
  %v7494 = vadd.f32 0.0, %v7493
  %v7495 = vpop.f32.mrf.mxu0
  %7496 = vmatprep.mubr.f32.mxu0 0.0
  %7497 = vmatmul.mubr.f32.gmra.mxu0 %v3222
  %v7498 = vpop.f32.mrf.mxu0
  %v7499 = vadd.f32 0.0, %v7498
  %v7500 = vpop.f32.mrf.mxu0
  %7501 = vmatprep.mubr.f32.mxu0 0.0
  %7502 = vmatmul.mubr.f32.gmra.mxu0 %v3225
  %v7503 = vpop.f32.mrf.mxu0
  %v7504 = vadd.f32 0.0, %v7503
  %v7505 = vpop.f32.mrf.mxu0
  %7506 = vmatprep.mubr.f32.mxu0 0.0
  %7507 = vmatmul.mubr.f32.gmra.mxu0 %v3228
  %v7508 = vpop.f32.mrf.mxu0
  %v7509 = vadd.f32 0.0, %v7508
  %v7510 = vpop.f32.mrf.mxu0
  %7511 = vmatprep.mubr.f32.mxu0 0.0
  %7512 = vmatmul.mubr.f32.gmra.mxu0 %v3231
  %v7513 = vpop.f32.mrf.mxu0
  %v7514 = vadd.f32 0.0, %v7513
  %v7515 = vpop.f32.mrf.mxu0
  %7516 = vmatprep.mubr.f32.mxu0 0.0
  %7517 = vmatmul.mubr.f32.gmra.mxu0 %v3234
  %v7518 = vpop.f32.mrf.mxu0
  %v7519 = vadd.f32 0.0, %v7518
  %v7520 = vpop.f32.mrf.mxu0
  %7521 = vmatprep.mubr.f32.mxu0 0.0
  %7522 = vmatmul.mubr.f32.gmra.mxu0 %v3237
  %v7523 = vpop.f32.mrf.mxu0
  %v7524 = vadd.f32 0.0, %v7523
  %v7525 = vpop.f32.mrf.mxu0
  %7526 = vmatprep.mubr.f32.mxu0 0.0
  %7527 = vmatmul.mubr.f32.gmra.mxu0 %v3240
  %v7528 = vpop.f32.mrf.mxu0
  %v7529 = vadd.f32 0.0, %v7528
  %v7530 = vpop.f32.mrf.mxu0
  %7531 = vmatprep.mubr.f32.mxu0 0.0
  %7532 = vmatmul.mubr.f32.gmra.mxu0 %v3243
  %v7533 = vpop.f32.mrf.mxu0
  %v7534 = vadd.f32 0.0, %v7533
  %v7535 = vpop.f32.mrf.mxu0
  %7536 = vmatprep.mubr.f32.mxu0 0.0
  %7537 = vmatmul.mubr.f32.gmra.mxu0 %v3246
  %v7538 = vpop.f32.mrf.mxu0
  %v7539 = vadd.f32 0.0, %v7538
  %v7540 = vpop.f32.mrf.mxu0
  %7541 = vmatprep.mubr.f32.mxu0 0.0
  %7542 = vmatmul.mubr.f32.gmra.mxu0 %v3249
  %v7543 = vpop.f32.mrf.mxu0
  %v7544 = vadd.f32 0.0, %v7543
  %v7545 = vpop.f32.mrf.mxu0
  %7546 = vmatprep.mubr.f32.mxu0 0.0
  %7547 = vmatmul.mubr.f32.gmra.mxu0 %v3252
  %v7548 = vpop.f32.mrf.mxu0
  %v7549 = vadd.f32 0.0, %v7548
  %v7550 = vpop.f32.mrf.mxu0
  %7551 = vmatprep.mubr.f32.mxu0 0.0
  %7552 = vmatmul.mubr.f32.gmra.mxu0 %v3255
  %v7553 = vpop.f32.mrf.mxu0
  %v7554 = vadd.f32 0.0, %v7553
  %v7555 = vpop.f32.mrf.mxu0
  %7556 = vmatprep.mubr.f32.mxu0 0.0
  %7557 = vmatmul.mubr.f32.gmra.mxu0 %v3258
  %v7558 = vpop.f32.mrf.mxu0
  %v7559 = vadd.f32 0.0, %v7558
  %v7560 = vpop.f32.mrf.mxu0
  %7561 = vmatprep.mubr.f32.mxu0 0.0
  %7562 = vmatmul.mubr.f32.gmra.mxu0 %v3261
  %v7563 = vpop.f32.mrf.mxu0
  %v7564 = vadd.f32 0.0, %v7563
  %v7565 = vpop.f32.mrf.mxu0
  %7566 = vmatprep.mubr.f32.mxu0 0.0
  %7567 = vmatmul.mubr.f32.gmra.mxu0 %v3264
  %v7568 = vpop.f32.mrf.mxu0
  %v7569 = vadd.f32 0.0, %v7568
  %v7570 = vpop.f32.mrf.mxu0
  %7571 = vmatprep.mubr.f32.mxu0 0.0
  %7572 = vmatmul.mubr.f32.gmra.mxu0 %v6177
  %v7573 = vpop.f32.mrf.mxu0
  %v7574 = vadd.f32 0.0, %v7573
  %v7575 = vpop.f32.mrf.mxu0
  %7576 = vmatprep.mubr.f32.mxu0 0.0
  %7577 = vmatmul.mubr.f32.gmra.mxu0 %v6180
  %v7578 = vpop.f32.mrf.mxu0
  %v7579 = vadd.f32 0.0, %v7578
  %v7580 = vpop.f32.mrf.mxu0
  %7581 = vmatprep.mubr.f32.mxu0 0.0
  %7582 = vmatmul.mubr.f32.gmra.mxu0 %v6183
  %v7583 = vpop.f32.mrf.mxu0
  %v7584 = vadd.f32 0.0, %v7583
  %v7585 = vpop.f32.mrf.mxu0
  %7586 = vmatprep.mubr.f32.mxu0 0.0
  %7587 = vmatmul.mubr.f32.gmra.mxu0 %v6186
  %v7588 = vpop.f32.mrf.mxu0
  %v7589 = vadd.f32 0.0, %v7588
  %v7590 = vpop.f32.mrf.mxu0
  %7591 = vmatprep.mubr.f32.mxu0 0.0
  %7592 = vmatmul.mubr.f32.gmra.mxu0 %v6189
  %v7593 = vpop.f32.mrf.mxu0
  %v7594 = vadd.f32 0.0, %v7593
  %v7595 = vpop.f32.mrf.mxu0
  %7596 = vmatprep.mubr.f32.mxu0 0.0
  %7597 = vmatmul.mubr.f32.gmra.mxu0 %v6192
  %v7598 = vpop.f32.mrf.mxu0
  %v7599 = vadd.f32 0.0, %v7598
  %v7600 = vpop.f32.mrf.mxu0
  %7601 = vmatprep.mubr.f32.mxu0 0.0
  %7602 = vmatmul.mubr.f32.gmra.mxu0 %v6195
  %v7603 = vpop.f32.mrf.mxu0
  %v7604 = vadd.f32 0.0, %v7603
  %v7605 = vpop.f32.mrf.mxu0
  %7606 = vmatprep.mubr.f32.mxu0 0.0
  %7607 = vmatmul.mubr.f32.gmra.mxu0 %v6198
  %v7608 = vpop.f32.mrf.mxu0
  %v7609 = vadd.f32 0.0, %v7608
  %v7610 = vpop.f32.mrf.mxu0
  %7611 = vmatprep.mubr.f32.mxu0 0.0
  %7612 = vmatmul.mubr.f32.gmra.mxu0 %v6201
  %v7613 = vpop.f32.mrf.mxu0
  %v7614 = vadd.f32 0.0, %v7613
  %v7615 = vpop.f32.mrf.mxu0
  %7616 = vmatprep.mubr.f32.mxu0 0.0
  %7617 = vmatmul.mubr.f32.gmra.mxu0 %v6204
  %v7618 = vpop.f32.mrf.mxu0
  %v7619 = vadd.f32 0.0, %v7618
  %v7620 = vpop.f32.mrf.mxu0
  %7621 = vmatprep.mubr.f32.mxu0 0.0
  %7622 = vmatmul.mubr.f32.gmra.mxu0 %v6207
  %v7623 = vpop.f32.mrf.mxu0
  %v7624 = vadd.f32 0.0, %v7623
  %v7625 = vpop.f32.mrf.mxu0
  %7626 = vmatprep.mubr.f32.mxu0 0.0
  %7627 = vmatmul.mubr.f32.gmra.mxu0 %v6210
  %v7628 = vpop.f32.mrf.mxu0
  %v7629 = vadd.f32 0.0, %v7628
  %v7630 = vpop.f32.mrf.mxu0
  %7631 = vmatprep.mubr.f32.mxu0 0.0
  %7632 = vmatmul.mubr.f32.gmra.mxu0 %v6213
  %v7633 = vpop.f32.mrf.mxu0
  %v7634 = vadd.f32 0.0, %v7633
  %v7635 = vpop.f32.mrf.mxu0
  %7636 = vmatprep.mubr.f32.mxu0 0.0
  %7637 = vmatmul.mubr.f32.gmra.mxu0 %v6216
  %v7638 = vpop.f32.mrf.mxu0
  %v7639 = vadd.f32 0.0, %v7638
  %v7640 = vpop.f32.mrf.mxu0
  %7641 = vmatprep.mubr.f32.mxu0 0.0
  %7642 = vmatmul.mubr.f32.gmra.mxu0 %v6219
  %v7643 = vpop.f32.mrf.mxu0
  %v7644 = vadd.f32 0.0, %v7643
  %v7645 = vpop.f32.mrf.mxu0
  %7646 = vmatprep.mubr.f32.mxu0 0.0
  %7647 = vmatmul.mubr.f32.gmra.mxu0 %v6222
  %v7648 = vpop.f32.mrf.mxu0
  %v7649 = vadd.f32 0.0, %v7648
  %v7650 = vpop.f32.mrf.mxu0
  %7651 = vdwg.mxu0
  %v7652 = vadd.f32 %v4813, %v6294
  %v7653 = vadd.f32 %v4818, %v6299
  %v7654 = vadd.f32 %v4823, %v6304
  %v7655 = vadd.f32 %v4828, %v6309
  %v7656 = vadd.f32 %v4833, %v6314
  %v7657 = vadd.f32 %v4838, %v6319
  %v7658 = vadd.f32 %v4843, %v6324
  %v7659 = vadd.f32 %v4848, %v6329
  %v7660 = vadd.f32 %v4853, %v6334
  %v7661 = vadd.f32 %v4858, %v6339
  %v7662 = vadd.f32 %v4863, %v6344
  %v7663 = vadd.f32 %v4868, %v6349
  %v7664 = vadd.f32 %v4873, %v6354
  %v7665 = vadd.f32 %v4878, %v6359
  %v7666 = vadd.f32 %v4883, %v6364
  %v7667 = vadd.f32 %v4888, %v6369
  %v7668 = vadd.f32 %v4893, %v6374
  %v7669 = vadd.f32 %v4898, %v6379
  %v7670 = vadd.f32 %v4903, %v6384
  %v7671 = vadd.f32 %v4908, %v6389
  %v7672 = vadd.f32 %v4913, %v6394
  %v7673 = vadd.f32 %v4918, %v6399
  %v7674 = vadd.f32 %v4923, %v6404
  %v7675 = vadd.f32 %v4928, %v6409
  %v7676 = vadd.f32 %v4933, %v6414
  %v7677 = vadd.f32 %v4938, %v6419
  %v7678 = vadd.f32 %v4943, %v6424
  %v7679 = vadd.f32 %v4948, %v6429
  %v7680 = vadd.f32 %v4953, %v6434
  %v7681 = vadd.f32 %v4958, %v6439
  %v7682 = vadd.f32 %v4963, %v6444
  %v7683 = vadd.f32 %v4968, %v6449
  %v7684 = vadd.f32 %v4973, %v6454
  %v7685 = vadd.f32 %v4978, %v6459
  %v7686 = vadd.f32 %v4983, %v6464
  %v7687 = vadd.f32 %v4988, %v6469
  %v7688 = vadd.f32 %v4993, %v6474
  %v7689 = vadd.f32 %v4998, %v6479
  %v7690 = vadd.f32 %v5003, %v6484
  %v7691 = vadd.f32 %v5008, %v6489
  %v7692 = vadd.f32 %v5013, %v6494
  %v7693 = vadd.f32 %v5018, %v6499
  %v7694 = vadd.f32 %v5023, %v6504
  %v7695 = vadd.f32 %v5028, %v6509
  %v7696 = vadd.f32 %v5033, %v6514
  %v7697 = vadd.f32 %v5038, %v6519
  %v7698 = vadd.f32 %v5043, %v6524
  %v7699 = vadd.f32 %v5048, %v6529
  %v7700 = vadd.f32 %v5053, %v6534
  %v7701 = vadd.f32 %v5058, %v6539
  %v7702 = vadd.f32 %v5063, %v6544
  %v7703 = vadd.f32 %v5068, %v6549
  %v7704 = vadd.f32 %v5073, %v6554
  %v7705 = vadd.f32 %v5078, %v6559
  %v7706 = vadd.f32 %v5083, %v6564
  %v7707 = vadd.f32 %v5088, %v6569
  %v7708 = vadd.f32 %v5093, %v6574
  %v7709 = vadd.f32 %v5098, %v6579
  %v7710 = vadd.f32 %v5103, %v6584
  %v7711 = vadd.f32 %v5108, %v6589
  %v7712 = vadd.f32 %v5113, %v6594
  %v7713 = vadd.f32 %v5118, %v6599
  %v7714 = vadd.f32 %v5123, %v6604
  %v7715 = vadd.f32 %v5128, %v6609
  %v7716 = vadd.f32 %v5133, %v6614
  %v7717 = vadd.f32 %v5138, %v6619
  %v7718 = vadd.f32 %v5143, %v6624
  %v7719 = vadd.f32 %v5148, %v6629
  %v7720 = vadd.f32 %v5153, %v6634
  %v7721 = vadd.f32 %v5158, %v6639
  %v7722 = vadd.f32 %v5163, %v6644
  %v7723 = vadd.f32 %v5168, %v6649
  %v7724 = vadd.f32 %v5173, %v6654
  %v7725 = vadd.f32 %v5178, %v6659
  %v7726 = vadd.f32 %v5183, %v6664
  %v7727 = vadd.f32 %v5188, %v6669
  %v7728 = vadd.f32 %v5193, %v6674
  %v7729 = vadd.f32 %v5198, %v6679
  %v7730 = vadd.f32 %v5203, %v6684
  %v7731 = vadd.f32 %v5208, %v6689
  %v7732 = vadd.f32 %v5213, %v6694
  %v7733 = vadd.f32 %v5218, %v6699
  %v7734 = vadd.f32 %v5223, %v6704
  %v7735 = vadd.f32 %v5228, %v6709
  %v7736 = vadd.f32 %v5233, %v6714
  %v7737 = vadd.f32 %v5238, %v6719
  %v7738 = vadd.f32 %v5243, %v6724
  %v7739 = vadd.f32 %v5248, %v6729
  %v7740 = vadd.f32 %v5253, %v6734
  %v7741 = vadd.f32 %v5258, %v6739
  %v7742 = vadd.f32 %v5263, %v6744
  %v7743 = vadd.f32 %v5268, %v6749
  %v7744 = vadd.f32 %v5273, %v6754
  %v7745 = vadd.f32 %v5278, %v6759
  %v7746 = vadd.f32 %v5283, %v6764
  %v7747 = vadd.f32 %v5288, %v6769
  %v7748 = vadd.f32 %v5293, %v6774
  %v7749 = vadd.f32 %v5298, %v6779
  %v7750 = vadd.f32 %v5303, %v6784
  %v7751 = vadd.f32 %v5308, %v6789
  %v7752 = vadd.f32 %v5313, %v6794
  %v7753 = vadd.f32 %v5318, %v6799
  %v7754 = vadd.f32 %v5323, %v6804
  %v7755 = vadd.f32 %v5328, %v6809
  %v7756 = vadd.f32 %v5333, %v6814
  %v7757 = vadd.f32 %v5338, %v6819
  %v7758 = vadd.f32 %v5343, %v6824
  %v7759 = vadd.f32 %v5348, %v6829
  %v7760 = vadd.f32 %v5353, %v6834
  %v7761 = vadd.f32 %v5358, %v6839
  %v7762 = vadd.f32 %v5363, %v6844
  %v7763 = vadd.f32 %v5368, %v6849
  %v7764 = vadd.f32 %v5373, %v6854
  %v7765 = vadd.f32 %v5378, %v6859
  %v7766 = vadd.f32 %v5383, %v6864
  %v7767 = vadd.f32 %v5388, %v6869
  %v7768 = vadd.f32 %v5393, %v6874
  %v7769 = vadd.f32 %v5398, %v6879
  %v7770 = vadd.f32 %v5403, %v6884
  %v7771 = vadd.f32 %v5408, %v6889
  %v7772 = vadd.f32 %v5413, %v6894
  %v7773 = vadd.f32 %v5418, %v6899
  %v7774 = vadd.f32 %v5423, %v6904
  %v7775 = vadd.f32 %v5428, %v6909
  %v7776 = vadd.f32 %v5433, %v6914
  %v7777 = vadd.f32 %v5438, %v6919
  %v7778 = vadd.f32 %v5443, %v6924
  %v7779 = vadd.f32 %v5448, %v6929
  %v7780 = vadd.f32 %v5453, %v6934
  %v7781 = vadd.f32 %v5458, %v6939
  %v7782 = vadd.f32 %v5463, %v6944
  %v7783 = vadd.f32 %v5468, %v6949
  %v7784 = vadd.f32 %v5473, %v6954
  %v7785 = vadd.f32 %v5478, %v6959
  %v7786 = vadd.f32 %v5483, %v6964
  %v7787 = vadd.f32 %v5488, %v6969
  %v7788 = vadd.f32 %v5493, %v6974
  %v7789 = vadd.f32 %v5498, %v6979
  %v7790 = vadd.f32 %v5503, %v6984
  %v7791 = vadd.f32 %v5508, %v6989
  %v7792 = vadd.f32 %v5513, %v6994
  %v7793 = vadd.f32 %v5518, %v6999
  %v7794 = vadd.f32 %v5523, %v7004
  %v7795 = vadd.f32 %v5528, %v7009
  %v7796 = vadd.f32 %v5533, %v7014
  %v7797 = vadd.f32 %v5538, %v7019
  %v7798 = vadd.f32 %v5543, %v7024
  %v7799 = vadd.f32 %v5548, %v7029
  %v7800 = vadd.f32 %v5553, %v7034
  %v7801 = vadd.f32 %v5558, %v7039
  %v7802 = vadd.f32 %v5563, %v7044
  %v7803 = vadd.f32 %v5568, %v7049
  %v7804 = vadd.f32 %v5573, %v7054
  %v7805 = vadd.f32 %v5578, %v7059
  %v7806 = vadd.f32 %v5583, %v7064
  %v7807 = vadd.f32 %v5588, %v7069
  %v7808 = vadd.f32 %v5593, %v7074
  %v7809 = vadd.f32 %v5598, %v7079
  %v7810 = vadd.f32 %v5603, %v7084
  %v7811 = vadd.f32 %v5608, %v7089
  %v7812 = vadd.f32 %v5613, %v7094
  %v7813 = vadd.f32 %v5618, %v7099
  %v7814 = vadd.f32 %v5623, %v7104
  %v7815 = vadd.f32 %v5628, %v7109
  %v7816 = vadd.f32 %v5633, %v7114
  %v7817 = vadd.f32 %v5638, %v7119
  %v7818 = vadd.f32 %v5643, %v7124
  %v7819 = vadd.f32 %v5648, %v7129
  %v7820 = vadd.f32 %v5653, %v7134
  %v7821 = vadd.f32 %v5658, %v7139
  %v7822 = vadd.f32 %v5663, %v7144
  %v7823 = vadd.f32 %v5668, %v7149
  %v7824 = vadd.f32 %v5673, %v7154
  %v7825 = vadd.f32 %v5678, %v7159
  %v7826 = vadd.f32 %v5683, %v7164
  %v7827 = vadd.f32 %v5688, %v7169
  %v7828 = vadd.f32 %v5693, %v7174
  %v7829 = vadd.f32 %v5698, %v7179
  %v7830 = vadd.f32 %v5703, %v7184
  %v7831 = vadd.f32 %v5708, %v7189
  %v7832 = vadd.f32 %v5713, %v7194
  %v7833 = vadd.f32 %v5718, %v7199
  %v7834 = vadd.f32 %v5723, %v7204
  %v7835 = vadd.f32 %v5728, %v7209
  %v7836 = vadd.f32 %v5733, %v7214
  %v7837 = vadd.f32 %v5738, %v7219
  %v7838 = vadd.f32 %v5743, %v7224
  %v7839 = vadd.f32 %v5748, %v7229
  %v7840 = vadd.f32 %v5753, %v7234
  %v7841 = vadd.f32 %v5758, %v7239
  %v7842 = vadd.f32 %v5763, %v7244
  %v7843 = vadd.f32 %v5768, %v7249
  %v7844 = vadd.f32 %v5773, %v7254
  %v7845 = vadd.f32 %v5778, %v7259
  %v7846 = vadd.f32 %v5783, %v7264
  %v7847 = vadd.f32 %v5788, %v7269
  %v7848 = vadd.f32 %v5793, %v7274
  %v7849 = vadd.f32 %v5798, %v7279
  %v7850 = vadd.f32 %v5803, %v7284
  %v7851 = vadd.f32 %v5808, %v7289
  %v7852 = vadd.f32 %v5813, %v7294
  %v7853 = vadd.f32 %v5818, %v7299
  %v7854 = vadd.f32 %v5823, %v7304
  %v7855 = vadd.f32 %v5828, %v7309
  %v7856 = vadd.f32 %v5833, %v7314
  %v7857 = vadd.f32 %v5838, %v7319
  %v7858 = vadd.f32 %v5843, %v7324
  %v7859 = vadd.f32 %v5848, %v7329
  %v7860 = vadd.f32 %v5853, %v7334
  %v7861 = vadd.f32 %v5858, %v7339
  %v7862 = vadd.f32 %v5863, %v7344
  %v7863 = vadd.f32 %v5868, %v7349
  %v7864 = vadd.f32 %v5873, %v7354
  %v7865 = vadd.f32 %v5878, %v7359
  %v7866 = vadd.f32 %v5883, %v7364
  %v7867 = vadd.f32 %v5888, %v7369
  %v7868 = vadd.f32 %v5893, %v7374
  %v7869 = vadd.f32 %v5898, %v7379
  %v7870 = vadd.f32 %v5903, %v7384
  %v7871 = vadd.f32 %v5908, %v7389
  %v7872 = vadd.f32 %v5913, %v7394
  %v7873 = vadd.f32 %v5918, %v7399
  %v7874 = vadd.f32 %v5923, %v7404
  %v7875 = vadd.f32 %v5928, %v7409
  %v7876 = vadd.f32 %v5933, %v7414
  %v7877 = vadd.f32 %v5938, %v7419
  %v7878 = vadd.f32 %v5943, %v7424
  %v7879 = vadd.f32 %v5948, %v7429
  %v7880 = vadd.f32 %v5953, %v7434
  %v7881 = vadd.f32 %v5958, %v7439
  %v7882 = vadd.f32 %v5963, %v7444
  %v7883 = vadd.f32 %v5968, %v7449
  %v7884 = vadd.f32 %v5973, %v7454
  %v7885 = vadd.f32 %v5978, %v7459
  %v7886 = vadd.f32 %v5983, %v7464
  %v7887 = vadd.f32 %v5988, %v7469
  %v7888 = vadd.f32 %v5993, %v7474
  %v7889 = vadd.f32 %v5998, %v7479
  %v7890 = vadd.f32 %v6003, %v7484
  %v7891 = vadd.f32 %v6008, %v7489
  %v7892 = vadd.f32 %v6013, %v7494
  %v7893 = vadd.f32 %v6018, %v7499
  %v7894 = vadd.f32 %v6023, %v7504
  %v7895 = vadd.f32 %v6028, %v7509
  %v7896 = vadd.f32 %v6033, %v7514
  %v7897 = vadd.f32 %v6038, %v7519
  %v7898 = vadd.f32 %v6043, %v7524
  %v7899 = vadd.f32 %v6048, %v7529
  %v7900 = vadd.f32 %v6053, %v7534
  %v7901 = vadd.f32 %v6058, %v7539
  %v7902 = vadd.f32 %v6063, %v7544
  %v7903 = vadd.f32 %v6068, %v7549
  %v7904 = vadd.f32 %v6073, %v7554
  %v7905 = vadd.f32 %v6078, %v7559
  %v7906 = vadd.f32 %v6083, %v7564
  %v7907 = vadd.f32 %v6088, %v7569
  %v7908 = vadd.f32 %v6093, %v7574
  %v7909 = vadd.f32 %v6098, %v7579
  %v7910 = vadd.f32 %v6103, %v7584
  %v7911 = vadd.f32 %v6108, %v7589
  %v7912 = vadd.f32 %v6113, %v7594
  %v7913 = vadd.f32 %v6118, %v7599
  %v7914 = vadd.f32 %v6123, %v7604
  %v7915 = vadd.f32 %v6128, %v7609
  %v7916 = vadd.f32 %v6133, %v7614
  %v7917 = vadd.f32 %v6138, %v7619
  %v7918 = vadd.f32 %v6143, %v7624
  %v7919 = vadd.f32 %v6148, %v7629
  %v7920 = vadd.f32 %v6153, %v7634
  %v7921 = vadd.f32 %v6158, %v7639
  %v7922 = vadd.f32 %v6163, %v7644
  %v7923 = vadd.f32 %v6168, %v7649
  %s7924 = scalar_lea.vmem %s1, 96
  %v7925 = vld [vmem:[%s7924] sm:$0xff]
  %v7926 = vld [vmem:[%s7924 + $0x8] sm:$0xff]
  %v7927 = vld [vmem:[%s7924 + $0x10] sm:$0xff]
  %v7928 = vld [vmem:[%s7924 + $0x18] sm:$0x3f]
  %v7930 = vsel %vm2449, %v2408, 0
  %v7933 = vsel %vm2449, %v2409, 0
  %v7936 = vsel %vm2449, %v2410, 0
  %v7939 = vsel %vm2449, %v2411, 0
  %v7942 = vsel %vm2449, %v2412, 0
  %v7945 = vsel %vm2449, %v2413, 0
  %v7948 = vsel %vm2449, %v2414, 0
  %v7951 = vsel %vm2449, %v2415, 0
  %v7954 = vsel %vm2449, %v2416, 0
  %v7957 = vsel %vm2449, %v2417, 0
  %v7960 = vsel %vm2449, %v2418, 0
  %v7963 = vsel %vm2449, %v2419, 0
  %v7966 = vsel %vm2449, %v2420, 0
  %v7969 = vsel %vm2449, %v2421, 0
  %v7972 = vsel %vm2449, %v2422, 0
  %v7975 = vsel %vm2449, %v2423, 0
  %v7978 = vsel %vm3266, %v7928, 0
  %7980 = vmatprep.subr.mxu0 0.0
  %7981 = vmatpush1.msra.mxu0 0.0
  %7982 = vmatprep.subr.mxu0 0.0
  %7983 = vmatpush1.msra.mxu0 0.0
  %7984 = vmatprep.subr.mxu0 0.0
  %7985 = vmatpush1.msra.mxu0 0.0
  %7986 = vmatprep.subr.mxu0 0.0
  %7987 = vmatpush1.msra.mxu0 0.0
  %7988 = vmatprep.subr.mxu0 0.0
  %7989 = vmatpush1.msra.mxu0 0.0
  %7990 = vmatprep.subr.mxu0 0.0
  %7991 = vmatpush1.msra.mxu0 0.0
  %7992 = vmatprep.subr.mxu0 0.0
  %7993 = vmatpush1.msra.mxu0 0.0
  %7994 = vmatprep.subr.mxu0 0.0
  %7995 = vmatpush1.msra.mxu0 0.0
  %7996 = vmatprep.subr.mxu0 0.0
  %7997 = vmatpush1.msra.mxu0 0.0
  %7998 = vmatprep.subr.mxu0 0.0
  %7999 = vmatpush1.msra.mxu0 0.0
  %8000 = vmatprep.subr.mxu0 0.0
  %8001 = vmatpush1.msra.mxu0 0.0
  %8002 = vmatprep.subr.mxu0 0.0
  %8003 = vmatpush1.msra.mxu0 0.0
  %8004 = vmatprep.subr.mxu0 0.0
  %8005 = vmatpush1.msra.mxu0 %v7978
  %8006 = vmatprep.subr.mxu0 0.0
  %8007 = vmatpush1.msra.mxu0 %v7927
  %8008 = vmatprep.subr.mxu0 0.0
  %8009 = vmatpush1.msra.mxu0 %v7926
  %8010 = vmatprep.subr.mxu0 0.0
  %8011 = vmatpush1.msra.mxu0 %v7925
  %8012 = vmatprep.subr.mxu0 0.0
  %8013 = vmatpush2.msra.mxu0 0.0
  %8014 = vmatprep.subr.mxu0 0.0
  %8015 = vmatpush2.msra.mxu0 0.0
  %8016 = vmatprep.subr.mxu0 0.0
  %8017 = vmatpush2.msra.mxu0 0.0
  %8018 = vmatprep.subr.mxu0 0.0
  %8019 = vmatpush2.msra.mxu0 0.0
  %8020 = vmatprep.subr.mxu0 0.0
  %8021 = vmatpush2.msra.mxu0 0.0
  %8022 = vmatprep.subr.mxu0 0.0
  %8023 = vmatpush2.msra.mxu0 0.0
  %8024 = vmatprep.subr.mxu0 0.0
  %8025 = vmatpush2.msra.mxu0 0.0
  %8026 = vmatprep.subr.mxu0 0.0
  %8027 = vmatpush2.msra.mxu0 0.0
  %8028 = vmatprep.subr.mxu0 0.0
  %8029 = vmatpush2.msra.mxu0 0.0
  %8030 = vmatprep.subr.mxu0 0.0
  %8031 = vmatpush2.msra.mxu0 0.0
  %8032 = vmatprep.subr.mxu0 0.0
  %8033 = vmatpush2.msra.mxu0 0.0
  %8034 = vmatprep.subr.mxu0 0.0
  %8035 = vmatpush2.msra.mxu0 0.0
  %8036 = vmatprep.subr.mxu0 0.0
  %8037 = vmatpush2.msra.mxu0 0.0
  %8038 = vmatprep.subr.mxu0 0.0
  %8039 = vmatpush2.msra.mxu0 0.0
  %8040 = vmatprep.subr.mxu0 0.0
  %8041 = vmatpush2.msra.mxu0 0.0
  %8042 = vmatprep.subr.mxu0 0.0
  %8043 = vmatpush2.msra.mxu0 0.0
  %8044 = vmatprep.mubr.f32.mxu0 0.0
  %8045 = vmatmul.mubr.f32.gmra.mxu0 %v2547
  %v8046 = vpop.f32.mrf.mxu0
  %v8047 = vadd.f32 0.0, %v8046
  %v8048 = vpop.f32.mrf.mxu0
  %8049 = vmatprep.mubr.f32.mxu0 0.0
  %8050 = vmatmul.mubr.f32.gmra.mxu0 %v2550
  %v8051 = vpop.f32.mrf.mxu0
  %v8052 = vadd.f32 0.0, %v8051
  %v8053 = vpop.f32.mrf.mxu0
  %8054 = vmatprep.mubr.f32.mxu0 0.0
  %8055 = vmatmul.mubr.f32.gmra.mxu0 %v2553
  %v8056 = vpop.f32.mrf.mxu0
  %v8057 = vadd.f32 0.0, %v8056
  %v8058 = vpop.f32.mrf.mxu0
  %8059 = vmatprep.mubr.f32.mxu0 0.0
  %8060 = vmatmul.mubr.f32.gmra.mxu0 %v2556
  %v8061 = vpop.f32.mrf.mxu0
  %v8062 = vadd.f32 0.0, %v8061
  %v8063 = vpop.f32.mrf.mxu0
  %8064 = vmatprep.mubr.f32.mxu0 0.0
  %8065 = vmatmul.mubr.f32.gmra.mxu0 %v2559
  %v8066 = vpop.f32.mrf.mxu0
  %v8067 = vadd.f32 0.0, %v8066
  %v8068 = vpop.f32.mrf.mxu0
  %8069 = vmatprep.mubr.f32.mxu0 0.0
  %8070 = vmatmul.mubr.f32.gmra.mxu0 %v2562
  %v8071 = vpop.f32.mrf.mxu0
  %v8072 = vadd.f32 0.0, %v8071
  %v8073 = vpop.f32.mrf.mxu0
  %8074 = vmatprep.mubr.f32.mxu0 0.0
  %8075 = vmatmul.mubr.f32.gmra.mxu0 %v2565
  %v8076 = vpop.f32.mrf.mxu0
  %v8077 = vadd.f32 0.0, %v8076
  %v8078 = vpop.f32.mrf.mxu0
  %8079 = vmatprep.mubr.f32.mxu0 0.0
  %8080 = vmatmul.mubr.f32.gmra.mxu0 %v2568
  %v8081 = vpop.f32.mrf.mxu0
  %v8082 = vadd.f32 0.0, %v8081
  %v8083 = vpop.f32.mrf.mxu0
  %8084 = vmatprep.mubr.f32.mxu0 0.0
  %8085 = vmatmul.mubr.f32.gmra.mxu0 %v2571
  %v8086 = vpop.f32.mrf.mxu0
  %v8087 = vadd.f32 0.0, %v8086
  %v8088 = vpop.f32.mrf.mxu0
  %8089 = vmatprep.mubr.f32.mxu0 0.0
  %8090 = vmatmul.mubr.f32.gmra.mxu0 %v2574
  %v8091 = vpop.f32.mrf.mxu0
  %v8092 = vadd.f32 0.0, %v8091
  %v8093 = vpop.f32.mrf.mxu0
  %8094 = vmatprep.mubr.f32.mxu0 0.0
  %8095 = vmatmul.mubr.f32.gmra.mxu0 %v2577
  %v8096 = vpop.f32.mrf.mxu0
  %v8097 = vadd.f32 0.0, %v8096
  %v8098 = vpop.f32.mrf.mxu0
  %8099 = vmatprep.mubr.f32.mxu0 0.0
  %8100 = vmatmul.mubr.f32.gmra.mxu0 %v2580
  %v8101 = vpop.f32.mrf.mxu0
  %v8102 = vadd.f32 0.0, %v8101
  %v8103 = vpop.f32.mrf.mxu0
  %8104 = vmatprep.mubr.f32.mxu0 0.0
  %8105 = vmatmul.mubr.f32.gmra.mxu0 %v2583
  %v8106 = vpop.f32.mrf.mxu0
  %v8107 = vadd.f32 0.0, %v8106
  %v8108 = vpop.f32.mrf.mxu0
  %8109 = vmatprep.mubr.f32.mxu0 0.0
  %8110 = vmatmul.mubr.f32.gmra.mxu0 %v2586
  %v8111 = vpop.f32.mrf.mxu0
  %v8112 = vadd.f32 0.0, %v8111
  %v8113 = vpop.f32.mrf.mxu0
  %8114 = vmatprep.mubr.f32.mxu0 0.0
  %8115 = vmatmul.mubr.f32.gmra.mxu0 %v2589
  %v8116 = vpop.f32.mrf.mxu0
  %v8117 = vadd.f32 0.0, %v8116
  %v8118 = vpop.f32.mrf.mxu0
  %8119 = vmatprep.mubr.f32.mxu0 0.0
  %8120 = vmatmul.mubr.f32.gmra.mxu0 %v2592
  %v8121 = vpop.f32.mrf.mxu0
  %v8122 = vadd.f32 0.0, %v8121
  %v8123 = vpop.f32.mrf.mxu0
  %8124 = vmatprep.mubr.f32.mxu0 0.0
  %8125 = vmatmul.mubr.f32.gmra.mxu0 %v2595
  %v8126 = vpop.f32.mrf.mxu0
  %v8127 = vadd.f32 0.0, %v8126
  %v8128 = vpop.f32.mrf.mxu0
  %8129 = vmatprep.mubr.f32.mxu0 0.0
  %8130 = vmatmul.mubr.f32.gmra.mxu0 %v2598
  %v8131 = vpop.f32.mrf.mxu0
  %v8132 = vadd.f32 0.0, %v8131
  %v8133 = vpop.f32.mrf.mxu0
  %8134 = vmatprep.mubr.f32.mxu0 0.0
  %8135 = vmatmul.mubr.f32.gmra.mxu0 %v2601
  %v8136 = vpop.f32.mrf.mxu0
  %v8137 = vadd.f32 0.0, %v8136
  %v8138 = vpop.f32.mrf.mxu0
  %8139 = vmatprep.mubr.f32.mxu0 0.0
  %8140 = vmatmul.mubr.f32.gmra.mxu0 %v2604
  %v8141 = vpop.f32.mrf.mxu0
  %v8142 = vadd.f32 0.0, %v8141
  %v8143 = vpop.f32.mrf.mxu0
  %8144 = vmatprep.mubr.f32.mxu0 0.0
  %8145 = vmatmul.mubr.f32.gmra.mxu0 %v2607
  %v8146 = vpop.f32.mrf.mxu0
  %v8147 = vadd.f32 0.0, %v8146
  %v8148 = vpop.f32.mrf.mxu0
  %8149 = vmatprep.mubr.f32.mxu0 0.0
  %8150 = vmatmul.mubr.f32.gmra.mxu0 %v2610
  %v8151 = vpop.f32.mrf.mxu0
  %v8152 = vadd.f32 0.0, %v8151
  %v8153 = vpop.f32.mrf.mxu0
  %8154 = vmatprep.mubr.f32.mxu0 0.0
  %8155 = vmatmul.mubr.f32.gmra.mxu0 %v2613
  %v8156 = vpop.f32.mrf.mxu0
  %v8157 = vadd.f32 0.0, %v8156
  %v8158 = vpop.f32.mrf.mxu0
  %8159 = vmatprep.mubr.f32.mxu0 0.0
  %8160 = vmatmul.mubr.f32.gmra.mxu0 %v2616
  %v8161 = vpop.f32.mrf.mxu0
  %v8162 = vadd.f32 0.0, %v8161
  %v8163 = vpop.f32.mrf.mxu0
  %8164 = vmatprep.mubr.f32.mxu0 0.0
  %8165 = vmatmul.mubr.f32.gmra.mxu0 %v2619
  %v8166 = vpop.f32.mrf.mxu0
  %v8167 = vadd.f32 0.0, %v8166
  %v8168 = vpop.f32.mrf.mxu0
  %8169 = vmatprep.mubr.f32.mxu0 0.0
  %8170 = vmatmul.mubr.f32.gmra.mxu0 %v2622
  %v8171 = vpop.f32.mrf.mxu0
  %v8172 = vadd.f32 0.0, %v8171
  %v8173 = vpop.f32.mrf.mxu0
  %8174 = vmatprep.mubr.f32.mxu0 0.0
  %8175 = vmatmul.mubr.f32.gmra.mxu0 %v2625
  %v8176 = vpop.f32.mrf.mxu0
  %v8177 = vadd.f32 0.0, %v8176
  %v8178 = vpop.f32.mrf.mxu0
  %8179 = vmatprep.mubr.f32.mxu0 0.0
  %8180 = vmatmul.mubr.f32.gmra.mxu0 %v2628
  %v8181 = vpop.f32.mrf.mxu0
  %v8182 = vadd.f32 0.0, %v8181
  %v8183 = vpop.f32.mrf.mxu0
  %8184 = vmatprep.mubr.f32.mxu0 0.0
  %8185 = vmatmul.mubr.f32.gmra.mxu0 %v2631
  %v8186 = vpop.f32.mrf.mxu0
  %v8187 = vadd.f32 0.0, %v8186
  %v8188 = vpop.f32.mrf.mxu0
  %8189 = vmatprep.mubr.f32.mxu0 0.0
  %8190 = vmatmul.mubr.f32.gmra.mxu0 %v2634
  %v8191 = vpop.f32.mrf.mxu0
  %v8192 = vadd.f32 0.0, %v8191
  %v8193 = vpop.f32.mrf.mxu0
  %8194 = vmatprep.mubr.f32.mxu0 0.0
  %8195 = vmatmul.mubr.f32.gmra.mxu0 %v2637
  %v8196 = vpop.f32.mrf.mxu0
  %v8197 = vadd.f32 0.0, %v8196
  %v8198 = vpop.f32.mrf.mxu0
  %8199 = vmatprep.mubr.f32.mxu0 0.0
  %8200 = vmatmul.mubr.f32.gmra.mxu0 %v2640
  %v8201 = vpop.f32.mrf.mxu0
  %v8202 = vadd.f32 0.0, %v8201
  %v8203 = vpop.f32.mrf.mxu0
  %8204 = vmatprep.mubr.f32.mxu0 0.0
  %8205 = vmatmul.mubr.f32.gmra.mxu0 %v2643
  %v8206 = vpop.f32.mrf.mxu0
  %v8207 = vadd.f32 0.0, %v8206
  %v8208 = vpop.f32.mrf.mxu0
  %8209 = vmatprep.mubr.f32.mxu0 0.0
  %8210 = vmatmul.mubr.f32.gmra.mxu0 %v2646
  %v8211 = vpop.f32.mrf.mxu0
  %v8212 = vadd.f32 0.0, %v8211
  %v8213 = vpop.f32.mrf.mxu0
  %8214 = vmatprep.mubr.f32.mxu0 0.0
  %8215 = vmatmul.mubr.f32.gmra.mxu0 %v2649
  %v8216 = vpop.f32.mrf.mxu0
  %v8217 = vadd.f32 0.0, %v8216
  %v8218 = vpop.f32.mrf.mxu0
  %8219 = vmatprep.mubr.f32.mxu0 0.0
  %8220 = vmatmul.mubr.f32.gmra.mxu0 %v2652
  %v8221 = vpop.f32.mrf.mxu0
  %v8222 = vadd.f32 0.0, %v8221
  %v8223 = vpop.f32.mrf.mxu0
  %8224 = vmatprep.mubr.f32.mxu0 0.0
  %8225 = vmatmul.mubr.f32.gmra.mxu0 %v2655
  %v8226 = vpop.f32.mrf.mxu0
  %v8227 = vadd.f32 0.0, %v8226
  %v8228 = vpop.f32.mrf.mxu0
  %8229 = vmatprep.mubr.f32.mxu0 0.0
  %8230 = vmatmul.mubr.f32.gmra.mxu0 %v2658
  %v8231 = vpop.f32.mrf.mxu0
  %v8232 = vadd.f32 0.0, %v8231
  %v8233 = vpop.f32.mrf.mxu0
  %8234 = vmatprep.mubr.f32.mxu0 0.0
  %8235 = vmatmul.mubr.f32.gmra.mxu0 %v2661
  %v8236 = vpop.f32.mrf.mxu0
  %v8237 = vadd.f32 0.0, %v8236
  %v8238 = vpop.f32.mrf.mxu0
  %8239 = vmatprep.mubr.f32.mxu0 0.0
  %8240 = vmatmul.mubr.f32.gmra.mxu0 %v2664
  %v8241 = vpop.f32.mrf.mxu0
  %v8242 = vadd.f32 0.0, %v8241
  %v8243 = vpop.f32.mrf.mxu0
  %8244 = vmatprep.mubr.f32.mxu0 0.0
  %8245 = vmatmul.mubr.f32.gmra.mxu0 %v2667
  %v8246 = vpop.f32.mrf.mxu0
  %v8247 = vadd.f32 0.0, %v8246
  %v8248 = vpop.f32.mrf.mxu0
  %8249 = vmatprep.mubr.f32.mxu0 0.0
  %8250 = vmatmul.mubr.f32.gmra.mxu0 %v2670
  %v8251 = vpop.f32.mrf.mxu0
  %v8252 = vadd.f32 0.0, %v8251
  %v8253 = vpop.f32.mrf.mxu0
  %8254 = vmatprep.mubr.f32.mxu0 0.0
  %8255 = vmatmul.mubr.f32.gmra.mxu0 %v2673
  %v8256 = vpop.f32.mrf.mxu0
  %v8257 = vadd.f32 0.0, %v8256
  %v8258 = vpop.f32.mrf.mxu0
  %8259 = vmatprep.mubr.f32.mxu0 0.0
  %8260 = vmatmul.mubr.f32.gmra.mxu0 %v2676
  %v8261 = vpop.f32.mrf.mxu0
  %v8262 = vadd.f32 0.0, %v8261
  %v8263 = vpop.f32.mrf.mxu0
  %8264 = vmatprep.mubr.f32.mxu0 0.0
  %8265 = vmatmul.mubr.f32.gmra.mxu0 %v2679
  %v8266 = vpop.f32.mrf.mxu0
  %v8267 = vadd.f32 0.0, %v8266
  %v8268 = vpop.f32.mrf.mxu0
  %8269 = vmatprep.mubr.f32.mxu0 0.0
  %8270 = vmatmul.mubr.f32.gmra.mxu0 %v2682
  %v8271 = vpop.f32.mrf.mxu0
  %v8272 = vadd.f32 0.0, %v8271
  %v8273 = vpop.f32.mrf.mxu0
  %8274 = vmatprep.mubr.f32.mxu0 0.0
  %8275 = vmatmul.mubr.f32.gmra.mxu0 %v2685
  %v8276 = vpop.f32.mrf.mxu0
  %v8277 = vadd.f32 0.0, %v8276
  %v8278 = vpop.f32.mrf.mxu0
  %8279 = vmatprep.mubr.f32.mxu0 0.0
  %8280 = vmatmul.mubr.f32.gmra.mxu0 %v2688
  %v8281 = vpop.f32.mrf.mxu0
  %v8282 = vadd.f32 0.0, %v8281
  %v8283 = vpop.f32.mrf.mxu0
  %8284 = vmatprep.mubr.f32.mxu0 0.0
  %8285 = vmatmul.mubr.f32.gmra.mxu0 %v2691
  %v8286 = vpop.f32.mrf.mxu0
  %v8287 = vadd.f32 0.0, %v8286
  %v8288 = vpop.f32.mrf.mxu0
  %8289 = vmatprep.mubr.f32.mxu0 0.0
  %8290 = vmatmul.mubr.f32.gmra.mxu0 %v2694
  %v8291 = vpop.f32.mrf.mxu0
  %v8292 = vadd.f32 0.0, %v8291
  %v8293 = vpop.f32.mrf.mxu0
  %8294 = vmatprep.mubr.f32.mxu0 0.0
  %8295 = vmatmul.mubr.f32.gmra.mxu0 %v2697
  %v8296 = vpop.f32.mrf.mxu0
  %v8297 = vadd.f32 0.0, %v8296
  %v8298 = vpop.f32.mrf.mxu0
  %8299 = vmatprep.mubr.f32.mxu0 0.0
  %8300 = vmatmul.mubr.f32.gmra.mxu0 %v2700
  %v8301 = vpop.f32.mrf.mxu0
  %v8302 = vadd.f32 0.0, %v8301
  %v8303 = vpop.f32.mrf.mxu0
  %8304 = vmatprep.mubr.f32.mxu0 0.0
  %8305 = vmatmul.mubr.f32.gmra.mxu0 %v2703
  %v8306 = vpop.f32.mrf.mxu0
  %v8307 = vadd.f32 0.0, %v8306
  %v8308 = vpop.f32.mrf.mxu0
  %8309 = vmatprep.mubr.f32.mxu0 0.0
  %8310 = vmatmul.mubr.f32.gmra.mxu0 %v2706
  %v8311 = vpop.f32.mrf.mxu0
  %v8312 = vadd.f32 0.0, %v8311
  %v8313 = vpop.f32.mrf.mxu0
  %8314 = vmatprep.mubr.f32.mxu0 0.0
  %8315 = vmatmul.mubr.f32.gmra.mxu0 %v2709
  %v8316 = vpop.f32.mrf.mxu0
  %v8317 = vadd.f32 0.0, %v8316
  %v8318 = vpop.f32.mrf.mxu0
  %8319 = vmatprep.mubr.f32.mxu0 0.0
  %8320 = vmatmul.mubr.f32.gmra.mxu0 %v2712
  %v8321 = vpop.f32.mrf.mxu0
  %v8322 = vadd.f32 0.0, %v8321
  %v8323 = vpop.f32.mrf.mxu0
  %8324 = vmatprep.mubr.f32.mxu0 0.0
  %8325 = vmatmul.mubr.f32.gmra.mxu0 %v2715
  %v8326 = vpop.f32.mrf.mxu0
  %v8327 = vadd.f32 0.0, %v8326
  %v8328 = vpop.f32.mrf.mxu0
  %8329 = vmatprep.mubr.f32.mxu0 0.0
  %8330 = vmatmul.mubr.f32.gmra.mxu0 %v2718
  %v8331 = vpop.f32.mrf.mxu0
  %v8332 = vadd.f32 0.0, %v8331
  %v8333 = vpop.f32.mrf.mxu0
  %8334 = vmatprep.mubr.f32.mxu0 0.0
  %8335 = vmatmul.mubr.f32.gmra.mxu0 %v2721
  %v8336 = vpop.f32.mrf.mxu0
  %v8337 = vadd.f32 0.0, %v8336
  %v8338 = vpop.f32.mrf.mxu0
  %8339 = vmatprep.mubr.f32.mxu0 0.0
  %8340 = vmatmul.mubr.f32.gmra.mxu0 %v2724
  %v8341 = vpop.f32.mrf.mxu0
  %v8342 = vadd.f32 0.0, %v8341
  %v8343 = vpop.f32.mrf.mxu0
  %8344 = vmatprep.mubr.f32.mxu0 0.0
  %8345 = vmatmul.mubr.f32.gmra.mxu0 %v2727
  %v8346 = vpop.f32.mrf.mxu0
  %v8347 = vadd.f32 0.0, %v8346
  %v8348 = vpop.f32.mrf.mxu0
  %8349 = vmatprep.mubr.f32.mxu0 0.0
  %8350 = vmatmul.mubr.f32.gmra.mxu0 %v2730
  %v8351 = vpop.f32.mrf.mxu0
  %v8352 = vadd.f32 0.0, %v8351
  %v8353 = vpop.f32.mrf.mxu0
  %8354 = vmatprep.mubr.f32.mxu0 0.0
  %8355 = vmatmul.mubr.f32.gmra.mxu0 %v2733
  %v8356 = vpop.f32.mrf.mxu0
  %v8357 = vadd.f32 0.0, %v8356
  %v8358 = vpop.f32.mrf.mxu0
  %8359 = vmatprep.mubr.f32.mxu0 0.0
  %8360 = vmatmul.mubr.f32.gmra.mxu0 %v2736
  %v8361 = vpop.f32.mrf.mxu0
  %v8362 = vadd.f32 0.0, %v8361
  %v8363 = vpop.f32.mrf.mxu0
  %8364 = vmatprep.mubr.f32.mxu0 0.0
  %8365 = vmatmul.mubr.f32.gmra.mxu0 %v2739
  %v8366 = vpop.f32.mrf.mxu0
  %v8367 = vadd.f32 0.0, %v8366
  %v8368 = vpop.f32.mrf.mxu0
  %8369 = vmatprep.mubr.f32.mxu0 0.0
  %8370 = vmatmul.mubr.f32.gmra.mxu0 %v2742
  %v8371 = vpop.f32.mrf.mxu0
  %v8372 = vadd.f32 0.0, %v8371
  %v8373 = vpop.f32.mrf.mxu0
  %8374 = vmatprep.mubr.f32.mxu0 0.0
  %8375 = vmatmul.mubr.f32.gmra.mxu0 %v2745
  %v8376 = vpop.f32.mrf.mxu0
  %v8377 = vadd.f32 0.0, %v8376
  %v8378 = vpop.f32.mrf.mxu0
  %8379 = vmatprep.mubr.f32.mxu0 0.0
  %8380 = vmatmul.mubr.f32.gmra.mxu0 %v2748
  %v8381 = vpop.f32.mrf.mxu0
  %v8382 = vadd.f32 0.0, %v8381
  %v8383 = vpop.f32.mrf.mxu0
  %8384 = vmatprep.mubr.f32.mxu0 0.0
  %8385 = vmatmul.mubr.f32.gmra.mxu0 %v2751
  %v8386 = vpop.f32.mrf.mxu0
  %v8387 = vadd.f32 0.0, %v8386
  %v8388 = vpop.f32.mrf.mxu0
  %8389 = vmatprep.mubr.f32.mxu0 0.0
  %8390 = vmatmul.mubr.f32.gmra.mxu0 %v2754
  %v8391 = vpop.f32.mrf.mxu0
  %v8392 = vadd.f32 0.0, %v8391
  %v8393 = vpop.f32.mrf.mxu0
  %8394 = vmatprep.mubr.f32.mxu0 0.0
  %8395 = vmatmul.mubr.f32.gmra.mxu0 %v2757
  %v8396 = vpop.f32.mrf.mxu0
  %v8397 = vadd.f32 0.0, %v8396
  %v8398 = vpop.f32.mrf.mxu0
  %8399 = vmatprep.mubr.f32.mxu0 0.0
  %8400 = vmatmul.mubr.f32.gmra.mxu0 %v2760
  %v8401 = vpop.f32.mrf.mxu0
  %v8402 = vadd.f32 0.0, %v8401
  %v8403 = vpop.f32.mrf.mxu0
  %8404 = vmatprep.mubr.f32.mxu0 0.0
  %8405 = vmatmul.mubr.f32.gmra.mxu0 %v2763
  %v8406 = vpop.f32.mrf.mxu0
  %v8407 = vadd.f32 0.0, %v8406
  %v8408 = vpop.f32.mrf.mxu0
  %8409 = vmatprep.mubr.f32.mxu0 0.0
  %8410 = vmatmul.mubr.f32.gmra.mxu0 %v2766
  %v8411 = vpop.f32.mrf.mxu0
  %v8412 = vadd.f32 0.0, %v8411
  %v8413 = vpop.f32.mrf.mxu0
  %8414 = vmatprep.mubr.f32.mxu0 0.0
  %8415 = vmatmul.mubr.f32.gmra.mxu0 %v2769
  %v8416 = vpop.f32.mrf.mxu0
  %v8417 = vadd.f32 0.0, %v8416
  %v8418 = vpop.f32.mrf.mxu0
  %8419 = vmatprep.mubr.f32.mxu0 0.0
  %8420 = vmatmul.mubr.f32.gmra.mxu0 %v2772
  %v8421 = vpop.f32.mrf.mxu0
  %v8422 = vadd.f32 0.0, %v8421
  %v8423 = vpop.f32.mrf.mxu0
  %8424 = vmatprep.mubr.f32.mxu0 0.0
  %8425 = vmatmul.mubr.f32.gmra.mxu0 %v2775
  %v8426 = vpop.f32.mrf.mxu0
  %v8427 = vadd.f32 0.0, %v8426
  %v8428 = vpop.f32.mrf.mxu0
  %8429 = vmatprep.mubr.f32.mxu0 0.0
  %8430 = vmatmul.mubr.f32.gmra.mxu0 %v2778
  %v8431 = vpop.f32.mrf.mxu0
  %v8432 = vadd.f32 0.0, %v8431
  %v8433 = vpop.f32.mrf.mxu0
  %8434 = vmatprep.mubr.f32.mxu0 0.0
  %8435 = vmatmul.mubr.f32.gmra.mxu0 %v2781
  %v8436 = vpop.f32.mrf.mxu0
  %v8437 = vadd.f32 0.0, %v8436
  %v8438 = vpop.f32.mrf.mxu0
  %8439 = vmatprep.mubr.f32.mxu0 0.0
  %8440 = vmatmul.mubr.f32.gmra.mxu0 %v2784
  %v8441 = vpop.f32.mrf.mxu0
  %v8442 = vadd.f32 0.0, %v8441
  %v8443 = vpop.f32.mrf.mxu0
  %8444 = vmatprep.mubr.f32.mxu0 0.0
  %8445 = vmatmul.mubr.f32.gmra.mxu0 %v2787
  %v8446 = vpop.f32.mrf.mxu0
  %v8447 = vadd.f32 0.0, %v8446
  %v8448 = vpop.f32.mrf.mxu0
  %8449 = vmatprep.mubr.f32.mxu0 0.0
  %8450 = vmatmul.mubr.f32.gmra.mxu0 %v2790
  %v8451 = vpop.f32.mrf.mxu0
  %v8452 = vadd.f32 0.0, %v8451
  %v8453 = vpop.f32.mrf.mxu0
  %8454 = vmatprep.mubr.f32.mxu0 0.0
  %8455 = vmatmul.mubr.f32.gmra.mxu0 %v2793
  %v8456 = vpop.f32.mrf.mxu0
  %v8457 = vadd.f32 0.0, %v8456
  %v8458 = vpop.f32.mrf.mxu0
  %8459 = vmatprep.mubr.f32.mxu0 0.0
  %8460 = vmatmul.mubr.f32.gmra.mxu0 %v2796
  %v8461 = vpop.f32.mrf.mxu0
  %v8462 = vadd.f32 0.0, %v8461
  %v8463 = vpop.f32.mrf.mxu0
  %8464 = vmatprep.mubr.f32.mxu0 0.0
  %8465 = vmatmul.mubr.f32.gmra.mxu0 %v2799
  %v8466 = vpop.f32.mrf.mxu0
  %v8467 = vadd.f32 0.0, %v8466
  %v8468 = vpop.f32.mrf.mxu0
  %8469 = vmatprep.mubr.f32.mxu0 0.0
  %8470 = vmatmul.mubr.f32.gmra.mxu0 %v2802
  %v8471 = vpop.f32.mrf.mxu0
  %v8472 = vadd.f32 0.0, %v8471
  %v8473 = vpop.f32.mrf.mxu0
  %8474 = vmatprep.mubr.f32.mxu0 0.0
  %8475 = vmatmul.mubr.f32.gmra.mxu0 %v2805
  %v8476 = vpop.f32.mrf.mxu0
  %v8477 = vadd.f32 0.0, %v8476
  %v8478 = vpop.f32.mrf.mxu0
  %8479 = vmatprep.mubr.f32.mxu0 0.0
  %8480 = vmatmul.mubr.f32.gmra.mxu0 %v2808
  %v8481 = vpop.f32.mrf.mxu0
  %v8482 = vadd.f32 0.0, %v8481
  %v8483 = vpop.f32.mrf.mxu0
  %8484 = vmatprep.mubr.f32.mxu0 0.0
  %8485 = vmatmul.mubr.f32.gmra.mxu0 %v2811
  %v8486 = vpop.f32.mrf.mxu0
  %v8487 = vadd.f32 0.0, %v8486
  %v8488 = vpop.f32.mrf.mxu0
  %8489 = vmatprep.mubr.f32.mxu0 0.0
  %8490 = vmatmul.mubr.f32.gmra.mxu0 %v2814
  %v8491 = vpop.f32.mrf.mxu0
  %v8492 = vadd.f32 0.0, %v8491
  %v8493 = vpop.f32.mrf.mxu0
  %8494 = vmatprep.mubr.f32.mxu0 0.0
  %8495 = vmatmul.mubr.f32.gmra.mxu0 %v2817
  %v8496 = vpop.f32.mrf.mxu0
  %v8497 = vadd.f32 0.0, %v8496
  %v8498 = vpop.f32.mrf.mxu0
  %8499 = vmatprep.mubr.f32.mxu0 0.0
  %8500 = vmatmul.mubr.f32.gmra.mxu0 %v2820
  %v8501 = vpop.f32.mrf.mxu0
  %v8502 = vadd.f32 0.0, %v8501
  %v8503 = vpop.f32.mrf.mxu0
  %8504 = vmatprep.mubr.f32.mxu0 0.0
  %8505 = vmatmul.mubr.f32.gmra.mxu0 %v2823
  %v8506 = vpop.f32.mrf.mxu0
  %v8507 = vadd.f32 0.0, %v8506
  %v8508 = vpop.f32.mrf.mxu0
  %8509 = vmatprep.mubr.f32.mxu0 0.0
  %8510 = vmatmul.mubr.f32.gmra.mxu0 %v2826
  %v8511 = vpop.f32.mrf.mxu0
  %v8512 = vadd.f32 0.0, %v8511
  %v8513 = vpop.f32.mrf.mxu0
  %8514 = vmatprep.mubr.f32.mxu0 0.0
  %8515 = vmatmul.mubr.f32.gmra.mxu0 %v2829
  %v8516 = vpop.f32.mrf.mxu0
  %v8517 = vadd.f32 0.0, %v8516
  %v8518 = vpop.f32.mrf.mxu0
  %8519 = vmatprep.mubr.f32.mxu0 0.0
  %8520 = vmatmul.mubr.f32.gmra.mxu0 %v2832
  %v8521 = vpop.f32.mrf.mxu0
  %v8522 = vadd.f32 0.0, %v8521
  %v8523 = vpop.f32.mrf.mxu0
  %8524 = vmatprep.mubr.f32.mxu0 0.0
  %8525 = vmatmul.mubr.f32.gmra.mxu0 %v2835
  %v8526 = vpop.f32.mrf.mxu0
  %v8527 = vadd.f32 0.0, %v8526
  %v8528 = vpop.f32.mrf.mxu0
  %8529 = vmatprep.mubr.f32.mxu0 0.0
  %8530 = vmatmul.mubr.f32.gmra.mxu0 %v2838
  %v8531 = vpop.f32.mrf.mxu0
  %v8532 = vadd.f32 0.0, %v8531
  %v8533 = vpop.f32.mrf.mxu0
  %8534 = vmatprep.mubr.f32.mxu0 0.0
  %8535 = vmatmul.mubr.f32.gmra.mxu0 %v2841
  %v8536 = vpop.f32.mrf.mxu0
  %v8537 = vadd.f32 0.0, %v8536
  %v8538 = vpop.f32.mrf.mxu0
  %8539 = vmatprep.mubr.f32.mxu0 0.0
  %8540 = vmatmul.mubr.f32.gmra.mxu0 %v2844
  %v8541 = vpop.f32.mrf.mxu0
  %v8542 = vadd.f32 0.0, %v8541
  %v8543 = vpop.f32.mrf.mxu0
  %8544 = vmatprep.mubr.f32.mxu0 0.0
  %8545 = vmatmul.mubr.f32.gmra.mxu0 %v2847
  %v8546 = vpop.f32.mrf.mxu0
  %v8547 = vadd.f32 0.0, %v8546
  %v8548 = vpop.f32.mrf.mxu0
  %8549 = vmatprep.mubr.f32.mxu0 0.0
  %8550 = vmatmul.mubr.f32.gmra.mxu0 %v2850
  %v8551 = vpop.f32.mrf.mxu0
  %v8552 = vadd.f32 0.0, %v8551
  %v8553 = vpop.f32.mrf.mxu0
  %8554 = vmatprep.mubr.f32.mxu0 0.0
  %8555 = vmatmul.mubr.f32.gmra.mxu0 %v2853
  %v8556 = vpop.f32.mrf.mxu0
  %v8557 = vadd.f32 0.0, %v8556
  %v8558 = vpop.f32.mrf.mxu0
  %8559 = vmatprep.mubr.f32.mxu0 0.0
  %8560 = vmatmul.mubr.f32.gmra.mxu0 %v2856
  %v8561 = vpop.f32.mrf.mxu0
  %v8562 = vadd.f32 0.0, %v8561
  %v8563 = vpop.f32.mrf.mxu0
  %8564 = vmatprep.mubr.f32.mxu0 0.0
  %8565 = vmatmul.mubr.f32.gmra.mxu0 %v2859
  %v8566 = vpop.f32.mrf.mxu0
  %v8567 = vadd.f32 0.0, %v8566
  %v8568 = vpop.f32.mrf.mxu0
  %8569 = vmatprep.mubr.f32.mxu0 0.0
  %8570 = vmatmul.mubr.f32.gmra.mxu0 %v2862
  %v8571 = vpop.f32.mrf.mxu0
  %v8572 = vadd.f32 0.0, %v8571
  %v8573 = vpop.f32.mrf.mxu0
  %8574 = vmatprep.mubr.f32.mxu0 0.0
  %8575 = vmatmul.mubr.f32.gmra.mxu0 %v2865
  %v8576 = vpop.f32.mrf.mxu0
  %v8577 = vadd.f32 0.0, %v8576
  %v8578 = vpop.f32.mrf.mxu0
  %8579 = vmatprep.mubr.f32.mxu0 0.0
  %8580 = vmatmul.mubr.f32.gmra.mxu0 %v2868
  %v8581 = vpop.f32.mrf.mxu0
  %v8582 = vadd.f32 0.0, %v8581
  %v8583 = vpop.f32.mrf.mxu0
  %8584 = vmatprep.mubr.f32.mxu0 0.0
  %8585 = vmatmul.mubr.f32.gmra.mxu0 %v2871
  %v8586 = vpop.f32.mrf.mxu0
  %v8587 = vadd.f32 0.0, %v8586
  %v8588 = vpop.f32.mrf.mxu0
  %8589 = vmatprep.mubr.f32.mxu0 0.0
  %8590 = vmatmul.mubr.f32.gmra.mxu0 %v2874
  %v8591 = vpop.f32.mrf.mxu0
  %v8592 = vadd.f32 0.0, %v8591
  %v8593 = vpop.f32.mrf.mxu0
  %8594 = vmatprep.mubr.f32.mxu0 0.0
  %8595 = vmatmul.mubr.f32.gmra.mxu0 %v2877
  %v8596 = vpop.f32.mrf.mxu0
  %v8597 = vadd.f32 0.0, %v8596
  %v8598 = vpop.f32.mrf.mxu0
  %8599 = vmatprep.mubr.f32.mxu0 0.0
  %8600 = vmatmul.mubr.f32.gmra.mxu0 %v2880
  %v8601 = vpop.f32.mrf.mxu0
  %v8602 = vadd.f32 0.0, %v8601
  %v8603 = vpop.f32.mrf.mxu0
  %8604 = vmatprep.mubr.f32.mxu0 0.0
  %8605 = vmatmul.mubr.f32.gmra.mxu0 %v2883
  %v8606 = vpop.f32.mrf.mxu0
  %v8607 = vadd.f32 0.0, %v8606
  %v8608 = vpop.f32.mrf.mxu0
  %8609 = vmatprep.mubr.f32.mxu0 0.0
  %8610 = vmatmul.mubr.f32.gmra.mxu0 %v2886
  %v8611 = vpop.f32.mrf.mxu0
  %v8612 = vadd.f32 0.0, %v8611
  %v8613 = vpop.f32.mrf.mxu0
  %8614 = vmatprep.mubr.f32.mxu0 0.0
  %8615 = vmatmul.mubr.f32.gmra.mxu0 %v2889
  %v8616 = vpop.f32.mrf.mxu0
  %v8617 = vadd.f32 0.0, %v8616
  %v8618 = vpop.f32.mrf.mxu0
  %8619 = vmatprep.mubr.f32.mxu0 0.0
  %8620 = vmatmul.mubr.f32.gmra.mxu0 %v2892
  %v8621 = vpop.f32.mrf.mxu0
  %v8622 = vadd.f32 0.0, %v8621
  %v8623 = vpop.f32.mrf.mxu0
  %8624 = vmatprep.mubr.f32.mxu0 0.0
  %8625 = vmatmul.mubr.f32.gmra.mxu0 %v2895
  %v8626 = vpop.f32.mrf.mxu0
  %v8627 = vadd.f32 0.0, %v8626
  %v8628 = vpop.f32.mrf.mxu0
  %8629 = vmatprep.mubr.f32.mxu0 0.0
  %8630 = vmatmul.mubr.f32.gmra.mxu0 %v2898
  %v8631 = vpop.f32.mrf.mxu0
  %v8632 = vadd.f32 0.0, %v8631
  %v8633 = vpop.f32.mrf.mxu0
  %8634 = vmatprep.mubr.f32.mxu0 0.0
  %8635 = vmatmul.mubr.f32.gmra.mxu0 %v2901
  %v8636 = vpop.f32.mrf.mxu0
  %v8637 = vadd.f32 0.0, %v8636
  %v8638 = vpop.f32.mrf.mxu0
  %8639 = vmatprep.mubr.f32.mxu0 0.0
  %8640 = vmatmul.mubr.f32.gmra.mxu0 %v2904
  %v8641 = vpop.f32.mrf.mxu0
  %v8642 = vadd.f32 0.0, %v8641
  %v8643 = vpop.f32.mrf.mxu0
  %8644 = vmatprep.mubr.f32.mxu0 0.0
  %8645 = vmatmul.mubr.f32.gmra.mxu0 %v2907
  %v8646 = vpop.f32.mrf.mxu0
  %v8647 = vadd.f32 0.0, %v8646
  %v8648 = vpop.f32.mrf.mxu0
  %8649 = vmatprep.mubr.f32.mxu0 0.0
  %8650 = vmatmul.mubr.f32.gmra.mxu0 %v2910
  %v8651 = vpop.f32.mrf.mxu0
  %v8652 = vadd.f32 0.0, %v8651
  %v8653 = vpop.f32.mrf.mxu0
  %8654 = vmatprep.mubr.f32.mxu0 0.0
  %8655 = vmatmul.mubr.f32.gmra.mxu0 %v2913
  %v8656 = vpop.f32.mrf.mxu0
  %v8657 = vadd.f32 0.0, %v8656
  %v8658 = vpop.f32.mrf.mxu0
  %8659 = vmatprep.mubr.f32.mxu0 0.0
  %8660 = vmatmul.mubr.f32.gmra.mxu0 %v2916
  %v8661 = vpop.f32.mrf.mxu0
  %v8662 = vadd.f32 0.0, %v8661
  %v8663 = vpop.f32.mrf.mxu0
  %8664 = vmatprep.mubr.f32.mxu0 0.0
  %8665 = vmatmul.mubr.f32.gmra.mxu0 %v2919
  %v8666 = vpop.f32.mrf.mxu0
  %v8667 = vadd.f32 0.0, %v8666
  %v8668 = vpop.f32.mrf.mxu0
  %8669 = vmatprep.mubr.f32.mxu0 0.0
  %8670 = vmatmul.mubr.f32.gmra.mxu0 %v2922
  %v8671 = vpop.f32.mrf.mxu0
  %v8672 = vadd.f32 0.0, %v8671
  %v8673 = vpop.f32.mrf.mxu0
  %8674 = vmatprep.mubr.f32.mxu0 0.0
  %8675 = vmatmul.mubr.f32.gmra.mxu0 %v2925
  %v8676 = vpop.f32.mrf.mxu0
  %v8677 = vadd.f32 0.0, %v8676
  %v8678 = vpop.f32.mrf.mxu0
  %8679 = vmatprep.mubr.f32.mxu0 0.0
  %8680 = vmatmul.mubr.f32.gmra.mxu0 %v2928
  %v8681 = vpop.f32.mrf.mxu0
  %v8682 = vadd.f32 0.0, %v8681
  %v8683 = vpop.f32.mrf.mxu0
  %8684 = vmatprep.mubr.f32.mxu0 0.0
  %8685 = vmatmul.mubr.f32.gmra.mxu0 %v2931
  %v8686 = vpop.f32.mrf.mxu0
  %v8687 = vadd.f32 0.0, %v8686
  %v8688 = vpop.f32.mrf.mxu0
  %8689 = vmatprep.mubr.f32.mxu0 0.0
  %8690 = vmatmul.mubr.f32.gmra.mxu0 %v2934
  %v8691 = vpop.f32.mrf.mxu0
  %v8692 = vadd.f32 0.0, %v8691
  %v8693 = vpop.f32.mrf.mxu0
  %8694 = vmatprep.mubr.f32.mxu0 0.0
  %8695 = vmatmul.mubr.f32.gmra.mxu0 %v2937
  %v8696 = vpop.f32.mrf.mxu0
  %v8697 = vadd.f32 0.0, %v8696
  %v8698 = vpop.f32.mrf.mxu0
  %8699 = vmatprep.mubr.f32.mxu0 0.0
  %8700 = vmatmul.mubr.f32.gmra.mxu0 %v2940
  %v8701 = vpop.f32.mrf.mxu0
  %v8702 = vadd.f32 0.0, %v8701
  %v8703 = vpop.f32.mrf.mxu0
  %8704 = vmatprep.mubr.f32.mxu0 0.0
  %8705 = vmatmul.mubr.f32.gmra.mxu0 %v2943
  %v8706 = vpop.f32.mrf.mxu0
  %v8707 = vadd.f32 0.0, %v8706
  %v8708 = vpop.f32.mrf.mxu0
  %8709 = vmatprep.mubr.f32.mxu0 0.0
  %8710 = vmatmul.mubr.f32.gmra.mxu0 %v2946
  %v8711 = vpop.f32.mrf.mxu0
  %v8712 = vadd.f32 0.0, %v8711
  %v8713 = vpop.f32.mrf.mxu0
  %8714 = vmatprep.mubr.f32.mxu0 0.0
  %8715 = vmatmul.mubr.f32.gmra.mxu0 %v2949
  %v8716 = vpop.f32.mrf.mxu0
  %v8717 = vadd.f32 0.0, %v8716
  %v8718 = vpop.f32.mrf.mxu0
  %8719 = vmatprep.mubr.f32.mxu0 0.0
  %8720 = vmatmul.mubr.f32.gmra.mxu0 %v2952
  %v8721 = vpop.f32.mrf.mxu0
  %v8722 = vadd.f32 0.0, %v8721
  %v8723 = vpop.f32.mrf.mxu0
  %8724 = vmatprep.mubr.f32.mxu0 0.0
  %8725 = vmatmul.mubr.f32.gmra.mxu0 %v2955
  %v8726 = vpop.f32.mrf.mxu0
  %v8727 = vadd.f32 0.0, %v8726
  %v8728 = vpop.f32.mrf.mxu0
  %8729 = vmatprep.mubr.f32.mxu0 0.0
  %8730 = vmatmul.mubr.f32.gmra.mxu0 %v2958
  %v8731 = vpop.f32.mrf.mxu0
  %v8732 = vadd.f32 0.0, %v8731
  %v8733 = vpop.f32.mrf.mxu0
  %8734 = vmatprep.mubr.f32.mxu0 0.0
  %8735 = vmatmul.mubr.f32.gmra.mxu0 %v2961
  %v8736 = vpop.f32.mrf.mxu0
  %v8737 = vadd.f32 0.0, %v8736
  %v8738 = vpop.f32.mrf.mxu0
  %8739 = vmatprep.mubr.f32.mxu0 0.0
  %8740 = vmatmul.mubr.f32.gmra.mxu0 %v2964
  %v8741 = vpop.f32.mrf.mxu0
  %v8742 = vadd.f32 0.0, %v8741
  %v8743 = vpop.f32.mrf.mxu0
  %8744 = vmatprep.mubr.f32.mxu0 0.0
  %8745 = vmatmul.mubr.f32.gmra.mxu0 %v2967
  %v8746 = vpop.f32.mrf.mxu0
  %v8747 = vadd.f32 0.0, %v8746
  %v8748 = vpop.f32.mrf.mxu0
  %8749 = vmatprep.mubr.f32.mxu0 0.0
  %8750 = vmatmul.mubr.f32.gmra.mxu0 %v2970
  %v8751 = vpop.f32.mrf.mxu0
  %v8752 = vadd.f32 0.0, %v8751
  %v8753 = vpop.f32.mrf.mxu0
  %8754 = vmatprep.mubr.f32.mxu0 0.0
  %8755 = vmatmul.mubr.f32.gmra.mxu0 %v2973
  %v8756 = vpop.f32.mrf.mxu0
  %v8757 = vadd.f32 0.0, %v8756
  %v8758 = vpop.f32.mrf.mxu0
  %8759 = vmatprep.mubr.f32.mxu0 0.0
  %8760 = vmatmul.mubr.f32.gmra.mxu0 %v2976
  %v8761 = vpop.f32.mrf.mxu0
  %v8762 = vadd.f32 0.0, %v8761
  %v8763 = vpop.f32.mrf.mxu0
  %8764 = vmatprep.mubr.f32.mxu0 0.0
  %8765 = vmatmul.mubr.f32.gmra.mxu0 %v2979
  %v8766 = vpop.f32.mrf.mxu0
  %v8767 = vadd.f32 0.0, %v8766
  %v8768 = vpop.f32.mrf.mxu0
  %8769 = vmatprep.mubr.f32.mxu0 0.0
  %8770 = vmatmul.mubr.f32.gmra.mxu0 %v2982
  %v8771 = vpop.f32.mrf.mxu0
  %v8772 = vadd.f32 0.0, %v8771
  %v8773 = vpop.f32.mrf.mxu0
  %8774 = vmatprep.mubr.f32.mxu0 0.0
  %8775 = vmatmul.mubr.f32.gmra.mxu0 %v2985
  %v8776 = vpop.f32.mrf.mxu0
  %v8777 = vadd.f32 0.0, %v8776
  %v8778 = vpop.f32.mrf.mxu0
  %8779 = vmatprep.mubr.f32.mxu0 0.0
  %8780 = vmatmul.mubr.f32.gmra.mxu0 %v2988
  %v8781 = vpop.f32.mrf.mxu0
  %v8782 = vadd.f32 0.0, %v8781
  %v8783 = vpop.f32.mrf.mxu0
  %8784 = vmatprep.mubr.f32.mxu0 0.0
  %8785 = vmatmul.mubr.f32.gmra.mxu0 %v2991
  %v8786 = vpop.f32.mrf.mxu0
  %v8787 = vadd.f32 0.0, %v8786
  %v8788 = vpop.f32.mrf.mxu0
  %8789 = vmatprep.mubr.f32.mxu0 0.0
  %8790 = vmatmul.mubr.f32.gmra.mxu0 %v2994
  %v8791 = vpop.f32.mrf.mxu0
  %v8792 = vadd.f32 0.0, %v8791
  %v8793 = vpop.f32.mrf.mxu0
  %8794 = vmatprep.mubr.f32.mxu0 0.0
  %8795 = vmatmul.mubr.f32.gmra.mxu0 %v2997
  %v8796 = vpop.f32.mrf.mxu0
  %v8797 = vadd.f32 0.0, %v8796
  %v8798 = vpop.f32.mrf.mxu0
  %8799 = vmatprep.mubr.f32.mxu0 0.0
  %8800 = vmatmul.mubr.f32.gmra.mxu0 %v3000
  %v8801 = vpop.f32.mrf.mxu0
  %v8802 = vadd.f32 0.0, %v8801
  %v8803 = vpop.f32.mrf.mxu0
  %8804 = vmatprep.mubr.f32.mxu0 0.0
  %8805 = vmatmul.mubr.f32.gmra.mxu0 %v3003
  %v8806 = vpop.f32.mrf.mxu0
  %v8807 = vadd.f32 0.0, %v8806
  %v8808 = vpop.f32.mrf.mxu0
  %8809 = vmatprep.mubr.f32.mxu0 0.0
  %8810 = vmatmul.mubr.f32.gmra.mxu0 %v3006
  %v8811 = vpop.f32.mrf.mxu0
  %v8812 = vadd.f32 0.0, %v8811
  %v8813 = vpop.f32.mrf.mxu0
  %8814 = vmatprep.mubr.f32.mxu0 0.0
  %8815 = vmatmul.mubr.f32.gmra.mxu0 %v3009
  %v8816 = vpop.f32.mrf.mxu0
  %v8817 = vadd.f32 0.0, %v8816
  %v8818 = vpop.f32.mrf.mxu0
  %8819 = vmatprep.mubr.f32.mxu0 0.0
  %8820 = vmatmul.mubr.f32.gmra.mxu0 %v3012
  %v8821 = vpop.f32.mrf.mxu0
  %v8822 = vadd.f32 0.0, %v8821
  %v8823 = vpop.f32.mrf.mxu0
  %8824 = vmatprep.mubr.f32.mxu0 0.0
  %8825 = vmatmul.mubr.f32.gmra.mxu0 %v3015
  %v8826 = vpop.f32.mrf.mxu0
  %v8827 = vadd.f32 0.0, %v8826
  %v8828 = vpop.f32.mrf.mxu0
  %8829 = vmatprep.mubr.f32.mxu0 0.0
  %8830 = vmatmul.mubr.f32.gmra.mxu0 %v3018
  %v8831 = vpop.f32.mrf.mxu0
  %v8832 = vadd.f32 0.0, %v8831
  %v8833 = vpop.f32.mrf.mxu0
  %8834 = vmatprep.mubr.f32.mxu0 0.0
  %8835 = vmatmul.mubr.f32.gmra.mxu0 %v3021
  %v8836 = vpop.f32.mrf.mxu0
  %v8837 = vadd.f32 0.0, %v8836
  %v8838 = vpop.f32.mrf.mxu0
  %8839 = vmatprep.mubr.f32.mxu0 0.0
  %8840 = vmatmul.mubr.f32.gmra.mxu0 %v3024
  %v8841 = vpop.f32.mrf.mxu0
  %v8842 = vadd.f32 0.0, %v8841
  %v8843 = vpop.f32.mrf.mxu0
  %8844 = vmatprep.mubr.f32.mxu0 0.0
  %8845 = vmatmul.mubr.f32.gmra.mxu0 %v3027
  %v8846 = vpop.f32.mrf.mxu0
  %v8847 = vadd.f32 0.0, %v8846
  %v8848 = vpop.f32.mrf.mxu0
  %8849 = vmatprep.mubr.f32.mxu0 0.0
  %8850 = vmatmul.mubr.f32.gmra.mxu0 %v3030
  %v8851 = vpop.f32.mrf.mxu0
  %v8852 = vadd.f32 0.0, %v8851
  %v8853 = vpop.f32.mrf.mxu0
  %8854 = vmatprep.mubr.f32.mxu0 0.0
  %8855 = vmatmul.mubr.f32.gmra.mxu0 %v3033
  %v8856 = vpop.f32.mrf.mxu0
  %v8857 = vadd.f32 0.0, %v8856
  %v8858 = vpop.f32.mrf.mxu0
  %8859 = vmatprep.mubr.f32.mxu0 0.0
  %8860 = vmatmul.mubr.f32.gmra.mxu0 %v3036
  %v8861 = vpop.f32.mrf.mxu0
  %v8862 = vadd.f32 0.0, %v8861
  %v8863 = vpop.f32.mrf.mxu0
  %8864 = vmatprep.mubr.f32.mxu0 0.0
  %8865 = vmatmul.mubr.f32.gmra.mxu0 %v3039
  %v8866 = vpop.f32.mrf.mxu0
  %v8867 = vadd.f32 0.0, %v8866
  %v8868 = vpop.f32.mrf.mxu0
  %8869 = vmatprep.mubr.f32.mxu0 0.0
  %8870 = vmatmul.mubr.f32.gmra.mxu0 %v3042
  %v8871 = vpop.f32.mrf.mxu0
  %v8872 = vadd.f32 0.0, %v8871
  %v8873 = vpop.f32.mrf.mxu0
  %8874 = vmatprep.mubr.f32.mxu0 0.0
  %8875 = vmatmul.mubr.f32.gmra.mxu0 %v3045
  %v8876 = vpop.f32.mrf.mxu0
  %v8877 = vadd.f32 0.0, %v8876
  %v8878 = vpop.f32.mrf.mxu0
  %8879 = vmatprep.mubr.f32.mxu0 0.0
  %8880 = vmatmul.mubr.f32.gmra.mxu0 %v3048
  %v8881 = vpop.f32.mrf.mxu0
  %v8882 = vadd.f32 0.0, %v8881
  %v8883 = vpop.f32.mrf.mxu0
  %8884 = vmatprep.mubr.f32.mxu0 0.0
  %8885 = vmatmul.mubr.f32.gmra.mxu0 %v3051
  %v8886 = vpop.f32.mrf.mxu0
  %v8887 = vadd.f32 0.0, %v8886
  %v8888 = vpop.f32.mrf.mxu0
  %8889 = vmatprep.mubr.f32.mxu0 0.0
  %8890 = vmatmul.mubr.f32.gmra.mxu0 %v3054
  %v8891 = vpop.f32.mrf.mxu0
  %v8892 = vadd.f32 0.0, %v8891
  %v8893 = vpop.f32.mrf.mxu0
  %8894 = vmatprep.mubr.f32.mxu0 0.0
  %8895 = vmatmul.mubr.f32.gmra.mxu0 %v3057
  %v8896 = vpop.f32.mrf.mxu0
  %v8897 = vadd.f32 0.0, %v8896
  %v8898 = vpop.f32.mrf.mxu0
  %8899 = vmatprep.mubr.f32.mxu0 0.0
  %8900 = vmatmul.mubr.f32.gmra.mxu0 %v3060
  %v8901 = vpop.f32.mrf.mxu0
  %v8902 = vadd.f32 0.0, %v8901
  %v8903 = vpop.f32.mrf.mxu0
  %8904 = vmatprep.mubr.f32.mxu0 0.0
  %8905 = vmatmul.mubr.f32.gmra.mxu0 %v3063
  %v8906 = vpop.f32.mrf.mxu0
  %v8907 = vadd.f32 0.0, %v8906
  %v8908 = vpop.f32.mrf.mxu0
  %8909 = vmatprep.mubr.f32.mxu0 0.0
  %8910 = vmatmul.mubr.f32.gmra.mxu0 %v3066
  %v8911 = vpop.f32.mrf.mxu0
  %v8912 = vadd.f32 0.0, %v8911
  %v8913 = vpop.f32.mrf.mxu0
  %8914 = vmatprep.mubr.f32.mxu0 0.0
  %8915 = vmatmul.mubr.f32.gmra.mxu0 %v3069
  %v8916 = vpop.f32.mrf.mxu0
  %v8917 = vadd.f32 0.0, %v8916
  %v8918 = vpop.f32.mrf.mxu0
  %8919 = vmatprep.mubr.f32.mxu0 0.0
  %8920 = vmatmul.mubr.f32.gmra.mxu0 %v3072
  %v8921 = vpop.f32.mrf.mxu0
  %v8922 = vadd.f32 0.0, %v8921
  %v8923 = vpop.f32.mrf.mxu0
  %8924 = vmatprep.mubr.f32.mxu0 0.0
  %8925 = vmatmul.mubr.f32.gmra.mxu0 %v3075
  %v8926 = vpop.f32.mrf.mxu0
  %v8927 = vadd.f32 0.0, %v8926
  %v8928 = vpop.f32.mrf.mxu0
  %8929 = vmatprep.mubr.f32.mxu0 0.0
  %8930 = vmatmul.mubr.f32.gmra.mxu0 %v3078
  %v8931 = vpop.f32.mrf.mxu0
  %v8932 = vadd.f32 0.0, %v8931
  %v8933 = vpop.f32.mrf.mxu0
  %8934 = vmatprep.mubr.f32.mxu0 0.0
  %8935 = vmatmul.mubr.f32.gmra.mxu0 %v3081
  %v8936 = vpop.f32.mrf.mxu0
  %v8937 = vadd.f32 0.0, %v8936
  %v8938 = vpop.f32.mrf.mxu0
  %8939 = vmatprep.mubr.f32.mxu0 0.0
  %8940 = vmatmul.mubr.f32.gmra.mxu0 %v3084
  %v8941 = vpop.f32.mrf.mxu0
  %v8942 = vadd.f32 0.0, %v8941
  %v8943 = vpop.f32.mrf.mxu0
  %8944 = vmatprep.mubr.f32.mxu0 0.0
  %8945 = vmatmul.mubr.f32.gmra.mxu0 %v3087
  %v8946 = vpop.f32.mrf.mxu0
  %v8947 = vadd.f32 0.0, %v8946
  %v8948 = vpop.f32.mrf.mxu0
  %8949 = vmatprep.mubr.f32.mxu0 0.0
  %8950 = vmatmul.mubr.f32.gmra.mxu0 %v3090
  %v8951 = vpop.f32.mrf.mxu0
  %v8952 = vadd.f32 0.0, %v8951
  %v8953 = vpop.f32.mrf.mxu0
  %8954 = vmatprep.mubr.f32.mxu0 0.0
  %8955 = vmatmul.mubr.f32.gmra.mxu0 %v3093
  %v8956 = vpop.f32.mrf.mxu0
  %v8957 = vadd.f32 0.0, %v8956
  %v8958 = vpop.f32.mrf.mxu0
  %8959 = vmatprep.mubr.f32.mxu0 0.0
  %8960 = vmatmul.mubr.f32.gmra.mxu0 %v3096
  %v8961 = vpop.f32.mrf.mxu0
  %v8962 = vadd.f32 0.0, %v8961
  %v8963 = vpop.f32.mrf.mxu0
  %8964 = vmatprep.mubr.f32.mxu0 0.0
  %8965 = vmatmul.mubr.f32.gmra.mxu0 %v3099
  %v8966 = vpop.f32.mrf.mxu0
  %v8967 = vadd.f32 0.0, %v8966
  %v8968 = vpop.f32.mrf.mxu0
  %8969 = vmatprep.mubr.f32.mxu0 0.0
  %8970 = vmatmul.mubr.f32.gmra.mxu0 %v3102
  %v8971 = vpop.f32.mrf.mxu0
  %v8972 = vadd.f32 0.0, %v8971
  %v8973 = vpop.f32.mrf.mxu0
  %8974 = vmatprep.mubr.f32.mxu0 0.0
  %8975 = vmatmul.mubr.f32.gmra.mxu0 %v3105
  %v8976 = vpop.f32.mrf.mxu0
  %v8977 = vadd.f32 0.0, %v8976
  %v8978 = vpop.f32.mrf.mxu0
  %8979 = vmatprep.mubr.f32.mxu0 0.0
  %8980 = vmatmul.mubr.f32.gmra.mxu0 %v3108
  %v8981 = vpop.f32.mrf.mxu0
  %v8982 = vadd.f32 0.0, %v8981
  %v8983 = vpop.f32.mrf.mxu0
  %8984 = vmatprep.mubr.f32.mxu0 0.0
  %8985 = vmatmul.mubr.f32.gmra.mxu0 %v3111
  %v8986 = vpop.f32.mrf.mxu0
  %v8987 = vadd.f32 0.0, %v8986
  %v8988 = vpop.f32.mrf.mxu0
  %8989 = vmatprep.mubr.f32.mxu0 0.0
  %8990 = vmatmul.mubr.f32.gmra.mxu0 %v3114
  %v8991 = vpop.f32.mrf.mxu0
  %v8992 = vadd.f32 0.0, %v8991
  %v8993 = vpop.f32.mrf.mxu0
  %8994 = vmatprep.mubr.f32.mxu0 0.0
  %8995 = vmatmul.mubr.f32.gmra.mxu0 %v3117
  %v8996 = vpop.f32.mrf.mxu0
  %v8997 = vadd.f32 0.0, %v8996
  %v8998 = vpop.f32.mrf.mxu0
  %8999 = vmatprep.mubr.f32.mxu0 0.0
  %9000 = vmatmul.mubr.f32.gmra.mxu0 %v3120
  %v9001 = vpop.f32.mrf.mxu0
  %v9002 = vadd.f32 0.0, %v9001
  %v9003 = vpop.f32.mrf.mxu0
  %9004 = vmatprep.mubr.f32.mxu0 0.0
  %9005 = vmatmul.mubr.f32.gmra.mxu0 %v3123
  %v9006 = vpop.f32.mrf.mxu0
  %v9007 = vadd.f32 0.0, %v9006
  %v9008 = vpop.f32.mrf.mxu0
  %9009 = vmatprep.mubr.f32.mxu0 0.0
  %9010 = vmatmul.mubr.f32.gmra.mxu0 %v3126
  %v9011 = vpop.f32.mrf.mxu0
  %v9012 = vadd.f32 0.0, %v9011
  %v9013 = vpop.f32.mrf.mxu0
  %9014 = vmatprep.mubr.f32.mxu0 0.0
  %9015 = vmatmul.mubr.f32.gmra.mxu0 %v3129
  %v9016 = vpop.f32.mrf.mxu0
  %v9017 = vadd.f32 0.0, %v9016
  %v9018 = vpop.f32.mrf.mxu0
  %9019 = vmatprep.mubr.f32.mxu0 0.0
  %9020 = vmatmul.mubr.f32.gmra.mxu0 %v3132
  %v9021 = vpop.f32.mrf.mxu0
  %v9022 = vadd.f32 0.0, %v9021
  %v9023 = vpop.f32.mrf.mxu0
  %9024 = vmatprep.mubr.f32.mxu0 0.0
  %9025 = vmatmul.mubr.f32.gmra.mxu0 %v3135
  %v9026 = vpop.f32.mrf.mxu0
  %v9027 = vadd.f32 0.0, %v9026
  %v9028 = vpop.f32.mrf.mxu0
  %9029 = vmatprep.mubr.f32.mxu0 0.0
  %9030 = vmatmul.mubr.f32.gmra.mxu0 %v3138
  %v9031 = vpop.f32.mrf.mxu0
  %v9032 = vadd.f32 0.0, %v9031
  %v9033 = vpop.f32.mrf.mxu0
  %9034 = vmatprep.mubr.f32.mxu0 0.0
  %9035 = vmatmul.mubr.f32.gmra.mxu0 %v3141
  %v9036 = vpop.f32.mrf.mxu0
  %v9037 = vadd.f32 0.0, %v9036
  %v9038 = vpop.f32.mrf.mxu0
  %9039 = vmatprep.mubr.f32.mxu0 0.0
  %9040 = vmatmul.mubr.f32.gmra.mxu0 %v3144
  %v9041 = vpop.f32.mrf.mxu0
  %v9042 = vadd.f32 0.0, %v9041
  %v9043 = vpop.f32.mrf.mxu0
  %9044 = vmatprep.mubr.f32.mxu0 0.0
  %9045 = vmatmul.mubr.f32.gmra.mxu0 %v3147
  %v9046 = vpop.f32.mrf.mxu0
  %v9047 = vadd.f32 0.0, %v9046
  %v9048 = vpop.f32.mrf.mxu0
  %9049 = vmatprep.mubr.f32.mxu0 0.0
  %9050 = vmatmul.mubr.f32.gmra.mxu0 %v3150
  %v9051 = vpop.f32.mrf.mxu0
  %v9052 = vadd.f32 0.0, %v9051
  %v9053 = vpop.f32.mrf.mxu0
  %9054 = vmatprep.mubr.f32.mxu0 0.0
  %9055 = vmatmul.mubr.f32.gmra.mxu0 %v3153
  %v9056 = vpop.f32.mrf.mxu0
  %v9057 = vadd.f32 0.0, %v9056
  %v9058 = vpop.f32.mrf.mxu0
  %9059 = vmatprep.mubr.f32.mxu0 0.0
  %9060 = vmatmul.mubr.f32.gmra.mxu0 %v3156
  %v9061 = vpop.f32.mrf.mxu0
  %v9062 = vadd.f32 0.0, %v9061
  %v9063 = vpop.f32.mrf.mxu0
  %9064 = vmatprep.mubr.f32.mxu0 0.0
  %9065 = vmatmul.mubr.f32.gmra.mxu0 %v3159
  %v9066 = vpop.f32.mrf.mxu0
  %v9067 = vadd.f32 0.0, %v9066
  %v9068 = vpop.f32.mrf.mxu0
  %9069 = vmatprep.mubr.f32.mxu0 0.0
  %9070 = vmatmul.mubr.f32.gmra.mxu0 %v3162
  %v9071 = vpop.f32.mrf.mxu0
  %v9072 = vadd.f32 0.0, %v9071
  %v9073 = vpop.f32.mrf.mxu0
  %9074 = vmatprep.mubr.f32.mxu0 0.0
  %9075 = vmatmul.mubr.f32.gmra.mxu0 %v3165
  %v9076 = vpop.f32.mrf.mxu0
  %v9077 = vadd.f32 0.0, %v9076
  %v9078 = vpop.f32.mrf.mxu0
  %9079 = vmatprep.mubr.f32.mxu0 0.0
  %9080 = vmatmul.mubr.f32.gmra.mxu0 %v3168
  %v9081 = vpop.f32.mrf.mxu0
  %v9082 = vadd.f32 0.0, %v9081
  %v9083 = vpop.f32.mrf.mxu0
  %9084 = vmatprep.mubr.f32.mxu0 0.0
  %9085 = vmatmul.mubr.f32.gmra.mxu0 %v3171
  %v9086 = vpop.f32.mrf.mxu0
  %v9087 = vadd.f32 0.0, %v9086
  %v9088 = vpop.f32.mrf.mxu0
  %9089 = vmatprep.mubr.f32.mxu0 0.0
  %9090 = vmatmul.mubr.f32.gmra.mxu0 %v3174
  %v9091 = vpop.f32.mrf.mxu0
  %v9092 = vadd.f32 0.0, %v9091
  %v9093 = vpop.f32.mrf.mxu0
  %9094 = vmatprep.mubr.f32.mxu0 0.0
  %9095 = vmatmul.mubr.f32.gmra.mxu0 %v3177
  %v9096 = vpop.f32.mrf.mxu0
  %v9097 = vadd.f32 0.0, %v9096
  %v9098 = vpop.f32.mrf.mxu0
  %9099 = vmatprep.mubr.f32.mxu0 0.0
  %9100 = vmatmul.mubr.f32.gmra.mxu0 %v3180
  %v9101 = vpop.f32.mrf.mxu0
  %v9102 = vadd.f32 0.0, %v9101
  %v9103 = vpop.f32.mrf.mxu0
  %9104 = vmatprep.mubr.f32.mxu0 0.0
  %9105 = vmatmul.mubr.f32.gmra.mxu0 %v3183
  %v9106 = vpop.f32.mrf.mxu0
  %v9107 = vadd.f32 0.0, %v9106
  %v9108 = vpop.f32.mrf.mxu0
  %9109 = vmatprep.mubr.f32.mxu0 0.0
  %9110 = vmatmul.mubr.f32.gmra.mxu0 %v3186
  %v9111 = vpop.f32.mrf.mxu0
  %v9112 = vadd.f32 0.0, %v9111
  %v9113 = vpop.f32.mrf.mxu0
  %9114 = vmatprep.mubr.f32.mxu0 0.0
  %9115 = vmatmul.mubr.f32.gmra.mxu0 %v3189
  %v9116 = vpop.f32.mrf.mxu0
  %v9117 = vadd.f32 0.0, %v9116
  %v9118 = vpop.f32.mrf.mxu0
  %9119 = vmatprep.mubr.f32.mxu0 0.0
  %9120 = vmatmul.mubr.f32.gmra.mxu0 %v3192
  %v9121 = vpop.f32.mrf.mxu0
  %v9122 = vadd.f32 0.0, %v9121
  %v9123 = vpop.f32.mrf.mxu0
  %9124 = vmatprep.mubr.f32.mxu0 0.0
  %9125 = vmatmul.mubr.f32.gmra.mxu0 %v3195
  %v9126 = vpop.f32.mrf.mxu0
  %v9127 = vadd.f32 0.0, %v9126
  %v9128 = vpop.f32.mrf.mxu0
  %9129 = vmatprep.mubr.f32.mxu0 0.0
  %9130 = vmatmul.mubr.f32.gmra.mxu0 %v3198
  %v9131 = vpop.f32.mrf.mxu0
  %v9132 = vadd.f32 0.0, %v9131
  %v9133 = vpop.f32.mrf.mxu0
  %9134 = vmatprep.mubr.f32.mxu0 0.0
  %9135 = vmatmul.mubr.f32.gmra.mxu0 %v3201
  %v9136 = vpop.f32.mrf.mxu0
  %v9137 = vadd.f32 0.0, %v9136
  %v9138 = vpop.f32.mrf.mxu0
  %9139 = vmatprep.mubr.f32.mxu0 0.0
  %9140 = vmatmul.mubr.f32.gmra.mxu0 %v3204
  %v9141 = vpop.f32.mrf.mxu0
  %v9142 = vadd.f32 0.0, %v9141
  %v9143 = vpop.f32.mrf.mxu0
  %9144 = vmatprep.mubr.f32.mxu0 0.0
  %9145 = vmatmul.mubr.f32.gmra.mxu0 %v3207
  %v9146 = vpop.f32.mrf.mxu0
  %v9147 = vadd.f32 0.0, %v9146
  %v9148 = vpop.f32.mrf.mxu0
  %9149 = vmatprep.mubr.f32.mxu0 0.0
  %9150 = vmatmul.mubr.f32.gmra.mxu0 %v3210
  %v9151 = vpop.f32.mrf.mxu0
  %v9152 = vadd.f32 0.0, %v9151
  %v9153 = vpop.f32.mrf.mxu0
  %9154 = vmatprep.mubr.f32.mxu0 0.0
  %9155 = vmatmul.mubr.f32.gmra.mxu0 %v3213
  %v9156 = vpop.f32.mrf.mxu0
  %v9157 = vadd.f32 0.0, %v9156
  %v9158 = vpop.f32.mrf.mxu0
  %9159 = vmatprep.mubr.f32.mxu0 0.0
  %9160 = vmatmul.mubr.f32.gmra.mxu0 %v3216
  %v9161 = vpop.f32.mrf.mxu0
  %v9162 = vadd.f32 0.0, %v9161
  %v9163 = vpop.f32.mrf.mxu0
  %9164 = vmatprep.mubr.f32.mxu0 0.0
  %9165 = vmatmul.mubr.f32.gmra.mxu0 %v3219
  %v9166 = vpop.f32.mrf.mxu0
  %v9167 = vadd.f32 0.0, %v9166
  %v9168 = vpop.f32.mrf.mxu0
  %9169 = vmatprep.mubr.f32.mxu0 0.0
  %9170 = vmatmul.mubr.f32.gmra.mxu0 %v3222
  %v9171 = vpop.f32.mrf.mxu0
  %v9172 = vadd.f32 0.0, %v9171
  %v9173 = vpop.f32.mrf.mxu0
  %9174 = vmatprep.mubr.f32.mxu0 0.0
  %9175 = vmatmul.mubr.f32.gmra.mxu0 %v3225
  %v9176 = vpop.f32.mrf.mxu0
  %v9177 = vadd.f32 0.0, %v9176
  %v9178 = vpop.f32.mrf.mxu0
  %9179 = vmatprep.mubr.f32.mxu0 0.0
  %9180 = vmatmul.mubr.f32.gmra.mxu0 %v3228
  %v9181 = vpop.f32.mrf.mxu0
  %v9182 = vadd.f32 0.0, %v9181
  %v9183 = vpop.f32.mrf.mxu0
  %9184 = vmatprep.mubr.f32.mxu0 0.0
  %9185 = vmatmul.mubr.f32.gmra.mxu0 %v3231
  %v9186 = vpop.f32.mrf.mxu0
  %v9187 = vadd.f32 0.0, %v9186
  %v9188 = vpop.f32.mrf.mxu0
  %9189 = vmatprep.mubr.f32.mxu0 0.0
  %9190 = vmatmul.mubr.f32.gmra.mxu0 %v3234
  %v9191 = vpop.f32.mrf.mxu0
  %v9192 = vadd.f32 0.0, %v9191
  %v9193 = vpop.f32.mrf.mxu0
  %9194 = vmatprep.mubr.f32.mxu0 0.0
  %9195 = vmatmul.mubr.f32.gmra.mxu0 %v3237
  %v9196 = vpop.f32.mrf.mxu0
  %v9197 = vadd.f32 0.0, %v9196
  %v9198 = vpop.f32.mrf.mxu0
  %9199 = vmatprep.mubr.f32.mxu0 0.0
  %9200 = vmatmul.mubr.f32.gmra.mxu0 %v3240
  %v9201 = vpop.f32.mrf.mxu0
  %v9202 = vadd.f32 0.0, %v9201
  %v9203 = vpop.f32.mrf.mxu0
  %9204 = vmatprep.mubr.f32.mxu0 0.0
  %9205 = vmatmul.mubr.f32.gmra.mxu0 %v3243
  %v9206 = vpop.f32.mrf.mxu0
  %v9207 = vadd.f32 0.0, %v9206
  %v9208 = vpop.f32.mrf.mxu0
  %9209 = vmatprep.mubr.f32.mxu0 0.0
  %9210 = vmatmul.mubr.f32.gmra.mxu0 %v3246
  %v9211 = vpop.f32.mrf.mxu0
  %v9212 = vadd.f32 0.0, %v9211
  %v9213 = vpop.f32.mrf.mxu0
  %9214 = vmatprep.mubr.f32.mxu0 0.0
  %9215 = vmatmul.mubr.f32.gmra.mxu0 %v3249
  %v9216 = vpop.f32.mrf.mxu0
  %v9217 = vadd.f32 0.0, %v9216
  %v9218 = vpop.f32.mrf.mxu0
  %9219 = vmatprep.mubr.f32.mxu0 0.0
  %9220 = vmatmul.mubr.f32.gmra.mxu0 %v3252
  %v9221 = vpop.f32.mrf.mxu0
  %v9222 = vadd.f32 0.0, %v9221
  %v9223 = vpop.f32.mrf.mxu0
  %9224 = vmatprep.mubr.f32.mxu0 0.0
  %9225 = vmatmul.mubr.f32.gmra.mxu0 %v3255
  %v9226 = vpop.f32.mrf.mxu0
  %v9227 = vadd.f32 0.0, %v9226
  %v9228 = vpop.f32.mrf.mxu0
  %9229 = vmatprep.mubr.f32.mxu0 0.0
  %9230 = vmatmul.mubr.f32.gmra.mxu0 %v3258
  %v9231 = vpop.f32.mrf.mxu0
  %v9232 = vadd.f32 0.0, %v9231
  %v9233 = vpop.f32.mrf.mxu0
  %9234 = vmatprep.mubr.f32.mxu0 0.0
  %9235 = vmatmul.mubr.f32.gmra.mxu0 %v3261
  %v9236 = vpop.f32.mrf.mxu0
  %v9237 = vadd.f32 0.0, %v9236
  %v9238 = vpop.f32.mrf.mxu0
  %9239 = vmatprep.mubr.f32.mxu0 0.0
  %9240 = vmatmul.mubr.f32.gmra.mxu0 %v3264
  %v9241 = vpop.f32.mrf.mxu0
  %v9242 = vadd.f32 0.0, %v9241
  %v9243 = vpop.f32.mrf.mxu0
  %9244 = vmatprep.mubr.f32.mxu0 0.0
  %9245 = vmatmul.mubr.f32.gmra.mxu0 %v6177
  %v9246 = vpop.f32.mrf.mxu0
  %v9247 = vadd.f32 0.0, %v9246
  %v9248 = vpop.f32.mrf.mxu0
  %9249 = vmatprep.mubr.f32.mxu0 0.0
  %9250 = vmatmul.mubr.f32.gmra.mxu0 %v6180
  %v9251 = vpop.f32.mrf.mxu0
  %v9252 = vadd.f32 0.0, %v9251
  %v9253 = vpop.f32.mrf.mxu0
  %9254 = vmatprep.mubr.f32.mxu0 0.0
  %9255 = vmatmul.mubr.f32.gmra.mxu0 %v6183
  %v9256 = vpop.f32.mrf.mxu0
  %v9257 = vadd.f32 0.0, %v9256
  %v9258 = vpop.f32.mrf.mxu0
  %9259 = vmatprep.mubr.f32.mxu0 0.0
  %9260 = vmatmul.mubr.f32.gmra.mxu0 %v6186
  %v9261 = vpop.f32.mrf.mxu0
  %v9262 = vadd.f32 0.0, %v9261
  %v9263 = vpop.f32.mrf.mxu0
  %9264 = vmatprep.mubr.f32.mxu0 0.0
  %9265 = vmatmul.mubr.f32.gmra.mxu0 %v6189
  %v9266 = vpop.f32.mrf.mxu0
  %v9267 = vadd.f32 0.0, %v9266
  %v9268 = vpop.f32.mrf.mxu0
  %9269 = vmatprep.mubr.f32.mxu0 0.0
  %9270 = vmatmul.mubr.f32.gmra.mxu0 %v6192
  %v9271 = vpop.f32.mrf.mxu0
  %v9272 = vadd.f32 0.0, %v9271
  %v9273 = vpop.f32.mrf.mxu0
  %9274 = vmatprep.mubr.f32.mxu0 0.0
  %9275 = vmatmul.mubr.f32.gmra.mxu0 %v6195
  %v9276 = vpop.f32.mrf.mxu0
  %v9277 = vadd.f32 0.0, %v9276
  %v9278 = vpop.f32.mrf.mxu0
  %9279 = vmatprep.mubr.f32.mxu0 0.0
  %9280 = vmatmul.mubr.f32.gmra.mxu0 %v6198
  %v9281 = vpop.f32.mrf.mxu0
  %v9282 = vadd.f32 0.0, %v9281
  %v9283 = vpop.f32.mrf.mxu0
  %9284 = vmatprep.mubr.f32.mxu0 0.0
  %9285 = vmatmul.mubr.f32.gmra.mxu0 %v6201
  %v9286 = vpop.f32.mrf.mxu0
  %v9287 = vadd.f32 0.0, %v9286
  %v9288 = vpop.f32.mrf.mxu0
  %9289 = vmatprep.mubr.f32.mxu0 0.0
  %9290 = vmatmul.mubr.f32.gmra.mxu0 %v6204
  %v9291 = vpop.f32.mrf.mxu0
  %v9292 = vadd.f32 0.0, %v9291
  %v9293 = vpop.f32.mrf.mxu0
  %9294 = vmatprep.mubr.f32.mxu0 0.0
  %9295 = vmatmul.mubr.f32.gmra.mxu0 %v6207
  %v9296 = vpop.f32.mrf.mxu0
  %v9297 = vadd.f32 0.0, %v9296
  %v9298 = vpop.f32.mrf.mxu0
  %9299 = vmatprep.mubr.f32.mxu0 0.0
  %9300 = vmatmul.mubr.f32.gmra.mxu0 %v6210
  %v9301 = vpop.f32.mrf.mxu0
  %v9302 = vadd.f32 0.0, %v9301
  %v9303 = vpop.f32.mrf.mxu0
  %9304 = vmatprep.mubr.f32.mxu0 0.0
  %9305 = vmatmul.mubr.f32.gmra.mxu0 %v6213
  %v9306 = vpop.f32.mrf.mxu0
  %v9307 = vadd.f32 0.0, %v9306
  %v9308 = vpop.f32.mrf.mxu0
  %9309 = vmatprep.mubr.f32.mxu0 0.0
  %9310 = vmatmul.mubr.f32.gmra.mxu0 %v6216
  %v9311 = vpop.f32.mrf.mxu0
  %v9312 = vadd.f32 0.0, %v9311
  %v9313 = vpop.f32.mrf.mxu0
  %9314 = vmatprep.mubr.f32.mxu0 0.0
  %9315 = vmatmul.mubr.f32.gmra.mxu0 %v6219
  %v9316 = vpop.f32.mrf.mxu0
  %v9317 = vadd.f32 0.0, %v9316
  %v9318 = vpop.f32.mrf.mxu0
  %9319 = vmatprep.mubr.f32.mxu0 0.0
  %9320 = vmatmul.mubr.f32.gmra.mxu0 %v6222
  %v9321 = vpop.f32.mrf.mxu0
  %v9322 = vadd.f32 0.0, %v9321
  %v9323 = vpop.f32.mrf.mxu0
  %9324 = vmatprep.mubr.f32.mxu0 0.0
  %9325 = vmatmul.mubr.f32.gmra.mxu0 %v7930
  %v9326 = vpop.f32.mrf.mxu0
  %v9327 = vadd.f32 0.0, %v9326
  %v9328 = vpop.f32.mrf.mxu0
  %9329 = vmatprep.mubr.f32.mxu0 0.0
  %9330 = vmatmul.mubr.f32.gmra.mxu0 %v7933
  %v9331 = vpop.f32.mrf.mxu0
  %v9332 = vadd.f32 0.0, %v9331
  %v9333 = vpop.f32.mrf.mxu0
  %9334 = vmatprep.mubr.f32.mxu0 0.0
  %9335 = vmatmul.mubr.f32.gmra.mxu0 %v7936
  %v9336 = vpop.f32.mrf.mxu0
  %v9337 = vadd.f32 0.0, %v9336
  %v9338 = vpop.f32.mrf.mxu0
  %9339 = vmatprep.mubr.f32.mxu0 0.0
  %9340 = vmatmul.mubr.f32.gmra.mxu0 %v7939
  %v9341 = vpop.f32.mrf.mxu0
  %v9342 = vadd.f32 0.0, %v9341
  %v9343 = vpop.f32.mrf.mxu0
  %9344 = vmatprep.mubr.f32.mxu0 0.0
  %9345 = vmatmul.mubr.f32.gmra.mxu0 %v7942
  %v9346 = vpop.f32.mrf.mxu0
  %v9347 = vadd.f32 0.0, %v9346
  %v9348 = vpop.f32.mrf.mxu0
  %9349 = vmatprep.mubr.f32.mxu0 0.0
  %9350 = vmatmul.mubr.f32.gmra.mxu0 %v7945
  %v9351 = vpop.f32.mrf.mxu0
  %v9352 = vadd.f32 0.0, %v9351
  %v9353 = vpop.f32.mrf.mxu0
  %9354 = vmatprep.mubr.f32.mxu0 0.0
  %9355 = vmatmul.mubr.f32.gmra.mxu0 %v7948
  %v9356 = vpop.f32.mrf.mxu0
  %v9357 = vadd.f32 0.0, %v9356
  %v9358 = vpop.f32.mrf.mxu0
  %9359 = vmatprep.mubr.f32.mxu0 0.0
  %9360 = vmatmul.mubr.f32.gmra.mxu0 %v7951
  %v9361 = vpop.f32.mrf.mxu0
  %v9362 = vadd.f32 0.0, %v9361
  %v9363 = vpop.f32.mrf.mxu0
  %9364 = vmatprep.mubr.f32.mxu0 0.0
  %9365 = vmatmul.mubr.f32.gmra.mxu0 %v7954
  %v9366 = vpop.f32.mrf.mxu0
  %v9367 = vadd.f32 0.0, %v9366
  %v9368 = vpop.f32.mrf.mxu0
  %9369 = vmatprep.mubr.f32.mxu0 0.0
  %9370 = vmatmul.mubr.f32.gmra.mxu0 %v7957
  %v9371 = vpop.f32.mrf.mxu0
  %v9372 = vadd.f32 0.0, %v9371
  %v9373 = vpop.f32.mrf.mxu0
  %9374 = vmatprep.mubr.f32.mxu0 0.0
  %9375 = vmatmul.mubr.f32.gmra.mxu0 %v7960
  %v9376 = vpop.f32.mrf.mxu0
  %v9377 = vadd.f32 0.0, %v9376
  %v9378 = vpop.f32.mrf.mxu0
  %9379 = vmatprep.mubr.f32.mxu0 0.0
  %9380 = vmatmul.mubr.f32.gmra.mxu0 %v7963
  %v9381 = vpop.f32.mrf.mxu0
  %v9382 = vadd.f32 0.0, %v9381
  %v9383 = vpop.f32.mrf.mxu0
  %9384 = vmatprep.mubr.f32.mxu0 0.0
  %9385 = vmatmul.mubr.f32.gmra.mxu0 %v7966
  %v9386 = vpop.f32.mrf.mxu0
  %v9387 = vadd.f32 0.0, %v9386
  %v9388 = vpop.f32.mrf.mxu0
  %9389 = vmatprep.mubr.f32.mxu0 0.0
  %9390 = vmatmul.mubr.f32.gmra.mxu0 %v7969
  %v9391 = vpop.f32.mrf.mxu0
  %v9392 = vadd.f32 0.0, %v9391
  %v9393 = vpop.f32.mrf.mxu0
  %9394 = vmatprep.mubr.f32.mxu0 0.0
  %9395 = vmatmul.mubr.f32.gmra.mxu0 %v7972
  %v9396 = vpop.f32.mrf.mxu0
  %v9397 = vadd.f32 0.0, %v9396
  %v9398 = vpop.f32.mrf.mxu0
  %9399 = vmatprep.mubr.f32.mxu0 0.0
  %9400 = vmatmul.mubr.f32.gmra.mxu0 %v7975
  %v9401 = vpop.f32.mrf.mxu0
  %v9402 = vadd.f32 0.0, %v9401
  %v9403 = vpop.f32.mrf.mxu0
  %9404 = vdwg.mxu0
  %v9405 = vadd.f32 %v7652, %v8047
  %v9406 = vadd.f32 %v7653, %v8052
  %v9407 = vadd.f32 %v7654, %v8057
  %v9408 = vadd.f32 %v7655, %v8062
  %v9409 = vadd.f32 %v7656, %v8067
  %v9410 = vadd.f32 %v7657, %v8072
  %v9411 = vadd.f32 %v7658, %v8077
  %v9412 = vadd.f32 %v7659, %v8082
  %v9413 = vadd.f32 %v7660, %v8087
  %v9414 = vadd.f32 %v7661, %v8092
  %v9415 = vadd.f32 %v7662, %v8097
  %v9416 = vadd.f32 %v7663, %v8102
  %v9417 = vadd.f32 %v7664, %v8107
  %v9418 = vadd.f32 %v7665, %v8112
  %v9419 = vadd.f32 %v7666, %v8117
  %v9420 = vadd.f32 %v7667, %v8122
  %v9421 = vadd.f32 %v7668, %v8127
  %v9422 = vadd.f32 %v7669, %v8132
  %v9423 = vadd.f32 %v7670, %v8137
  %v9424 = vadd.f32 %v7671, %v8142
  %v9425 = vadd.f32 %v7672, %v8147
  %v9426 = vadd.f32 %v7673, %v8152
  %v9427 = vadd.f32 %v7674, %v8157
  %v9428 = vadd.f32 %v7675, %v8162
  %v9429 = vadd.f32 %v7676, %v8167
  %v9430 = vadd.f32 %v7677, %v8172
  %v9431 = vadd.f32 %v7678, %v8177
  %v9432 = vadd.f32 %v7679, %v8182
  %v9433 = vadd.f32 %v7680, %v8187
  %v9434 = vadd.f32 %v7681, %v8192
  %v9435 = vadd.f32 %v7682, %v8197
  %v9436 = vadd.f32 %v7683, %v8202
  %v9437 = vadd.f32 %v7684, %v8207
  %v9438 = vadd.f32 %v7685, %v8212
  %v9439 = vadd.f32 %v7686, %v8217
  %v9440 = vadd.f32 %v7687, %v8222
  %v9441 = vadd.f32 %v7688, %v8227
  %v9442 = vadd.f32 %v7689, %v8232
  %v9443 = vadd.f32 %v7690, %v8237
  %v9444 = vadd.f32 %v7691, %v8242
  %v9445 = vadd.f32 %v7692, %v8247
  %v9446 = vadd.f32 %v7693, %v8252
  %v9447 = vadd.f32 %v7694, %v8257
  %v9448 = vadd.f32 %v7695, %v8262
  %v9449 = vadd.f32 %v7696, %v8267
  %v9450 = vadd.f32 %v7697, %v8272
  %v9451 = vadd.f32 %v7698, %v8277
  %v9452 = vadd.f32 %v7699, %v8282
  %v9453 = vadd.f32 %v7700, %v8287
  %v9454 = vadd.f32 %v7701, %v8292
  %v9455 = vadd.f32 %v7702, %v8297
  %v9456 = vadd.f32 %v7703, %v8302
  %v9457 = vadd.f32 %v7704, %v8307
  %v9458 = vadd.f32 %v7705, %v8312
  %v9459 = vadd.f32 %v7706, %v8317
  %v9460 = vadd.f32 %v7707, %v8322
  %v9461 = vadd.f32 %v7708, %v8327
  %v9462 = vadd.f32 %v7709, %v8332
  %v9463 = vadd.f32 %v7710, %v8337
  %v9464 = vadd.f32 %v7711, %v8342
  %v9465 = vadd.f32 %v7712, %v8347
  %v9466 = vadd.f32 %v7713, %v8352
  %v9467 = vadd.f32 %v7714, %v8357
  %v9468 = vadd.f32 %v7715, %v8362
  %v9469 = vadd.f32 %v7716, %v8367
  %v9470 = vadd.f32 %v7717, %v8372
  %v9471 = vadd.f32 %v7718, %v8377
  %v9472 = vadd.f32 %v7719, %v8382
  %v9473 = vadd.f32 %v7720, %v8387
  %v9474 = vadd.f32 %v7721, %v8392
  %v9475 = vadd.f32 %v7722, %v8397
  %v9476 = vadd.f32 %v7723, %v8402
  %v9477 = vadd.f32 %v7724, %v8407
  %v9478 = vadd.f32 %v7725, %v8412
  %v9479 = vadd.f32 %v7726, %v8417
  %v9480 = vadd.f32 %v7727, %v8422
  %v9481 = vadd.f32 %v7728, %v8427
  %v9482 = vadd.f32 %v7729, %v8432
  %v9483 = vadd.f32 %v7730, %v8437
  %v9484 = vadd.f32 %v7731, %v8442
  %v9485 = vadd.f32 %v7732, %v8447
  %v9486 = vadd.f32 %v7733, %v8452
  %v9487 = vadd.f32 %v7734, %v8457
  %v9488 = vadd.f32 %v7735, %v8462
  %v9489 = vadd.f32 %v7736, %v8467
  %v9490 = vadd.f32 %v7737, %v8472
  %v9491 = vadd.f32 %v7738, %v8477
  %v9492 = vadd.f32 %v7739, %v8482
  %v9493 = vadd.f32 %v7740, %v8487
  %v9494 = vadd.f32 %v7741, %v8492
  %v9495 = vadd.f32 %v7742, %v8497
  %v9496 = vadd.f32 %v7743, %v8502
  %v9497 = vadd.f32 %v7744, %v8507
  %v9498 = vadd.f32 %v7745, %v8512
  %v9499 = vadd.f32 %v7746, %v8517
  %v9500 = vadd.f32 %v7747, %v8522
  %v9501 = vadd.f32 %v7748, %v8527
  %v9502 = vadd.f32 %v7749, %v8532
  %v9503 = vadd.f32 %v7750, %v8537
  %v9504 = vadd.f32 %v7751, %v8542
  %v9505 = vadd.f32 %v7752, %v8547
  %v9506 = vadd.f32 %v7753, %v8552
  %v9507 = vadd.f32 %v7754, %v8557
  %v9508 = vadd.f32 %v7755, %v8562
  %v9509 = vadd.f32 %v7756, %v8567
  %v9510 = vadd.f32 %v7757, %v8572
  %v9511 = vadd.f32 %v7758, %v8577
  %v9512 = vadd.f32 %v7759, %v8582
  %v9513 = vadd.f32 %v7760, %v8587
  %v9514 = vadd.f32 %v7761, %v8592
  %v9515 = vadd.f32 %v7762, %v8597
  %v9516 = vadd.f32 %v7763, %v8602
  %v9517 = vadd.f32 %v7764, %v8607
  %v9518 = vadd.f32 %v7765, %v8612
  %v9519 = vadd.f32 %v7766, %v8617
  %v9520 = vadd.f32 %v7767, %v8622
  %v9521 = vadd.f32 %v7768, %v8627
  %v9522 = vadd.f32 %v7769, %v8632
  %v9523 = vadd.f32 %v7770, %v8637
  %v9524 = vadd.f32 %v7771, %v8642
  %v9525 = vadd.f32 %v7772, %v8647
  %v9526 = vadd.f32 %v7773, %v8652
  %v9527 = vadd.f32 %v7774, %v8657
  %v9528 = vadd.f32 %v7775, %v8662
  %v9529 = vadd.f32 %v7776, %v8667
  %v9530 = vadd.f32 %v7777, %v8672
  %v9531 = vadd.f32 %v7778, %v8677
  %v9532 = vadd.f32 %v7779, %v8682
  %v9533 = vadd.f32 %v7780, %v8687
  %v9534 = vadd.f32 %v7781, %v8692
  %v9535 = vadd.f32 %v7782, %v8697
  %v9536 = vadd.f32 %v7783, %v8702
  %v9537 = vadd.f32 %v7784, %v8707
  %v9538 = vadd.f32 %v7785, %v8712
  %v9539 = vadd.f32 %v7786, %v8717
  %v9540 = vadd.f32 %v7787, %v8722
  %v9541 = vadd.f32 %v7788, %v8727
  %v9542 = vadd.f32 %v7789, %v8732
  %v9543 = vadd.f32 %v7790, %v8737
  %v9544 = vadd.f32 %v7791, %v8742
  %v9545 = vadd.f32 %v7792, %v8747
  %v9546 = vadd.f32 %v7793, %v8752
  %v9547 = vadd.f32 %v7794, %v8757
  %v9548 = vadd.f32 %v7795, %v8762
  %v9549 = vadd.f32 %v7796, %v8767
  %v9550 = vadd.f32 %v7797, %v8772
  %v9551 = vadd.f32 %v7798, %v8777
  %v9552 = vadd.f32 %v7799, %v8782
  %v9553 = vadd.f32 %v7800, %v8787
  %v9554 = vadd.f32 %v7801, %v8792
  %v9555 = vadd.f32 %v7802, %v8797
  %v9556 = vadd.f32 %v7803, %v8802
  %v9557 = vadd.f32 %v7804, %v8807
  %v9558 = vadd.f32 %v7805, %v8812
  %v9559 = vadd.f32 %v7806, %v8817
  %v9560 = vadd.f32 %v7807, %v8822
  %v9561 = vadd.f32 %v7808, %v8827
  %v9562 = vadd.f32 %v7809, %v8832
  %v9563 = vadd.f32 %v7810, %v8837
  %v9564 = vadd.f32 %v7811, %v8842
  %v9565 = vadd.f32 %v7812, %v8847
  %v9566 = vadd.f32 %v7813, %v8852
  %v9567 = vadd.f32 %v7814, %v8857
  %v9568 = vadd.f32 %v7815, %v8862
  %v9569 = vadd.f32 %v7816, %v8867
  %v9570 = vadd.f32 %v7817, %v8872
  %v9571 = vadd.f32 %v7818, %v8877
  %v9572 = vadd.f32 %v7819, %v8882
  %v9573 = vadd.f32 %v7820, %v8887
  %v9574 = vadd.f32 %v7821, %v8892
  %v9575 = vadd.f32 %v7822, %v8897
  %v9576 = vadd.f32 %v7823, %v8902
  %v9577 = vadd.f32 %v7824, %v8907
  %v9578 = vadd.f32 %v7825, %v8912
  %v9579 = vadd.f32 %v7826, %v8917
  %v9580 = vadd.f32 %v7827, %v8922
  %v9581 = vadd.f32 %v7828, %v8927
  %v9582 = vadd.f32 %v7829, %v8932
  %v9583 = vadd.f32 %v7830, %v8937
  %v9584 = vadd.f32 %v7831, %v8942
  %v9585 = vadd.f32 %v7832, %v8947
  %v9586 = vadd.f32 %v7833, %v8952
  %v9587 = vadd.f32 %v7834, %v8957
  %v9588 = vadd.f32 %v7835, %v8962
  %v9589 = vadd.f32 %v7836, %v8967
  %v9590 = vadd.f32 %v7837, %v8972
  %v9591 = vadd.f32 %v7838, %v8977
  %v9592 = vadd.f32 %v7839, %v8982
  %v9593 = vadd.f32 %v7840, %v8987
  %v9594 = vadd.f32 %v7841, %v8992
  %v9595 = vadd.f32 %v7842, %v8997
  %v9596 = vadd.f32 %v7843, %v9002
  %v9597 = vadd.f32 %v7844, %v9007
  %v9598 = vadd.f32 %v7845, %v9012
  %v9599 = vadd.f32 %v7846, %v9017
  %v9600 = vadd.f32 %v7847, %v9022
  %v9601 = vadd.f32 %v7848, %v9027
  %v9602 = vadd.f32 %v7849, %v9032
  %v9603 = vadd.f32 %v7850, %v9037
  %v9604 = vadd.f32 %v7851, %v9042
  %v9605 = vadd.f32 %v7852, %v9047
  %v9606 = vadd.f32 %v7853, %v9052
  %v9607 = vadd.f32 %v7854, %v9057
  %v9608 = vadd.f32 %v7855, %v9062
  %v9609 = vadd.f32 %v7856, %v9067
  %v9610 = vadd.f32 %v7857, %v9072
  %v9611 = vadd.f32 %v7858, %v9077
  %v9612 = vadd.f32 %v7859, %v9082
  %v9613 = vadd.f32 %v7860, %v9087
  %v9614 = vadd.f32 %v7861, %v9092
  %v9615 = vadd.f32 %v7862, %v9097
  %v9616 = vadd.f32 %v7863, %v9102
  %v9617 = vadd.f32 %v7864, %v9107
  %v9618 = vadd.f32 %v7865, %v9112
  %v9619 = vadd.f32 %v7866, %v9117
  %v9620 = vadd.f32 %v7867, %v9122
  %v9621 = vadd.f32 %v7868, %v9127
  %v9622 = vadd.f32 %v7869, %v9132
  %v9623 = vadd.f32 %v7870, %v9137
  %v9624 = vadd.f32 %v7871, %v9142
  %v9625 = vadd.f32 %v7872, %v9147
  %v9626 = vadd.f32 %v7873, %v9152
  %v9627 = vadd.f32 %v7874, %v9157
  %v9628 = vadd.f32 %v7875, %v9162
  %v9629 = vadd.f32 %v7876, %v9167
  %v9630 = vadd.f32 %v7877, %v9172
  %v9631 = vadd.f32 %v7878, %v9177
  %v9632 = vadd.f32 %v7879, %v9182
  %v9633 = vadd.f32 %v7880, %v9187
  %v9634 = vadd.f32 %v7881, %v9192
  %v9635 = vadd.f32 %v7882, %v9197
  %v9636 = vadd.f32 %v7883, %v9202
  %v9637 = vadd.f32 %v7884, %v9207
  %v9638 = vadd.f32 %v7885, %v9212
  %v9639 = vadd.f32 %v7886, %v9217
  %v9640 = vadd.f32 %v7887, %v9222
  %v9641 = vadd.f32 %v7888, %v9227
  %v9642 = vadd.f32 %v7889, %v9232
  %v9643 = vadd.f32 %v7890, %v9237
  %v9644 = vadd.f32 %v7891, %v9242
  %v9645 = vadd.f32 %v7892, %v9247
  %v9646 = vadd.f32 %v7893, %v9252
  %v9647 = vadd.f32 %v7894, %v9257
  %v9648 = vadd.f32 %v7895, %v9262
  %v9649 = vadd.f32 %v7896, %v9267
  %v9650 = vadd.f32 %v7897, %v9272
  %v9651 = vadd.f32 %v7898, %v9277
  %v9652 = vadd.f32 %v7899, %v9282
  %v9653 = vadd.f32 %v7900, %v9287
  %v9654 = vadd.f32 %v7901, %v9292
  %v9655 = vadd.f32 %v7902, %v9297
  %v9656 = vadd.f32 %v7903, %v9302
  %v9657 = vadd.f32 %v7904, %v9307
  %v9658 = vadd.f32 %v7905, %v9312
  %v9659 = vadd.f32 %v7906, %v9317
  %v9660 = vadd.f32 %v7907, %v9322
  %v9661 = vadd.f32 %v7908, %v9327
  %v9662 = vadd.f32 %v7909, %v9332
  %v9663 = vadd.f32 %v7910, %v9337
  %v9664 = vadd.f32 %v7911, %v9342
  %v9665 = vadd.f32 %v7912, %v9347
  %v9666 = vadd.f32 %v7913, %v9352
  %v9667 = vadd.f32 %v7914, %v9357
  %v9668 = vadd.f32 %v7915, %v9362
  %v9669 = vadd.f32 %v7916, %v9367
  %v9670 = vadd.f32 %v7917, %v9372
  %v9671 = vadd.f32 %v7918, %v9377
  %v9672 = vadd.f32 %v7919, %v9382
  %v9673 = vadd.f32 %v7920, %v9387
  %v9674 = vadd.f32 %v7921, %v9392
  %v9675 = vadd.f32 %v7922, %v9397
  %v9676 = vadd.f32 %v7923, %v9402
  %s9677 = scalar_lea.vmem %s1, 128
  %v9678 = vld [vmem:[%s9677] sm:$0xff]
  %v9679 = vld [vmem:[%s9677 + $0x8] sm:$0xff]
  %v9680 = vld [vmem:[%s9677 + $0x10] sm:$0xff]
  %v9681 = vld [vmem:[%s9677 + $0x18] sm:$0x3f]
  %v9683 = vsel %vm2449, %v2424, 0
  %v9686 = vsel %vm2449, %v2425, 0
  %v9689 = vsel %vm2449, %v2426, 0
  %v9692 = vsel %vm2449, %v2427, 0
  %v9695 = vsel %vm2449, %v2428, 0
  %v9698 = vsel %vm2449, %v2429, 0
  %v9701 = vsel %vm2449, %v2430, 0
  %v9704 = vsel %vm2449, %v2431, 0
  %v9707 = vsel %vm2449, %v2432, 0
  %v9710 = vsel %vm2449, %v2433, 0
  %v9713 = vsel %vm2449, %v2434, 0
  %v9716 = vsel %vm2449, %v2435, 0
  %v9719 = vsel %vm2449, %v2436, 0
  %v9722 = vsel %vm2449, %v2437, 0
  %v9725 = vsel %vm2449, %v2438, 0
  %v9728 = vsel %vm2449, %v2439, 0
  %v9731 = vsel %vm3266, %v9681, 0
  %9733 = vmatprep.subr.mxu0 0.0
  %9734 = vmatpush1.msra.mxu0 0.0
  %9735 = vmatprep.subr.mxu0 0.0
  %9736 = vmatpush1.msra.mxu0 0.0
  %9737 = vmatprep.subr.mxu0 0.0
  %9738 = vmatpush1.msra.mxu0 0.0
  %9739 = vmatprep.subr.mxu0 0.0
  %9740 = vmatpush1.msra.mxu0 0.0
  %9741 = vmatprep.subr.mxu0 0.0
  %9742 = vmatpush1.msra.mxu0 0.0
  %9743 = vmatprep.subr.mxu0 0.0
  %9744 = vmatpush1.msra.mxu0 0.0
  %9745 = vmatprep.subr.mxu0 0.0
  %9746 = vmatpush1.msra.mxu0 0.0
  %9747 = vmatprep.subr.mxu0 0.0
  %9748 = vmatpush1.msra.mxu0 0.0
  %9749 = vmatprep.subr.mxu0 0.0
  %9750 = vmatpush1.msra.mxu0 0.0
  %9751 = vmatprep.subr.mxu0 0.0
  %9752 = vmatpush1.msra.mxu0 0.0
  %9753 = vmatprep.subr.mxu0 0.0
  %9754 = vmatpush1.msra.mxu0 0.0
  %9755 = vmatprep.subr.mxu0 0.0
  %9756 = vmatpush1.msra.mxu0 0.0
  %9757 = vmatprep.subr.mxu0 0.0
  %9758 = vmatpush1.msra.mxu0 %v9731
  %9759 = vmatprep.subr.mxu0 0.0
  %9760 = vmatpush1.msra.mxu0 %v9680
  %9761 = vmatprep.subr.mxu0 0.0
  %9762 = vmatpush1.msra.mxu0 %v9679
  %9763 = vmatprep.subr.mxu0 0.0
  %9764 = vmatpush1.msra.mxu0 %v9678
  %9765 = vmatprep.subr.mxu0 0.0
  %9766 = vmatpush2.msra.mxu0 0.0
  %9767 = vmatprep.subr.mxu0 0.0
  %9768 = vmatpush2.msra.mxu0 0.0
  %9769 = vmatprep.subr.mxu0 0.0
  %9770 = vmatpush2.msra.mxu0 0.0
  %9771 = vmatprep.subr.mxu0 0.0
  %9772 = vmatpush2.msra.mxu0 0.0
  %9773 = vmatprep.subr.mxu0 0.0
  %9774 = vmatpush2.msra.mxu0 0.0
  %9775 = vmatprep.subr.mxu0 0.0
  %9776 = vmatpush2.msra.mxu0 0.0
  %9777 = vmatprep.subr.mxu0 0.0
  %9778 = vmatpush2.msra.mxu0 0.0
  %9779 = vmatprep.subr.mxu0 0.0
  %9780 = vmatpush2.msra.mxu0 0.0
  %9781 = vmatprep.subr.mxu0 0.0
  %9782 = vmatpush2.msra.mxu0 0.0
  %9783 = vmatprep.subr.mxu0 0.0
  %9784 = vmatpush2.msra.mxu0 0.0
  %9785 = vmatprep.subr.mxu0 0.0
  %9786 = vmatpush2.msra.mxu0 0.0
  %9787 = vmatprep.subr.mxu0 0.0
  %9788 = vmatpush2.msra.mxu0 0.0
  %9789 = vmatprep.subr.mxu0 0.0
  %9790 = vmatpush2.msra.mxu0 0.0
  %9791 = vmatprep.subr.mxu0 0.0
  %9792 = vmatpush2.msra.mxu0 0.0
  %9793 = vmatprep.subr.mxu0 0.0
  %9794 = vmatpush2.msra.mxu0 0.0
  %9795 = vmatprep.subr.mxu0 0.0
  %9796 = vmatpush2.msra.mxu0 0.0
  %9797 = vmatprep.mubr.f32.mxu0 0.0
  %9798 = vmatmul.mubr.f32.gmra.mxu0 %v2595
  %v9799 = vpop.f32.mrf.mxu0
  %v9800 = vadd.f32 0.0, %v9799
  %v9801 = vpop.f32.mrf.mxu0
  %9802 = vmatprep.mubr.f32.mxu0 0.0
  %9803 = vmatmul.mubr.f32.gmra.mxu0 %v2598
  %v9804 = vpop.f32.mrf.mxu0
  %v9805 = vadd.f32 0.0, %v9804
  %v9806 = vpop.f32.mrf.mxu0
  %9807 = vmatprep.mubr.f32.mxu0 0.0
  %9808 = vmatmul.mubr.f32.gmra.mxu0 %v2601
  %v9809 = vpop.f32.mrf.mxu0
  %v9810 = vadd.f32 0.0, %v9809
  %v9811 = vpop.f32.mrf.mxu0
  %9812 = vmatprep.mubr.f32.mxu0 0.0
  %9813 = vmatmul.mubr.f32.gmra.mxu0 %v2604
  %v9814 = vpop.f32.mrf.mxu0
  %v9815 = vadd.f32 0.0, %v9814
  %v9816 = vpop.f32.mrf.mxu0
  %9817 = vmatprep.mubr.f32.mxu0 0.0
  %9818 = vmatmul.mubr.f32.gmra.mxu0 %v2607
  %v9819 = vpop.f32.mrf.mxu0
  %v9820 = vadd.f32 0.0, %v9819
  %v9821 = vpop.f32.mrf.mxu0
  %9822 = vmatprep.mubr.f32.mxu0 0.0
  %9823 = vmatmul.mubr.f32.gmra.mxu0 %v2610
  %v9824 = vpop.f32.mrf.mxu0
  %v9825 = vadd.f32 0.0, %v9824
  %v9826 = vpop.f32.mrf.mxu0
  %9827 = vmatprep.mubr.f32.mxu0 0.0
  %9828 = vmatmul.mubr.f32.gmra.mxu0 %v2613
  %v9829 = vpop.f32.mrf.mxu0
  %v9830 = vadd.f32 0.0, %v9829
  %v9831 = vpop.f32.mrf.mxu0
  %9832 = vmatprep.mubr.f32.mxu0 0.0
  %9833 = vmatmul.mubr.f32.gmra.mxu0 %v2616
  %v9834 = vpop.f32.mrf.mxu0
  %v9835 = vadd.f32 0.0, %v9834
  %v9836 = vpop.f32.mrf.mxu0
  %9837 = vmatprep.mubr.f32.mxu0 0.0
  %9838 = vmatmul.mubr.f32.gmra.mxu0 %v2619
  %v9839 = vpop.f32.mrf.mxu0
  %v9840 = vadd.f32 0.0, %v9839
  %v9841 = vpop.f32.mrf.mxu0
  %9842 = vmatprep.mubr.f32.mxu0 0.0
  %9843 = vmatmul.mubr.f32.gmra.mxu0 %v2622
  %v9844 = vpop.f32.mrf.mxu0
  %v9845 = vadd.f32 0.0, %v9844
  %v9846 = vpop.f32.mrf.mxu0
  %9847 = vmatprep.mubr.f32.mxu0 0.0
  %9848 = vmatmul.mubr.f32.gmra.mxu0 %v2625
  %v9849 = vpop.f32.mrf.mxu0
  %v9850 = vadd.f32 0.0, %v9849
  %v9851 = vpop.f32.mrf.mxu0
  %9852 = vmatprep.mubr.f32.mxu0 0.0
  %9853 = vmatmul.mubr.f32.gmra.mxu0 %v2628
  %v9854 = vpop.f32.mrf.mxu0
  %v9855 = vadd.f32 0.0, %v9854
  %v9856 = vpop.f32.mrf.mxu0
  %9857 = vmatprep.mubr.f32.mxu0 0.0
  %9858 = vmatmul.mubr.f32.gmra.mxu0 %v2631
  %v9859 = vpop.f32.mrf.mxu0
  %v9860 = vadd.f32 0.0, %v9859
  %v9861 = vpop.f32.mrf.mxu0
  %9862 = vmatprep.mubr.f32.mxu0 0.0
  %9863 = vmatmul.mubr.f32.gmra.mxu0 %v2634
  %v9864 = vpop.f32.mrf.mxu0
  %v9865 = vadd.f32 0.0, %v9864
  %v9866 = vpop.f32.mrf.mxu0
  %9867 = vmatprep.mubr.f32.mxu0 0.0
  %9868 = vmatmul.mubr.f32.gmra.mxu0 %v2637
  %v9869 = vpop.f32.mrf.mxu0
  %v9870 = vadd.f32 0.0, %v9869
  %v9871 = vpop.f32.mrf.mxu0
  %9872 = vmatprep.mubr.f32.mxu0 0.0
  %9873 = vmatmul.mubr.f32.gmra.mxu0 %v2640
  %v9874 = vpop.f32.mrf.mxu0
  %v9875 = vadd.f32 0.0, %v9874
  %v9876 = vpop.f32.mrf.mxu0
  %9877 = vmatprep.mubr.f32.mxu0 0.0
  %9878 = vmatmul.mubr.f32.gmra.mxu0 %v2643
  %v9879 = vpop.f32.mrf.mxu0
  %v9880 = vadd.f32 0.0, %v9879
  %v9881 = vpop.f32.mrf.mxu0
  %9882 = vmatprep.mubr.f32.mxu0 0.0
  %9883 = vmatmul.mubr.f32.gmra.mxu0 %v2646
  %v9884 = vpop.f32.mrf.mxu0
  %v9885 = vadd.f32 0.0, %v9884
  %v9886 = vpop.f32.mrf.mxu0
  %9887 = vmatprep.mubr.f32.mxu0 0.0
  %9888 = vmatmul.mubr.f32.gmra.mxu0 %v2649
  %v9889 = vpop.f32.mrf.mxu0
  %v9890 = vadd.f32 0.0, %v9889
  %v9891 = vpop.f32.mrf.mxu0
  %9892 = vmatprep.mubr.f32.mxu0 0.0
  %9893 = vmatmul.mubr.f32.gmra.mxu0 %v2652
  %v9894 = vpop.f32.mrf.mxu0
  %v9895 = vadd.f32 0.0, %v9894
  %v9896 = vpop.f32.mrf.mxu0
  %9897 = vmatprep.mubr.f32.mxu0 0.0
  %9898 = vmatmul.mubr.f32.gmra.mxu0 %v2655
  %v9899 = vpop.f32.mrf.mxu0
  %v9900 = vadd.f32 0.0, %v9899
  %v9901 = vpop.f32.mrf.mxu0
  %9902 = vmatprep.mubr.f32.mxu0 0.0
  %9903 = vmatmul.mubr.f32.gmra.mxu0 %v2658
  %v9904 = vpop.f32.mrf.mxu0
  %v9905 = vadd.f32 0.0, %v9904
  %v9906 = vpop.f32.mrf.mxu0
  %9907 = vmatprep.mubr.f32.mxu0 0.0
  %9908 = vmatmul.mubr.f32.gmra.mxu0 %v2661
  %v9909 = vpop.f32.mrf.mxu0
  %v9910 = vadd.f32 0.0, %v9909
  %v9911 = vpop.f32.mrf.mxu0
  %9912 = vmatprep.mubr.f32.mxu0 0.0
  %9913 = vmatmul.mubr.f32.gmra.mxu0 %v2664
  %v9914 = vpop.f32.mrf.mxu0
  %v9915 = vadd.f32 0.0, %v9914
  %v9916 = vpop.f32.mrf.mxu0
  %9917 = vmatprep.mubr.f32.mxu0 0.0
  %9918 = vmatmul.mubr.f32.gmra.mxu0 %v2667
  %v9919 = vpop.f32.mrf.mxu0
  %v9920 = vadd.f32 0.0, %v9919
  %v9921 = vpop.f32.mrf.mxu0
  %9922 = vmatprep.mubr.f32.mxu0 0.0
  %9923 = vmatmul.mubr.f32.gmra.mxu0 %v2670
  %v9924 = vpop.f32.mrf.mxu0
  %v9925 = vadd.f32 0.0, %v9924
  %v9926 = vpop.f32.mrf.mxu0
  %9927 = vmatprep.mubr.f32.mxu0 0.0
  %9928 = vmatmul.mubr.f32.gmra.mxu0 %v2673
  %v9929 = vpop.f32.mrf.mxu0
  %v9930 = vadd.f32 0.0, %v9929
  %v9931 = vpop.f32.mrf.mxu0
  %9932 = vmatprep.mubr.f32.mxu0 0.0
  %9933 = vmatmul.mubr.f32.gmra.mxu0 %v2676
  %v9934 = vpop.f32.mrf.mxu0
  %v9935 = vadd.f32 0.0, %v9934
  %v9936 = vpop.f32.mrf.mxu0
  %9937 = vmatprep.mubr.f32.mxu0 0.0
  %9938 = vmatmul.mubr.f32.gmra.mxu0 %v2679
  %v9939 = vpop.f32.mrf.mxu0
  %v9940 = vadd.f32 0.0, %v9939
  %v9941 = vpop.f32.mrf.mxu0
  %9942 = vmatprep.mubr.f32.mxu0 0.0
  %9943 = vmatmul.mubr.f32.gmra.mxu0 %v2682
  %v9944 = vpop.f32.mrf.mxu0
  %v9945 = vadd.f32 0.0, %v9944
  %v9946 = vpop.f32.mrf.mxu0
  %9947 = vmatprep.mubr.f32.mxu0 0.0
  %9948 = vmatmul.mubr.f32.gmra.mxu0 %v2685
  %v9949 = vpop.f32.mrf.mxu0
  %v9950 = vadd.f32 0.0, %v9949
  %v9951 = vpop.f32.mrf.mxu0
  %9952 = vmatprep.mubr.f32.mxu0 0.0
  %9953 = vmatmul.mubr.f32.gmra.mxu0 %v2688
  %v9954 = vpop.f32.mrf.mxu0
  %v9955 = vadd.f32 0.0, %v9954
  %v9956 = vpop.f32.mrf.mxu0
  %9957 = vmatprep.mubr.f32.mxu0 0.0
  %9958 = vmatmul.mubr.f32.gmra.mxu0 %v2691
  %v9959 = vpop.f32.mrf.mxu0
  %v9960 = vadd.f32 0.0, %v9959
  %v9961 = vpop.f32.mrf.mxu0
  %9962 = vmatprep.mubr.f32.mxu0 0.0
  %9963 = vmatmul.mubr.f32.gmra.mxu0 %v2694
  %v9964 = vpop.f32.mrf.mxu0
  %v9965 = vadd.f32 0.0, %v9964
  %v9966 = vpop.f32.mrf.mxu0
  %9967 = vmatprep.mubr.f32.mxu0 0.0
  %9968 = vmatmul.mubr.f32.gmra.mxu0 %v2697
  %v9969 = vpop.f32.mrf.mxu0
  %v9970 = vadd.f32 0.0, %v9969
  %v9971 = vpop.f32.mrf.mxu0
  %9972 = vmatprep.mubr.f32.mxu0 0.0
  %9973 = vmatmul.mubr.f32.gmra.mxu0 %v2700
  %v9974 = vpop.f32.mrf.mxu0
  %v9975 = vadd.f32 0.0, %v9974
  %v9976 = vpop.f32.mrf.mxu0
  %9977 = vmatprep.mubr.f32.mxu0 0.0
  %9978 = vmatmul.mubr.f32.gmra.mxu0 %v2703
  %v9979 = vpop.f32.mrf.mxu0
  %v9980 = vadd.f32 0.0, %v9979
  %v9981 = vpop.f32.mrf.mxu0
  %9982 = vmatprep.mubr.f32.mxu0 0.0
  %9983 = vmatmul.mubr.f32.gmra.mxu0 %v2706
  %v9984 = vpop.f32.mrf.mxu0
  %v9985 = vadd.f32 0.0, %v9984
  %v9986 = vpop.f32.mrf.mxu0
  %9987 = vmatprep.mubr.f32.mxu0 0.0
  %9988 = vmatmul.mubr.f32.gmra.mxu0 %v2709
  %v9989 = vpop.f32.mrf.mxu0
  %v9990 = vadd.f32 0.0, %v9989
  %v9991 = vpop.f32.mrf.mxu0
  %9992 = vmatprep.mubr.f32.mxu0 0.0
  %9993 = vmatmul.mubr.f32.gmra.mxu0 %v2712
  %v9994 = vpop.f32.mrf.mxu0
  %v9995 = vadd.f32 0.0, %v9994
  %v9996 = vpop.f32.mrf.mxu0
  %9997 = vmatprep.mubr.f32.mxu0 0.0
  %9998 = vmatmul.mubr.f32.gmra.mxu0 %v2715
  %v9999 = vpop.f32.mrf.mxu0
  %v10000 = vadd.f32 0.0, %v9999
  %v10001 = vpop.f32.mrf.mxu0
  %10002 = vmatprep.mubr.f32.mxu0 0.0
  %10003 = vmatmul.mubr.f32.gmra.mxu0 %v2718
  %v10004 = vpop.f32.mrf.mxu0
  %v10005 = vadd.f32 0.0, %v10004
  %v10006 = vpop.f32.mrf.mxu0
  %10007 = vmatprep.mubr.f32.mxu0 0.0
  %10008 = vmatmul.mubr.f32.gmra.mxu0 %v2721
  %v10009 = vpop.f32.mrf.mxu0
  %v10010 = vadd.f32 0.0, %v10009
  %v10011 = vpop.f32.mrf.mxu0
  %10012 = vmatprep.mubr.f32.mxu0 0.0
  %10013 = vmatmul.mubr.f32.gmra.mxu0 %v2724
  %v10014 = vpop.f32.mrf.mxu0
  %v10015 = vadd.f32 0.0, %v10014
  %v10016 = vpop.f32.mrf.mxu0
  %10017 = vmatprep.mubr.f32.mxu0 0.0
  %10018 = vmatmul.mubr.f32.gmra.mxu0 %v2727
  %v10019 = vpop.f32.mrf.mxu0
  %v10020 = vadd.f32 0.0, %v10019
  %v10021 = vpop.f32.mrf.mxu0
  %10022 = vmatprep.mubr.f32.mxu0 0.0
  %10023 = vmatmul.mubr.f32.gmra.mxu0 %v2730
  %v10024 = vpop.f32.mrf.mxu0
  %v10025 = vadd.f32 0.0, %v10024
  %v10026 = vpop.f32.mrf.mxu0
  %10027 = vmatprep.mubr.f32.mxu0 0.0
  %10028 = vmatmul.mubr.f32.gmra.mxu0 %v2733
  %v10029 = vpop.f32.mrf.mxu0
  %v10030 = vadd.f32 0.0, %v10029
  %v10031 = vpop.f32.mrf.mxu0
  %10032 = vmatprep.mubr.f32.mxu0 0.0
  %10033 = vmatmul.mubr.f32.gmra.mxu0 %v2736
  %v10034 = vpop.f32.mrf.mxu0
  %v10035 = vadd.f32 0.0, %v10034
  %v10036 = vpop.f32.mrf.mxu0
  %10037 = vmatprep.mubr.f32.mxu0 0.0
  %10038 = vmatmul.mubr.f32.gmra.mxu0 %v2739
  %v10039 = vpop.f32.mrf.mxu0
  %v10040 = vadd.f32 0.0, %v10039
  %v10041 = vpop.f32.mrf.mxu0
  %10042 = vmatprep.mubr.f32.mxu0 0.0
  %10043 = vmatmul.mubr.f32.gmra.mxu0 %v2742
  %v10044 = vpop.f32.mrf.mxu0
  %v10045 = vadd.f32 0.0, %v10044
  %v10046 = vpop.f32.mrf.mxu0
  %10047 = vmatprep.mubr.f32.mxu0 0.0
  %10048 = vmatmul.mubr.f32.gmra.mxu0 %v2745
  %v10049 = vpop.f32.mrf.mxu0
  %v10050 = vadd.f32 0.0, %v10049
  %v10051 = vpop.f32.mrf.mxu0
  %10052 = vmatprep.mubr.f32.mxu0 0.0
  %10053 = vmatmul.mubr.f32.gmra.mxu0 %v2748
  %v10054 = vpop.f32.mrf.mxu0
  %v10055 = vadd.f32 0.0, %v10054
  %v10056 = vpop.f32.mrf.mxu0
  %10057 = vmatprep.mubr.f32.mxu0 0.0
  %10058 = vmatmul.mubr.f32.gmra.mxu0 %v2751
  %v10059 = vpop.f32.mrf.mxu0
  %v10060 = vadd.f32 0.0, %v10059
  %v10061 = vpop.f32.mrf.mxu0
  %10062 = vmatprep.mubr.f32.mxu0 0.0
  %10063 = vmatmul.mubr.f32.gmra.mxu0 %v2754
  %v10064 = vpop.f32.mrf.mxu0
  %v10065 = vadd.f32 0.0, %v10064
  %v10066 = vpop.f32.mrf.mxu0
  %10067 = vmatprep.mubr.f32.mxu0 0.0
  %10068 = vmatmul.mubr.f32.gmra.mxu0 %v2757
  %v10069 = vpop.f32.mrf.mxu0
  %v10070 = vadd.f32 0.0, %v10069
  %v10071 = vpop.f32.mrf.mxu0
  %10072 = vmatprep.mubr.f32.mxu0 0.0
  %10073 = vmatmul.mubr.f32.gmra.mxu0 %v2760
  %v10074 = vpop.f32.mrf.mxu0
  %v10075 = vadd.f32 0.0, %v10074
  %v10076 = vpop.f32.mrf.mxu0
  %10077 = vmatprep.mubr.f32.mxu0 0.0
  %10078 = vmatmul.mubr.f32.gmra.mxu0 %v2763
  %v10079 = vpop.f32.mrf.mxu0
  %v10080 = vadd.f32 0.0, %v10079
  %v10081 = vpop.f32.mrf.mxu0
  %10082 = vmatprep.mubr.f32.mxu0 0.0
  %10083 = vmatmul.mubr.f32.gmra.mxu0 %v2766
  %v10084 = vpop.f32.mrf.mxu0
  %v10085 = vadd.f32 0.0, %v10084
  %v10086 = vpop.f32.mrf.mxu0
  %10087 = vmatprep.mubr.f32.mxu0 0.0
  %10088 = vmatmul.mubr.f32.gmra.mxu0 %v2769
  %v10089 = vpop.f32.mrf.mxu0
  %v10090 = vadd.f32 0.0, %v10089
  %v10091 = vpop.f32.mrf.mxu0
  %10092 = vmatprep.mubr.f32.mxu0 0.0
  %10093 = vmatmul.mubr.f32.gmra.mxu0 %v2772
  %v10094 = vpop.f32.mrf.mxu0
  %v10095 = vadd.f32 0.0, %v10094
  %v10096 = vpop.f32.mrf.mxu0
  %10097 = vmatprep.mubr.f32.mxu0 0.0
  %10098 = vmatmul.mubr.f32.gmra.mxu0 %v2775
  %v10099 = vpop.f32.mrf.mxu0
  %v10100 = vadd.f32 0.0, %v10099
  %v10101 = vpop.f32.mrf.mxu0
  %10102 = vmatprep.mubr.f32.mxu0 0.0
  %10103 = vmatmul.mubr.f32.gmra.mxu0 %v2778
  %v10104 = vpop.f32.mrf.mxu0
  %v10105 = vadd.f32 0.0, %v10104
  %v10106 = vpop.f32.mrf.mxu0
  %10107 = vmatprep.mubr.f32.mxu0 0.0
  %10108 = vmatmul.mubr.f32.gmra.mxu0 %v2781
  %v10109 = vpop.f32.mrf.mxu0
  %v10110 = vadd.f32 0.0, %v10109
  %v10111 = vpop.f32.mrf.mxu0
  %10112 = vmatprep.mubr.f32.mxu0 0.0
  %10113 = vmatmul.mubr.f32.gmra.mxu0 %v2784
  %v10114 = vpop.f32.mrf.mxu0
  %v10115 = vadd.f32 0.0, %v10114
  %v10116 = vpop.f32.mrf.mxu0
  %10117 = vmatprep.mubr.f32.mxu0 0.0
  %10118 = vmatmul.mubr.f32.gmra.mxu0 %v2787
  %v10119 = vpop.f32.mrf.mxu0
  %v10120 = vadd.f32 0.0, %v10119
  %v10121 = vpop.f32.mrf.mxu0
  %10122 = vmatprep.mubr.f32.mxu0 0.0
  %10123 = vmatmul.mubr.f32.gmra.mxu0 %v2790
  %v10124 = vpop.f32.mrf.mxu0
  %v10125 = vadd.f32 0.0, %v10124
  %v10126 = vpop.f32.mrf.mxu0
  %10127 = vmatprep.mubr.f32.mxu0 0.0
  %10128 = vmatmul.mubr.f32.gmra.mxu0 %v2793
  %v10129 = vpop.f32.mrf.mxu0
  %v10130 = vadd.f32 0.0, %v10129
  %v10131 = vpop.f32.mrf.mxu0
  %10132 = vmatprep.mubr.f32.mxu0 0.0
  %10133 = vmatmul.mubr.f32.gmra.mxu0 %v2796
  %v10134 = vpop.f32.mrf.mxu0
  %v10135 = vadd.f32 0.0, %v10134
  %v10136 = vpop.f32.mrf.mxu0
  %10137 = vmatprep.mubr.f32.mxu0 0.0
  %10138 = vmatmul.mubr.f32.gmra.mxu0 %v2799
  %v10139 = vpop.f32.mrf.mxu0
  %v10140 = vadd.f32 0.0, %v10139
  %v10141 = vpop.f32.mrf.mxu0
  %10142 = vmatprep.mubr.f32.mxu0 0.0
  %10143 = vmatmul.mubr.f32.gmra.mxu0 %v2802
  %v10144 = vpop.f32.mrf.mxu0
  %v10145 = vadd.f32 0.0, %v10144
  %v10146 = vpop.f32.mrf.mxu0
  %10147 = vmatprep.mubr.f32.mxu0 0.0
  %10148 = vmatmul.mubr.f32.gmra.mxu0 %v2805
  %v10149 = vpop.f32.mrf.mxu0
  %v10150 = vadd.f32 0.0, %v10149
  %v10151 = vpop.f32.mrf.mxu0
  %10152 = vmatprep.mubr.f32.mxu0 0.0
  %10153 = vmatmul.mubr.f32.gmra.mxu0 %v2808
  %v10154 = vpop.f32.mrf.mxu0
  %v10155 = vadd.f32 0.0, %v10154
  %v10156 = vpop.f32.mrf.mxu0
  %10157 = vmatprep.mubr.f32.mxu0 0.0
  %10158 = vmatmul.mubr.f32.gmra.mxu0 %v2811
  %v10159 = vpop.f32.mrf.mxu0
  %v10160 = vadd.f32 0.0, %v10159
  %v10161 = vpop.f32.mrf.mxu0
  %10162 = vmatprep.mubr.f32.mxu0 0.0
  %10163 = vmatmul.mubr.f32.gmra.mxu0 %v2814
  %v10164 = vpop.f32.mrf.mxu0
  %v10165 = vadd.f32 0.0, %v10164
  %v10166 = vpop.f32.mrf.mxu0
  %10167 = vmatprep.mubr.f32.mxu0 0.0
  %10168 = vmatmul.mubr.f32.gmra.mxu0 %v2817
  %v10169 = vpop.f32.mrf.mxu0
  %v10170 = vadd.f32 0.0, %v10169
  %v10171 = vpop.f32.mrf.mxu0
  %10172 = vmatprep.mubr.f32.mxu0 0.0
  %10173 = vmatmul.mubr.f32.gmra.mxu0 %v2820
  %v10174 = vpop.f32.mrf.mxu0
  %v10175 = vadd.f32 0.0, %v10174
  %v10176 = vpop.f32.mrf.mxu0
  %10177 = vmatprep.mubr.f32.mxu0 0.0
  %10178 = vmatmul.mubr.f32.gmra.mxu0 %v2823
  %v10179 = vpop.f32.mrf.mxu0
  %v10180 = vadd.f32 0.0, %v10179
  %v10181 = vpop.f32.mrf.mxu0
  %10182 = vmatprep.mubr.f32.mxu0 0.0
  %10183 = vmatmul.mubr.f32.gmra.mxu0 %v2826
  %v10184 = vpop.f32.mrf.mxu0
  %v10185 = vadd.f32 0.0, %v10184
  %v10186 = vpop.f32.mrf.mxu0
  %10187 = vmatprep.mubr.f32.mxu0 0.0
  %10188 = vmatmul.mubr.f32.gmra.mxu0 %v2829
  %v10189 = vpop.f32.mrf.mxu0
  %v10190 = vadd.f32 0.0, %v10189
  %v10191 = vpop.f32.mrf.mxu0
  %10192 = vmatprep.mubr.f32.mxu0 0.0
  %10193 = vmatmul.mubr.f32.gmra.mxu0 %v2832
  %v10194 = vpop.f32.mrf.mxu0
  %v10195 = vadd.f32 0.0, %v10194
  %v10196 = vpop.f32.mrf.mxu0
  %10197 = vmatprep.mubr.f32.mxu0 0.0
  %10198 = vmatmul.mubr.f32.gmra.mxu0 %v2835
  %v10199 = vpop.f32.mrf.mxu0
  %v10200 = vadd.f32 0.0, %v10199
  %v10201 = vpop.f32.mrf.mxu0
  %10202 = vmatprep.mubr.f32.mxu0 0.0
  %10203 = vmatmul.mubr.f32.gmra.mxu0 %v2838
  %v10204 = vpop.f32.mrf.mxu0
  %v10205 = vadd.f32 0.0, %v10204
  %v10206 = vpop.f32.mrf.mxu0
  %10207 = vmatprep.mubr.f32.mxu0 0.0
  %10208 = vmatmul.mubr.f32.gmra.mxu0 %v2841
  %v10209 = vpop.f32.mrf.mxu0
  %v10210 = vadd.f32 0.0, %v10209
  %v10211 = vpop.f32.mrf.mxu0
  %10212 = vmatprep.mubr.f32.mxu0 0.0
  %10213 = vmatmul.mubr.f32.gmra.mxu0 %v2844
  %v10214 = vpop.f32.mrf.mxu0
  %v10215 = vadd.f32 0.0, %v10214
  %v10216 = vpop.f32.mrf.mxu0
  %10217 = vmatprep.mubr.f32.mxu0 0.0
  %10218 = vmatmul.mubr.f32.gmra.mxu0 %v2847
  %v10219 = vpop.f32.mrf.mxu0
  %v10220 = vadd.f32 0.0, %v10219
  %v10221 = vpop.f32.mrf.mxu0
  %10222 = vmatprep.mubr.f32.mxu0 0.0
  %10223 = vmatmul.mubr.f32.gmra.mxu0 %v2850
  %v10224 = vpop.f32.mrf.mxu0
  %v10225 = vadd.f32 0.0, %v10224
  %v10226 = vpop.f32.mrf.mxu0
  %10227 = vmatprep.mubr.f32.mxu0 0.0
  %10228 = vmatmul.mubr.f32.gmra.mxu0 %v2853
  %v10229 = vpop.f32.mrf.mxu0
  %v10230 = vadd.f32 0.0, %v10229
  %v10231 = vpop.f32.mrf.mxu0
  %10232 = vmatprep.mubr.f32.mxu0 0.0
  %10233 = vmatmul.mubr.f32.gmra.mxu0 %v2856
  %v10234 = vpop.f32.mrf.mxu0
  %v10235 = vadd.f32 0.0, %v10234
  %v10236 = vpop.f32.mrf.mxu0
  %10237 = vmatprep.mubr.f32.mxu0 0.0
  %10238 = vmatmul.mubr.f32.gmra.mxu0 %v2859
  %v10239 = vpop.f32.mrf.mxu0
  %v10240 = vadd.f32 0.0, %v10239
  %v10241 = vpop.f32.mrf.mxu0
  %10242 = vmatprep.mubr.f32.mxu0 0.0
  %10243 = vmatmul.mubr.f32.gmra.mxu0 %v2862
  %v10244 = vpop.f32.mrf.mxu0
  %v10245 = vadd.f32 0.0, %v10244
  %v10246 = vpop.f32.mrf.mxu0
  %10247 = vmatprep.mubr.f32.mxu0 0.0
  %10248 = vmatmul.mubr.f32.gmra.mxu0 %v2865
  %v10249 = vpop.f32.mrf.mxu0
  %v10250 = vadd.f32 0.0, %v10249
  %v10251 = vpop.f32.mrf.mxu0
  %10252 = vmatprep.mubr.f32.mxu0 0.0
  %10253 = vmatmul.mubr.f32.gmra.mxu0 %v2868
  %v10254 = vpop.f32.mrf.mxu0
  %v10255 = vadd.f32 0.0, %v10254
  %v10256 = vpop.f32.mrf.mxu0
  %10257 = vmatprep.mubr.f32.mxu0 0.0
  %10258 = vmatmul.mubr.f32.gmra.mxu0 %v2871
  %v10259 = vpop.f32.mrf.mxu0
  %v10260 = vadd.f32 0.0, %v10259
  %v10261 = vpop.f32.mrf.mxu0
  %10262 = vmatprep.mubr.f32.mxu0 0.0
  %10263 = vmatmul.mubr.f32.gmra.mxu0 %v2874
  %v10264 = vpop.f32.mrf.mxu0
  %v10265 = vadd.f32 0.0, %v10264
  %v10266 = vpop.f32.mrf.mxu0
  %10267 = vmatprep.mubr.f32.mxu0 0.0
  %10268 = vmatmul.mubr.f32.gmra.mxu0 %v2877
  %v10269 = vpop.f32.mrf.mxu0
  %v10270 = vadd.f32 0.0, %v10269
  %v10271 = vpop.f32.mrf.mxu0
  %10272 = vmatprep.mubr.f32.mxu0 0.0
  %10273 = vmatmul.mubr.f32.gmra.mxu0 %v2880
  %v10274 = vpop.f32.mrf.mxu0
  %v10275 = vadd.f32 0.0, %v10274
  %v10276 = vpop.f32.mrf.mxu0
  %10277 = vmatprep.mubr.f32.mxu0 0.0
  %10278 = vmatmul.mubr.f32.gmra.mxu0 %v2883
  %v10279 = vpop.f32.mrf.mxu0
  %v10280 = vadd.f32 0.0, %v10279
  %v10281 = vpop.f32.mrf.mxu0
  %10282 = vmatprep.mubr.f32.mxu0 0.0
  %10283 = vmatmul.mubr.f32.gmra.mxu0 %v2886
  %v10284 = vpop.f32.mrf.mxu0
  %v10285 = vadd.f32 0.0, %v10284
  %v10286 = vpop.f32.mrf.mxu0
  %10287 = vmatprep.mubr.f32.mxu0 0.0
  %10288 = vmatmul.mubr.f32.gmra.mxu0 %v2889
  %v10289 = vpop.f32.mrf.mxu0
  %v10290 = vadd.f32 0.0, %v10289
  %v10291 = vpop.f32.mrf.mxu0
  %10292 = vmatprep.mubr.f32.mxu0 0.0
  %10293 = vmatmul.mubr.f32.gmra.mxu0 %v2892
  %v10294 = vpop.f32.mrf.mxu0
  %v10295 = vadd.f32 0.0, %v10294
  %v10296 = vpop.f32.mrf.mxu0
  %10297 = vmatprep.mubr.f32.mxu0 0.0
  %10298 = vmatmul.mubr.f32.gmra.mxu0 %v2895
  %v10299 = vpop.f32.mrf.mxu0
  %v10300 = vadd.f32 0.0, %v10299
  %v10301 = vpop.f32.mrf.mxu0
  %10302 = vmatprep.mubr.f32.mxu0 0.0
  %10303 = vmatmul.mubr.f32.gmra.mxu0 %v2898
  %v10304 = vpop.f32.mrf.mxu0
  %v10305 = vadd.f32 0.0, %v10304
  %v10306 = vpop.f32.mrf.mxu0
  %10307 = vmatprep.mubr.f32.mxu0 0.0
  %10308 = vmatmul.mubr.f32.gmra.mxu0 %v2901
  %v10309 = vpop.f32.mrf.mxu0
  %v10310 = vadd.f32 0.0, %v10309
  %v10311 = vpop.f32.mrf.mxu0
  %10312 = vmatprep.mubr.f32.mxu0 0.0
  %10313 = vmatmul.mubr.f32.gmra.mxu0 %v2904
  %v10314 = vpop.f32.mrf.mxu0
  %v10315 = vadd.f32 0.0, %v10314
  %v10316 = vpop.f32.mrf.mxu0
  %10317 = vmatprep.mubr.f32.mxu0 0.0
  %10318 = vmatmul.mubr.f32.gmra.mxu0 %v2907
  %v10319 = vpop.f32.mrf.mxu0
  %v10320 = vadd.f32 0.0, %v10319
  %v10321 = vpop.f32.mrf.mxu0
  %10322 = vmatprep.mubr.f32.mxu0 0.0
  %10323 = vmatmul.mubr.f32.gmra.mxu0 %v2910
  %v10324 = vpop.f32.mrf.mxu0
  %v10325 = vadd.f32 0.0, %v10324
  %v10326 = vpop.f32.mrf.mxu0
  %10327 = vmatprep.mubr.f32.mxu0 0.0
  %10328 = vmatmul.mubr.f32.gmra.mxu0 %v2913
  %v10329 = vpop.f32.mrf.mxu0
  %v10330 = vadd.f32 0.0, %v10329
  %v10331 = vpop.f32.mrf.mxu0
  %10332 = vmatprep.mubr.f32.mxu0 0.0
  %10333 = vmatmul.mubr.f32.gmra.mxu0 %v2916
  %v10334 = vpop.f32.mrf.mxu0
  %v10335 = vadd.f32 0.0, %v10334
  %v10336 = vpop.f32.mrf.mxu0
  %10337 = vmatprep.mubr.f32.mxu0 0.0
  %10338 = vmatmul.mubr.f32.gmra.mxu0 %v2919
  %v10339 = vpop.f32.mrf.mxu0
  %v10340 = vadd.f32 0.0, %v10339
  %v10341 = vpop.f32.mrf.mxu0
  %10342 = vmatprep.mubr.f32.mxu0 0.0
  %10343 = vmatmul.mubr.f32.gmra.mxu0 %v2922
  %v10344 = vpop.f32.mrf.mxu0
  %v10345 = vadd.f32 0.0, %v10344
  %v10346 = vpop.f32.mrf.mxu0
  %10347 = vmatprep.mubr.f32.mxu0 0.0
  %10348 = vmatmul.mubr.f32.gmra.mxu0 %v2925
  %v10349 = vpop.f32.mrf.mxu0
  %v10350 = vadd.f32 0.0, %v10349
  %v10351 = vpop.f32.mrf.mxu0
  %10352 = vmatprep.mubr.f32.mxu0 0.0
  %10353 = vmatmul.mubr.f32.gmra.mxu0 %v2928
  %v10354 = vpop.f32.mrf.mxu0
  %v10355 = vadd.f32 0.0, %v10354
  %v10356 = vpop.f32.mrf.mxu0
  %10357 = vmatprep.mubr.f32.mxu0 0.0
  %10358 = vmatmul.mubr.f32.gmra.mxu0 %v2931
  %v10359 = vpop.f32.mrf.mxu0
  %v10360 = vadd.f32 0.0, %v10359
  %v10361 = vpop.f32.mrf.mxu0
  %10362 = vmatprep.mubr.f32.mxu0 0.0
  %10363 = vmatmul.mubr.f32.gmra.mxu0 %v2934
  %v10364 = vpop.f32.mrf.mxu0
  %v10365 = vadd.f32 0.0, %v10364
  %v10366 = vpop.f32.mrf.mxu0
  %10367 = vmatprep.mubr.f32.mxu0 0.0
  %10368 = vmatmul.mubr.f32.gmra.mxu0 %v2937
  %v10369 = vpop.f32.mrf.mxu0
  %v10370 = vadd.f32 0.0, %v10369
  %v10371 = vpop.f32.mrf.mxu0
  %10372 = vmatprep.mubr.f32.mxu0 0.0
  %10373 = vmatmul.mubr.f32.gmra.mxu0 %v2940
  %v10374 = vpop.f32.mrf.mxu0
  %v10375 = vadd.f32 0.0, %v10374
  %v10376 = vpop.f32.mrf.mxu0
  %10377 = vmatprep.mubr.f32.mxu0 0.0
  %10378 = vmatmul.mubr.f32.gmra.mxu0 %v2943
  %v10379 = vpop.f32.mrf.mxu0
  %v10380 = vadd.f32 0.0, %v10379
  %v10381 = vpop.f32.mrf.mxu0
  %10382 = vmatprep.mubr.f32.mxu0 0.0
  %10383 = vmatmul.mubr.f32.gmra.mxu0 %v2946
  %v10384 = vpop.f32.mrf.mxu0
  %v10385 = vadd.f32 0.0, %v10384
  %v10386 = vpop.f32.mrf.mxu0
  %10387 = vmatprep.mubr.f32.mxu0 0.0
  %10388 = vmatmul.mubr.f32.gmra.mxu0 %v2949
  %v10389 = vpop.f32.mrf.mxu0
  %v10390 = vadd.f32 0.0, %v10389
  %v10391 = vpop.f32.mrf.mxu0
  %10392 = vmatprep.mubr.f32.mxu0 0.0
  %10393 = vmatmul.mubr.f32.gmra.mxu0 %v2952
  %v10394 = vpop.f32.mrf.mxu0
  %v10395 = vadd.f32 0.0, %v10394
  %v10396 = vpop.f32.mrf.mxu0
  %10397 = vmatprep.mubr.f32.mxu0 0.0
  %10398 = vmatmul.mubr.f32.gmra.mxu0 %v2955
  %v10399 = vpop.f32.mrf.mxu0
  %v10400 = vadd.f32 0.0, %v10399
  %v10401 = vpop.f32.mrf.mxu0
  %10402 = vmatprep.mubr.f32.mxu0 0.0
  %10403 = vmatmul.mubr.f32.gmra.mxu0 %v2958
  %v10404 = vpop.f32.mrf.mxu0
  %v10405 = vadd.f32 0.0, %v10404
  %v10406 = vpop.f32.mrf.mxu0
  %10407 = vmatprep.mubr.f32.mxu0 0.0
  %10408 = vmatmul.mubr.f32.gmra.mxu0 %v2961
  %v10409 = vpop.f32.mrf.mxu0
  %v10410 = vadd.f32 0.0, %v10409
  %v10411 = vpop.f32.mrf.mxu0
  %10412 = vmatprep.mubr.f32.mxu0 0.0
  %10413 = vmatmul.mubr.f32.gmra.mxu0 %v2964
  %v10414 = vpop.f32.mrf.mxu0
  %v10415 = vadd.f32 0.0, %v10414
  %v10416 = vpop.f32.mrf.mxu0
  %10417 = vmatprep.mubr.f32.mxu0 0.0
  %10418 = vmatmul.mubr.f32.gmra.mxu0 %v2967
  %v10419 = vpop.f32.mrf.mxu0
  %v10420 = vadd.f32 0.0, %v10419
  %v10421 = vpop.f32.mrf.mxu0
  %10422 = vmatprep.mubr.f32.mxu0 0.0
  %10423 = vmatmul.mubr.f32.gmra.mxu0 %v2970
  %v10424 = vpop.f32.mrf.mxu0
  %v10425 = vadd.f32 0.0, %v10424
  %v10426 = vpop.f32.mrf.mxu0
  %10427 = vmatprep.mubr.f32.mxu0 0.0
  %10428 = vmatmul.mubr.f32.gmra.mxu0 %v2973
  %v10429 = vpop.f32.mrf.mxu0
  %v10430 = vadd.f32 0.0, %v10429
  %v10431 = vpop.f32.mrf.mxu0
  %10432 = vmatprep.mubr.f32.mxu0 0.0
  %10433 = vmatmul.mubr.f32.gmra.mxu0 %v2976
  %v10434 = vpop.f32.mrf.mxu0
  %v10435 = vadd.f32 0.0, %v10434
  %v10436 = vpop.f32.mrf.mxu0
  %10437 = vmatprep.mubr.f32.mxu0 0.0
  %10438 = vmatmul.mubr.f32.gmra.mxu0 %v2979
  %v10439 = vpop.f32.mrf.mxu0
  %v10440 = vadd.f32 0.0, %v10439
  %v10441 = vpop.f32.mrf.mxu0
  %10442 = vmatprep.mubr.f32.mxu0 0.0
  %10443 = vmatmul.mubr.f32.gmra.mxu0 %v2982
  %v10444 = vpop.f32.mrf.mxu0
  %v10445 = vadd.f32 0.0, %v10444
  %v10446 = vpop.f32.mrf.mxu0
  %10447 = vmatprep.mubr.f32.mxu0 0.0
  %10448 = vmatmul.mubr.f32.gmra.mxu0 %v2985
  %v10449 = vpop.f32.mrf.mxu0
  %v10450 = vadd.f32 0.0, %v10449
  %v10451 = vpop.f32.mrf.mxu0
  %10452 = vmatprep.mubr.f32.mxu0 0.0
  %10453 = vmatmul.mubr.f32.gmra.mxu0 %v2988
  %v10454 = vpop.f32.mrf.mxu0
  %v10455 = vadd.f32 0.0, %v10454
  %v10456 = vpop.f32.mrf.mxu0
  %10457 = vmatprep.mubr.f32.mxu0 0.0
  %10458 = vmatmul.mubr.f32.gmra.mxu0 %v2991
  %v10459 = vpop.f32.mrf.mxu0
  %v10460 = vadd.f32 0.0, %v10459
  %v10461 = vpop.f32.mrf.mxu0
  %10462 = vmatprep.mubr.f32.mxu0 0.0
  %10463 = vmatmul.mubr.f32.gmra.mxu0 %v2994
  %v10464 = vpop.f32.mrf.mxu0
  %v10465 = vadd.f32 0.0, %v10464
  %v10466 = vpop.f32.mrf.mxu0
  %10467 = vmatprep.mubr.f32.mxu0 0.0
  %10468 = vmatmul.mubr.f32.gmra.mxu0 %v2997
  %v10469 = vpop.f32.mrf.mxu0
  %v10470 = vadd.f32 0.0, %v10469
  %v10471 = vpop.f32.mrf.mxu0
  %10472 = vmatprep.mubr.f32.mxu0 0.0
  %10473 = vmatmul.mubr.f32.gmra.mxu0 %v3000
  %v10474 = vpop.f32.mrf.mxu0
  %v10475 = vadd.f32 0.0, %v10474
  %v10476 = vpop.f32.mrf.mxu0
  %10477 = vmatprep.mubr.f32.mxu0 0.0
  %10478 = vmatmul.mubr.f32.gmra.mxu0 %v3003
  %v10479 = vpop.f32.mrf.mxu0
  %v10480 = vadd.f32 0.0, %v10479
  %v10481 = vpop.f32.mrf.mxu0
  %10482 = vmatprep.mubr.f32.mxu0 0.0
  %10483 = vmatmul.mubr.f32.gmra.mxu0 %v3006
  %v10484 = vpop.f32.mrf.mxu0
  %v10485 = vadd.f32 0.0, %v10484
  %v10486 = vpop.f32.mrf.mxu0
  %10487 = vmatprep.mubr.f32.mxu0 0.0
  %10488 = vmatmul.mubr.f32.gmra.mxu0 %v3009
  %v10489 = vpop.f32.mrf.mxu0
  %v10490 = vadd.f32 0.0, %v10489
  %v10491 = vpop.f32.mrf.mxu0
  %10492 = vmatprep.mubr.f32.mxu0 0.0
  %10493 = vmatmul.mubr.f32.gmra.mxu0 %v3012
  %v10494 = vpop.f32.mrf.mxu0
  %v10495 = vadd.f32 0.0, %v10494
  %v10496 = vpop.f32.mrf.mxu0
  %10497 = vmatprep.mubr.f32.mxu0 0.0
  %10498 = vmatmul.mubr.f32.gmra.mxu0 %v3015
  %v10499 = vpop.f32.mrf.mxu0
  %v10500 = vadd.f32 0.0, %v10499
  %v10501 = vpop.f32.mrf.mxu0
  %10502 = vmatprep.mubr.f32.mxu0 0.0
  %10503 = vmatmul.mubr.f32.gmra.mxu0 %v3018
  %v10504 = vpop.f32.mrf.mxu0
  %v10505 = vadd.f32 0.0, %v10504
  %v10506 = vpop.f32.mrf.mxu0
  %10507 = vmatprep.mubr.f32.mxu0 0.0
  %10508 = vmatmul.mubr.f32.gmra.mxu0 %v3021
  %v10509 = vpop.f32.mrf.mxu0
  %v10510 = vadd.f32 0.0, %v10509
  %v10511 = vpop.f32.mrf.mxu0
  %10512 = vmatprep.mubr.f32.mxu0 0.0
  %10513 = vmatmul.mubr.f32.gmra.mxu0 %v3024
  %v10514 = vpop.f32.mrf.mxu0
  %v10515 = vadd.f32 0.0, %v10514
  %v10516 = vpop.f32.mrf.mxu0
  %10517 = vmatprep.mubr.f32.mxu0 0.0
  %10518 = vmatmul.mubr.f32.gmra.mxu0 %v3027
  %v10519 = vpop.f32.mrf.mxu0
  %v10520 = vadd.f32 0.0, %v10519
  %v10521 = vpop.f32.mrf.mxu0
  %10522 = vmatprep.mubr.f32.mxu0 0.0
  %10523 = vmatmul.mubr.f32.gmra.mxu0 %v3030
  %v10524 = vpop.f32.mrf.mxu0
  %v10525 = vadd.f32 0.0, %v10524
  %v10526 = vpop.f32.mrf.mxu0
  %10527 = vmatprep.mubr.f32.mxu0 0.0
  %10528 = vmatmul.mubr.f32.gmra.mxu0 %v3033
  %v10529 = vpop.f32.mrf.mxu0
  %v10530 = vadd.f32 0.0, %v10529
  %v10531 = vpop.f32.mrf.mxu0
  %10532 = vmatprep.mubr.f32.mxu0 0.0
  %10533 = vmatmul.mubr.f32.gmra.mxu0 %v3036
  %v10534 = vpop.f32.mrf.mxu0
  %v10535 = vadd.f32 0.0, %v10534
  %v10536 = vpop.f32.mrf.mxu0
  %10537 = vmatprep.mubr.f32.mxu0 0.0
  %10538 = vmatmul.mubr.f32.gmra.mxu0 %v3039
  %v10539 = vpop.f32.mrf.mxu0
  %v10540 = vadd.f32 0.0, %v10539
  %v10541 = vpop.f32.mrf.mxu0
  %10542 = vmatprep.mubr.f32.mxu0 0.0
  %10543 = vmatmul.mubr.f32.gmra.mxu0 %v3042
  %v10544 = vpop.f32.mrf.mxu0
  %v10545 = vadd.f32 0.0, %v10544
  %v10546 = vpop.f32.mrf.mxu0
  %10547 = vmatprep.mubr.f32.mxu0 0.0
  %10548 = vmatmul.mubr.f32.gmra.mxu0 %v3045
  %v10549 = vpop.f32.mrf.mxu0
  %v10550 = vadd.f32 0.0, %v10549
  %v10551 = vpop.f32.mrf.mxu0
  %10552 = vmatprep.mubr.f32.mxu0 0.0
  %10553 = vmatmul.mubr.f32.gmra.mxu0 %v3048
  %v10554 = vpop.f32.mrf.mxu0
  %v10555 = vadd.f32 0.0, %v10554
  %v10556 = vpop.f32.mrf.mxu0
  %10557 = vmatprep.mubr.f32.mxu0 0.0
  %10558 = vmatmul.mubr.f32.gmra.mxu0 %v3051
  %v10559 = vpop.f32.mrf.mxu0
  %v10560 = vadd.f32 0.0, %v10559
  %v10561 = vpop.f32.mrf.mxu0
  %10562 = vmatprep.mubr.f32.mxu0 0.0
  %10563 = vmatmul.mubr.f32.gmra.mxu0 %v3054
  %v10564 = vpop.f32.mrf.mxu0
  %v10565 = vadd.f32 0.0, %v10564
  %v10566 = vpop.f32.mrf.mxu0
  %10567 = vmatprep.mubr.f32.mxu0 0.0
  %10568 = vmatmul.mubr.f32.gmra.mxu0 %v3057
  %v10569 = vpop.f32.mrf.mxu0
  %v10570 = vadd.f32 0.0, %v10569
  %v10571 = vpop.f32.mrf.mxu0
  %10572 = vmatprep.mubr.f32.mxu0 0.0
  %10573 = vmatmul.mubr.f32.gmra.mxu0 %v3060
  %v10574 = vpop.f32.mrf.mxu0
  %v10575 = vadd.f32 0.0, %v10574
  %v10576 = vpop.f32.mrf.mxu0
  %10577 = vmatprep.mubr.f32.mxu0 0.0
  %10578 = vmatmul.mubr.f32.gmra.mxu0 %v3063
  %v10579 = vpop.f32.mrf.mxu0
  %v10580 = vadd.f32 0.0, %v10579
  %v10581 = vpop.f32.mrf.mxu0
  %10582 = vmatprep.mubr.f32.mxu0 0.0
  %10583 = vmatmul.mubr.f32.gmra.mxu0 %v3066
  %v10584 = vpop.f32.mrf.mxu0
  %v10585 = vadd.f32 0.0, %v10584
  %v10586 = vpop.f32.mrf.mxu0
  %10587 = vmatprep.mubr.f32.mxu0 0.0
  %10588 = vmatmul.mubr.f32.gmra.mxu0 %v3069
  %v10589 = vpop.f32.mrf.mxu0
  %v10590 = vadd.f32 0.0, %v10589
  %v10591 = vpop.f32.mrf.mxu0
  %10592 = vmatprep.mubr.f32.mxu0 0.0
  %10593 = vmatmul.mubr.f32.gmra.mxu0 %v3072
  %v10594 = vpop.f32.mrf.mxu0
  %v10595 = vadd.f32 0.0, %v10594
  %v10596 = vpop.f32.mrf.mxu0
  %10597 = vmatprep.mubr.f32.mxu0 0.0
  %10598 = vmatmul.mubr.f32.gmra.mxu0 %v3075
  %v10599 = vpop.f32.mrf.mxu0
  %v10600 = vadd.f32 0.0, %v10599
  %v10601 = vpop.f32.mrf.mxu0
  %10602 = vmatprep.mubr.f32.mxu0 0.0
  %10603 = vmatmul.mubr.f32.gmra.mxu0 %v3078
  %v10604 = vpop.f32.mrf.mxu0
  %v10605 = vadd.f32 0.0, %v10604
  %v10606 = vpop.f32.mrf.mxu0
  %10607 = vmatprep.mubr.f32.mxu0 0.0
  %10608 = vmatmul.mubr.f32.gmra.mxu0 %v3081
  %v10609 = vpop.f32.mrf.mxu0
  %v10610 = vadd.f32 0.0, %v10609
  %v10611 = vpop.f32.mrf.mxu0
  %10612 = vmatprep.mubr.f32.mxu0 0.0
  %10613 = vmatmul.mubr.f32.gmra.mxu0 %v3084
  %v10614 = vpop.f32.mrf.mxu0
  %v10615 = vadd.f32 0.0, %v10614
  %v10616 = vpop.f32.mrf.mxu0
  %10617 = vmatprep.mubr.f32.mxu0 0.0
  %10618 = vmatmul.mubr.f32.gmra.mxu0 %v3087
  %v10619 = vpop.f32.mrf.mxu0
  %v10620 = vadd.f32 0.0, %v10619
  %v10621 = vpop.f32.mrf.mxu0
  %10622 = vmatprep.mubr.f32.mxu0 0.0
  %10623 = vmatmul.mubr.f32.gmra.mxu0 %v3090
  %v10624 = vpop.f32.mrf.mxu0
  %v10625 = vadd.f32 0.0, %v10624
  %v10626 = vpop.f32.mrf.mxu0
  %10627 = vmatprep.mubr.f32.mxu0 0.0
  %10628 = vmatmul.mubr.f32.gmra.mxu0 %v3093
  %v10629 = vpop.f32.mrf.mxu0
  %v10630 = vadd.f32 0.0, %v10629
  %v10631 = vpop.f32.mrf.mxu0
  %10632 = vmatprep.mubr.f32.mxu0 0.0
  %10633 = vmatmul.mubr.f32.gmra.mxu0 %v3096
  %v10634 = vpop.f32.mrf.mxu0
  %v10635 = vadd.f32 0.0, %v10634
  %v10636 = vpop.f32.mrf.mxu0
  %10637 = vmatprep.mubr.f32.mxu0 0.0
  %10638 = vmatmul.mubr.f32.gmra.mxu0 %v3099
  %v10639 = vpop.f32.mrf.mxu0
  %v10640 = vadd.f32 0.0, %v10639
  %v10641 = vpop.f32.mrf.mxu0
  %10642 = vmatprep.mubr.f32.mxu0 0.0
  %10643 = vmatmul.mubr.f32.gmra.mxu0 %v3102
  %v10644 = vpop.f32.mrf.mxu0
  %v10645 = vadd.f32 0.0, %v10644
  %v10646 = vpop.f32.mrf.mxu0
  %10647 = vmatprep.mubr.f32.mxu0 0.0
  %10648 = vmatmul.mubr.f32.gmra.mxu0 %v3105
  %v10649 = vpop.f32.mrf.mxu0
  %v10650 = vadd.f32 0.0, %v10649
  %v10651 = vpop.f32.mrf.mxu0
  %10652 = vmatprep.mubr.f32.mxu0 0.0
  %10653 = vmatmul.mubr.f32.gmra.mxu0 %v3108
  %v10654 = vpop.f32.mrf.mxu0
  %v10655 = vadd.f32 0.0, %v10654
  %v10656 = vpop.f32.mrf.mxu0
  %10657 = vmatprep.mubr.f32.mxu0 0.0
  %10658 = vmatmul.mubr.f32.gmra.mxu0 %v3111
  %v10659 = vpop.f32.mrf.mxu0
  %v10660 = vadd.f32 0.0, %v10659
  %v10661 = vpop.f32.mrf.mxu0
  %10662 = vmatprep.mubr.f32.mxu0 0.0
  %10663 = vmatmul.mubr.f32.gmra.mxu0 %v3114
  %v10664 = vpop.f32.mrf.mxu0
  %v10665 = vadd.f32 0.0, %v10664
  %v10666 = vpop.f32.mrf.mxu0
  %10667 = vmatprep.mubr.f32.mxu0 0.0
  %10668 = vmatmul.mubr.f32.gmra.mxu0 %v3117
  %v10669 = vpop.f32.mrf.mxu0
  %v10670 = vadd.f32 0.0, %v10669
  %v10671 = vpop.f32.mrf.mxu0
  %10672 = vmatprep.mubr.f32.mxu0 0.0
  %10673 = vmatmul.mubr.f32.gmra.mxu0 %v3120
  %v10674 = vpop.f32.mrf.mxu0
  %v10675 = vadd.f32 0.0, %v10674
  %v10676 = vpop.f32.mrf.mxu0
  %10677 = vmatprep.mubr.f32.mxu0 0.0
  %10678 = vmatmul.mubr.f32.gmra.mxu0 %v3123
  %v10679 = vpop.f32.mrf.mxu0
  %v10680 = vadd.f32 0.0, %v10679
  %v10681 = vpop.f32.mrf.mxu0
  %10682 = vmatprep.mubr.f32.mxu0 0.0
  %10683 = vmatmul.mubr.f32.gmra.mxu0 %v3126
  %v10684 = vpop.f32.mrf.mxu0
  %v10685 = vadd.f32 0.0, %v10684
  %v10686 = vpop.f32.mrf.mxu0
  %10687 = vmatprep.mubr.f32.mxu0 0.0
  %10688 = vmatmul.mubr.f32.gmra.mxu0 %v3129
  %v10689 = vpop.f32.mrf.mxu0
  %v10690 = vadd.f32 0.0, %v10689
  %v10691 = vpop.f32.mrf.mxu0
  %10692 = vmatprep.mubr.f32.mxu0 0.0
  %10693 = vmatmul.mubr.f32.gmra.mxu0 %v3132
  %v10694 = vpop.f32.mrf.mxu0
  %v10695 = vadd.f32 0.0, %v10694
  %v10696 = vpop.f32.mrf.mxu0
  %10697 = vmatprep.mubr.f32.mxu0 0.0
  %10698 = vmatmul.mubr.f32.gmra.mxu0 %v3135
  %v10699 = vpop.f32.mrf.mxu0
  %v10700 = vadd.f32 0.0, %v10699
  %v10701 = vpop.f32.mrf.mxu0
  %10702 = vmatprep.mubr.f32.mxu0 0.0
  %10703 = vmatmul.mubr.f32.gmra.mxu0 %v3138
  %v10704 = vpop.f32.mrf.mxu0
  %v10705 = vadd.f32 0.0, %v10704
  %v10706 = vpop.f32.mrf.mxu0
  %10707 = vmatprep.mubr.f32.mxu0 0.0
  %10708 = vmatmul.mubr.f32.gmra.mxu0 %v3141
  %v10709 = vpop.f32.mrf.mxu0
  %v10710 = vadd.f32 0.0, %v10709
  %v10711 = vpop.f32.mrf.mxu0
  %10712 = vmatprep.mubr.f32.mxu0 0.0
  %10713 = vmatmul.mubr.f32.gmra.mxu0 %v3144
  %v10714 = vpop.f32.mrf.mxu0
  %v10715 = vadd.f32 0.0, %v10714
  %v10716 = vpop.f32.mrf.mxu0
  %10717 = vmatprep.mubr.f32.mxu0 0.0
  %10718 = vmatmul.mubr.f32.gmra.mxu0 %v3147
  %v10719 = vpop.f32.mrf.mxu0
  %v10720 = vadd.f32 0.0, %v10719
  %v10721 = vpop.f32.mrf.mxu0
  %10722 = vmatprep.mubr.f32.mxu0 0.0
  %10723 = vmatmul.mubr.f32.gmra.mxu0 %v3150
  %v10724 = vpop.f32.mrf.mxu0
  %v10725 = vadd.f32 0.0, %v10724
  %v10726 = vpop.f32.mrf.mxu0
  %10727 = vmatprep.mubr.f32.mxu0 0.0
  %10728 = vmatmul.mubr.f32.gmra.mxu0 %v3153
  %v10729 = vpop.f32.mrf.mxu0
  %v10730 = vadd.f32 0.0, %v10729
  %v10731 = vpop.f32.mrf.mxu0
  %10732 = vmatprep.mubr.f32.mxu0 0.0
  %10733 = vmatmul.mubr.f32.gmra.mxu0 %v3156
  %v10734 = vpop.f32.mrf.mxu0
  %v10735 = vadd.f32 0.0, %v10734
  %v10736 = vpop.f32.mrf.mxu0
  %10737 = vmatprep.mubr.f32.mxu0 0.0
  %10738 = vmatmul.mubr.f32.gmra.mxu0 %v3159
  %v10739 = vpop.f32.mrf.mxu0
  %v10740 = vadd.f32 0.0, %v10739
  %v10741 = vpop.f32.mrf.mxu0
  %10742 = vmatprep.mubr.f32.mxu0 0.0
  %10743 = vmatmul.mubr.f32.gmra.mxu0 %v3162
  %v10744 = vpop.f32.mrf.mxu0
  %v10745 = vadd.f32 0.0, %v10744
  %v10746 = vpop.f32.mrf.mxu0
  %10747 = vmatprep.mubr.f32.mxu0 0.0
  %10748 = vmatmul.mubr.f32.gmra.mxu0 %v3165
  %v10749 = vpop.f32.mrf.mxu0
  %v10750 = vadd.f32 0.0, %v10749
  %v10751 = vpop.f32.mrf.mxu0
  %10752 = vmatprep.mubr.f32.mxu0 0.0
  %10753 = vmatmul.mubr.f32.gmra.mxu0 %v3168
  %v10754 = vpop.f32.mrf.mxu0
  %v10755 = vadd.f32 0.0, %v10754
  %v10756 = vpop.f32.mrf.mxu0
  %10757 = vmatprep.mubr.f32.mxu0 0.0
  %10758 = vmatmul.mubr.f32.gmra.mxu0 %v3171
  %v10759 = vpop.f32.mrf.mxu0
  %v10760 = vadd.f32 0.0, %v10759
  %v10761 = vpop.f32.mrf.mxu0
  %10762 = vmatprep.mubr.f32.mxu0 0.0
  %10763 = vmatmul.mubr.f32.gmra.mxu0 %v3174
  %v10764 = vpop.f32.mrf.mxu0
  %v10765 = vadd.f32 0.0, %v10764
  %v10766 = vpop.f32.mrf.mxu0
  %10767 = vmatprep.mubr.f32.mxu0 0.0
  %10768 = vmatmul.mubr.f32.gmra.mxu0 %v3177
  %v10769 = vpop.f32.mrf.mxu0
  %v10770 = vadd.f32 0.0, %v10769
  %v10771 = vpop.f32.mrf.mxu0
  %10772 = vmatprep.mubr.f32.mxu0 0.0
  %10773 = vmatmul.mubr.f32.gmra.mxu0 %v3180
  %v10774 = vpop.f32.mrf.mxu0
  %v10775 = vadd.f32 0.0, %v10774
  %v10776 = vpop.f32.mrf.mxu0
  %10777 = vmatprep.mubr.f32.mxu0 0.0
  %10778 = vmatmul.mubr.f32.gmra.mxu0 %v3183
  %v10779 = vpop.f32.mrf.mxu0
  %v10780 = vadd.f32 0.0, %v10779
  %v10781 = vpop.f32.mrf.mxu0
  %10782 = vmatprep.mubr.f32.mxu0 0.0
  %10783 = vmatmul.mubr.f32.gmra.mxu0 %v3186
  %v10784 = vpop.f32.mrf.mxu0
  %v10785 = vadd.f32 0.0, %v10784
  %v10786 = vpop.f32.mrf.mxu0
  %10787 = vmatprep.mubr.f32.mxu0 0.0
  %10788 = vmatmul.mubr.f32.gmra.mxu0 %v3189
  %v10789 = vpop.f32.mrf.mxu0
  %v10790 = vadd.f32 0.0, %v10789
  %v10791 = vpop.f32.mrf.mxu0
  %10792 = vmatprep.mubr.f32.mxu0 0.0
  %10793 = vmatmul.mubr.f32.gmra.mxu0 %v3192
  %v10794 = vpop.f32.mrf.mxu0
  %v10795 = vadd.f32 0.0, %v10794
  %v10796 = vpop.f32.mrf.mxu0
  %10797 = vmatprep.mubr.f32.mxu0 0.0
  %10798 = vmatmul.mubr.f32.gmra.mxu0 %v3195
  %v10799 = vpop.f32.mrf.mxu0
  %v10800 = vadd.f32 0.0, %v10799
  %v10801 = vpop.f32.mrf.mxu0
  %10802 = vmatprep.mubr.f32.mxu0 0.0
  %10803 = vmatmul.mubr.f32.gmra.mxu0 %v3198
  %v10804 = vpop.f32.mrf.mxu0
  %v10805 = vadd.f32 0.0, %v10804
  %v10806 = vpop.f32.mrf.mxu0
  %10807 = vmatprep.mubr.f32.mxu0 0.0
  %10808 = vmatmul.mubr.f32.gmra.mxu0 %v3201
  %v10809 = vpop.f32.mrf.mxu0
  %v10810 = vadd.f32 0.0, %v10809
  %v10811 = vpop.f32.mrf.mxu0
  %10812 = vmatprep.mubr.f32.mxu0 0.0
  %10813 = vmatmul.mubr.f32.gmra.mxu0 %v3204
  %v10814 = vpop.f32.mrf.mxu0
  %v10815 = vadd.f32 0.0, %v10814
  %v10816 = vpop.f32.mrf.mxu0
  %10817 = vmatprep.mubr.f32.mxu0 0.0
  %10818 = vmatmul.mubr.f32.gmra.mxu0 %v3207
  %v10819 = vpop.f32.mrf.mxu0
  %v10820 = vadd.f32 0.0, %v10819
  %v10821 = vpop.f32.mrf.mxu0
  %10822 = vmatprep.mubr.f32.mxu0 0.0
  %10823 = vmatmul.mubr.f32.gmra.mxu0 %v3210
  %v10824 = vpop.f32.mrf.mxu0
  %v10825 = vadd.f32 0.0, %v10824
  %v10826 = vpop.f32.mrf.mxu0
  %10827 = vmatprep.mubr.f32.mxu0 0.0
  %10828 = vmatmul.mubr.f32.gmra.mxu0 %v3213
  %v10829 = vpop.f32.mrf.mxu0
  %v10830 = vadd.f32 0.0, %v10829
  %v10831 = vpop.f32.mrf.mxu0
  %10832 = vmatprep.mubr.f32.mxu0 0.0
  %10833 = vmatmul.mubr.f32.gmra.mxu0 %v3216
  %v10834 = vpop.f32.mrf.mxu0
  %v10835 = vadd.f32 0.0, %v10834
  %v10836 = vpop.f32.mrf.mxu0
  %10837 = vmatprep.mubr.f32.mxu0 0.0
  %10838 = vmatmul.mubr.f32.gmra.mxu0 %v3219
  %v10839 = vpop.f32.mrf.mxu0
  %v10840 = vadd.f32 0.0, %v10839
  %v10841 = vpop.f32.mrf.mxu0
  %10842 = vmatprep.mubr.f32.mxu0 0.0
  %10843 = vmatmul.mubr.f32.gmra.mxu0 %v3222
  %v10844 = vpop.f32.mrf.mxu0
  %v10845 = vadd.f32 0.0, %v10844
  %v10846 = vpop.f32.mrf.mxu0
  %10847 = vmatprep.mubr.f32.mxu0 0.0
  %10848 = vmatmul.mubr.f32.gmra.mxu0 %v3225
  %v10849 = vpop.f32.mrf.mxu0
  %v10850 = vadd.f32 0.0, %v10849
  %v10851 = vpop.f32.mrf.mxu0
  %10852 = vmatprep.mubr.f32.mxu0 0.0
  %10853 = vmatmul.mubr.f32.gmra.mxu0 %v3228
  %v10854 = vpop.f32.mrf.mxu0
  %v10855 = vadd.f32 0.0, %v10854
  %v10856 = vpop.f32.mrf.mxu0
  %10857 = vmatprep.mubr.f32.mxu0 0.0
  %10858 = vmatmul.mubr.f32.gmra.mxu0 %v3231
  %v10859 = vpop.f32.mrf.mxu0
  %v10860 = vadd.f32 0.0, %v10859
  %v10861 = vpop.f32.mrf.mxu0
  %10862 = vmatprep.mubr.f32.mxu0 0.0
  %10863 = vmatmul.mubr.f32.gmra.mxu0 %v3234
  %v10864 = vpop.f32.mrf.mxu0
  %v10865 = vadd.f32 0.0, %v10864
  %v10866 = vpop.f32.mrf.mxu0
  %10867 = vmatprep.mubr.f32.mxu0 0.0
  %10868 = vmatmul.mubr.f32.gmra.mxu0 %v3237
  %v10869 = vpop.f32.mrf.mxu0
  %v10870 = vadd.f32 0.0, %v10869
  %v10871 = vpop.f32.mrf.mxu0
  %10872 = vmatprep.mubr.f32.mxu0 0.0
  %10873 = vmatmul.mubr.f32.gmra.mxu0 %v3240
  %v10874 = vpop.f32.mrf.mxu0
  %v10875 = vadd.f32 0.0, %v10874
  %v10876 = vpop.f32.mrf.mxu0
  %10877 = vmatprep.mubr.f32.mxu0 0.0
  %10878 = vmatmul.mubr.f32.gmra.mxu0 %v3243
  %v10879 = vpop.f32.mrf.mxu0
  %v10880 = vadd.f32 0.0, %v10879
  %v10881 = vpop.f32.mrf.mxu0
  %10882 = vmatprep.mubr.f32.mxu0 0.0
  %10883 = vmatmul.mubr.f32.gmra.mxu0 %v3246
  %v10884 = vpop.f32.mrf.mxu0
  %v10885 = vadd.f32 0.0, %v10884
  %v10886 = vpop.f32.mrf.mxu0
  %10887 = vmatprep.mubr.f32.mxu0 0.0
  %10888 = vmatmul.mubr.f32.gmra.mxu0 %v3249
  %v10889 = vpop.f32.mrf.mxu0
  %v10890 = vadd.f32 0.0, %v10889
  %v10891 = vpop.f32.mrf.mxu0
  %10892 = vmatprep.mubr.f32.mxu0 0.0
  %10893 = vmatmul.mubr.f32.gmra.mxu0 %v3252
  %v10894 = vpop.f32.mrf.mxu0
  %v10895 = vadd.f32 0.0, %v10894
  %v10896 = vpop.f32.mrf.mxu0
  %10897 = vmatprep.mubr.f32.mxu0 0.0
  %10898 = vmatmul.mubr.f32.gmra.mxu0 %v3255
  %v10899 = vpop.f32.mrf.mxu0
  %v10900 = vadd.f32 0.0, %v10899
  %v10901 = vpop.f32.mrf.mxu0
  %10902 = vmatprep.mubr.f32.mxu0 0.0
  %10903 = vmatmul.mubr.f32.gmra.mxu0 %v3258
  %v10904 = vpop.f32.mrf.mxu0
  %v10905 = vadd.f32 0.0, %v10904
  %v10906 = vpop.f32.mrf.mxu0
  %10907 = vmatprep.mubr.f32.mxu0 0.0
  %10908 = vmatmul.mubr.f32.gmra.mxu0 %v3261
  %v10909 = vpop.f32.mrf.mxu0
  %v10910 = vadd.f32 0.0, %v10909
  %v10911 = vpop.f32.mrf.mxu0
  %10912 = vmatprep.mubr.f32.mxu0 0.0
  %10913 = vmatmul.mubr.f32.gmra.mxu0 %v3264
  %v10914 = vpop.f32.mrf.mxu0
  %v10915 = vadd.f32 0.0, %v10914
  %v10916 = vpop.f32.mrf.mxu0
  %10917 = vmatprep.mubr.f32.mxu0 0.0
  %10918 = vmatmul.mubr.f32.gmra.mxu0 %v6177
  %v10919 = vpop.f32.mrf.mxu0
  %v10920 = vadd.f32 0.0, %v10919
  %v10921 = vpop.f32.mrf.mxu0
  %10922 = vmatprep.mubr.f32.mxu0 0.0
  %10923 = vmatmul.mubr.f32.gmra.mxu0 %v6180
  %v10924 = vpop.f32.mrf.mxu0
  %v10925 = vadd.f32 0.0, %v10924
  %v10926 = vpop.f32.mrf.mxu0
  %10927 = vmatprep.mubr.f32.mxu0 0.0
  %10928 = vmatmul.mubr.f32.gmra.mxu0 %v6183
  %v10929 = vpop.f32.mrf.mxu0
  %v10930 = vadd.f32 0.0, %v10929
  %v10931 = vpop.f32.mrf.mxu0
  %10932 = vmatprep.mubr.f32.mxu0 0.0
  %10933 = vmatmul.mubr.f32.gmra.mxu0 %v6186
  %v10934 = vpop.f32.mrf.mxu0
  %v10935 = vadd.f32 0.0, %v10934
  %v10936 = vpop.f32.mrf.mxu0
  %10937 = vmatprep.mubr.f32.mxu0 0.0
  %10938 = vmatmul.mubr.f32.gmra.mxu0 %v6189
  %v10939 = vpop.f32.mrf.mxu0
  %v10940 = vadd.f32 0.0, %v10939
  %v10941 = vpop.f32.mrf.mxu0
  %10942 = vmatprep.mubr.f32.mxu0 0.0
  %10943 = vmatmul.mubr.f32.gmra.mxu0 %v6192
  %v10944 = vpop.f32.mrf.mxu0
  %v10945 = vadd.f32 0.0, %v10944
  %v10946 = vpop.f32.mrf.mxu0
  %10947 = vmatprep.mubr.f32.mxu0 0.0
  %10948 = vmatmul.mubr.f32.gmra.mxu0 %v6195
  %v10949 = vpop.f32.mrf.mxu0
  %v10950 = vadd.f32 0.0, %v10949
  %v10951 = vpop.f32.mrf.mxu0
  %10952 = vmatprep.mubr.f32.mxu0 0.0
  %10953 = vmatmul.mubr.f32.gmra.mxu0 %v6198
  %v10954 = vpop.f32.mrf.mxu0
  %v10955 = vadd.f32 0.0, %v10954
  %v10956 = vpop.f32.mrf.mxu0
  %10957 = vmatprep.mubr.f32.mxu0 0.0
  %10958 = vmatmul.mubr.f32.gmra.mxu0 %v6201
  %v10959 = vpop.f32.mrf.mxu0
  %v10960 = vadd.f32 0.0, %v10959
  %v10961 = vpop.f32.mrf.mxu0
  %10962 = vmatprep.mubr.f32.mxu0 0.0
  %10963 = vmatmul.mubr.f32.gmra.mxu0 %v6204
  %v10964 = vpop.f32.mrf.mxu0
  %v10965 = vadd.f32 0.0, %v10964
  %v10966 = vpop.f32.mrf.mxu0
  %10967 = vmatprep.mubr.f32.mxu0 0.0
  %10968 = vmatmul.mubr.f32.gmra.mxu0 %v6207
  %v10969 = vpop.f32.mrf.mxu0
  %v10970 = vadd.f32 0.0, %v10969
  %v10971 = vpop.f32.mrf.mxu0
  %10972 = vmatprep.mubr.f32.mxu0 0.0
  %10973 = vmatmul.mubr.f32.gmra.mxu0 %v6210
  %v10974 = vpop.f32.mrf.mxu0
  %v10975 = vadd.f32 0.0, %v10974
  %v10976 = vpop.f32.mrf.mxu0
  %10977 = vmatprep.mubr.f32.mxu0 0.0
  %10978 = vmatmul.mubr.f32.gmra.mxu0 %v6213
  %v10979 = vpop.f32.mrf.mxu0
  %v10980 = vadd.f32 0.0, %v10979
  %v10981 = vpop.f32.mrf.mxu0
  %10982 = vmatprep.mubr.f32.mxu0 0.0
  %10983 = vmatmul.mubr.f32.gmra.mxu0 %v6216
  %v10984 = vpop.f32.mrf.mxu0
  %v10985 = vadd.f32 0.0, %v10984
  %v10986 = vpop.f32.mrf.mxu0
  %10987 = vmatprep.mubr.f32.mxu0 0.0
  %10988 = vmatmul.mubr.f32.gmra.mxu0 %v6219
  %v10989 = vpop.f32.mrf.mxu0
  %v10990 = vadd.f32 0.0, %v10989
  %v10991 = vpop.f32.mrf.mxu0
  %10992 = vmatprep.mubr.f32.mxu0 0.0
  %10993 = vmatmul.mubr.f32.gmra.mxu0 %v6222
  %v10994 = vpop.f32.mrf.mxu0
  %v10995 = vadd.f32 0.0, %v10994
  %v10996 = vpop.f32.mrf.mxu0
  %10997 = vmatprep.mubr.f32.mxu0 0.0
  %10998 = vmatmul.mubr.f32.gmra.mxu0 %v7930
  %v10999 = vpop.f32.mrf.mxu0
  %v11000 = vadd.f32 0.0, %v10999
  %v11001 = vpop.f32.mrf.mxu0
  %11002 = vmatprep.mubr.f32.mxu0 0.0
  %11003 = vmatmul.mubr.f32.gmra.mxu0 %v7933
  %v11004 = vpop.f32.mrf.mxu0
  %v11005 = vadd.f32 0.0, %v11004
  %v11006 = vpop.f32.mrf.mxu0
  %11007 = vmatprep.mubr.f32.mxu0 0.0
  %11008 = vmatmul.mubr.f32.gmra.mxu0 %v7936
  %v11009 = vpop.f32.mrf.mxu0
  %v11010 = vadd.f32 0.0, %v11009
  %v11011 = vpop.f32.mrf.mxu0
  %11012 = vmatprep.mubr.f32.mxu0 0.0
  %11013 = vmatmul.mubr.f32.gmra.mxu0 %v7939
  %v11014 = vpop.f32.mrf.mxu0
  %v11015 = vadd.f32 0.0, %v11014
  %v11016 = vpop.f32.mrf.mxu0
  %11017 = vmatprep.mubr.f32.mxu0 0.0
  %11018 = vmatmul.mubr.f32.gmra.mxu0 %v7942
  %v11019 = vpop.f32.mrf.mxu0
  %v11020 = vadd.f32 0.0, %v11019
  %v11021 = vpop.f32.mrf.mxu0
  %11022 = vmatprep.mubr.f32.mxu0 0.0
  %11023 = vmatmul.mubr.f32.gmra.mxu0 %v7945
  %v11024 = vpop.f32.mrf.mxu0
  %v11025 = vadd.f32 0.0, %v11024
  %v11026 = vpop.f32.mrf.mxu0
  %11027 = vmatprep.mubr.f32.mxu0 0.0
  %11028 = vmatmul.mubr.f32.gmra.mxu0 %v7948
  %v11029 = vpop.f32.mrf.mxu0
  %v11030 = vadd.f32 0.0, %v11029
  %v11031 = vpop.f32.mrf.mxu0
  %11032 = vmatprep.mubr.f32.mxu0 0.0
  %11033 = vmatmul.mubr.f32.gmra.mxu0 %v7951
  %v11034 = vpop.f32.mrf.mxu0
  %v11035 = vadd.f32 0.0, %v11034
  %v11036 = vpop.f32.mrf.mxu0
  %11037 = vmatprep.mubr.f32.mxu0 0.0
  %11038 = vmatmul.mubr.f32.gmra.mxu0 %v7954
  %v11039 = vpop.f32.mrf.mxu0
  %v11040 = vadd.f32 0.0, %v11039
  %v11041 = vpop.f32.mrf.mxu0
  %11042 = vmatprep.mubr.f32.mxu0 0.0
  %11043 = vmatmul.mubr.f32.gmra.mxu0 %v7957
  %v11044 = vpop.f32.mrf.mxu0
  %v11045 = vadd.f32 0.0, %v11044
  %v11046 = vpop.f32.mrf.mxu0
  %11047 = vmatprep.mubr.f32.mxu0 0.0
  %11048 = vmatmul.mubr.f32.gmra.mxu0 %v7960
  %v11049 = vpop.f32.mrf.mxu0
  %v11050 = vadd.f32 0.0, %v11049
  %v11051 = vpop.f32.mrf.mxu0
  %11052 = vmatprep.mubr.f32.mxu0 0.0
  %11053 = vmatmul.mubr.f32.gmra.mxu0 %v7963
  %v11054 = vpop.f32.mrf.mxu0
  %v11055 = vadd.f32 0.0, %v11054
  %v11056 = vpop.f32.mrf.mxu0
  %11057 = vmatprep.mubr.f32.mxu0 0.0
  %11058 = vmatmul.mubr.f32.gmra.mxu0 %v7966
  %v11059 = vpop.f32.mrf.mxu0
  %v11060 = vadd.f32 0.0, %v11059
  %v11061 = vpop.f32.mrf.mxu0
  %11062 = vmatprep.mubr.f32.mxu0 0.0
  %11063 = vmatmul.mubr.f32.gmra.mxu0 %v7969
  %v11064 = vpop.f32.mrf.mxu0
  %v11065 = vadd.f32 0.0, %v11064
  %v11066 = vpop.f32.mrf.mxu0
  %11067 = vmatprep.mubr.f32.mxu0 0.0
  %11068 = vmatmul.mubr.f32.gmra.mxu0 %v7972
  %v11069 = vpop.f32.mrf.mxu0
  %v11070 = vadd.f32 0.0, %v11069
  %v11071 = vpop.f32.mrf.mxu0
  %11072 = vmatprep.mubr.f32.mxu0 0.0
  %11073 = vmatmul.mubr.f32.gmra.mxu0 %v7975
  %v11074 = vpop.f32.mrf.mxu0
  %v11075 = vadd.f32 0.0, %v11074
  %v11076 = vpop.f32.mrf.mxu0
  %11077 = vmatprep.mubr.f32.mxu0 0.0
  %11078 = vmatmul.mubr.f32.gmra.mxu0 %v9683
  %v11079 = vpop.f32.mrf.mxu0
  %v11080 = vadd.f32 0.0, %v11079
  %v11081 = vpop.f32.mrf.mxu0
  %11082 = vmatprep.mubr.f32.mxu0 0.0
  %11083 = vmatmul.mubr.f32.gmra.mxu0 %v9686
  %v11084 = vpop.f32.mrf.mxu0
  %v11085 = vadd.f32 0.0, %v11084
  %v11086 = vpop.f32.mrf.mxu0
  %11087 = vmatprep.mubr.f32.mxu0 0.0
  %11088 = vmatmul.mubr.f32.gmra.mxu0 %v9689
  %v11089 = vpop.f32.mrf.mxu0
  %v11090 = vadd.f32 0.0, %v11089
  %v11091 = vpop.f32.mrf.mxu0
  %11092 = vmatprep.mubr.f32.mxu0 0.0
  %11093 = vmatmul.mubr.f32.gmra.mxu0 %v9692
  %v11094 = vpop.f32.mrf.mxu0
  %v11095 = vadd.f32 0.0, %v11094
  %v11096 = vpop.f32.mrf.mxu0
  %11097 = vmatprep.mubr.f32.mxu0 0.0
  %11098 = vmatmul.mubr.f32.gmra.mxu0 %v9695
  %v11099 = vpop.f32.mrf.mxu0
  %v11100 = vadd.f32 0.0, %v11099
  %v11101 = vpop.f32.mrf.mxu0
  %11102 = vmatprep.mubr.f32.mxu0 0.0
  %11103 = vmatmul.mubr.f32.gmra.mxu0 %v9698
  %v11104 = vpop.f32.mrf.mxu0
  %v11105 = vadd.f32 0.0, %v11104
  %v11106 = vpop.f32.mrf.mxu0
  %11107 = vmatprep.mubr.f32.mxu0 0.0
  %11108 = vmatmul.mubr.f32.gmra.mxu0 %v9701
  %v11109 = vpop.f32.mrf.mxu0
  %v11110 = vadd.f32 0.0, %v11109
  %v11111 = vpop.f32.mrf.mxu0
  %11112 = vmatprep.mubr.f32.mxu0 0.0
  %11113 = vmatmul.mubr.f32.gmra.mxu0 %v9704
  %v11114 = vpop.f32.mrf.mxu0
  %v11115 = vadd.f32 0.0, %v11114
  %v11116 = vpop.f32.mrf.mxu0
  %11117 = vmatprep.mubr.f32.mxu0 0.0
  %11118 = vmatmul.mubr.f32.gmra.mxu0 %v9707
  %v11119 = vpop.f32.mrf.mxu0
  %v11120 = vadd.f32 0.0, %v11119
  %v11121 = vpop.f32.mrf.mxu0
  %11122 = vmatprep.mubr.f32.mxu0 0.0
  %11123 = vmatmul.mubr.f32.gmra.mxu0 %v9710
  %v11124 = vpop.f32.mrf.mxu0
  %v11125 = vadd.f32 0.0, %v11124
  %v11126 = vpop.f32.mrf.mxu0
  %11127 = vmatprep.mubr.f32.mxu0 0.0
  %11128 = vmatmul.mubr.f32.gmra.mxu0 %v9713
  %v11129 = vpop.f32.mrf.mxu0
  %v11130 = vadd.f32 0.0, %v11129
  %v11131 = vpop.f32.mrf.mxu0
  %11132 = vmatprep.mubr.f32.mxu0 0.0
  %11133 = vmatmul.mubr.f32.gmra.mxu0 %v9716
  %v11134 = vpop.f32.mrf.mxu0
  %v11135 = vadd.f32 0.0, %v11134
  %v11136 = vpop.f32.mrf.mxu0
  %11137 = vmatprep.mubr.f32.mxu0 0.0
  %11138 = vmatmul.mubr.f32.gmra.mxu0 %v9719
  %v11139 = vpop.f32.mrf.mxu0
  %v11140 = vadd.f32 0.0, %v11139
  %v11141 = vpop.f32.mrf.mxu0
  %11142 = vmatprep.mubr.f32.mxu0 0.0
  %11143 = vmatmul.mubr.f32.gmra.mxu0 %v9722
  %v11144 = vpop.f32.mrf.mxu0
  %v11145 = vadd.f32 0.0, %v11144
  %v11146 = vpop.f32.mrf.mxu0
  %11147 = vmatprep.mubr.f32.mxu0 0.0
  %11148 = vmatmul.mubr.f32.gmra.mxu0 %v9725
  %v11149 = vpop.f32.mrf.mxu0
  %v11150 = vadd.f32 0.0, %v11149
  %v11151 = vpop.f32.mrf.mxu0
  %11152 = vmatprep.mubr.f32.mxu0 0.0
  %11153 = vmatmul.mubr.f32.gmra.mxu0 %v9728
  %v11154 = vpop.f32.mrf.mxu0
  %v11155 = vadd.f32 0.0, %v11154
  %v11156 = vpop.f32.mrf.mxu0
  %11157 = vdwg.mxu0
  %v11158 = vadd.f32 %v9405, %v9800
  %v11159 = vadd.f32 %v9406, %v9805
  %v11160 = vadd.f32 %v9407, %v9810
  %v11161 = vadd.f32 %v9408, %v9815
  %v11162 = vadd.f32 %v9409, %v9820
  %v11163 = vadd.f32 %v9410, %v9825
  %v11164 = vadd.f32 %v9411, %v9830
  %v11165 = vadd.f32 %v9412, %v9835
  %v11166 = vadd.f32 %v9413, %v9840
  %v11167 = vadd.f32 %v9414, %v9845
  %v11168 = vadd.f32 %v9415, %v9850
  %v11169 = vadd.f32 %v9416, %v9855
  %v11170 = vadd.f32 %v9417, %v9860
  %v11171 = vadd.f32 %v9418, %v9865
  %v11172 = vadd.f32 %v9419, %v9870
  %v11173 = vadd.f32 %v9420, %v9875
  %v11174 = vadd.f32 %v9421, %v9880
  %v11175 = vadd.f32 %v9422, %v9885
  %v11176 = vadd.f32 %v9423, %v9890
  %v11177 = vadd.f32 %v9424, %v9895
  %v11178 = vadd.f32 %v9425, %v9900
  %v11179 = vadd.f32 %v9426, %v9905
  %v11180 = vadd.f32 %v9427, %v9910
  %v11181 = vadd.f32 %v9428, %v9915
  %v11182 = vadd.f32 %v9429, %v9920
  %v11183 = vadd.f32 %v9430, %v9925
  %v11184 = vadd.f32 %v9431, %v9930
  %v11185 = vadd.f32 %v9432, %v9935
  %v11186 = vadd.f32 %v9433, %v9940
  %v11187 = vadd.f32 %v9434, %v9945
  %v11188 = vadd.f32 %v9435, %v9950
  %v11189 = vadd.f32 %v9436, %v9955
  %v11190 = vadd.f32 %v9437, %v9960
  %v11191 = vadd.f32 %v9438, %v9965
  %v11192 = vadd.f32 %v9439, %v9970
  %v11193 = vadd.f32 %v9440, %v9975
  %v11194 = vadd.f32 %v9441, %v9980
  %v11195 = vadd.f32 %v9442, %v9985
  %v11196 = vadd.f32 %v9443, %v9990
  %v11197 = vadd.f32 %v9444, %v9995
  %v11198 = vadd.f32 %v9445, %v10000
  %v11199 = vadd.f32 %v9446, %v10005
  %v11200 = vadd.f32 %v9447, %v10010
  %v11201 = vadd.f32 %v9448, %v10015
  %v11202 = vadd.f32 %v9449, %v10020
  %v11203 = vadd.f32 %v9450, %v10025
  %v11204 = vadd.f32 %v9451, %v10030
  %v11205 = vadd.f32 %v9452, %v10035
  %v11206 = vadd.f32 %v9453, %v10040
  %v11207 = vadd.f32 %v9454, %v10045
  %v11208 = vadd.f32 %v9455, %v10050
  %v11209 = vadd.f32 %v9456, %v10055
  %v11210 = vadd.f32 %v9457, %v10060
  %v11211 = vadd.f32 %v9458, %v10065
  %v11212 = vadd.f32 %v9459, %v10070
  %v11213 = vadd.f32 %v9460, %v10075
  %v11214 = vadd.f32 %v9461, %v10080
  %v11215 = vadd.f32 %v9462, %v10085
  %v11216 = vadd.f32 %v9463, %v10090
  %v11217 = vadd.f32 %v9464, %v10095
  %v11218 = vadd.f32 %v9465, %v10100
  %v11219 = vadd.f32 %v9466, %v10105
  %v11220 = vadd.f32 %v9467, %v10110
  %v11221 = vadd.f32 %v9468, %v10115
  %v11222 = vadd.f32 %v9469, %v10120
  %v11223 = vadd.f32 %v9470, %v10125
  %v11224 = vadd.f32 %v9471, %v10130
  %v11225 = vadd.f32 %v9472, %v10135
  %v11226 = vadd.f32 %v9473, %v10140
  %v11227 = vadd.f32 %v9474, %v10145
  %v11228 = vadd.f32 %v9475, %v10150
  %v11229 = vadd.f32 %v9476, %v10155
  %v11230 = vadd.f32 %v9477, %v10160
  %v11231 = vadd.f32 %v9478, %v10165
  %v11232 = vadd.f32 %v9479, %v10170
  %v11233 = vadd.f32 %v9480, %v10175
  %v11234 = vadd.f32 %v9481, %v10180
  %v11235 = vadd.f32 %v9482, %v10185
  %v11236 = vadd.f32 %v9483, %v10190
  %v11237 = vadd.f32 %v9484, %v10195
  %v11238 = vadd.f32 %v9485, %v10200
  %v11239 = vadd.f32 %v9486, %v10205
  %v11240 = vadd.f32 %v9487, %v10210
  %v11241 = vadd.f32 %v9488, %v10215
  %v11242 = vadd.f32 %v9489, %v10220
  %v11243 = vadd.f32 %v9490, %v10225
  %v11244 = vadd.f32 %v9491, %v10230
  %v11245 = vadd.f32 %v9492, %v10235
  %v11246 = vadd.f32 %v9493, %v10240
  %v11247 = vadd.f32 %v9494, %v10245
  %v11248 = vadd.f32 %v9495, %v10250
  %v11249 = vadd.f32 %v9496, %v10255
  %v11250 = vadd.f32 %v9497, %v10260
  %v11251 = vadd.f32 %v9498, %v10265
  %v11252 = vadd.f32 %v9499, %v10270
  %v11253 = vadd.f32 %v9500, %v10275
  %v11254 = vadd.f32 %v9501, %v10280
  %v11255 = vadd.f32 %v9502, %v10285
  %v11256 = vadd.f32 %v9503, %v10290
  %v11257 = vadd.f32 %v9504, %v10295
  %v11258 = vadd.f32 %v9505, %v10300
  %v11259 = vadd.f32 %v9506, %v10305
  %v11260 = vadd.f32 %v9507, %v10310
  %v11261 = vadd.f32 %v9508, %v10315
  %v11262 = vadd.f32 %v9509, %v10320
  %v11263 = vadd.f32 %v9510, %v10325
  %v11264 = vadd.f32 %v9511, %v10330
  %v11265 = vadd.f32 %v9512, %v10335
  %v11266 = vadd.f32 %v9513, %v10340
  %v11267 = vadd.f32 %v9514, %v10345
  %v11268 = vadd.f32 %v9515, %v10350
  %v11269 = vadd.f32 %v9516, %v10355
  %v11270 = vadd.f32 %v9517, %v10360
  %v11271 = vadd.f32 %v9518, %v10365
  %v11272 = vadd.f32 %v9519, %v10370
  %v11273 = vadd.f32 %v9520, %v10375
  %v11274 = vadd.f32 %v9521, %v10380
  %v11275 = vadd.f32 %v9522, %v10385
  %v11276 = vadd.f32 %v9523, %v10390
  %v11277 = vadd.f32 %v9524, %v10395
  %v11278 = vadd.f32 %v9525, %v10400
  %v11279 = vadd.f32 %v9526, %v10405
  %v11280 = vadd.f32 %v9527, %v10410
  %v11281 = vadd.f32 %v9528, %v10415
  %v11282 = vadd.f32 %v9529, %v10420
  %v11283 = vadd.f32 %v9530, %v10425
  %v11284 = vadd.f32 %v9531, %v10430
  %v11285 = vadd.f32 %v9532, %v10435
  %v11286 = vadd.f32 %v9533, %v10440
  %v11287 = vadd.f32 %v9534, %v10445
  %v11288 = vadd.f32 %v9535, %v10450
  %v11289 = vadd.f32 %v9536, %v10455
  %v11290 = vadd.f32 %v9537, %v10460
  %v11291 = vadd.f32 %v9538, %v10465
  %v11292 = vadd.f32 %v9539, %v10470
  %v11293 = vadd.f32 %v9540, %v10475
  %v11294 = vadd.f32 %v9541, %v10480
  %v11295 = vadd.f32 %v9542, %v10485
  %v11296 = vadd.f32 %v9543, %v10490
  %v11297 = vadd.f32 %v9544, %v10495
  %v11298 = vadd.f32 %v9545, %v10500
  %v11299 = vadd.f32 %v9546, %v10505
  %v11300 = vadd.f32 %v9547, %v10510
  %v11301 = vadd.f32 %v9548, %v10515
  %v11302 = vadd.f32 %v9549, %v10520
  %v11303 = vadd.f32 %v9550, %v10525
  %v11304 = vadd.f32 %v9551, %v10530
  %v11305 = vadd.f32 %v9552, %v10535
  %v11306 = vadd.f32 %v9553, %v10540
  %v11307 = vadd.f32 %v9554, %v10545
  %v11308 = vadd.f32 %v9555, %v10550
  %v11309 = vadd.f32 %v9556, %v10555
  %v11310 = vadd.f32 %v9557, %v10560
  %v11311 = vadd.f32 %v9558, %v10565
  %v11312 = vadd.f32 %v9559, %v10570
  %v11313 = vadd.f32 %v9560, %v10575
  %v11314 = vadd.f32 %v9561, %v10580
  %v11315 = vadd.f32 %v9562, %v10585
  %v11316 = vadd.f32 %v9563, %v10590
  %v11317 = vadd.f32 %v9564, %v10595
  %v11318 = vadd.f32 %v9565, %v10600
  %v11319 = vadd.f32 %v9566, %v10605
  %v11320 = vadd.f32 %v9567, %v10610
  %v11321 = vadd.f32 %v9568, %v10615
  %v11322 = vadd.f32 %v9569, %v10620
  %v11323 = vadd.f32 %v9570, %v10625
  %v11324 = vadd.f32 %v9571, %v10630
  %v11325 = vadd.f32 %v9572, %v10635
  %v11326 = vadd.f32 %v9573, %v10640
  %v11327 = vadd.f32 %v9574, %v10645
  %v11328 = vadd.f32 %v9575, %v10650
  %v11329 = vadd.f32 %v9576, %v10655
  %v11330 = vadd.f32 %v9577, %v10660
  %v11331 = vadd.f32 %v9578, %v10665
  %v11332 = vadd.f32 %v9579, %v10670
  %v11333 = vadd.f32 %v9580, %v10675
  %v11334 = vadd.f32 %v9581, %v10680
  %v11335 = vadd.f32 %v9582, %v10685
  %v11336 = vadd.f32 %v9583, %v10690
  %v11337 = vadd.f32 %v9584, %v10695
  %v11338 = vadd.f32 %v9585, %v10700
  %v11339 = vadd.f32 %v9586, %v10705
  %v11340 = vadd.f32 %v9587, %v10710
  %v11341 = vadd.f32 %v9588, %v10715
  %v11342 = vadd.f32 %v9589, %v10720
  %v11343 = vadd.f32 %v9590, %v10725
  %v11344 = vadd.f32 %v9591, %v10730
  %v11345 = vadd.f32 %v9592, %v10735
  %v11346 = vadd.f32 %v9593, %v10740
  %v11347 = vadd.f32 %v9594, %v10745
  %v11348 = vadd.f32 %v9595, %v10750
  %v11349 = vadd.f32 %v9596, %v10755
  %v11350 = vadd.f32 %v9597, %v10760
  %v11351 = vadd.f32 %v9598, %v10765
  %v11352 = vadd.f32 %v9599, %v10770
  %v11353 = vadd.f32 %v9600, %v10775
  %v11354 = vadd.f32 %v9601, %v10780
  %v11355 = vadd.f32 %v9602, %v10785
  %v11356 = vadd.f32 %v9603, %v10790
  %v11357 = vadd.f32 %v9604, %v10795
  %v11358 = vadd.f32 %v9605, %v10800
  %v11359 = vadd.f32 %v9606, %v10805
  %v11360 = vadd.f32 %v9607, %v10810
  %v11361 = vadd.f32 %v9608, %v10815
  %v11362 = vadd.f32 %v9609, %v10820
  %v11363 = vadd.f32 %v9610, %v10825
  %v11364 = vadd.f32 %v9611, %v10830
  %v11365 = vadd.f32 %v9612, %v10835
  %v11366 = vadd.f32 %v9613, %v10840
  %v11367 = vadd.f32 %v9614, %v10845
  %v11368 = vadd.f32 %v9615, %v10850
  %v11369 = vadd.f32 %v9616, %v10855
  %v11370 = vadd.f32 %v9617, %v10860
  %v11371 = vadd.f32 %v9618, %v10865
  %v11372 = vadd.f32 %v9619, %v10870
  %v11373 = vadd.f32 %v9620, %v10875
  %v11374 = vadd.f32 %v9621, %v10880
  %v11375 = vadd.f32 %v9622, %v10885
  %v11376 = vadd.f32 %v9623, %v10890
  %v11377 = vadd.f32 %v9624, %v10895
  %v11378 = vadd.f32 %v9625, %v10900
  %v11379 = vadd.f32 %v9626, %v10905
  %v11380 = vadd.f32 %v9627, %v10910
  %v11381 = vadd.f32 %v9628, %v10915
  %v11382 = vadd.f32 %v9629, %v10920
  %v11383 = vadd.f32 %v9630, %v10925
  %v11384 = vadd.f32 %v9631, %v10930
  %v11385 = vadd.f32 %v9632, %v10935
  %v11386 = vadd.f32 %v9633, %v10940
  %v11387 = vadd.f32 %v9634, %v10945
  %v11388 = vadd.f32 %v9635, %v10950
  %v11389 = vadd.f32 %v9636, %v10955
  %v11390 = vadd.f32 %v9637, %v10960
  %v11391 = vadd.f32 %v9638, %v10965
  %v11392 = vadd.f32 %v9639, %v10970
  %v11393 = vadd.f32 %v9640, %v10975
  %v11394 = vadd.f32 %v9641, %v10980
  %v11395 = vadd.f32 %v9642, %v10985
  %v11396 = vadd.f32 %v9643, %v10990
  %v11397 = vadd.f32 %v9644, %v10995
  %v11398 = vadd.f32 %v9645, %v11000
  %v11399 = vadd.f32 %v9646, %v11005
  %v11400 = vadd.f32 %v9647, %v11010
  %v11401 = vadd.f32 %v9648, %v11015
  %v11402 = vadd.f32 %v9649, %v11020
  %v11403 = vadd.f32 %v9650, %v11025
  %v11404 = vadd.f32 %v9651, %v11030
  %v11405 = vadd.f32 %v9652, %v11035
  %v11406 = vadd.f32 %v9653, %v11040
  %v11407 = vadd.f32 %v9654, %v11045
  %v11408 = vadd.f32 %v9655, %v11050
  %v11409 = vadd.f32 %v9656, %v11055
  %v11410 = vadd.f32 %v9657, %v11060
  %v11411 = vadd.f32 %v9658, %v11065
  %v11412 = vadd.f32 %v9659, %v11070
  %v11413 = vadd.f32 %v9660, %v11075
  %v11414 = vadd.f32 %v9661, %v11080
  %v11415 = vadd.f32 %v9662, %v11085
  %v11416 = vadd.f32 %v9663, %v11090
  %v11417 = vadd.f32 %v9664, %v11095
  %v11418 = vadd.f32 %v9665, %v11100
  %v11419 = vadd.f32 %v9666, %v11105
  %v11420 = vadd.f32 %v9667, %v11110
  %v11421 = vadd.f32 %v9668, %v11115
  %v11422 = vadd.f32 %v9669, %v11120
  %v11423 = vadd.f32 %v9670, %v11125
  %v11424 = vadd.f32 %v9671, %v11130
  %v11425 = vadd.f32 %v9672, %v11135
  %v11426 = vadd.f32 %v9673, %v11140
  %v11427 = vadd.f32 %v9674, %v11145
  %v11428 = vadd.f32 %v9675, %v11150
  %v11429 = vadd.f32 %v9676, %v11155
  %vm11430 = vcmask 261120
  %v11431 = vsel %vm11430, %v11158, -inf
  %v11432 = vsel %vm11430, %v11174, -inf
  %v11433 = vmax.f32 %v11431, %v11432
  %v11434 = vsel %vm11430, %v11190, -inf
  %v11435 = vmax.f32 %v11433, %v11434
  %v11436 = vsel %vm11430, %v11206, -inf
  %v11437 = vmax.f32 %v11435, %v11436
  %v11438 = vsel %vm11430, %v11222, -inf
  %v11439 = vmax.f32 %v11437, %v11438
  %v11440 = vsel %vm11430, %v11238, -inf
  %v11441 = vmax.f32 %v11439, %v11440
  %v11442 = vsel %vm11430, %v11254, -inf
  %v11443 = vmax.f32 %v11441, %v11442
  %v11444 = vsel %vm11430, %v11270, -inf
  %v11445 = vmax.f32 %v11443, %v11444
  %v11446 = vsel %vm11430, %v11286, -inf
  %v11447 = vmax.f32 %v11445, %v11446
  %v11448 = vsel %vm11430, %v11302, -inf
  %v11449 = vmax.f32 %v11447, %v11448
  %v11450 = vsel %vm11430, %v11318, -inf
  %v11451 = vmax.f32 %v11449, %v11450
  %v11452 = vsel %vm11430, %v11334, -inf
  %v11453 = vmax.f32 %v11451, %v11452
  %v11454 = vsel %vm11430, %v11350, -inf
  %v11455 = vmax.f32 %v11453, %v11454
  %v11456 = vsel %vm11430, %v11366, -inf
  %v11457 = vmax.f32 %v11455, %v11456
  %v11458 = vsel %vm11430, %v11382, -inf
  %v11459 = vmax.f32 %v11457, %v11458
  %v11460 = vsel %vm11430, %v11398, -inf
  %v11461 = vmax.f32 %v11459, %v11460
  %v11462 = vsel %vm11430, %v11414, -inf
  %v11463 = vmax.f32 %v11461, %v11462
  %v11464 = vsel %vm11430, %v11159, -inf
  %v11465 = vsel %vm11430, %v11175, -inf
  %v11466 = vmax.f32 %v11464, %v11465
  %v11467 = vsel %vm11430, %v11191, -inf
  %v11468 = vmax.f32 %v11466, %v11467
  %v11469 = vsel %vm11430, %v11207, -inf
  %v11470 = vmax.f32 %v11468, %v11469
  %v11471 = vsel %vm11430, %v11223, -inf
  %v11472 = vmax.f32 %v11470, %v11471
  %v11473 = vsel %vm11430, %v11239, -inf
  %v11474 = vmax.f32 %v11472, %v11473
  %v11475 = vsel %vm11430, %v11255, -inf
  %v11476 = vmax.f32 %v11474, %v11475
  %v11477 = vsel %vm11430, %v11271, -inf
  %v11478 = vmax.f32 %v11476, %v11477
  %v11479 = vsel %vm11430, %v11287, -inf
  %v11480 = vmax.f32 %v11478, %v11479
  %v11481 = vsel %vm11430, %v11303, -inf
  %v11482 = vmax.f32 %v11480, %v11481
  %v11483 = vsel %vm11430, %v11319, -inf
  %v11484 = vmax.f32 %v11482, %v11483
  %v11485 = vsel %vm11430, %v11335, -inf
  %v11486 = vmax.f32 %v11484, %v11485
  %v11487 = vsel %vm11430, %v11351, -inf
  %v11488 = vmax.f32 %v11486, %v11487
  %v11489 = vsel %vm11430, %v11367, -inf
  %v11490 = vmax.f32 %v11488, %v11489
  %v11491 = vsel %vm11430, %v11383, -inf
  %v11492 = vmax.f32 %v11490, %v11491
  %v11493 = vsel %vm11430, %v11399, -inf
  %v11494 = vmax.f32 %v11492, %v11493
  %v11495 = vsel %vm11430, %v11415, -inf
  %v11496 = vmax.f32 %v11494, %v11495
  %v11497 = vsel %vm11430, %v11160, -inf
  %v11498 = vsel %vm11430, %v11176, -inf
  %v11499 = vmax.f32 %v11497, %v11498
  %v11500 = vsel %vm11430, %v11192, -inf
  %v11501 = vmax.f32 %v11499, %v11500
  %v11502 = vsel %vm11430, %v11208, -inf
  %v11503 = vmax.f32 %v11501, %v11502
  %v11504 = vsel %vm11430, %v11224, -inf
  %v11505 = vmax.f32 %v11503, %v11504
  %v11506 = vsel %vm11430, %v11240, -inf
  %v11507 = vmax.f32 %v11505, %v11506
  %v11508 = vsel %vm11430, %v11256, -inf
  %v11509 = vmax.f32 %v11507, %v11508
  %v11510 = vsel %vm11430, %v11272, -inf
  %v11511 = vmax.f32 %v11509, %v11510
  %v11512 = vsel %vm11430, %v11288, -inf
  %v11513 = vmax.f32 %v11511, %v11512
  %v11514 = vsel %vm11430, %v11304, -inf
  %v11515 = vmax.f32 %v11513, %v11514
  %v11516 = vsel %vm11430, %v11320, -inf
  %v11517 = vmax.f32 %v11515, %v11516
  %v11518 = vsel %vm11430, %v11336, -inf
  %v11519 = vmax.f32 %v11517, %v11518
  %v11520 = vsel %vm11430, %v11352, -inf
  %v11521 = vmax.f32 %v11519, %v11520
  %v11522 = vsel %vm11430, %v11368, -inf
  %v11523 = vmax.f32 %v11521, %v11522
  %v11524 = vsel %vm11430, %v11384, -inf
  %v11525 = vmax.f32 %v11523, %v11524
  %v11526 = vsel %vm11430, %v11400, -inf
  %v11527 = vmax.f32 %v11525, %v11526
  %v11528 = vsel %vm11430, %v11416, -inf
  %v11529 = vmax.f32 %v11527, %v11528
  %v11530 = vsel %vm11430, %v11161, -inf
  %v11531 = vsel %vm11430, %v11177, -inf
  %v11532 = vmax.f32 %v11530, %v11531
  %v11533 = vsel %vm11430, %v11193, -inf
  %v11534 = vmax.f32 %v11532, %v11533
  %v11535 = vsel %vm11430, %v11209, -inf
  %v11536 = vmax.f32 %v11534, %v11535
  %v11537 = vsel %vm11430, %v11225, -inf
  %v11538 = vmax.f32 %v11536, %v11537
  %v11539 = vsel %vm11430, %v11241, -inf
  %v11540 = vmax.f32 %v11538, %v11539
  %v11541 = vsel %vm11430, %v11257, -inf
  %v11542 = vmax.f32 %v11540, %v11541
  %v11543 = vsel %vm11430, %v11273, -inf
  %v11544 = vmax.f32 %v11542, %v11543
  %v11545 = vsel %vm11430, %v11289, -inf
  %v11546 = vmax.f32 %v11544, %v11545
  %v11547 = vsel %vm11430, %v11305, -inf
  %v11548 = vmax.f32 %v11546, %v11547
  %v11549 = vsel %vm11430, %v11321, -inf
  %v11550 = vmax.f32 %v11548, %v11549
  %v11551 = vsel %vm11430, %v11337, -inf
  %v11552 = vmax.f32 %v11550, %v11551
  %v11553 = vsel %vm11430, %v11353, -inf
  %v11554 = vmax.f32 %v11552, %v11553
  %v11555 = vsel %vm11430, %v11369, -inf
  %v11556 = vmax.f32 %v11554, %v11555
  %v11557 = vsel %vm11430, %v11385, -inf
  %v11558 = vmax.f32 %v11556, %v11557
  %v11559 = vsel %vm11430, %v11401, -inf
  %v11560 = vmax.f32 %v11558, %v11559
  %v11561 = vsel %vm11430, %v11417, -inf
  %v11562 = vmax.f32 %v11560, %v11561
  %v11563 = vsel %vm11430, %v11162, -inf
  %v11564 = vsel %vm11430, %v11178, -inf
  %v11565 = vmax.f32 %v11563, %v11564
  %v11566 = vsel %vm11430, %v11194, -inf
  %v11567 = vmax.f32 %v11565, %v11566
  %v11568 = vsel %vm11430, %v11210, -inf
  %v11569 = vmax.f32 %v11567, %v11568
  %v11570 = vsel %vm11430, %v11226, -inf
  %v11571 = vmax.f32 %v11569, %v11570
  %v11572 = vsel %vm11430, %v11242, -inf
  %v11573 = vmax.f32 %v11571, %v11572
  %v11574 = vsel %vm11430, %v11258, -inf
  %v11575 = vmax.f32 %v11573, %v11574
  %v11576 = vsel %vm11430, %v11274, -inf
  %v11577 = vmax.f32 %v11575, %v11576
  %v11578 = vsel %vm11430, %v11290, -inf
  %v11579 = vmax.f32 %v11577, %v11578
  %v11580 = vsel %vm11430, %v11306, -inf
  %v11581 = vmax.f32 %v11579, %v11580
  %v11582 = vsel %vm11430, %v11322, -inf
  %v11583 = vmax.f32 %v11581, %v11582
  %v11584 = vsel %vm11430, %v11338, -inf
  %v11585 = vmax.f32 %v11583, %v11584
  %v11586 = vsel %vm11430, %v11354, -inf
  %v11587 = vmax.f32 %v11585, %v11586
  %v11588 = vsel %vm11430, %v11370, -inf
  %v11589 = vmax.f32 %v11587, %v11588
  %v11590 = vsel %vm11430, %v11386, -inf
  %v11591 = vmax.f32 %v11589, %v11590
  %v11592 = vsel %vm11430, %v11402, -inf
  %v11593 = vmax.f32 %v11591, %v11592
  %v11594 = vsel %vm11430, %v11418, -inf
  %v11595 = vmax.f32 %v11593, %v11594
  %v11596 = vsel %vm11430, %v11163, -inf
  %v11597 = vsel %vm11430, %v11179, -inf
  %v11598 = vmax.f32 %v11596, %v11597
  %v11599 = vsel %vm11430, %v11195, -inf
  %v11600 = vmax.f32 %v11598, %v11599
  %v11601 = vsel %vm11430, %v11211, -inf
  %v11602 = vmax.f32 %v11600, %v11601
  %v11603 = vsel %vm11430, %v11227, -inf
  %v11604 = vmax.f32 %v11602, %v11603
  %v11605 = vsel %vm11430, %v11243, -inf
  %v11606 = vmax.f32 %v11604, %v11605
  %v11607 = vsel %vm11430, %v11259, -inf
  %v11608 = vmax.f32 %v11606, %v11607
  %v11609 = vsel %vm11430, %v11275, -inf
  %v11610 = vmax.f32 %v11608, %v11609
  %v11611 = vsel %vm11430, %v11291, -inf
  %v11612 = vmax.f32 %v11610, %v11611
  %v11613 = vsel %vm11430, %v11307, -inf
  %v11614 = vmax.f32 %v11612, %v11613
  %v11615 = vsel %vm11430, %v11323, -inf
  %v11616 = vmax.f32 %v11614, %v11615
  %v11617 = vsel %vm11430, %v11339, -inf
  %v11618 = vmax.f32 %v11616, %v11617
  %v11619 = vsel %vm11430, %v11355, -inf
  %v11620 = vmax.f32 %v11618, %v11619
  %v11621 = vsel %vm11430, %v11371, -inf
  %v11622 = vmax.f32 %v11620, %v11621
  %v11623 = vsel %vm11430, %v11387, -inf
  %v11624 = vmax.f32 %v11622, %v11623
  %v11625 = vsel %vm11430, %v11403, -inf
  %v11626 = vmax.f32 %v11624, %v11625
  %v11627 = vsel %vm11430, %v11419, -inf
  %v11628 = vmax.f32 %v11626, %v11627
  %v11629 = vsel %vm11430, %v11164, -inf
  %v11630 = vsel %vm11430, %v11180, -inf
  %v11631 = vmax.f32 %v11629, %v11630
  %v11632 = vsel %vm11430, %v11196, -inf
  %v11633 = vmax.f32 %v11631, %v11632
  %v11634 = vsel %vm11430, %v11212, -inf
  %v11635 = vmax.f32 %v11633, %v11634
  %v11636 = vsel %vm11430, %v11228, -inf
  %v11637 = vmax.f32 %v11635, %v11636
  %v11638 = vsel %vm11430, %v11244, -inf
  %v11639 = vmax.f32 %v11637, %v11638
  %v11640 = vsel %vm11430, %v11260, -inf
  %v11641 = vmax.f32 %v11639, %v11640
  %v11642 = vsel %vm11430, %v11276, -inf
  %v11643 = vmax.f32 %v11641, %v11642
  %v11644 = vsel %vm11430, %v11292, -inf
  %v11645 = vmax.f32 %v11643, %v11644
  %v11646 = vsel %vm11430, %v11308, -inf
  %v11647 = vmax.f32 %v11645, %v11646
  %v11648 = vsel %vm11430, %v11324, -inf
  %v11649 = vmax.f32 %v11647, %v11648
  %v11650 = vsel %vm11430, %v11340, -inf
  %v11651 = vmax.f32 %v11649, %v11650
  %v11652 = vsel %vm11430, %v11356, -inf
  %v11653 = vmax.f32 %v11651, %v11652
  %v11654 = vsel %vm11430, %v11372, -inf
  %v11655 = vmax.f32 %v11653, %v11654
  %v11656 = vsel %vm11430, %v11388, -inf
  %v11657 = vmax.f32 %v11655, %v11656
  %v11658 = vsel %vm11430, %v11404, -inf
  %v11659 = vmax.f32 %v11657, %v11658
  %v11660 = vsel %vm11430, %v11420, -inf
  %v11661 = vmax.f32 %v11659, %v11660
  %v11662 = vsel %vm11430, %v11165, -inf
  %v11663 = vsel %vm11430, %v11181, -inf
  %v11664 = vmax.f32 %v11662, %v11663
  %v11665 = vsel %vm11430, %v11197, -inf
  %v11666 = vmax.f32 %v11664, %v11665
  %v11667 = vsel %vm11430, %v11213, -inf
  %v11668 = vmax.f32 %v11666, %v11667
  %v11669 = vsel %vm11430, %v11229, -inf
  %v11670 = vmax.f32 %v11668, %v11669
  %v11671 = vsel %vm11430, %v11245, -inf
  %v11672 = vmax.f32 %v11670, %v11671
  %v11673 = vsel %vm11430, %v11261, -inf
  %v11674 = vmax.f32 %v11672, %v11673
  %v11675 = vsel %vm11430, %v11277, -inf
  %v11676 = vmax.f32 %v11674, %v11675
  %v11677 = vsel %vm11430, %v11293, -inf
  %v11678 = vmax.f32 %v11676, %v11677
  %v11679 = vsel %vm11430, %v11309, -inf
  %v11680 = vmax.f32 %v11678, %v11679
  %v11681 = vsel %vm11430, %v11325, -inf
  %v11682 = vmax.f32 %v11680, %v11681
  %v11683 = vsel %vm11430, %v11341, -inf
  %v11684 = vmax.f32 %v11682, %v11683
  %v11685 = vsel %vm11430, %v11357, -inf
  %v11686 = vmax.f32 %v11684, %v11685
  %v11687 = vsel %vm11430, %v11373, -inf
  %v11688 = vmax.f32 %v11686, %v11687
  %v11689 = vsel %vm11430, %v11389, -inf
  %v11690 = vmax.f32 %v11688, %v11689
  %v11691 = vsel %vm11430, %v11405, -inf
  %v11692 = vmax.f32 %v11690, %v11691
  %v11693 = vsel %vm11430, %v11421, -inf
  %v11694 = vmax.f32 %v11692, %v11693
  %v11695 = vsel %vm11430, %v11166, -inf
  %v11696 = vsel %vm11430, %v11182, -inf
  %v11697 = vmax.f32 %v11695, %v11696
  %v11698 = vsel %vm11430, %v11198, -inf
  %v11699 = vmax.f32 %v11697, %v11698
  %v11700 = vsel %vm11430, %v11214, -inf
  %v11701 = vmax.f32 %v11699, %v11700
  %v11702 = vsel %vm11430, %v11230, -inf
  %v11703 = vmax.f32 %v11701, %v11702
  %v11704 = vsel %vm11430, %v11246, -inf
  %v11705 = vmax.f32 %v11703, %v11704
  %v11706 = vsel %vm11430, %v11262, -inf
  %v11707 = vmax.f32 %v11705, %v11706
  %v11708 = vsel %vm11430, %v11278, -inf
  %v11709 = vmax.f32 %v11707, %v11708
  %v11710 = vsel %vm11430, %v11294, -inf
  %v11711 = vmax.f32 %v11709, %v11710
  %v11712 = vsel %vm11430, %v11310, -inf
  %v11713 = vmax.f32 %v11711, %v11712
  %v11714 = vsel %vm11430, %v11326, -inf
  %v11715 = vmax.f32 %v11713, %v11714
  %v11716 = vsel %vm11430, %v11342, -inf
  %v11717 = vmax.f32 %v11715, %v11716
  %v11718 = vsel %vm11430, %v11358, -inf
  %v11719 = vmax.f32 %v11717, %v11718
  %v11720 = vsel %vm11430, %v11374, -inf
  %v11721 = vmax.f32 %v11719, %v11720
  %v11722 = vsel %vm11430, %v11390, -inf
  %v11723 = vmax.f32 %v11721, %v11722
  %v11724 = vsel %vm11430, %v11406, -inf
  %v11725 = vmax.f32 %v11723, %v11724
  %v11726 = vsel %vm11430, %v11422, -inf
  %v11727 = vmax.f32 %v11725, %v11726
  %v11728 = vsel %vm11430, %v11167, -inf
  %v11729 = vsel %vm11430, %v11183, -inf
  %v11730 = vmax.f32 %v11728, %v11729
  %v11731 = vsel %vm11430, %v11199, -inf
  %v11732 = vmax.f32 %v11730, %v11731
  %v11733 = vsel %vm11430, %v11215, -inf
  %v11734 = vmax.f32 %v11732, %v11733
  %v11735 = vsel %vm11430, %v11231, -inf
  %v11736 = vmax.f32 %v11734, %v11735
  %v11737 = vsel %vm11430, %v11247, -inf
  %v11738 = vmax.f32 %v11736, %v11737
  %v11739 = vsel %vm11430, %v11263, -inf
  %v11740 = vmax.f32 %v11738, %v11739
  %v11741 = vsel %vm11430, %v11279, -inf
  %v11742 = vmax.f32 %v11740, %v11741
  %v11743 = vsel %vm11430, %v11295, -inf
  %v11744 = vmax.f32 %v11742, %v11743
  %v11745 = vsel %vm11430, %v11311, -inf
  %v11746 = vmax.f32 %v11744, %v11745
  %v11747 = vsel %vm11430, %v11327, -inf
  %v11748 = vmax.f32 %v11746, %v11747
  %v11749 = vsel %vm11430, %v11343, -inf
  %v11750 = vmax.f32 %v11748, %v11749
  %v11751 = vsel %vm11430, %v11359, -inf
  %v11752 = vmax.f32 %v11750, %v11751
  %v11753 = vsel %vm11430, %v11375, -inf
  %v11754 = vmax.f32 %v11752, %v11753
  %v11755 = vsel %vm11430, %v11391, -inf
  %v11756 = vmax.f32 %v11754, %v11755
  %v11757 = vsel %vm11430, %v11407, -inf
  %v11758 = vmax.f32 %v11756, %v11757
  %v11759 = vsel %vm11430, %v11423, -inf
  %v11760 = vmax.f32 %v11758, %v11759
  %v11761 = vsel %vm11430, %v11168, -inf
  %v11762 = vsel %vm11430, %v11184, -inf
  %v11763 = vmax.f32 %v11761, %v11762
  %v11764 = vsel %vm11430, %v11200, -inf
  %v11765 = vmax.f32 %v11763, %v11764
  %v11766 = vsel %vm11430, %v11216, -inf
  %v11767 = vmax.f32 %v11765, %v11766
  %v11768 = vsel %vm11430, %v11232, -inf
  %v11769 = vmax.f32 %v11767, %v11768
  %v11770 = vsel %vm11430, %v11248, -inf
  %v11771 = vmax.f32 %v11769, %v11770
  %v11772 = vsel %vm11430, %v11264, -inf
  %v11773 = vmax.f32 %v11771, %v11772
  %v11774 = vsel %vm11430, %v11280, -inf
  %v11775 = vmax.f32 %v11773, %v11774
  %v11776 = vsel %vm11430, %v11296, -inf
  %v11777 = vmax.f32 %v11775, %v11776
  %v11778 = vsel %vm11430, %v11312, -inf
  %v11779 = vmax.f32 %v11777, %v11778
  %v11780 = vsel %vm11430, %v11328, -inf
  %v11781 = vmax.f32 %v11779, %v11780
  %v11782 = vsel %vm11430, %v11344, -inf
  %v11783 = vmax.f32 %v11781, %v11782
  %v11784 = vsel %vm11430, %v11360, -inf
  %v11785 = vmax.f32 %v11783, %v11784
  %v11786 = vsel %vm11430, %v11376, -inf
  %v11787 = vmax.f32 %v11785, %v11786
  %v11788 = vsel %vm11430, %v11392, -inf
  %v11789 = vmax.f32 %v11787, %v11788
  %v11790 = vsel %vm11430, %v11408, -inf
  %v11791 = vmax.f32 %v11789, %v11790
  %v11792 = vsel %vm11430, %v11424, -inf
  %v11793 = vmax.f32 %v11791, %v11792
  %v11794 = vsel %vm11430, %v11169, -inf
  %v11795 = vsel %vm11430, %v11185, -inf
  %v11796 = vmax.f32 %v11794, %v11795
  %v11797 = vsel %vm11430, %v11201, -inf
  %v11798 = vmax.f32 %v11796, %v11797
  %v11799 = vsel %vm11430, %v11217, -inf
  %v11800 = vmax.f32 %v11798, %v11799
  %v11801 = vsel %vm11430, %v11233, -inf
  %v11802 = vmax.f32 %v11800, %v11801
  %v11803 = vsel %vm11430, %v11249, -inf
  %v11804 = vmax.f32 %v11802, %v11803
  %v11805 = vsel %vm11430, %v11265, -inf
  %v11806 = vmax.f32 %v11804, %v11805
  %v11807 = vsel %vm11430, %v11281, -inf
  %v11808 = vmax.f32 %v11806, %v11807
  %v11809 = vsel %vm11430, %v11297, -inf
  %v11810 = vmax.f32 %v11808, %v11809
  %v11811 = vsel %vm11430, %v11313, -inf
  %v11812 = vmax.f32 %v11810, %v11811
  %v11813 = vsel %vm11430, %v11329, -inf
  %v11814 = vmax.f32 %v11812, %v11813
  %v11815 = vsel %vm11430, %v11345, -inf
  %v11816 = vmax.f32 %v11814, %v11815
  %v11817 = vsel %vm11430, %v11361, -inf
  %v11818 = vmax.f32 %v11816, %v11817
  %v11819 = vsel %vm11430, %v11377, -inf
  %v11820 = vmax.f32 %v11818, %v11819
  %v11821 = vsel %vm11430, %v11393, -inf
  %v11822 = vmax.f32 %v11820, %v11821
  %v11823 = vsel %vm11430, %v11409, -inf
  %v11824 = vmax.f32 %v11822, %v11823
  %v11825 = vsel %vm11430, %v11425, -inf
  %v11826 = vmax.f32 %v11824, %v11825
  %v11827 = vsel %vm11430, %v11170, -inf
  %v11828 = vsel %vm11430, %v11186, -inf
  %v11829 = vmax.f32 %v11827, %v11828
  %v11830 = vsel %vm11430, %v11202, -inf
  %v11831 = vmax.f32 %v11829, %v11830
  %v11832 = vsel %vm11430, %v11218, -inf
  %v11833 = vmax.f32 %v11831, %v11832
  %v11834 = vsel %vm11430, %v11234, -inf
  %v11835 = vmax.f32 %v11833, %v11834
  %v11836 = vsel %vm11430, %v11250, -inf
  %v11837 = vmax.f32 %v11835, %v11836
  %v11838 = vsel %vm11430, %v11266, -inf
  %v11839 = vmax.f32 %v11837, %v11838
  %v11840 = vsel %vm11430, %v11282, -inf
  %v11841 = vmax.f32 %v11839, %v11840
  %v11842 = vsel %vm11430, %v11298, -inf
  %v11843 = vmax.f32 %v11841, %v11842
  %v11844 = vsel %vm11430, %v11314, -inf
  %v11845 = vmax.f32 %v11843, %v11844
  %v11846 = vsel %vm11430, %v11330, -inf
  %v11847 = vmax.f32 %v11845, %v11846
  %v11848 = vsel %vm11430, %v11346, -inf
  %v11849 = vmax.f32 %v11847, %v11848
  %v11850 = vsel %vm11430, %v11362, -inf
  %v11851 = vmax.f32 %v11849, %v11850
  %v11852 = vsel %vm11430, %v11378, -inf
  %v11853 = vmax.f32 %v11851, %v11852
  %v11854 = vsel %vm11430, %v11394, -inf
  %v11855 = vmax.f32 %v11853, %v11854
  %v11856 = vsel %vm11430, %v11410, -inf
  %v11857 = vmax.f32 %v11855, %v11856
  %v11858 = vsel %vm11430, %v11426, -inf
  %v11859 = vmax.f32 %v11857, %v11858
  %v11860 = vsel %vm11430, %v11171, -inf
  %v11861 = vsel %vm11430, %v11187, -inf
  %v11862 = vmax.f32 %v11860, %v11861
  %v11863 = vsel %vm11430, %v11203, -inf
  %v11864 = vmax.f32 %v11862, %v11863
  %v11865 = vsel %vm11430, %v11219, -inf
  %v11866 = vmax.f32 %v11864, %v11865
  %v11867 = vsel %vm11430, %v11235, -inf
  %v11868 = vmax.f32 %v11866, %v11867
  %v11869 = vsel %vm11430, %v11251, -inf
  %v11870 = vmax.f32 %v11868, %v11869
  %v11871 = vsel %vm11430, %v11267, -inf
  %v11872 = vmax.f32 %v11870, %v11871
  %v11873 = vsel %vm11430, %v11283, -inf
  %v11874 = vmax.f32 %v11872, %v11873
  %v11875 = vsel %vm11430, %v11299, -inf
  %v11876 = vmax.f32 %v11874, %v11875
  %v11877 = vsel %vm11430, %v11315, -inf
  %v11878 = vmax.f32 %v11876, %v11877
  %v11879 = vsel %vm11430, %v11331, -inf
  %v11880 = vmax.f32 %v11878, %v11879
  %v11881 = vsel %vm11430, %v11347, -inf
  %v11882 = vmax.f32 %v11880, %v11881
  %v11883 = vsel %vm11430, %v11363, -inf
  %v11884 = vmax.f32 %v11882, %v11883
  %v11885 = vsel %vm11430, %v11379, -inf
  %v11886 = vmax.f32 %v11884, %v11885
  %v11887 = vsel %vm11430, %v11395, -inf
  %v11888 = vmax.f32 %v11886, %v11887
  %v11889 = vsel %vm11430, %v11411, -inf
  %v11890 = vmax.f32 %v11888, %v11889
  %v11891 = vsel %vm11430, %v11427, -inf
  %v11892 = vmax.f32 %v11890, %v11891
  %v11893 = vsel %vm11430, %v11172, -inf
  %v11894 = vsel %vm11430, %v11188, -inf
  %v11895 = vmax.f32 %v11893, %v11894
  %v11896 = vsel %vm11430, %v11204, -inf
  %v11897 = vmax.f32 %v11895, %v11896
  %v11898 = vsel %vm11430, %v11220, -inf
  %v11899 = vmax.f32 %v11897, %v11898
  %v11900 = vsel %vm11430, %v11236, -inf
  %v11901 = vmax.f32 %v11899, %v11900
  %v11902 = vsel %vm11430, %v11252, -inf
  %v11903 = vmax.f32 %v11901, %v11902
  %v11904 = vsel %vm11430, %v11268, -inf
  %v11905 = vmax.f32 %v11903, %v11904
  %v11906 = vsel %vm11430, %v11284, -inf
  %v11907 = vmax.f32 %v11905, %v11906
  %v11908 = vsel %vm11430, %v11300, -inf
  %v11909 = vmax.f32 %v11907, %v11908
  %v11910 = vsel %vm11430, %v11316, -inf
  %v11911 = vmax.f32 %v11909, %v11910
  %v11912 = vsel %vm11430, %v11332, -inf
  %v11913 = vmax.f32 %v11911, %v11912
  %v11914 = vsel %vm11430, %v11348, -inf
  %v11915 = vmax.f32 %v11913, %v11914
  %v11916 = vsel %vm11430, %v11364, -inf
  %v11917 = vmax.f32 %v11915, %v11916
  %v11918 = vsel %vm11430, %v11380, -inf
  %v11919 = vmax.f32 %v11917, %v11918
  %v11920 = vsel %vm11430, %v11396, -inf
  %v11921 = vmax.f32 %v11919, %v11920
  %v11922 = vsel %vm11430, %v11412, -inf
  %v11923 = vmax.f32 %v11921, %v11922
  %v11924 = vsel %vm11430, %v11428, -inf
  %v11925 = vmax.f32 %v11923, %v11924
  %v11926 = vsel %vm11430, %v11173, -inf
  %v11927 = vsel %vm11430, %v11189, -inf
  %v11928 = vmax.f32 %v11926, %v11927
  %v11929 = vsel %vm11430, %v11205, -inf
  %v11930 = vmax.f32 %v11928, %v11929
  %v11931 = vsel %vm11430, %v11221, -inf
  %v11932 = vmax.f32 %v11930, %v11931
  %v11933 = vsel %vm11430, %v11237, -inf
  %v11934 = vmax.f32 %v11932, %v11933
  %v11935 = vsel %vm11430, %v11253, -inf
  %v11936 = vmax.f32 %v11934, %v11935
  %v11937 = vsel %vm11430, %v11269, -inf
  %v11938 = vmax.f32 %v11936, %v11937
  %v11939 = vsel %vm11430, %v11285, -inf
  %v11940 = vmax.f32 %v11938, %v11939
  %v11941 = vsel %vm11430, %v11301, -inf
  %v11942 = vmax.f32 %v11940, %v11941
  %v11943 = vsel %vm11430, %v11317, -inf
  %v11944 = vmax.f32 %v11942, %v11943
  %v11945 = vsel %vm11430, %v11333, -inf
  %v11946 = vmax.f32 %v11944, %v11945
  %v11947 = vsel %vm11430, %v11349, -inf
  %v11948 = vmax.f32 %v11946, %v11947
  %v11949 = vsel %vm11430, %v11365, -inf
  %v11950 = vmax.f32 %v11948, %v11949
  %v11951 = vsel %vm11430, %v11381, -inf
  %v11952 = vmax.f32 %v11950, %v11951
  %v11953 = vsel %vm11430, %v11397, -inf
  %v11954 = vmax.f32 %v11952, %v11953
  %v11955 = vsel %vm11430, %v11413, -inf
  %v11956 = vmax.f32 %v11954, %v11955
  %v11957 = vsel %vm11430, %v11429, -inf
  %v11958 = vmax.f32 %v11956, %v11957
  %v11959 = vld [vmem:[%s2] sm:$0x1]
  %v11961 = vlaneseq
  %v11962 = vshrl.u32 %v11961, 7
  %v11963 = vsub.s32 0, %v11962
  %v11964 = vrot.slane %v11959, %v11963
  %v11966 = vadd.f32 %v11463, %v11964
  %v11967 = vadd.f32 %v11496, %v11964
  %v11968 = vadd.f32 %v11529, %v11964
  %v11969 = vadd.f32 %v11562, %v11964
  %v11970 = vadd.f32 %v11595, %v11964
  %v11971 = vadd.f32 %v11628, %v11964
  %v11972 = vadd.f32 %v11661, %v11964
  %v11973 = vadd.f32 %v11694, %v11964
  %v11974 = vadd.f32 %v11727, %v11964
  %v11975 = vadd.f32 %v11760, %v11964
  %v11976 = vadd.f32 %v11793, %v11964
  %v11977 = vadd.f32 %v11826, %v11964
  %v11978 = vadd.f32 %v11859, %v11964
  %v11979 = vadd.f32 %v11892, %v11964
  %v11980 = vadd.f32 %v11925, %v11964
  %v11981 = vadd.f32 %v11958, %v11964
  %v11982 = vmax.f32 %v11966, 0.0
  %v11983 = vmax.f32 %v11967, 0.0
  %v11984 = vmax.f32 %v11968, 0.0
  %v11985 = vmax.f32 %v11969, 0.0
  %v11986 = vmax.f32 %v11970, 0.0
  %v11987 = vmax.f32 %v11971, 0.0
  %v11988 = vmax.f32 %v11972, 0.0
  %v11989 = vmax.f32 %v11973, 0.0
  %v11990 = vmax.f32 %v11974, 0.0
  %v11991 = vmax.f32 %v11975, 0.0
  %v11992 = vmax.f32 %v11976, 0.0
  %v11993 = vmax.f32 %v11977, 0.0
  %v11994 = vmax.f32 %v11978, 0.0
  %v11995 = vmax.f32 %v11979, 0.0
  %v11996 = vmax.f32 %v11980, 0.0
  %v11997 = vmax.f32 %v11981, 0.0
  %v11998 = vld [vmem:[%s3] sm:$0xff]
  %v11999 = vld [vmem:[%s3 + $0x8] sm:$0xff]
  %v12000 = vld [vmem:[%s3 + $0x10] sm:$0xff]
  %v12001 = vld [vmem:[%s3 + $0x18] sm:$0xff]
  %v12002 = vld [vmem:[%s4] sm:$0x1]
  %v12004 = vlaneseq
  %v12005 = vshrl.u32 %v12004, 7
  %v12006 = vsub.s32 0, %v12005
  %v12007 = vrot.slane %v12002, %v12006
  %v12010 = vsel %vm11430, %v11982, 0
  %v12013 = vsel %vm11430, %v11983, 0
  %v12016 = vsel %vm11430, %v11984, 0
  %v12019 = vsel %vm11430, %v11985, 0
  %v12022 = vsel %vm11430, %v11986, 0
  %v12025 = vsel %vm11430, %v11987, 0
  %v12028 = vsel %vm11430, %v11988, 0
  %v12031 = vsel %vm11430, %v11989, 0
  %v12034 = vsel %vm11430, %v11990, 0
  %v12037 = vsel %vm11430, %v11991, 0
  %v12040 = vsel %vm11430, %v11992, 0
  %v12043 = vsel %vm11430, %v11993, 0
  %v12046 = vsel %vm11430, %v11994, 0
  %v12049 = vsel %vm11430, %v11995, 0
  %v12052 = vsel %vm11430, %v11996, 0
  %v12055 = vsel %vm11430, %v11997, 0
  %12057 = vmatprep.subr.mxu0 0.0
  %12058 = vmatpush1.msra.mxu0 0.0
  %12059 = vmatprep.subr.mxu0 0.0
  %12060 = vmatpush1.msra.mxu0 0.0
  %12061 = vmatprep.subr.mxu0 0.0
  %12062 = vmatpush1.msra.mxu0 0.0
  %12063 = vmatprep.subr.mxu0 0.0
  %12064 = vmatpush1.msra.mxu0 0.0
  %12065 = vmatprep.subr.mxu0 0.0
  %12066 = vmatpush1.msra.mxu0 0.0
  %12067 = vmatprep.subr.mxu0 0.0
  %12068 = vmatpush1.msra.mxu0 0.0
  %12069 = vmatprep.subr.mxu0 0.0
  %12070 = vmatpush1.msra.mxu0 0.0
  %12071 = vmatprep.subr.mxu0 0.0
  %12072 = vmatpush1.msra.mxu0 0.0
  %12073 = vmatprep.subr.mxu0 0.0
  %12074 = vmatpush1.msra.mxu0 0.0
  %12075 = vmatprep.subr.mxu0 0.0
  %12076 = vmatpush1.msra.mxu0 0.0
  %12077 = vmatprep.subr.mxu0 0.0
  %12078 = vmatpush1.msra.mxu0 0.0
  %12079 = vmatprep.subr.mxu0 0.0
  %12080 = vmatpush1.msra.mxu0 0.0
  %12081 = vmatprep.subr.mxu0 0.0
  %12082 = vmatpush1.msra.mxu0 %v12001
  %12083 = vmatprep.subr.mxu0 0.0
  %12084 = vmatpush1.msra.mxu0 %v12000
  %12085 = vmatprep.subr.mxu0 0.0
  %12086 = vmatpush1.msra.mxu0 %v11999
  %12087 = vmatprep.subr.mxu0 0.0
  %12088 = vmatpush1.msra.mxu0 %v11998
  %12089 = vmatprep.subr.mxu0 0.0
  %12090 = vmatpush2.msra.mxu0 0.0
  %12091 = vmatprep.subr.mxu0 0.0
  %12092 = vmatpush2.msra.mxu0 0.0
  %12093 = vmatprep.subr.mxu0 0.0
  %12094 = vmatpush2.msra.mxu0 0.0
  %12095 = vmatprep.subr.mxu0 0.0
  %12096 = vmatpush2.msra.mxu0 0.0
  %12097 = vmatprep.subr.mxu0 0.0
  %12098 = vmatpush2.msra.mxu0 0.0
  %12099 = vmatprep.subr.mxu0 0.0
  %12100 = vmatpush2.msra.mxu0 0.0
  %12101 = vmatprep.subr.mxu0 0.0
  %12102 = vmatpush2.msra.mxu0 0.0
  %12103 = vmatprep.subr.mxu0 0.0
  %12104 = vmatpush2.msra.mxu0 0.0
  %12105 = vmatprep.subr.mxu0 0.0
  %12106 = vmatpush2.msra.mxu0 0.0
  %12107 = vmatprep.subr.mxu0 0.0
  %12108 = vmatpush2.msra.mxu0 0.0
  %12109 = vmatprep.subr.mxu0 0.0
  %12110 = vmatpush2.msra.mxu0 0.0
  %12111 = vmatprep.subr.mxu0 0.0
  %12112 = vmatpush2.msra.mxu0 0.0
  %12113 = vmatprep.subr.mxu0 0.0
  %12114 = vmatpush2.msra.mxu0 0.0
  %12115 = vmatprep.subr.mxu0 0.0
  %12116 = vmatpush2.msra.mxu0 0.0
  %12117 = vmatprep.subr.mxu0 0.0
  %12118 = vmatpush2.msra.mxu0 0.0
  %12119 = vmatprep.subr.mxu0 0.0
  %12120 = vmatpush2.msra.mxu0 0.0
  %12121 = vmatprep.mubr.f32.mxu0 0.0
  %12122 = vmatmul.mubr.f32.gmra.mxu0 %v12010
  %v12123 = vpop.f32.mrf.mxu0
  %v12124 = vadd.f32 %v12007, %v12123
  %v12125 = vpop.f32.mrf.mxu0
  %12126 = vmatprep.mubr.f32.mxu0 0.0
  %12127 = vmatmul.mubr.f32.gmra.mxu0 %v12013
  %v12128 = vpop.f32.mrf.mxu0
  %v12129 = vadd.f32 %v12007, %v12128
  %v12130 = vpop.f32.mrf.mxu0
  %12131 = vmatprep.mubr.f32.mxu0 0.0
  %12132 = vmatmul.mubr.f32.gmra.mxu0 %v12016
  %v12133 = vpop.f32.mrf.mxu0
  %v12134 = vadd.f32 %v12007, %v12133
  %v12135 = vpop.f32.mrf.mxu0
  %12136 = vmatprep.mubr.f32.mxu0 0.0
  %12137 = vmatmul.mubr.f32.gmra.mxu0 %v12019
  %v12138 = vpop.f32.mrf.mxu0
  %v12139 = vadd.f32 %v12007, %v12138
  %v12140 = vpop.f32.mrf.mxu0
  %12141 = vmatprep.mubr.f32.mxu0 0.0
  %12142 = vmatmul.mubr.f32.gmra.mxu0 %v12022
  %v12143 = vpop.f32.mrf.mxu0
  %v12144 = vadd.f32 %v12007, %v12143
  %v12145 = vpop.f32.mrf.mxu0
  %12146 = vmatprep.mubr.f32.mxu0 0.0
  %12147 = vmatmul.mubr.f32.gmra.mxu0 %v12025
  %v12148 = vpop.f32.mrf.mxu0
  %v12149 = vadd.f32 %v12007, %v12148
  %v12150 = vpop.f32.mrf.mxu0
  %12151 = vmatprep.mubr.f32.mxu0 0.0
  %12152 = vmatmul.mubr.f32.gmra.mxu0 %v12028
  %v12153 = vpop.f32.mrf.mxu0
  %v12154 = vadd.f32 %v12007, %v12153
  %v12155 = vpop.f32.mrf.mxu0
  %12156 = vmatprep.mubr.f32.mxu0 0.0
  %12157 = vmatmul.mubr.f32.gmra.mxu0 %v12031
  %v12158 = vpop.f32.mrf.mxu0
  %v12159 = vadd.f32 %v12007, %v12158
  %v12160 = vpop.f32.mrf.mxu0
  %12161 = vmatprep.mubr.f32.mxu0 0.0
  %12162 = vmatmul.mubr.f32.gmra.mxu0 %v12034
  %v12163 = vpop.f32.mrf.mxu0
  %v12164 = vadd.f32 %v12007, %v12163
  %v12165 = vpop.f32.mrf.mxu0
  %12166 = vmatprep.mubr.f32.mxu0 0.0
  %12167 = vmatmul.mubr.f32.gmra.mxu0 %v12037
  %v12168 = vpop.f32.mrf.mxu0
  %v12169 = vadd.f32 %v12007, %v12168
  %v12170 = vpop.f32.mrf.mxu0
  %12171 = vmatprep.mubr.f32.mxu0 0.0
  %12172 = vmatmul.mubr.f32.gmra.mxu0 %v12040
  %v12173 = vpop.f32.mrf.mxu0
  %v12174 = vadd.f32 %v12007, %v12173
  %v12175 = vpop.f32.mrf.mxu0
  %12176 = vmatprep.mubr.f32.mxu0 0.0
  %12177 = vmatmul.mubr.f32.gmra.mxu0 %v12043
  %v12178 = vpop.f32.mrf.mxu0
  %v12179 = vadd.f32 %v12007, %v12178
  %v12180 = vpop.f32.mrf.mxu0
  %12181 = vmatprep.mubr.f32.mxu0 0.0
  %12182 = vmatmul.mubr.f32.gmra.mxu0 %v12046
  %v12183 = vpop.f32.mrf.mxu0
  %v12184 = vadd.f32 %v12007, %v12183
  %v12185 = vpop.f32.mrf.mxu0
  %12186 = vmatprep.mubr.f32.mxu0 0.0
  %12187 = vmatmul.mubr.f32.gmra.mxu0 %v12049
  %v12188 = vpop.f32.mrf.mxu0
  %v12189 = vadd.f32 %v12007, %v12188
  %v12190 = vpop.f32.mrf.mxu0
  %12191 = vmatprep.mubr.f32.mxu0 0.0
  %12192 = vmatmul.mubr.f32.gmra.mxu0 %v12052
  %v12193 = vpop.f32.mrf.mxu0
  %v12194 = vadd.f32 %v12007, %v12193
  %v12195 = vpop.f32.mrf.mxu0
  %12196 = vmatprep.mubr.f32.mxu0 0.0
  %12197 = vmatmul.mubr.f32.gmra.mxu0 %v12055
  %v12198 = vpop.f32.mrf.mxu0
  %v12199 = vadd.f32 %v12007, %v12198
  %v12200 = vpop.f32.mrf.mxu0
  %12201 = vdwg.mxu0
  %v12202 = vmax.f32 %v12124, 0.0
  %v12203 = vmax.f32 %v12129, 0.0
  %v12204 = vmax.f32 %v12134, 0.0
  %v12205 = vmax.f32 %v12139, 0.0
  %v12206 = vmax.f32 %v12144, 0.0
  %v12207 = vmax.f32 %v12149, 0.0
  %v12208 = vmax.f32 %v12154, 0.0
  %v12209 = vmax.f32 %v12159, 0.0
  %v12210 = vmax.f32 %v12164, 0.0
  %v12211 = vmax.f32 %v12169, 0.0
  %v12212 = vmax.f32 %v12174, 0.0
  %v12213 = vmax.f32 %v12179, 0.0
  %v12214 = vmax.f32 %v12184, 0.0
  %v12215 = vmax.f32 %v12189, 0.0
  %v12216 = vmax.f32 %v12194, 0.0
  %v12217 = vmax.f32 %v12199, 0.0
  %v12218 = vxor.u32 %v12124, 2147483648
  %v12219 = vxor.u32 %v12129, 2147483648
  %v12220 = vxor.u32 %v12134, 2147483648
  %v12221 = vxor.u32 %v12139, 2147483648
  %v12222 = vxor.u32 %v12144, 2147483648
  %v12223 = vxor.u32 %v12149, 2147483648
  %v12224 = vxor.u32 %v12154, 2147483648
  %v12225 = vxor.u32 %v12159, 2147483648
  %v12226 = vxor.u32 %v12164, 2147483648
  %v12227 = vxor.u32 %v12169, 2147483648
  %v12228 = vxor.u32 %v12174, 2147483648
  %v12229 = vxor.u32 %v12179, 2147483648
  %v12230 = vxor.u32 %v12184, 2147483648
  %v12231 = vxor.u32 %v12189, 2147483648
  %v12232 = vxor.u32 %v12194, 2147483648
  %v12233 = vxor.u32 %v12199, 2147483648
  %v12234 = vmul.f32 %v12218, 1.442695
  %v12235 = vpow.pop %v12234
  %v12236 = vmul.f32 %v12219, 1.442695
  %v12237 = vpow.pop %v12236
  %v12238 = vmul.f32 %v12220, 1.442695
  %v12239 = vpow.pop %v12238
  %v12240 = vmul.f32 %v12221, 1.442695
  %v12241 = vpow.pop %v12240
  %v12242 = vmul.f32 %v12222, 1.442695
  %v12243 = vpow.pop %v12242
  %v12244 = vmul.f32 %v12223, 1.442695
  %v12245 = vpow.pop %v12244
  %v12246 = vmul.f32 %v12224, 1.442695
  %v12247 = vpow.pop %v12246
  %v12248 = vmul.f32 %v12225, 1.442695
  %v12249 = vpow.pop %v12248
  %v12250 = vmul.f32 %v12226, 1.442695
  %v12251 = vpow.pop %v12250
  %v12252 = vmul.f32 %v12227, 1.442695
  %v12253 = vpow.pop %v12252
  %v12254 = vmul.f32 %v12228, 1.442695
  %v12255 = vpow.pop %v12254
  %v12256 = vmul.f32 %v12229, 1.442695
  %v12257 = vpow.pop %v12256
  %v12258 = vmul.f32 %v12230, 1.442695
  %v12259 = vpow.pop %v12258
  %v12260 = vmul.f32 %v12231, 1.442695
  %v12261 = vpow.pop %v12260
  %v12262 = vmul.f32 %v12232, 1.442695
  %v12263 = vpow.pop %v12262
  %v12264 = vmul.f32 %v12233, 1.442695
  %v12265 = vpow.pop %v12264
  %v12266 = vadd.f32 %v12235, 1.0
  %v12267 = vadd.f32 %v12237, 1.0
  %v12268 = vadd.f32 %v12239, 1.0
  %v12269 = vadd.f32 %v12241, 1.0
  %v12270 = vadd.f32 %v12243, 1.0
  %v12271 = vadd.f32 %v12245, 1.0
  %v12272 = vadd.f32 %v12247, 1.0
  %v12273 = vadd.f32 %v12249, 1.0
  %v12274 = vadd.f32 %v12251, 1.0
  %v12275 = vadd.f32 %v12253, 1.0
  %v12276 = vadd.f32 %v12255, 1.0
  %v12277 = vadd.f32 %v12257, 1.0
  %v12278 = vadd.f32 %v12259, 1.0
  %v12279 = vadd.f32 %v12261, 1.0
  %v12280 = vadd.f32 %v12263, 1.0
  %v12281 = vadd.f32 %v12265, 1.0
  %v12282 = vrcp.pop %v12266
  %v12283 = vmul.f32 1.0, %v12282
  %v12284 = vrcp.pop %v12267
  %v12285 = vmul.f32 1.0, %v12284
  %v12286 = vrcp.pop %v12268
  %v12287 = vmul.f32 1.0, %v12286
  %v12288 = vrcp.pop %v12269
  %v12289 = vmul.f32 1.0, %v12288
  %v12290 = vrcp.pop %v12270
  %v12291 = vmul.f32 1.0, %v12290
  %v12292 = vrcp.pop %v12271
  %v12293 = vmul.f32 1.0, %v12292
  %v12294 = vrcp.pop %v12272
  %v12295 = vmul.f32 1.0, %v12294
  %v12296 = vrcp.pop %v12273
  %v12297 = vmul.f32 1.0, %v12296
  %v12298 = vrcp.pop %v12274
  %v12299 = vmul.f32 1.0, %v12298
  %v12300 = vrcp.pop %v12275
  %v12301 = vmul.f32 1.0, %v12300
  %v12302 = vrcp.pop %v12276
  %v12303 = vmul.f32 1.0, %v12302
  %v12304 = vrcp.pop %v12277
  %v12305 = vmul.f32 1.0, %v12304
  %v12306 = vrcp.pop %v12278
  %v12307 = vmul.f32 1.0, %v12306
  %v12308 = vrcp.pop %v12279
  %v12309 = vmul.f32 1.0, %v12308
  %v12310 = vrcp.pop %v12280
  %v12311 = vmul.f32 1.0, %v12310
  %v12312 = vrcp.pop %v12281
  %v12313 = vmul.f32 1.0, %v12312
  %12330 = vrot.lane.b32.xlu0 %v12202, 32
  %v12331 = vpop.permute.xlu0 %12330
  %12332 = vrot.lane.b32.xlu0 %v12203, 32
  %v12333 = vpop.permute.xlu0 %12332
  %12334 = vrot.lane.b32.xlu0 %v12204, 32
  %v12335 = vpop.permute.xlu0 %12334
  %12336 = vrot.lane.b32.xlu0 %v12205, 32
  %v12337 = vpop.permute.xlu0 %12336
  %12338 = vrot.lane.b32.xlu0 %v12206, 32
  %v12339 = vpop.permute.xlu0 %12338
  %12340 = vrot.lane.b32.xlu0 %v12207, 32
  %v12341 = vpop.permute.xlu0 %12340
  %12342 = vrot.lane.b32.xlu0 %v12208, 32
  %v12343 = vpop.permute.xlu0 %12342
  %12344 = vrot.lane.b32.xlu0 %v12209, 32
  %v12345 = vpop.permute.xlu0 %12344
  %12346 = vrot.lane.b32.xlu0 %v12210, 32
  %v12347 = vpop.permute.xlu0 %12346
  %12348 = vrot.lane.b32.xlu0 %v12211, 32
  %v12349 = vpop.permute.xlu0 %12348
  %12350 = vrot.lane.b32.xlu0 %v12212, 32
  %v12351 = vpop.permute.xlu0 %12350
  %12352 = vrot.lane.b32.xlu0 %v12213, 32
  %v12353 = vpop.permute.xlu0 %12352
  %12354 = vrot.lane.b32.xlu0 %v12214, 32
  %v12355 = vpop.permute.xlu0 %12354
  %12356 = vrot.lane.b32.xlu0 %v12215, 32
  %v12357 = vpop.permute.xlu0 %12356
  %12358 = vrot.lane.b32.xlu0 %v12216, 32
  %v12359 = vpop.permute.xlu0 %12358
  %12360 = vrot.lane.b32.xlu0 %v12217, 32
  %v12361 = vpop.permute.xlu0 %12360
  %v12378 = vmul.f32 %v12283, %v12331
  %v12379 = vmul.f32 %v12285, %v12333
  %v12380 = vmul.f32 %v12287, %v12335
  %v12381 = vmul.f32 %v12289, %v12337
  %v12382 = vmul.f32 %v12291, %v12339
  %v12383 = vmul.f32 %v12293, %v12341
  %v12384 = vmul.f32 %v12295, %v12343
  %v12385 = vmul.f32 %v12297, %v12345
  %v12386 = vmul.f32 %v12299, %v12347
  %v12387 = vmul.f32 %v12301, %v12349
  %v12388 = vmul.f32 %v12303, %v12351
  %v12389 = vmul.f32 %v12305, %v12353
  %v12390 = vmul.f32 %v12307, %v12355
  %v12391 = vmul.f32 %v12309, %v12357
  %v12392 = vmul.f32 %v12311, %v12359
  %v12393 = vmul.f32 %v12313, %v12361
  %v12394 = vsub.f32 1.0, %v12283
  %v12395 = vsub.f32 1.0, %v12285
  %v12396 = vsub.f32 1.0, %v12287
  %v12397 = vsub.f32 1.0, %v12289
  %v12398 = vsub.f32 1.0, %v12291
  %v12399 = vsub.f32 1.0, %v12293
  %v12400 = vsub.f32 1.0, %v12295
  %v12401 = vsub.f32 1.0, %v12297
  %v12402 = vsub.f32 1.0, %v12299
  %v12403 = vsub.f32 1.0, %v12301
  %v12404 = vsub.f32 1.0, %v12303
  %v12405 = vsub.f32 1.0, %v12305
  %v12406 = vsub.f32 1.0, %v12307
  %v12407 = vsub.f32 1.0, %v12309
  %v12408 = vsub.f32 1.0, %v12311
  %v12409 = vsub.f32 1.0, %v12313
  %12410 = vrot.lane.b32.xlu0 %v11982, 32
  %v12411 = vpop.permute.xlu0 %12410
  %12412 = vrot.lane.b32.xlu0 %v11983, 32
  %v12413 = vpop.permute.xlu0 %12412
  %12414 = vrot.lane.b32.xlu0 %v11984, 32
  %v12415 = vpop.permute.xlu0 %12414
  %12416 = vrot.lane.b32.xlu0 %v11985, 32
  %v12417 = vpop.permute.xlu0 %12416
  %12418 = vrot.lane.b32.xlu0 %v11986, 32
  %v12419 = vpop.permute.xlu0 %12418
  %12420 = vrot.lane.b32.xlu0 %v11987, 32
  %v12421 = vpop.permute.xlu0 %12420
  %12422 = vrot.lane.b32.xlu0 %v11988, 32
  %v12423 = vpop.permute.xlu0 %12422
  %12424 = vrot.lane.b32.xlu0 %v11989, 32
  %v12425 = vpop.permute.xlu0 %12424
  %12426 = vrot.lane.b32.xlu0 %v11990, 32
  %v12427 = vpop.permute.xlu0 %12426
  %12428 = vrot.lane.b32.xlu0 %v11991, 32
  %v12429 = vpop.permute.xlu0 %12428
  %12430 = vrot.lane.b32.xlu0 %v11992, 32
  %v12431 = vpop.permute.xlu0 %12430
  %12432 = vrot.lane.b32.xlu0 %v11993, 32
  %v12433 = vpop.permute.xlu0 %12432
  %12434 = vrot.lane.b32.xlu0 %v11994, 32
  %v12435 = vpop.permute.xlu0 %12434
  %12436 = vrot.lane.b32.xlu0 %v11995, 32
  %v12437 = vpop.permute.xlu0 %12436
  %12438 = vrot.lane.b32.xlu0 %v11996, 32
  %v12439 = vpop.permute.xlu0 %12438
  %12440 = vrot.lane.b32.xlu0 %v11997, 32
  %v12441 = vpop.permute.xlu0 %12440
  %v12458 = vmul.f32 %v12394, %v12411
  %v12459 = vmul.f32 %v12395, %v12413
  %v12460 = vmul.f32 %v12396, %v12415
  %v12461 = vmul.f32 %v12397, %v12417
  %v12462 = vmul.f32 %v12398, %v12419
  %v12463 = vmul.f32 %v12399, %v12421
  %v12464 = vmul.f32 %v12400, %v12423
  %v12465 = vmul.f32 %v12401, %v12425
  %v12466 = vmul.f32 %v12402, %v12427
  %v12467 = vmul.f32 %v12403, %v12429
  %v12468 = vmul.f32 %v12404, %v12431
  %v12469 = vmul.f32 %v12405, %v12433
  %v12470 = vmul.f32 %v12406, %v12435
  %v12471 = vmul.f32 %v12407, %v12437
  %v12472 = vmul.f32 %v12408, %v12439
  %v12473 = vmul.f32 %v12409, %v12441
  %v12474 = vadd.f32 %v12378, %v12458
  %v12475 = vadd.f32 %v12379, %v12459
  %v12476 = vadd.f32 %v12380, %v12460
  %v12477 = vadd.f32 %v12381, %v12461
  %v12478 = vadd.f32 %v12382, %v12462
  %v12479 = vadd.f32 %v12383, %v12463
  %v12480 = vadd.f32 %v12384, %v12464
  %v12481 = vadd.f32 %v12385, %v12465
  %v12482 = vadd.f32 %v12386, %v12466
  %v12483 = vadd.f32 %v12387, %v12467
  %v12484 = vadd.f32 %v12388, %v12468
  %v12485 = vadd.f32 %v12389, %v12469
  %v12486 = vadd.f32 %v12390, %v12470
  %v12487 = vadd.f32 %v12391, %v12471
  %v12488 = vadd.f32 %v12392, %v12472
  %v12489 = vadd.f32 %v12393, %v12473
  %12506 = vrot.lane.b32.xlu0 %v12474, 96
  %v12507 = vpop.permute.xlu0 %12506
  %12508 = vrot.lane.b32.xlu0 %v12475, 96
  %v12509 = vpop.permute.xlu0 %12508
  %12510 = vrot.lane.b32.xlu0 %v12476, 96
  %v12511 = vpop.permute.xlu0 %12510
  %12512 = vrot.lane.b32.xlu0 %v12477, 96
  %v12513 = vpop.permute.xlu0 %12512
  %12514 = vrot.lane.b32.xlu0 %v12478, 96
  %v12515 = vpop.permute.xlu0 %12514
  %12516 = vrot.lane.b32.xlu0 %v12479, 96
  %v12517 = vpop.permute.xlu0 %12516
  %12518 = vrot.lane.b32.xlu0 %v12480, 96
  %v12519 = vpop.permute.xlu0 %12518
  %12520 = vrot.lane.b32.xlu0 %v12481, 96
  %v12521 = vpop.permute.xlu0 %12520
  %12522 = vrot.lane.b32.xlu0 %v12482, 96
  %v12523 = vpop.permute.xlu0 %12522
  %12524 = vrot.lane.b32.xlu0 %v12483, 96
  %v12525 = vpop.permute.xlu0 %12524
  %12526 = vrot.lane.b32.xlu0 %v12484, 96
  %v12527 = vpop.permute.xlu0 %12526
  %12528 = vrot.lane.b32.xlu0 %v12485, 96
  %v12529 = vpop.permute.xlu0 %12528
  %12530 = vrot.lane.b32.xlu0 %v12486, 96
  %v12531 = vpop.permute.xlu0 %12530
  %12532 = vrot.lane.b32.xlu0 %v12487, 96
  %v12533 = vpop.permute.xlu0 %12532
  %12534 = vrot.lane.b32.xlu0 %v12488, 96
  %v12535 = vpop.permute.xlu0 %12534
  %12536 = vrot.lane.b32.xlu0 %v12489, 96
  %v12537 = vpop.permute.xlu0 %12536
  %12554 = vst.msk [vmem:[%s5] sm:$0xff] %vm11430, %v12507
  %12555 = vst.msk [vmem:[%s5 + $0x8] sm:$0xff] %vm11430, %v12509
  %12556 = vst.msk [vmem:[%s5 + $0x10] sm:$0xff] %vm11430, %v12511
  %12557 = vst.msk [vmem:[%s5 + $0x18] sm:$0xff] %vm11430, %v12513
  %12558 = vst.msk [vmem:[%s5 + $0x20] sm:$0xff] %vm11430, %v12515
  %12559 = vst.msk [vmem:[%s5 + $0x28] sm:$0xff] %vm11430, %v12517
  %12560 = vst.msk [vmem:[%s5 + $0x30] sm:$0xff] %vm11430, %v12519
  %12561 = vst.msk [vmem:[%s5 + $0x38] sm:$0xff] %vm11430, %v12521
  %12562 = vst.msk [vmem:[%s5 + $0x40] sm:$0xff] %vm11430, %v12523
  %12563 = vst.msk [vmem:[%s5 + $0x48] sm:$0xff] %vm11430, %v12525
  %12564 = vst.msk [vmem:[%s5 + $0x50] sm:$0xff] %vm11430, %v12527
  %12565 = vst.msk [vmem:[%s5 + $0x58] sm:$0xff] %vm11430, %v12529
  %12566 = vst.msk [vmem:[%s5 + $0x60] sm:$0xff] %vm11430, %v12531
  %12567 = vst.msk [vmem:[%s5 + $0x68] sm:$0xff] %vm11430, %v12533
  %12568 = vst.msk [vmem:[%s5 + $0x70] sm:$0xff] %vm11430, %v12535
  %12569 = vst.msk [vmem:[%s5 + $0x78] sm:$0xff] %vm11430, %v12537
  // Predicated region
  $region22: #{_forward.1} parent=0 // pred_check
    _
  $region23: #{_forward.1} parent=0 // pred_check_branch
    %12571 = sbr.rel (0) target = $region25
  $region24: #{_forward.1} parent=0 // pred_region
    _
  $region25: #{_forward.1} parent=0 // pred_fallthru
    _
  // Predicated region
  $region26: #{_forward.1} parent=0 // pred_check
    _
  $region27: #{_forward.1} parent=0 // pred_check_branch
    %12573 = sbr.rel (0) target = $region29
  $region28: #{_forward.1} parent=0 // pred_region
    _
  $region29: #{_forward.1} parent=0 // pred_fallthru
    _

</llo_original>
